<compile_context>
chip_gen: v7x
topology: tpu7x:2x2x1
jax: 0.10.0
libtpu: 0.0.40
codegen_flags: <defaults>
</compile_context>

<pallas_src>
import functools

import jax
import jax.numpy as jnp
from jax.experimental import pallas as pl
from jax.experimental.pallas import tpu as pltpu

# ---- small-but-lane-aligned configuration (scaled down from dim=2048, heads=8,
#      dim_head=256, mlp_dim=2048 in the reference defaults) ----
DIM = 256          # model dim
HEADS = 2          # attention heads
DIM_HEAD = 128     # per-head dim  -> inner_dim = HEADS * DIM_HEAD = 256
MLP_DIM = 512      # FeedForward hidden dim
DEPTH = 1          # reference default
SEQ = 128          # tokens per sequence
BATCH = 2
LN_EPS = 1e-5      # PyTorch nn.LayerNorm default


def _transformer_layer_kernel(x_ref, gamma_ref, beta_ref, wqkv_ref,
                              wout_ref, bout_ref, w1_ref, b1_ref,
                              w2_ref, b2_ref, o_ref,
                              *, batch, seq, heads, dim_head):
    """Whole (collapsed) batch per call: pre-norm attention + residual, FFN + residual."""
    x = x_ref[...].astype(jnp.float32)                     # (b*n, dim)

    # ---- LayerNorm (PreNormattention.norm), f32 statistics ----
    mu = jnp.mean(x, axis=-1, keepdims=True)
    diff = x - mu
    var = jnp.mean(diff * diff, axis=-1, keepdims=True)
    xn = diff * jax.lax.rsqrt(var + LN_EPS)
    xn = xn * gamma_ref[...] + beta_ref[...]               # (b*n, dim)

    # ---- Attention: to_qkv (no bias, scale pre-folded into Q), softmax, to_out ----
    inner = heads * dim_head
    qkv = jnp.dot(xn.astype(jnp.bfloat16), wqkv_ref[...],
                  preferred_element_type=jnp.float32)      # (b*n, 3*inner), f32 acc

    row_outs = []
    for bi in range(batch):                                # static unroll over batch rows
        r0 = bi * seq
        head_outs = []
        for h in range(heads):                             # static unroll, lane-aligned cols
            lo = h * dim_head
            qh = qkv[r0:r0 + seq, lo:lo + dim_head].astype(jnp.bfloat16)
            kh = qkv[r0:r0 + seq, inner + lo:inner + lo + dim_head].astype(jnp.bfloat16)
            vh = qkv[r0:r0 + seq, 2 * inner + lo:2 * inner + lo + dim_head].astype(jnp.bfloat16)
            dots = jax.lax.dot_general(
                qh, kh, (((1,), (1,)), ((), ())),
                preferred_element_type=jnp.float32)        # (n, n); scale already in Wq
            m = jnp.max(dots, axis=-1, keepdims=True)
            p = jnp.exp(dots - m)
            l = jnp.sum(p, axis=-1, keepdims=True)
            attn = (p * pl.reciprocal(l, approx=True)).astype(jnp.bfloat16)
            head_outs.append(jnp.dot(attn, vh, preferred_element_type=jnp.float32))
        row_outs.append(jnp.concatenate(head_outs, axis=-1))   # (n, inner)
    attn_cat = jnp.concatenate(row_outs, axis=0)            # (b*n, inner)

    attn_out = jnp.dot(attn_cat.astype(jnp.bfloat16), wout_ref[...],
                       preferred_element_type=jnp.float32) + bout_ref[...]
    x1 = attn_out + x                                       # PreNormattention residual (f32)

    # ---- FeedForward: Linear -> GELU -> Linear, residual ----
    h1 = jnp.dot(x1.astype(jnp.bfloat16), w1_ref[...],
                 preferred_element_type=jnp.float32) + b1_ref[...]
    h1 = jax.nn.gelu(h1)                                    # f32 elementwise (v5e-safe)
    ff = jnp.dot(h1.astype(jnp.bfloat16), w2_ref[...],
                 preferred_element_type=jnp.float32) + b2_ref[...]

    o_ref[...] = (ff + x1).astype(o_ref.dtype)


def _transformer_layer(x2d, layer_params, *, batch, seq, heads, dim_head):
    """Apply one fused transformer layer via a single pallas_call (single grid step)."""
    gamma, beta, wqkv, wout, bout, w1, b1, w2, b2 = layer_params
    m, dim = x2d.shape                                      # m = batch * seq
    inner = heads * dim_head
    mlp_dim = w1.shape[1]

    kernel = functools.partial(_transformer_layer_kernel, batch=batch, seq=seq,
                               heads=heads, dim_head=dim_head)

    # Advisory cost estimate (scheduling hint for XLA around the custom call).
    flops = (2 * m * dim * 3 * inner                        # QKV projection
             + batch * heads * (2 * seq * seq * dim_head) * 2   # QK^T + attn@V
             + 2 * m * inner * dim                          # to_out
             + 2 * m * dim * mlp_dim * 2)                   # FFN (W1 + W2)
    transcendentals = batch * heads * seq * seq + m * mlp_dim + m
    bytes_accessed = (x2d.size * 4 * 2
                      + (wqkv.size + wout.size + w1.size + w2.size) * 2
                      + (gamma.size + beta.size + bout.size + b1.size + b2.size) * 4)

    const2 = lambda i: (0, 0)
    return pl.pallas_call(
        kernel,
        out_shape=jax.ShapeDtypeStruct((m, dim), jnp.float32),
        grid_spec=pltpu.PrefetchScalarGridSpec(
            num_scalar_prefetch=0,
            grid=(1,),
            in_specs=[
                pl.BlockSpec((m, dim), const2),                 # x (collapsed batch)
                pl.BlockSpec((1, dim), const2),                 # LN gamma (f32)
                pl.BlockSpec((1, dim), const2),                 # LN beta  (f32)
                pl.BlockSpec((dim, 3 * inner), const2),         # Wqkv (bf16, scale folded)
                pl.BlockSpec((inner, dim), const2),             # Wout (bf16)
                pl.BlockSpec((1, dim), const2),                 # bout (f32)
                pl.BlockSpec((dim, mlp_dim), const2),           # W1   (bf16)
                pl.BlockSpec((1, mlp_dim), const2),             # b1   (f32)
                pl.BlockSpec((mlp_dim, dim), const2),           # W2   (bf16)
                pl.BlockSpec((1, dim), const2),                 # b2   (f32)
            ],
            out_specs=pl.BlockSpec((m, dim), const2),
        ),
        compiler_params=pltpu.CompilerParams(
            dimension_semantics=("arbitrary",)),
        cost_estimate=pl.CostEstimate(flops=int(flops),
                                      transcendentals=int(transcendentals),
                                      bytes_accessed=int(bytes_accessed)),
    )(x2d, gamma, beta, wqkv, wout, bout, w1, b1, w2, b2)


def prepare_params(params, *, heads=HEADS, dim_head=DIM_HEAD):
    """Fold the softmax scale into the Q columns of Wqkv and cast weights to bf16."""
    scale = float(dim_head) ** -0.5
    inner = heads * dim_head
    prepped = []
    for (gamma, beta, wqkv, wout, bout, w1, b1, w2, b2) in params:
        wqkv_scaled = wqkv.at[:, :inner].multiply(scale)
        prepped.append((gamma, beta,
                        wqkv_scaled.astype(jnp.bfloat16),
                        wout.astype(jnp.bfloat16), bout,
                        w1.astype(jnp.bfloat16), b1,
                        w2.astype(jnp.bfloat16), b2))
    return prepped


def transformer_v2_forward(prepped_params, x, *, heads=HEADS, dim_head=DIM_HEAD):
    """Mirrors Transformer_v2.forward: sequentially apply all depth layers."""
    b, n, dim = x.shape
    x2d = x.reshape(b * n, dim)                 # lane-layout no-op; M = b*n feeds the MXU
    for layer_params in prepped_params:
        x2d = _transformer_layer(x2d, layer_params, batch=b, seq=n,
                                 heads=heads, dim_head=dim_head)
    return x2d.reshape(b, n, dim)


def init_params(key, *, dim=DIM, heads=HEADS, dim_head=DIM_HEAD,
                mlp_dim=MLP_DIM, depth=DEPTH):
    inner = heads * dim_head
    params = []
    for d in range(depth):
        ks = jax.random.split(jax.random.fold_in(key, d), 6)
        gamma = jnp.ones((1, dim), jnp.float32)
        beta = jnp.zeros((1, dim), jnp.float32)
        wqkv = 0.02 * jax.random.normal(ks[0], (dim, 3 * inner), jnp.float32)
        wout = 0.02 * jax.random.normal(ks[1], (inner, dim), jnp.float32)
        bout = 0.01 * jax.random.normal(ks[2], (1, dim), jnp.float32)
        w1 = 0.02 * jax.random.normal(ks[3], (dim, mlp_dim), jnp.float32)
        b1 = 0.01 * jax.random.normal(ks[4], (1, mlp_dim), jnp.float32)
        w2 = 0.02 * jax.random.normal(ks[5], (mlp_dim, dim), jnp.float32)
        b2 = jnp.zeros((1, dim), jnp.float32)
        params.append((gamma, beta, wqkv, wout, bout, w1, b1, w2, b2))
    return params


if __name__ == "__main__":
    key = jax.random.PRNGKey(0)
    kp, kx = jax.random.split(key)
    params = init_params(kp)
    prepped = prepare_params(params)

    x = jax.random.normal(kx, (BATCH, SEQ, DIM), jnp.float32)

    out = transformer_v2_forward(prepped, x)
    jax.block_until_ready(out)

    assert out.shape == (BATCH, SEQ, DIM)
    assert bool(jnp.all(jnp.isfinite(out)))
    print("KERNEL_OK")
</pallas_src>

<mosaic_0001>
module attributes {stable_mosaic.version = 11 : i64} {
  func.func @_transformer_layer_kernel(%arg0: i32, %arg1: memref<256x256xf32, #tpu.memory_space<vmem>>, %arg2: memref<1x256xf32, #tpu.memory_space<vmem>>, %arg3: memref<1x256xf32, #tpu.memory_space<vmem>>, %arg4: memref<256x768xbf16, #tpu.memory_space<vmem>>, %arg5: memref<256x256xbf16, #tpu.memory_space<vmem>>, %arg6: memref<1x256xf32, #tpu.memory_space<vmem>>, %arg7: memref<256x512xbf16, #tpu.memory_space<vmem>>, %arg8: memref<1x512xf32, #tpu.memory_space<vmem>>, %arg9: memref<512x256xbf16, #tpu.memory_space<vmem>>, %arg10: memref<1x256xf32, #tpu.memory_space<vmem>>, %arg11: memref<256x256xf32, #tpu.memory_space<vmem>>) attributes {dimension_semantics = [#tpu.dimension_semantics<arbitrary>], iteration_bounds = array<i64: 1>, scalar_prefetch = 0 : i64, scratch_operands = 0 : i64, tpu.core_type = #tpu.core_type<tc>, window_params = [{pipeline_mode = #tpu.pipeline_mode<synchronous>, transform_indices = @transform_0, window_bounds = array<i64: 256, 256>}, {pipeline_mode = #tpu.pipeline_mode<synchronous>, transform_indices = @transform_1, window_bounds = array<i64: 1, 256>}, {pipeline_mode = #tpu.pipeline_mode<synchronous>, transform_indices = @transform_2, window_bounds = array<i64: 1, 256>}, {pipeline_mode = #tpu.pipeline_mode<synchronous>, transform_indices = @transform_3, window_bounds = array<i64: 256, 768>}, {pipeline_mode = #tpu.pipeline_mode<synchronous>, transform_indices = @transform_4, window_bounds = array<i64: 256, 256>}, {pipeline_mode = #tpu.pipeline_mode<synchronous>, transform_indices = @transform_5, window_bounds = array<i64: 1, 256>}, {pipeline_mode = #tpu.pipeline_mode<synchronous>, transform_indices = @transform_6, window_bounds = array<i64: 256, 512>}, {pipeline_mode = #tpu.pipeline_mode<synchronous>, transform_indices = @transform_7, window_bounds = array<i64: 1, 512>}, {pipeline_mode = #tpu.pipeline_mode<synchronous>, transform_indices = @transform_8, window_bounds = array<i64: 512, 256>}, {pipeline_mode = #tpu.pipeline_mode<synchronous>, transform_indices = @transform_9, window_bounds = array<i64: 1, 256>}, {pipeline_mode = #tpu.pipeline_mode<synchronous>, transform_indices = @transform_10, window_bounds = array<i64: 256, 256>}]} {
    %c0 = arith.constant 0 : index
    %c0_0 = arith.constant 0 : index
    %0 = vector.load %arg1[%c0, %c0_0] : memref<256x256xf32, #tpu.memory_space<vmem>>, vector<256x256xf32>
    %cst = arith.constant dense<0.000000e+00> : vector<256xf32>
    %1 = vector.multi_reduction <add>, %0, %cst [1] : vector<256x256xf32> to vector<256xf32>
    %2 = vector.shape_cast %1 : vector<256xf32> to vector<256x1xf32>
    %cst_1 = arith.constant 2.560000e+02 : f32
    %3 = vector.broadcast %cst_1 : f32 to vector<256x1xf32>
    %4 = arith.divf %2, %3 : vector<256x1xf32>
    %5 = vector.broadcast %4 : vector<256x1xf32> to vector<256x256xf32>
    %6 = arith.subf %0, %5 : vector<256x256xf32>
    %7 = arith.mulf %6, %6 : vector<256x256xf32>
    %cst_2 = arith.constant dense<0.000000e+00> : vector<256xf32>
    %8 = vector.multi_reduction <add>, %7, %cst_2 [1] : vector<256x256xf32> to vector<256xf32>
    %9 = vector.shape_cast %8 : vector<256xf32> to vector<256x1xf32>
    %cst_3 = arith.constant 2.560000e+02 : f32
    %10 = vector.broadcast %cst_3 : f32 to vector<256x1xf32>
    %11 = arith.divf %9, %10 : vector<256x1xf32>
    %cst_4 = arith.constant 9.99999974E-6 : f32
    %12 = vector.broadcast %cst_4 : f32 to vector<256x1xf32>
    %13 = arith.addf %11, %12 : vector<256x1xf32>
    %14 = math.rsqrt %13 : vector<256x1xf32>
    %15 = vector.broadcast %14 : vector<256x1xf32> to vector<256x256xf32>
    %16 = arith.mulf %6, %15 : vector<256x256xf32>
    %c0_5 = arith.constant 0 : index
    %c0_6 = arith.constant 0 : index
    %17 = vector.load %arg2[%c0_5, %c0_6] : memref<1x256xf32, #tpu.memory_space<vmem>>, vector<1x256xf32>
    %18 = vector.broadcast %17 : vector<1x256xf32> to vector<256x256xf32>
    %19 = arith.mulf %16, %18 : vector<256x256xf32>
    %c0_7 = arith.constant 0 : index
    %c0_8 = arith.constant 0 : index
    %20 = vector.load %arg3[%c0_7, %c0_8] : memref<1x256xf32, #tpu.memory_space<vmem>>, vector<1x256xf32>
    %21 = vector.broadcast %20 : vector<1x256xf32> to vector<256x256xf32>
    %22 = arith.addf %19, %21 : vector<256x256xf32>
    %23 = arith.truncf %22 : vector<256x256xf32> to vector<256x256xbf16>
    %c0_9 = arith.constant 0 : index
    %c0_10 = arith.constant 0 : index
    %24 = vector.load %arg4[%c0_9, %c0_10] : memref<256x768xbf16, #tpu.memory_space<vmem>>, vector<256x768xbf16>
    %cst_11 = arith.constant dense<0.000000e+00> : vector<256x768xf32>
    %25 = tpu.matmul %23, %24, %cst_11 {dimension_numbers = #tpu.dot_dimension_numbers<[1], [0], [0], [1], [0, 0, 1, 1], [], []>} : vector<256x256xbf16>, vector<256x768xbf16>, vector<256x768xf32> -> vector<256x768xf32>
    %26 = vector.extract_strided_slice %25 {offsets = [0, 0], sizes = [128, 128], strides = [1, 1]} : vector<256x768xf32> to vector<128x128xf32>
    %27 = arith.truncf %26 : vector<128x128xf32> to vector<128x128xbf16>
    %28 = vector.extract_strided_slice %25 {offsets = [0, 256], sizes = [128, 128], strides = [1, 1]} : vector<256x768xf32> to vector<128x128xf32>
    %29 = arith.truncf %28 : vector<128x128xf32> to vector<128x128xbf16>
    %30 = vector.extract_strided_slice %25 {offsets = [0, 512], sizes = [128, 128], strides = [1, 1]} : vector<256x768xf32> to vector<128x128xf32>
    %31 = arith.truncf %30 : vector<128x128xf32> to vector<128x128xbf16>
    %cst_12 = arith.constant dense<0.000000e+00> : vector<128x128xf32>
    %32 = tpu.matmul %27, %29, %cst_12 {dimension_numbers = #tpu.dot_dimension_numbers<[1], [1], [0], [0], [0, 0, 1, 0], [], []>} : vector<128x128xbf16>, vector<128x128xbf16>, vector<128x128xf32> -> vector<128x128xf32>
    %cst_13 = arith.constant dense<0xFF800000> : vector<128xf32>
    %33 = vector.multi_reduction <maximumf>, %32, %cst_13 [1] : vector<128x128xf32> to vector<128xf32>
    %34 = vector.shape_cast %33 : vector<128xf32> to vector<128x1xf32>
    %35 = vector.broadcast %34 : vector<128x1xf32> to vector<128x128xf32>
    %36 = arith.subf %32, %35 : vector<128x128xf32>
    %37 = math.exp %36 : vector<128x128xf32>
    %cst_14 = arith.constant dense<0.000000e+00> : vector<128xf32>
    %38 = vector.multi_reduction <add>, %37, %cst_14 [1] : vector<128x128xf32> to vector<128xf32>
    %39 = vector.shape_cast %38 : vector<128xf32> to vector<128x1xf32>
    %40 = tpu.reciprocal %39 {approx = true} : vector<128x1xf32> -> vector<128x1xf32>
    %41 = vector.broadcast %40 : vector<128x1xf32> to vector<128x128xf32>
    %42 = arith.mulf %37, %41 : vector<128x128xf32>
    %43 = arith.truncf %42 : vector<128x128xf32> to vector<128x128xbf16>
    %cst_15 = arith.constant dense<0.000000e+00> : vector<128x128xf32>
    %44 = tpu.matmul %43, %31, %cst_15 {dimension_numbers = #tpu.dot_dimension_numbers<[1], [0], [0], [1], [0, 0, 1, 1], [], []>} : vector<128x128xbf16>, vector<128x128xbf16>, vector<128x128xf32> -> vector<128x128xf32>
    %45 = vector.extract_strided_slice %25 {offsets = [0, 128], sizes = [128, 128], strides = [1, 1]} : vector<256x768xf32> to vector<128x128xf32>
    %46 = arith.truncf %45 : vector<128x128xf32> to vector<128x128xbf16>
    %47 = vector.extract_strided_slice %25 {offsets = [0, 384], sizes = [128, 128], strides = [1, 1]} : vector<256x768xf32> to vector<128x128xf32>
    %48 = arith.truncf %47 : vector<128x128xf32> to vector<128x128xbf16>
    %49 = vector.extract_strided_slice %25 {offsets = [0, 640], sizes = [128, 128], strides = [1, 1]} : vector<256x768xf32> to vector<128x128xf32>
    %50 = arith.truncf %49 : vector<128x128xf32> to vector<128x128xbf16>
    %cst_16 = arith.constant dense<0.000000e+00> : vector<128x128xf32>
    %51 = tpu.matmul %46, %48, %cst_16 {dimension_numbers = #tpu.dot_dimension_numbers<[1], [1], [0], [0], [0, 0, 1, 0], [], []>} : vector<128x128xbf16>, vector<128x128xbf16>, vector<128x128xf32> -> vector<128x128xf32>
    %cst_17 = arith.constant dense<0xFF800000> : vector<128xf32>
    %52 = vector.multi_reduction <maximumf>, %51, %cst_17 [1] : vector<128x128xf32> to vector<128xf32>
    %53 = vector.shape_cast %52 : vector<128xf32> to vector<128x1xf32>
    %54 = vector.broadcast %53 : vector<128x1xf32> to vector<128x128xf32>
    %55 = arith.subf %51, %54 : vector<128x128xf32>
    %56 = math.exp %55 : vector<128x128xf32>
    %cst_18 = arith.constant dense<0.000000e+00> : vector<128xf32>
    %57 = vector.multi_reduction <add>, %56, %cst_18 [1] : vector<128x128xf32> to vector<128xf32>
    %58 = vector.shape_cast %57 : vector<128xf32> to vector<128x1xf32>
    %59 = tpu.reciprocal %58 {approx = true} : vector<128x1xf32> -> vector<128x1xf32>
    %60 = vector.broadcast %59 : vector<128x1xf32> to vector<128x128xf32>
    %61 = arith.mulf %56, %60 : vector<128x128xf32>
    %62 = arith.truncf %61 : vector<128x128xf32> to vector<128x128xbf16>
    %cst_19 = arith.constant dense<0.000000e+00> : vector<128x128xf32>
    %63 = tpu.matmul %62, %50, %cst_19 {dimension_numbers = #tpu.dot_dimension_numbers<[1], [0], [0], [1], [0, 0, 1, 1], [], []>} : vector<128x128xbf16>, vector<128x128xbf16>, vector<128x128xf32> -> vector<128x128xf32>
    %64 = tpu.concatenate %44, %63 in 1 : vector<128x128xf32>, vector<128x128xf32> -> vector<128x256xf32>
    %65 = vector.extract_strided_slice %25 {offsets = [128, 0], sizes = [128, 128], strides = [1, 1]} : vector<256x768xf32> to vector<128x128xf32>
    %66 = arith.truncf %65 : vector<128x128xf32> to vector<128x128xbf16>
    %67 = vector.extract_strided_slice %25 {offsets = [128, 256], sizes = [128, 128], strides = [1, 1]} : vector<256x768xf32> to vector<128x128xf32>
    %68 = arith.truncf %67 : vector<128x128xf32> to vector<128x128xbf16>
    %69 = vector.extract_strided_slice %25 {offsets = [128, 512], sizes = [128, 128], strides = [1, 1]} : vector<256x768xf32> to vector<128x128xf32>
    %70 = arith.truncf %69 : vector<128x128xf32> to vector<128x128xbf16>
    %cst_20 = arith.constant dense<0.000000e+00> : vector<128x128xf32>
    %71 = tpu.matmul %66, %68, %cst_20 {dimension_numbers = #tpu.dot_dimension_numbers<[1], [1], [0], [0], [0, 0, 1, 0], [], []>} : vector<128x128xbf16>, vector<128x128xbf16>, vector<128x128xf32> -> vector<128x128xf32>
    %cst_21 = arith.constant dense<0xFF800000> : vector<128xf32>
    %72 = vector.multi_reduction <maximumf>, %71, %cst_21 [1] : vector<128x128xf32> to vector<128xf32>
    %73 = vector.shape_cast %72 : vector<128xf32> to vector<128x1xf32>
    %74 = vector.broadcast %73 : vector<128x1xf32> to vector<128x128xf32>
    %75 = arith.subf %71, %74 : vector<128x128xf32>
    %76 = math.exp %75 : vector<128x128xf32>
    %cst_22 = arith.constant dense<0.000000e+00> : vector<128xf32>
    %77 = vector.multi_reduction <add>, %76, %cst_22 [1] : vector<128x128xf32> to vector<128xf32>
    %78 = vector.shape_cast %77 : vector<128xf32> to vector<128x1xf32>
    %79 = tpu.reciprocal %78 {approx = true} : vector<128x1xf32> -> vector<128x1xf32>
    %80 = vector.broadcast %79 : vector<128x1xf32> to vector<128x128xf32>
    %81 = arith.mulf %76, %80 : vector<128x128xf32>
    %82 = arith.truncf %81 : vector<128x128xf32> to vector<128x128xbf16>
    %cst_23 = arith.constant dense<0.000000e+00> : vector<128x128xf32>
    %83 = tpu.matmul %82, %70, %cst_23 {dimension_numbers = #tpu.dot_dimension_numbers<[1], [0], [0], [1], [0, 0, 1, 1], [], []>} : vector<128x128xbf16>, vector<128x128xbf16>, vector<128x128xf32> -> vector<128x128xf32>
    %84 = vector.extract_strided_slice %25 {offsets = [128, 128], sizes = [128, 128], strides = [1, 1]} : vector<256x768xf32> to vector<128x128xf32>
    %85 = arith.truncf %84 : vector<128x128xf32> to vector<128x128xbf16>
    %86 = vector.extract_strided_slice %25 {offsets = [128, 384], sizes = [128, 128], strides = [1, 1]} : vector<256x768xf32> to vector<128x128xf32>
    %87 = arith.truncf %86 : vector<128x128xf32> to vector<128x128xbf16>
    %88 = vector.extract_strided_slice %25 {offsets = [128, 640], sizes = [128, 128], strides = [1, 1]} : vector<256x768xf32> to vector<128x128xf32>
    %89 = arith.truncf %88 : vector<128x128xf32> to vector<128x128xbf16>
    %cst_24 = arith.constant dense<0.000000e+00> : vector<128x128xf32>
    %90 = tpu.matmul %85, %87, %cst_24 {dimension_numbers = #tpu.dot_dimension_numbers<[1], [1], [0], [0], [0, 0, 1, 0], [], []>} : vector<128x128xbf16>, vector<128x128xbf16>, vector<128x128xf32> -> vector<128x128xf32>
    %cst_25 = arith.constant dense<0xFF800000> : vector<128xf32>
    %91 = vector.multi_reduction <maximumf>, %90, %cst_25 [1] : vector<128x128xf32> to vector<128xf32>
    %92 = vector.shape_cast %91 : vector<128xf32> to vector<128x1xf32>
    %93 = vector.broadcast %92 : vector<128x1xf32> to vector<128x128xf32>
    %94 = arith.subf %90, %93 : vector<128x128xf32>
    %95 = math.exp %94 : vector<128x128xf32>
    %cst_26 = arith.constant dense<0.000000e+00> : vector<128xf32>
    %96 = vector.multi_reduction <add>, %95, %cst_26 [1] : vector<128x128xf32> to vector<128xf32>
    %97 = vector.shape_cast %96 : vector<128xf32> to vector<128x1xf32>
    %98 = tpu.reciprocal %97 {approx = true} : vector<128x1xf32> -> vector<128x1xf32>
    %99 = vector.broadcast %98 : vector<128x1xf32> to vector<128x128xf32>
    %100 = arith.mulf %95, %99 : vector<128x128xf32>
    %101 = arith.truncf %100 : vector<128x128xf32> to vector<128x128xbf16>
    %cst_27 = arith.constant dense<0.000000e+00> : vector<128x128xf32>
    %102 = tpu.matmul %101, %89, %cst_27 {dimension_numbers = #tpu.dot_dimension_numbers<[1], [0], [0], [1], [0, 0, 1, 1], [], []>} : vector<128x128xbf16>, vector<128x128xbf16>, vector<128x128xf32> -> vector<128x128xf32>
    %103 = tpu.concatenate %83, %102 in 1 : vector<128x128xf32>, vector<128x128xf32> -> vector<128x256xf32>
    %104 = tpu.concatenate %64, %103 in 0 : vector<128x256xf32>, vector<128x256xf32> -> vector<256x256xf32>
    %105 = arith.truncf %104 : vector<256x256xf32> to vector<256x256xbf16>
    %c0_28 = arith.constant 0 : index
    %c0_29 = arith.constant 0 : index
    %106 = vector.load %arg5[%c0_28, %c0_29] : memref<256x256xbf16, #tpu.memory_space<vmem>>, vector<256x256xbf16>
    %cst_30 = arith.constant dense<0.000000e+00> : vector<256x256xf32>
    %107 = tpu.matmul %105, %106, %cst_30 {dimension_numbers = #tpu.dot_dimension_numbers<[1], [0], [0], [1], [0, 0, 1, 1], [], []>} : vector<256x256xbf16>, vector<256x256xbf16>, vector<256x256xf32> -> vector<256x256xf32>
    %c0_31 = arith.constant 0 : index
    %c0_32 = arith.constant 0 : index
    %108 = vector.load %arg6[%c0_31, %c0_32] : memref<1x256xf32, #tpu.memory_space<vmem>>, vector<1x256xf32>
    %109 = vector.broadcast %108 : vector<1x256xf32> to vector<256x256xf32>
    %110 = arith.addf %107, %109 : vector<256x256xf32>
    %111 = arith.addf %110, %0 : vector<256x256xf32>
    %112 = arith.truncf %111 : vector<256x256xf32> to vector<256x256xbf16>
    %c0_33 = arith.constant 0 : index
    %c0_34 = arith.constant 0 : index
    %113 = vector.load %arg7[%c0_33, %c0_34] : memref<256x512xbf16, #tpu.memory_space<vmem>>, vector<256x512xbf16>
    %cst_35 = arith.constant dense<0.000000e+00> : vector<256x512xf32>
    %114 = tpu.matmul %112, %113, %cst_35 {dimension_numbers = #tpu.dot_dimension_numbers<[1], [0], [0], [1], [0, 0, 1, 1], [], []>} : vector<256x256xbf16>, vector<256x512xbf16>, vector<256x512xf32> -> vector<256x512xf32>
    %c0_36 = arith.constant 0 : index
    %c0_37 = arith.constant 0 : index
    %115 = vector.load %arg8[%c0_36, %c0_37] : memref<1x512xf32, #tpu.memory_space<vmem>>, vector<1x512xf32>
    %116 = vector.broadcast %115 : vector<1x512xf32> to vector<256x512xf32>
    %117 = arith.addf %114, %116 : vector<256x512xf32>
    %118 = arith.mulf %117, %117 : vector<256x512xf32>
    %119 = arith.mulf %117, %118 : vector<256x512xf32>
    %cst_38 = arith.constant 4.471500e-02 : f32
    %120 = vector.broadcast %cst_38 : f32 to vector<256x512xf32>
    %121 = arith.mulf %120, %119 : vector<256x512xf32>
    %122 = arith.addf %117, %121 : vector<256x512xf32>
    %cst_39 = arith.constant 0.797884583 : f32
    %123 = vector.broadcast %cst_39 : f32 to vector<256x512xf32>
    %124 = arith.mulf %123, %122 : vector<256x512xf32>
    %125 = math.tanh %124 : vector<256x512xf32>
    %cst_40 = arith.constant 1.000000e+00 : f32
    %126 = vector.broadcast %cst_40 : f32 to vector<256x512xf32>
    %127 = arith.addf %126, %125 : vector<256x512xf32>
    %cst_41 = arith.constant 5.000000e-01 : f32
    %128 = vector.broadcast %cst_41 : f32 to vector<256x512xf32>
    %129 = arith.mulf %128, %127 : vector<256x512xf32>
    %130 = arith.mulf %117, %129 : vector<256x512xf32>
    %131 = arith.truncf %130 : vector<256x512xf32> to vector<256x512xbf16>
    %c0_42 = arith.constant 0 : index
    %c0_43 = arith.constant 0 : index
    %132 = vector.load %arg9[%c0_42, %c0_43] : memref<512x256xbf16, #tpu.memory_space<vmem>>, vector<512x256xbf16>
    %cst_44 = arith.constant dense<0.000000e+00> : vector<256x256xf32>
    %133 = tpu.matmul %131, %132, %cst_44 {dimension_numbers = #tpu.dot_dimension_numbers<[1], [0], [0], [1], [0, 0, 1, 1], [], []>} : vector<256x512xbf16>, vector<512x256xbf16>, vector<256x256xf32> -> vector<256x256xf32>
    %c0_45 = arith.constant 0 : index
    %c0_46 = arith.constant 0 : index
    %134 = vector.load %arg10[%c0_45, %c0_46] : memref<1x256xf32, #tpu.memory_space<vmem>>, vector<1x256xf32>
    %135 = vector.broadcast %134 : vector<1x256xf32> to vector<256x256xf32>
    %136 = arith.addf %133, %135 : vector<256x256xf32>
    %137 = arith.addf %136, %111 : vector<256x256xf32>
    %c0_47 = arith.constant 0 : index
    %c0_48 = arith.constant 0 : index
    %138 = vector.load %arg11[%c0_47, %c0_48] : memref<256x256xf32, #tpu.memory_space<vmem>>, vector<256x256xf32>
    tpu.vector_store %arg11[%c0_47, %c0_48], %137 {strides = array<i32>} : memref<256x256xf32, #tpu.memory_space<vmem>>, vector<256x256xf32>,
    return
  }
  func.func @transform_0(%arg0: i32) -> (i32, i32) {
    %c0_i32 = arith.constant 0 : i32
    %c0_i32_0 = arith.constant 0 : i32
    %c0_i32_1 = arith.constant 0 : i32
    return %c0_i32, %c0_i32_0 : i32, i32
  }
  func.func @transform_1(%arg0: i32) -> (i32, i32) {
    %c0_i32 = arith.constant 0 : i32
    %c0_i32_0 = arith.constant 0 : i32
    %c0_i32_1 = arith.constant 0 : i32
    return %c0_i32, %c0_i32_0 : i32, i32
  }
  func.func @transform_2(%arg0: i32) -> (i32, i32) {
    %c0_i32 = arith.constant 0 : i32
    %c0_i32_0 = arith.constant 0 : i32
    %c0_i32_1 = arith.constant 0 : i32
    return %c0_i32, %c0_i32_0 : i32, i32
  }
  func.func @transform_3(%arg0: i32) -> (i32, i32) {
    %c0_i32 = arith.constant 0 : i32
    %c0_i32_0 = arith.constant 0 : i32
    %c0_i32_1 = arith.constant 0 : i32
    return %c0_i32, %c0_i32_0 : i32, i32
  }
  func.func @transform_4(%arg0: i32) -> (i32, i32) {
    %c0_i32 = arith.constant 0 : i32
    %c0_i32_0 = arith.constant 0 : i32
    %c0_i32_1 = arith.constant 0 : i32
    return %c0_i32, %c0_i32_0 : i32, i32
  }
  func.func @transform_5(%arg0: i32) -> (i32, i32) {
    %c0_i32 = arith.constant 0 : i32
    %c0_i32_0 = arith.constant 0 : i32
    %c0_i32_1 = arith.constant 0 : i32
    return %c0_i32, %c0_i32_0 : i32, i32
  }
  func.func @transform_6(%arg0: i32) -> (i32, i32) {
    %c0_i32 = arith.constant 0 : i32
    %c0_i32_0 = arith.constant 0 : i32
    %c0_i32_1 = arith.constant 0 : i32
    return %c0_i32, %c0_i32_0 : i32, i32
  }
  func.func @transform_7(%arg0: i32) -> (i32, i32) {
    %c0_i32 = arith.constant 0 : i32
    %c0_i32_0 = arith.constant 0 : i32
    %c0_i32_1 = arith.constant 0 : i32
    return %c0_i32, %c0_i32_0 : i32, i32
  }
  func.func @transform_8(%arg0: i32) -> (i32, i32) {
    %c0_i32 = arith.constant 0 : i32
    %c0_i32_0 = arith.constant 0 : i32
    %c0_i32_1 = arith.constant 0 : i32
    return %c0_i32, %c0_i32_0 : i32, i32
  }
  func.func @transform_9(%arg0: i32) -> (i32, i32) {
    %c0_i32 = arith.constant 0 : i32
    %c0_i32_0 = arith.constant 0 : i32
    %c0_i32_1 = arith.constant 0 : i32
    return %c0_i32, %c0_i32_0 : i32, i32
  }
  func.func @transform_10(%arg0: i32) -> (i32, i32) {
    %c0_i32 = arith.constant 0 : i32
    %c0_i32_0 = arith.constant 0 : i32
    %c0_i32_1 = arith.constant 0 : i32
    return %c0_i32, %c0_i32_0 : i32, i32
  }
}

</mosaic_0001>

<llo_original>
// kernel: tpu_custom_call.1
$region0: #{tpu_custom_call.1}
  #allocation0 [shape = 'u32[]', space=smem, size = 0x4, offset = 0x4, fixed_abs, tag = 'smem constant byte address 0x4 - core index']
  #allocation1 [shape = 'u32[144,128]{1,0:T(1,128)}', space=vmem, size = 0x12000, scoped, tag = 'internal scratch']
  %s0 = inlined_call_operand.hbm [shape: f32[256,256], index: 0, kind: input, shape index: {}]
  %s1 = inlined_call_operand.vmem [shape: f32[1,256], index: 1, kind: input, shape index: {}]
  %s2 = inlined_call_operand.hbm [shape: f32[1,256], index: 2, kind: input, shape index: {}]
  %s3 = inlined_call_operand.hbm [shape: bf16[256,768], index: 3, kind: input, shape index: {}]
  %s4 = inlined_call_operand.hbm [shape: bf16[256,256], index: 4, kind: input, shape index: {}]
  %s5 = inlined_call_operand.vmem [shape: f32[1,256], index: 5, kind: input, shape index: {}]
  %s6 = inlined_call_operand.hbm [shape: bf16[256,512], index: 6, kind: input, shape index: {}]
  %s7 = inlined_call_operand.vmem [shape: f32[1,512], index: 7, kind: input, shape index: {}]
  %s8 = inlined_call_operand.hbm [shape: bf16[512,256], index: 8, kind: input, shape index: {}]
  %s9 = inlined_call_operand.vmem [shape: f32[1,256], index: 9, kind: input, shape index: {}]
  %s10 = inlined_call_operand.hbm [shape: f32[256,256], index: 10, kind: output, shape index: {}]
  %s11 = sld [smem:[#allocation0]]
  $region74: #{tpu_custom_call.1} parent=0
    _
  %s13 = ssub.s32 1, %s11
  %s14 = scalar_select 0, %s13, %s11
  $region1: #{tpu_custom_call.1} parent=0
    #allocation2 [shape = 'u8[262144]{0}', space=vmem, size = 0x40000, scoped, tag = 'input window, operand 0, single buffered']
    #allocation3 [shape = 's32[1]{0}', space=sflag, size = 0x4, scoped, tag = 'scoped memory for tpu_custom_call.1']
    #allocation4 [shape = 's32[1]{0}', space=sflag, size = 0x4, scoped, tag = 'scoped memory for tpu_custom_call.1']
    #allocation5 [shape = 'u8[1024]{0}', space=vmem, size = 0x400, scoped, tag = 'input window, operand 2, single buffered']
    #allocation6 [shape = 's32[1]{0}', space=sflag, size = 0x4, scoped, tag = 'scoped memory for tpu_custom_call.1']
    #allocation7 [shape = 'u8[393216]{0}', space=vmem, size = 0x60000, scoped, tag = 'input window, operand 3, single buffered']
    #allocation8 [shape = 'u8[131072]{0}', space=vmem, size = 0x20000, scoped, tag = 'input window, operand 4, single buffered']
    #allocation9 [shape = 's32[1]{0}', space=sflag, size = 0x4, scoped, tag = 'scoped memory for tpu_custom_call.1']
    #allocation10 [shape = 'u8[262144]{0}', space=vmem, size = 0x40000, scoped, tag = 'input window, operand 6, single buffered']
    #allocation11 [shape = 'u8[262144]{0}', space=vmem, size = 0x40000, scoped, tag = 'input window, operand 8, single buffered']
    #allocation12 [shape = 's32[1]{0}', space=sflag, size = 0x4, scoped, tag = 'scoped memory for tpu_custom_call.1']
    #allocation13 [shape = 'u8[262144]{0}', space=vmem, size = 0x40000, scoped, tag = 'output window, operand 0, single buffered']
    %15 = vsyncpa [#allocation3], 0
    %16 = vsyncpa [#allocation6], 0
    %17 = vsyncpa [#allocation9], 0
    %18 = vsyncpa [#allocation12], 0
    %19 = vsyncpa [#allocation4], 0
    // Predicated region
    $region2: #{tpu_custom_call.1} parent=1 // pred_check
      _
    $region3: #{tpu_custom_call.1} parent=1 // pred_check_branch
      %21 = sbr.rel (0) target = $region5
    $region4: #{tpu_custom_call.1} parent=1 // pred_region
      %s23 = ssub.s32 8192, 8192
      %24 = vsyncadd [#allocation3], %s23
      %s25 = sshll.u32 [#allocation2], 4
      %s26 = int_to_ptr.vmem [resolvable:$true] %s25
      %31 = dma.hbm_to_vmem [thread:$0]  %s0, 8192, %s26, [#allocation3], 256, 256, 16
    $region5: #{tpu_custom_call.1} parent=1 // pred_fallthru
      _
    // Predicated region
    $region6: #{tpu_custom_call.1} parent=1 // pred_check
      _
    $region7: #{tpu_custom_call.1} parent=1 // pred_check_branch
      %33 = sbr.rel (0) target = $region9
    $region8: #{tpu_custom_call.1} parent=1 // pred_region
      _
    $region9: #{tpu_custom_call.1} parent=1 // pred_fallthru
      _
    // Predicated region
    $region10: #{tpu_custom_call.1} parent=1 // pred_check
      _
    $region11: #{tpu_custom_call.1} parent=1 // pred_check_branch
      %35 = sbr.rel (0) target = $region13
    $region12: #{tpu_custom_call.1} parent=1 // pred_region
      %s37 = ssub.s32 32, 32
      %38 = vsyncadd [#allocation6], %s37
      %s40 = sshll.u32 [#allocation5], 4
      %s41 = int_to_ptr.vmem [resolvable:$true] %s40
      %43 = dma.hbm_to_vmem [thread:$0]  %s2, 32, %s41, [#allocation6]
    $region13: #{tpu_custom_call.1} parent=1 // pred_fallthru
      _
    // Predicated region
    $region14: #{tpu_custom_call.1} parent=1 // pred_check
      _
    $region15: #{tpu_custom_call.1} parent=1 // pred_check_branch
      %45 = sbr.rel (0) target = $region17
    $region16: #{tpu_custom_call.1} parent=1 // pred_region
      %s47 = ssub.s32 12288, 12288
      %48 = vsyncadd [#allocation6], %s47
      %s49 = sshll.u32 [#allocation7], 4
      %s50 = int_to_ptr.vmem [resolvable:$true] %s49
      %55 = dma.hbm_to_vmem [thread:$0]  %s3, 12288, %s50, [#allocation6], 384, 384, 24
    $region17: #{tpu_custom_call.1} parent=1 // pred_fallthru
      _
    // Predicated region
    $region18: #{tpu_custom_call.1} parent=1 // pred_check
      _
    $region19: #{tpu_custom_call.1} parent=1 // pred_check_branch
      %57 = sbr.rel (0) target = $region21
    $region20: #{tpu_custom_call.1} parent=1 // pred_region
      %s59 = ssub.s32 4096, 4096
      %60 = vsyncadd [#allocation9], %s59
      %s61 = sshll.u32 [#allocation8], 4
      %s62 = int_to_ptr.vmem [resolvable:$true] %s61
      %67 = dma.hbm_to_vmem [thread:$0]  %s4, 4096, %s62, [#allocation9], 128, 128, 8
    $region21: #{tpu_custom_call.1} parent=1 // pred_fallthru
      _
    // Predicated region
    $region22: #{tpu_custom_call.1} parent=1 // pred_check
      _
    $region23: #{tpu_custom_call.1} parent=1 // pred_check_branch
      %69 = sbr.rel (0) target = $region25
    $region24: #{tpu_custom_call.1} parent=1 // pred_region
      _
    $region25: #{tpu_custom_call.1} parent=1 // pred_fallthru
      _
    // Predicated region
    $region26: #{tpu_custom_call.1} parent=1 // pred_check
      _
    $region27: #{tpu_custom_call.1} parent=1 // pred_check_branch
      %71 = sbr.rel (0) target = $region29
    $region28: #{tpu_custom_call.1} parent=1 // pred_region
      %s73 = ssub.s32 8192, 8192
      %74 = vsyncadd [#allocation9], %s73
      %s75 = sshll.u32 [#allocation10], 4
      %s76 = int_to_ptr.vmem [resolvable:$true] %s75
      %81 = dma.hbm_to_vmem [thread:$0]  %s6, 8192, %s76, [#allocation9], 256, 256, 16
    $region29: #{tpu_custom_call.1} parent=1 // pred_fallthru
      _
    // Predicated region
    $region30: #{tpu_custom_call.1} parent=1 // pred_check
      _
    $region31: #{tpu_custom_call.1} parent=1 // pred_check_branch
      %83 = sbr.rel (0) target = $region33
    $region32: #{tpu_custom_call.1} parent=1 // pred_region
      _
    $region33: #{tpu_custom_call.1} parent=1 // pred_fallthru
      _
    // Predicated region
    $region34: #{tpu_custom_call.1} parent=1 // pred_check
      _
    $region35: #{tpu_custom_call.1} parent=1 // pred_check_branch
      %85 = sbr.rel (0) target = $region37
    $region36: #{tpu_custom_call.1} parent=1 // pred_region
      %s87 = ssub.s32 8192, 8192
      %88 = vsyncadd [#allocation12], %s87
      %s89 = sshll.u32 [#allocation11], 4
      %s90 = int_to_ptr.vmem [resolvable:$true] %s89
      %95 = dma.hbm_to_vmem [thread:$0]  %s8, 8192, %s90, [#allocation12], 128, 128, 8
    $region37: #{tpu_custom_call.1} parent=1 // pred_fallthru
      _
    // Predicated region
    $region38: #{tpu_custom_call.1} parent=1 // pred_check
      _
    $region39: #{tpu_custom_call.1} parent=1 // pred_check_branch
      %97 = sbr.rel (0) target = $region41
    $region40: #{tpu_custom_call.1} parent=1 // pred_region
      _
    $region41: #{tpu_custom_call.1} parent=1 // pred_fallthru
      _
    // Predicated region
    $region42: #{tpu_custom_call.1} parent=1 // pred_check
      _
    $region43: #{tpu_custom_call.1} parent=1 // pred_check_branch
      %99 = sbr.rel (0) target = $region45
    $region44: #{tpu_custom_call.1} parent=1 // pred_region
      %100 = dma.done [#allocation3], 8192
    $region45: #{tpu_custom_call.1} parent=1 // pred_fallthru
      _
    // Predicated region
    $region46: #{tpu_custom_call.1} parent=1 // pred_check
      _
    $region47: #{tpu_custom_call.1} parent=1 // pred_check_branch
      %102 = sbr.rel (0) target = $region49
    $region48: #{tpu_custom_call.1} parent=1 // pred_region
      %103 = dma.done [#allocation6], 32
    $region49: #{tpu_custom_call.1} parent=1 // pred_fallthru
      _
    // Predicated region
    $region50: #{tpu_custom_call.1} parent=1 // pred_check
      _
    $region51: #{tpu_custom_call.1} parent=1 // pred_check_branch
      %105 = sbr.rel (0) target = $region53
    $region52: #{tpu_custom_call.1} parent=1 // pred_region
      %106 = dma.done [#allocation6], 12288
    $region53: #{tpu_custom_call.1} parent=1 // pred_fallthru
      _
    // Predicated region
    $region54: #{tpu_custom_call.1} parent=1 // pred_check
      _
    $region55: #{tpu_custom_call.1} parent=1 // pred_check_branch
      %108 = sbr.rel (0) target = $region57
    $region56: #{tpu_custom_call.1} parent=1 // pred_region
      %109 = dma.done [#allocation9], 4096
    $region57: #{tpu_custom_call.1} parent=1 // pred_fallthru
      _
    // Predicated region
    $region58: #{tpu_custom_call.1} parent=1 // pred_check
      _
    $region59: #{tpu_custom_call.1} parent=1 // pred_check_branch
      %111 = sbr.rel (0) target = $region61
    $region60: #{tpu_custom_call.1} parent=1 // pred_region
      %112 = dma.done [#allocation9], 8192
    $region61: #{tpu_custom_call.1} parent=1 // pred_fallthru
      _
    // Predicated region
    $region62: #{tpu_custom_call.1} parent=1 // pred_check
      _
    $region63: #{tpu_custom_call.1} parent=1 // pred_check_branch
      %114 = sbr.rel (0) target = $region65
    $region64: #{tpu_custom_call.1} parent=1 // pred_region
      %115 = dma.done [#allocation12], 8192
    $region65: #{tpu_custom_call.1} parent=1 // pred_fallthru
      _
    %v117 = vld [vmem:[#allocation2] sm:$0xff]
    %v118 = vld [vmem:[#allocation2 + $0x8] sm:$0xff]
    %v119 = vld [vmem:[#allocation2 + $0x10] sm:$0xff]
    %v120 = vld [vmem:[#allocation2 + $0x18] sm:$0xff]
    %v121 = vld [vmem:[#allocation2 + $0x20] sm:$0xff]
    %v122 = vld [vmem:[#allocation2 + $0x28] sm:$0xff]
    %v123 = vld [vmem:[#allocation2 + $0x30] sm:$0xff]
    %v124 = vld [vmem:[#allocation2 + $0x38] sm:$0xff]
    %v125 = vld [vmem:[#allocation2 + $0x40] sm:$0xff]
    %v126 = vld [vmem:[#allocation2 + $0x48] sm:$0xff]
    %v127 = vld [vmem:[#allocation2 + $0x50] sm:$0xff]
    %v128 = vld [vmem:[#allocation2 + $0x58] sm:$0xff]
    %v129 = vld [vmem:[#allocation2 + $0x60] sm:$0xff]
    %v130 = vld [vmem:[#allocation2 + $0x68] sm:$0xff]
    %v131 = vld [vmem:[#allocation2 + $0x70] sm:$0xff]
    %v132 = vld [vmem:[#allocation2 + $0x78] sm:$0xff]
    %v133 = vld [vmem:[#allocation2 + $0x80] sm:$0xff]
    %v134 = vld [vmem:[#allocation2 + $0x88] sm:$0xff]
    %v135 = vld [vmem:[#allocation2 + $0x90] sm:$0xff]
    %v136 = vld [vmem:[#allocation2 + $0x98] sm:$0xff]
    %v137 = vld [vmem:[#allocation2 + $0xa0] sm:$0xff]
    %v138 = vld [vmem:[#allocation2 + $0xa8] sm:$0xff]
    %v139 = vld [vmem:[#allocation2 + $0xb0] sm:$0xff]
    %v140 = vld [vmem:[#allocation2 + $0xb8] sm:$0xff]
    %v141 = vld [vmem:[#allocation2 + $0xc0] sm:$0xff]
    %v142 = vld [vmem:[#allocation2 + $0xc8] sm:$0xff]
    %v143 = vld [vmem:[#allocation2 + $0xd0] sm:$0xff]
    %v144 = vld [vmem:[#allocation2 + $0xd8] sm:$0xff]
    %v145 = vld [vmem:[#allocation2 + $0xe0] sm:$0xff]
    %v146 = vld [vmem:[#allocation2 + $0xe8] sm:$0xff]
    %v147 = vld [vmem:[#allocation2 + $0xf0] sm:$0xff]
    %v148 = vld [vmem:[#allocation2 + $0xf8] sm:$0xff]
    %v149 = vld [vmem:[#allocation2 + $0x100] sm:$0xff]
    %v150 = vld [vmem:[#allocation2 + $0x108] sm:$0xff]
    %v151 = vld [vmem:[#allocation2 + $0x110] sm:$0xff]
    %v152 = vld [vmem:[#allocation2 + $0x118] sm:$0xff]
    %v153 = vld [vmem:[#allocation2 + $0x120] sm:$0xff]
    %v154 = vld [vmem:[#allocation2 + $0x128] sm:$0xff]
    %v155 = vld [vmem:[#allocation2 + $0x130] sm:$0xff]
    %v156 = vld [vmem:[#allocation2 + $0x138] sm:$0xff]
    %v157 = vld [vmem:[#allocation2 + $0x140] sm:$0xff]
    %v158 = vld [vmem:[#allocation2 + $0x148] sm:$0xff]
    %v159 = vld [vmem:[#allocation2 + $0x150] sm:$0xff]
    %v160 = vld [vmem:[#allocation2 + $0x158] sm:$0xff]
    %v161 = vld [vmem:[#allocation2 + $0x160] sm:$0xff]
    %v162 = vld [vmem:[#allocation2 + $0x168] sm:$0xff]
    %v163 = vld [vmem:[#allocation2 + $0x170] sm:$0xff]
    %v164 = vld [vmem:[#allocation2 + $0x178] sm:$0xff]
    %v165 = vld [vmem:[#allocation2 + $0x180] sm:$0xff]
    %v166 = vld [vmem:[#allocation2 + $0x188] sm:$0xff]
    %v167 = vld [vmem:[#allocation2 + $0x190] sm:$0xff]
    %v168 = vld [vmem:[#allocation2 + $0x198] sm:$0xff]
    %v169 = vld [vmem:[#allocation2 + $0x1a0] sm:$0xff]
    %v170 = vld [vmem:[#allocation2 + $0x1a8] sm:$0xff]
    %v171 = vld [vmem:[#allocation2 + $0x1b0] sm:$0xff]
    %v172 = vld [vmem:[#allocation2 + $0x1b8] sm:$0xff]
    %v173 = vld [vmem:[#allocation2 + $0x1c0] sm:$0xff]
    %v174 = vld [vmem:[#allocation2 + $0x1c8] sm:$0xff]
    %v175 = vld [vmem:[#allocation2 + $0x1d0] sm:$0xff]
    %v176 = vld [vmem:[#allocation2 + $0x1d8] sm:$0xff]
    %v177 = vld [vmem:[#allocation2 + $0x1e0] sm:$0xff]
    %v178 = vld [vmem:[#allocation2 + $0x1e8] sm:$0xff]
    %v179 = vld [vmem:[#allocation2 + $0x1f0] sm:$0xff]
    %v180 = vld [vmem:[#allocation2 + $0x1f8] sm:$0xff]
    %v181 = vadd.f32 %v117, %v118
    %182 = vadd.xlane.f32.xlu0 %v181
    %v183 = vpop.xlane.xlu0 %182
    %v184 = vadd.f32 %v119, %v120
    %185 = vadd.xlane.f32.xlu0 %v184
    %v186 = vpop.xlane.xlu0 %185
    %v187 = vadd.f32 %v121, %v122
    %188 = vadd.xlane.f32.xlu0 %v187
    %v189 = vpop.xlane.xlu0 %188
    %v190 = vadd.f32 %v123, %v124
    %191 = vadd.xlane.f32.xlu0 %v190
    %v192 = vpop.xlane.xlu0 %191
    %v193 = vadd.f32 %v125, %v126
    %194 = vadd.xlane.f32.xlu0 %v193
    %v195 = vpop.xlane.xlu0 %194
    %v196 = vadd.f32 %v127, %v128
    %197 = vadd.xlane.f32.xlu0 %v196
    %v198 = vpop.xlane.xlu0 %197
    %v199 = vadd.f32 %v129, %v130
    %200 = vadd.xlane.f32.xlu0 %v199
    %v201 = vpop.xlane.xlu0 %200
    %v202 = vadd.f32 %v131, %v132
    %203 = vadd.xlane.f32.xlu0 %v202
    %v204 = vpop.xlane.xlu0 %203
    %v205 = vadd.f32 %v133, %v134
    %206 = vadd.xlane.f32.xlu0 %v205
    %v207 = vpop.xlane.xlu0 %206
    %v208 = vadd.f32 %v135, %v136
    %209 = vadd.xlane.f32.xlu0 %v208
    %v210 = vpop.xlane.xlu0 %209
    %v211 = vadd.f32 %v137, %v138
    %212 = vadd.xlane.f32.xlu0 %v211
    %v213 = vpop.xlane.xlu0 %212
    %v214 = vadd.f32 %v139, %v140
    %215 = vadd.xlane.f32.xlu0 %v214
    %v216 = vpop.xlane.xlu0 %215
    %v217 = vadd.f32 %v141, %v142
    %218 = vadd.xlane.f32.xlu0 %v217
    %v219 = vpop.xlane.xlu0 %218
    %v220 = vadd.f32 %v143, %v144
    %221 = vadd.xlane.f32.xlu0 %v220
    %v222 = vpop.xlane.xlu0 %221
    %v223 = vadd.f32 %v145, %v146
    %224 = vadd.xlane.f32.xlu0 %v223
    %v225 = vpop.xlane.xlu0 %224
    %v226 = vadd.f32 %v147, %v148
    %227 = vadd.xlane.f32.xlu0 %v226
    %v228 = vpop.xlane.xlu0 %227
    %v229 = vadd.f32 %v149, %v150
    %230 = vadd.xlane.f32.xlu0 %v229
    %v231 = vpop.xlane.xlu0 %230
    %v232 = vadd.f32 %v151, %v152
    %233 = vadd.xlane.f32.xlu0 %v232
    %v234 = vpop.xlane.xlu0 %233
    %v235 = vadd.f32 %v153, %v154
    %236 = vadd.xlane.f32.xlu0 %v235
    %v237 = vpop.xlane.xlu0 %236
    %v238 = vadd.f32 %v155, %v156
    %239 = vadd.xlane.f32.xlu0 %v238
    %v240 = vpop.xlane.xlu0 %239
    %v241 = vadd.f32 %v157, %v158
    %242 = vadd.xlane.f32.xlu0 %v241
    %v243 = vpop.xlane.xlu0 %242
    %v244 = vadd.f32 %v159, %v160
    %245 = vadd.xlane.f32.xlu0 %v244
    %v246 = vpop.xlane.xlu0 %245
    %v247 = vadd.f32 %v161, %v162
    %248 = vadd.xlane.f32.xlu0 %v247
    %v249 = vpop.xlane.xlu0 %248
    %v250 = vadd.f32 %v163, %v164
    %251 = vadd.xlane.f32.xlu0 %v250
    %v252 = vpop.xlane.xlu0 %251
    %v253 = vadd.f32 %v165, %v166
    %254 = vadd.xlane.f32.xlu0 %v253
    %v255 = vpop.xlane.xlu0 %254
    %v256 = vadd.f32 %v167, %v168
    %257 = vadd.xlane.f32.xlu0 %v256
    %v258 = vpop.xlane.xlu0 %257
    %v259 = vadd.f32 %v169, %v170
    %260 = vadd.xlane.f32.xlu0 %v259
    %v261 = vpop.xlane.xlu0 %260
    %v262 = vadd.f32 %v171, %v172
    %263 = vadd.xlane.f32.xlu0 %v262
    %v264 = vpop.xlane.xlu0 %263
    %v265 = vadd.f32 %v173, %v174
    %266 = vadd.xlane.f32.xlu0 %v265
    %v267 = vpop.xlane.xlu0 %266
    %v268 = vadd.f32 %v175, %v176
    %269 = vadd.xlane.f32.xlu0 %v268
    %v270 = vpop.xlane.xlu0 %269
    %v271 = vadd.f32 %v177, %v178
    %272 = vadd.xlane.f32.xlu0 %v271
    %v273 = vpop.xlane.xlu0 %272
    %v274 = vadd.f32 %v179, %v180
    %275 = vadd.xlane.f32.xlu0 %v274
    %v276 = vpop.xlane.xlu0 %275
    %v277 = vrcp.pop 256.0
    %v278 = vmul.f32 %v183, %v277
    %v279 = vmul.f32 %v186, %v277
    %v280 = vmul.f32 %v189, %v277
    %v281 = vmul.f32 %v192, %v277
    %v282 = vmul.f32 %v195, %v277
    %v283 = vmul.f32 %v198, %v277
    %v284 = vmul.f32 %v201, %v277
    %v285 = vmul.f32 %v204, %v277
    %v286 = vmul.f32 %v207, %v277
    %v287 = vmul.f32 %v210, %v277
    %v288 = vmul.f32 %v213, %v277
    %v289 = vmul.f32 %v216, %v277
    %v290 = vmul.f32 %v219, %v277
    %v291 = vmul.f32 %v222, %v277
    %v292 = vmul.f32 %v225, %v277
    %v293 = vmul.f32 %v228, %v277
    %v294 = vmul.f32 %v231, %v277
    %v295 = vmul.f32 %v234, %v277
    %v296 = vmul.f32 %v237, %v277
    %v297 = vmul.f32 %v240, %v277
    %v298 = vmul.f32 %v243, %v277
    %v299 = vmul.f32 %v246, %v277
    %v300 = vmul.f32 %v249, %v277
    %v301 = vmul.f32 %v252, %v277
    %v302 = vmul.f32 %v255, %v277
    %v303 = vmul.f32 %v258, %v277
    %v304 = vmul.f32 %v261, %v277
    %v305 = vmul.f32 %v264, %v277
    %v306 = vmul.f32 %v267, %v277
    %v307 = vmul.f32 %v270, %v277
    %v308 = vmul.f32 %v273, %v277
    %v309 = vmul.f32 %v276, %v277
    %v310 = vsub.f32 %v117, %v278
    %v311 = vsub.f32 %v118, %v278
    %v312 = vsub.f32 %v119, %v279
    %v313 = vsub.f32 %v120, %v279
    %v314 = vsub.f32 %v121, %v280
    %v315 = vsub.f32 %v122, %v280
    %v316 = vsub.f32 %v123, %v281
    %v317 = vsub.f32 %v124, %v281
    %v318 = vsub.f32 %v125, %v282
    %v319 = vsub.f32 %v126, %v282
    %v320 = vsub.f32 %v127, %v283
    %v321 = vsub.f32 %v128, %v283
    %v322 = vsub.f32 %v129, %v284
    %v323 = vsub.f32 %v130, %v284
    %v324 = vsub.f32 %v131, %v285
    %v325 = vsub.f32 %v132, %v285
    %v326 = vsub.f32 %v133, %v286
    %v327 = vsub.f32 %v134, %v286
    %v328 = vsub.f32 %v135, %v287
    %v329 = vsub.f32 %v136, %v287
    %v330 = vsub.f32 %v137, %v288
    %v331 = vsub.f32 %v138, %v288
    %v332 = vsub.f32 %v139, %v289
    %v333 = vsub.f32 %v140, %v289
    %v334 = vsub.f32 %v141, %v290
    %v335 = vsub.f32 %v142, %v290
    %v336 = vsub.f32 %v143, %v291
    %v337 = vsub.f32 %v144, %v291
    %v338 = vsub.f32 %v145, %v292
    %v339 = vsub.f32 %v146, %v292
    %v340 = vsub.f32 %v147, %v293
    %v341 = vsub.f32 %v148, %v293
    %v342 = vsub.f32 %v149, %v294
    %v343 = vsub.f32 %v150, %v294
    %v344 = vsub.f32 %v151, %v295
    %v345 = vsub.f32 %v152, %v295
    %v346 = vsub.f32 %v153, %v296
    %v347 = vsub.f32 %v154, %v296
    %v348 = vsub.f32 %v155, %v297
    %v349 = vsub.f32 %v156, %v297
    %v350 = vsub.f32 %v157, %v298
    %v351 = vsub.f32 %v158, %v298
    %v352 = vsub.f32 %v159, %v299
    %v353 = vsub.f32 %v160, %v299
    %v354 = vsub.f32 %v161, %v300
    %v355 = vsub.f32 %v162, %v300
    %v356 = vsub.f32 %v163, %v301
    %v357 = vsub.f32 %v164, %v301
    %v358 = vsub.f32 %v165, %v302
    %v359 = vsub.f32 %v166, %v302
    %v360 = vsub.f32 %v167, %v303
    %v361 = vsub.f32 %v168, %v303
    %v362 = vsub.f32 %v169, %v304
    %v363 = vsub.f32 %v170, %v304
    %v364 = vsub.f32 %v171, %v305
    %v365 = vsub.f32 %v172, %v305
    %v366 = vsub.f32 %v173, %v306
    %v367 = vsub.f32 %v174, %v306
    %v368 = vsub.f32 %v175, %v307
    %v369 = vsub.f32 %v176, %v307
    %v370 = vsub.f32 %v177, %v308
    %v371 = vsub.f32 %v178, %v308
    %v372 = vsub.f32 %v179, %v309
    %v373 = vsub.f32 %v180, %v309
    %v374 = vmul.f32 %v310, %v310
    %v375 = vmul.f32 %v311, %v311
    %v376 = vmul.f32 %v312, %v312
    %v377 = vmul.f32 %v313, %v313
    %v378 = vmul.f32 %v314, %v314
    %v379 = vmul.f32 %v315, %v315
    %v380 = vmul.f32 %v316, %v316
    %v381 = vmul.f32 %v317, %v317
    %v382 = vmul.f32 %v318, %v318
    %v383 = vmul.f32 %v319, %v319
    %v384 = vmul.f32 %v320, %v320
    %v385 = vmul.f32 %v321, %v321
    %v386 = vmul.f32 %v322, %v322
    %v387 = vmul.f32 %v323, %v323
    %v388 = vmul.f32 %v324, %v324
    %v389 = vmul.f32 %v325, %v325
    %v390 = vmul.f32 %v326, %v326
    %v391 = vmul.f32 %v327, %v327
    %v392 = vmul.f32 %v328, %v328
    %v393 = vmul.f32 %v329, %v329
    %v394 = vmul.f32 %v330, %v330
    %v395 = vmul.f32 %v331, %v331
    %v396 = vmul.f32 %v332, %v332
    %v397 = vmul.f32 %v333, %v333
    %v398 = vmul.f32 %v334, %v334
    %v399 = vmul.f32 %v335, %v335
    %v400 = vmul.f32 %v336, %v336
    %v401 = vmul.f32 %v337, %v337
    %v402 = vmul.f32 %v338, %v338
    %v403 = vmul.f32 %v339, %v339
    %v404 = vmul.f32 %v340, %v340
    %v405 = vmul.f32 %v341, %v341
    %v406 = vmul.f32 %v342, %v342
    %v407 = vmul.f32 %v343, %v343
    %v408 = vmul.f32 %v344, %v344
    %v409 = vmul.f32 %v345, %v345
    %v410 = vmul.f32 %v346, %v346
    %v411 = vmul.f32 %v347, %v347
    %v412 = vmul.f32 %v348, %v348
    %v413 = vmul.f32 %v349, %v349
    %v414 = vmul.f32 %v350, %v350
    %v415 = vmul.f32 %v351, %v351
    %v416 = vmul.f32 %v352, %v352
    %v417 = vmul.f32 %v353, %v353
    %v418 = vmul.f32 %v354, %v354
    %v419 = vmul.f32 %v355, %v355
    %v420 = vmul.f32 %v356, %v356
    %v421 = vmul.f32 %v357, %v357
    %v422 = vmul.f32 %v358, %v358
    %v423 = vmul.f32 %v359, %v359
    %v424 = vmul.f32 %v360, %v360
    %v425 = vmul.f32 %v361, %v361
    %v426 = vmul.f32 %v362, %v362
    %v427 = vmul.f32 %v363, %v363
    %v428 = vmul.f32 %v364, %v364
    %v429 = vmul.f32 %v365, %v365
    %v430 = vmul.f32 %v366, %v366
    %v431 = vmul.f32 %v367, %v367
    %v432 = vmul.f32 %v368, %v368
    %v433 = vmul.f32 %v369, %v369
    %v434 = vmul.f32 %v370, %v370
    %v435 = vmul.f32 %v371, %v371
    %v436 = vmul.f32 %v372, %v372
    %v437 = vmul.f32 %v373, %v373
    %v438 = vadd.f32 %v374, %v375
    %439 = vadd.xlane.f32.xlu0 %v438
    %v440 = vpop.xlane.xlu0 %439
    %v441 = vadd.f32 %v376, %v377
    %442 = vadd.xlane.f32.xlu0 %v441
    %v443 = vpop.xlane.xlu0 %442
    %v444 = vadd.f32 %v378, %v379
    %445 = vadd.xlane.f32.xlu0 %v444
    %v446 = vpop.xlane.xlu0 %445
    %v447 = vadd.f32 %v380, %v381
    %448 = vadd.xlane.f32.xlu0 %v447
    %v449 = vpop.xlane.xlu0 %448
    %v450 = vadd.f32 %v382, %v383
    %451 = vadd.xlane.f32.xlu0 %v450
    %v452 = vpop.xlane.xlu0 %451
    %v453 = vadd.f32 %v384, %v385
    %454 = vadd.xlane.f32.xlu0 %v453
    %v455 = vpop.xlane.xlu0 %454
    %v456 = vadd.f32 %v386, %v387
    %457 = vadd.xlane.f32.xlu0 %v456
    %v458 = vpop.xlane.xlu0 %457
    %v459 = vadd.f32 %v388, %v389
    %460 = vadd.xlane.f32.xlu0 %v459
    %v461 = vpop.xlane.xlu0 %460
    %v462 = vadd.f32 %v390, %v391
    %463 = vadd.xlane.f32.xlu0 %v462
    %v464 = vpop.xlane.xlu0 %463
    %v465 = vadd.f32 %v392, %v393
    %466 = vadd.xlane.f32.xlu0 %v465
    %v467 = vpop.xlane.xlu0 %466
    %v468 = vadd.f32 %v394, %v395
    %469 = vadd.xlane.f32.xlu0 %v468
    %v470 = vpop.xlane.xlu0 %469
    %v471 = vadd.f32 %v396, %v397
    %472 = vadd.xlane.f32.xlu0 %v471
    %v473 = vpop.xlane.xlu0 %472
    %v474 = vadd.f32 %v398, %v399
    %475 = vadd.xlane.f32.xlu0 %v474
    %v476 = vpop.xlane.xlu0 %475
    %v477 = vadd.f32 %v400, %v401
    %478 = vadd.xlane.f32.xlu0 %v477
    %v479 = vpop.xlane.xlu0 %478
    %v480 = vadd.f32 %v402, %v403
    %481 = vadd.xlane.f32.xlu0 %v480
    %v482 = vpop.xlane.xlu0 %481
    %v483 = vadd.f32 %v404, %v405
    %484 = vadd.xlane.f32.xlu0 %v483
    %v485 = vpop.xlane.xlu0 %484
    %v486 = vadd.f32 %v406, %v407
    %487 = vadd.xlane.f32.xlu0 %v486
    %v488 = vpop.xlane.xlu0 %487
    %v489 = vadd.f32 %v408, %v409
    %490 = vadd.xlane.f32.xlu0 %v489
    %v491 = vpop.xlane.xlu0 %490
    %v492 = vadd.f32 %v410, %v411
    %493 = vadd.xlane.f32.xlu0 %v492
    %v494 = vpop.xlane.xlu0 %493
    %v495 = vadd.f32 %v412, %v413
    %496 = vadd.xlane.f32.xlu0 %v495
    %v497 = vpop.xlane.xlu0 %496
    %v498 = vadd.f32 %v414, %v415
    %499 = vadd.xlane.f32.xlu0 %v498
    %v500 = vpop.xlane.xlu0 %499
    %v501 = vadd.f32 %v416, %v417
    %502 = vadd.xlane.f32.xlu0 %v501
    %v503 = vpop.xlane.xlu0 %502
    %v504 = vadd.f32 %v418, %v419
    %505 = vadd.xlane.f32.xlu0 %v504
    %v506 = vpop.xlane.xlu0 %505
    %v507 = vadd.f32 %v420, %v421
    %508 = vadd.xlane.f32.xlu0 %v507
    %v509 = vpop.xlane.xlu0 %508
    %v510 = vadd.f32 %v422, %v423
    %511 = vadd.xlane.f32.xlu0 %v510
    %v512 = vpop.xlane.xlu0 %511
    %v513 = vadd.f32 %v424, %v425
    %514 = vadd.xlane.f32.xlu0 %v513
    %v515 = vpop.xlane.xlu0 %514
    %v516 = vadd.f32 %v426, %v427
    %517 = vadd.xlane.f32.xlu0 %v516
    %v518 = vpop.xlane.xlu0 %517
    %v519 = vadd.f32 %v428, %v429
    %520 = vadd.xlane.f32.xlu0 %v519
    %v521 = vpop.xlane.xlu0 %520
    %v522 = vadd.f32 %v430, %v431
    %523 = vadd.xlane.f32.xlu0 %v522
    %v524 = vpop.xlane.xlu0 %523
    %v525 = vadd.f32 %v432, %v433
    %526 = vadd.xlane.f32.xlu0 %v525
    %v527 = vpop.xlane.xlu0 %526
    %v528 = vadd.f32 %v434, %v435
    %529 = vadd.xlane.f32.xlu0 %v528
    %v530 = vpop.xlane.xlu0 %529
    %v531 = vadd.f32 %v436, %v437
    %532 = vadd.xlane.f32.xlu0 %v531
    %v533 = vpop.xlane.xlu0 %532
    %v534 = vmul.f32 %v440, %v277
    %v535 = vmul.f32 %v443, %v277
    %v536 = vmul.f32 %v446, %v277
    %v537 = vmul.f32 %v449, %v277
    %v538 = vmul.f32 %v452, %v277
    %v539 = vmul.f32 %v455, %v277
    %v540 = vmul.f32 %v458, %v277
    %v541 = vmul.f32 %v461, %v277
    %v542 = vmul.f32 %v464, %v277
    %v543 = vmul.f32 %v467, %v277
    %v544 = vmul.f32 %v470, %v277
    %v545 = vmul.f32 %v473, %v277
    %v546 = vmul.f32 %v476, %v277
    %v547 = vmul.f32 %v479, %v277
    %v548 = vmul.f32 %v482, %v277
    %v549 = vmul.f32 %v485, %v277
    %v550 = vmul.f32 %v488, %v277
    %v551 = vmul.f32 %v491, %v277
    %v552 = vmul.f32 %v494, %v277
    %v553 = vmul.f32 %v497, %v277
    %v554 = vmul.f32 %v500, %v277
    %v555 = vmul.f32 %v503, %v277
    %v556 = vmul.f32 %v506, %v277
    %v557 = vmul.f32 %v509, %v277
    %v558 = vmul.f32 %v512, %v277
    %v559 = vmul.f32 %v515, %v277
    %v560 = vmul.f32 %v518, %v277
    %v561 = vmul.f32 %v521, %v277
    %v562 = vmul.f32 %v524, %v277
    %v563 = vmul.f32 %v527, %v277
    %v564 = vmul.f32 %v530, %v277
    %v565 = vmul.f32 %v533, %v277
    %v566 = vadd.f32 %v534, 1e-05
    %v567 = vadd.f32 %v535, 1e-05
    %v568 = vadd.f32 %v536, 1e-05
    %v569 = vadd.f32 %v537, 1e-05
    %v570 = vadd.f32 %v538, 1e-05
    %v571 = vadd.f32 %v539, 1e-05
    %v572 = vadd.f32 %v540, 1e-05
    %v573 = vadd.f32 %v541, 1e-05
    %v574 = vadd.f32 %v542, 1e-05
    %v575 = vadd.f32 %v543, 1e-05
    %v576 = vadd.f32 %v544, 1e-05
    %v577 = vadd.f32 %v545, 1e-05
    %v578 = vadd.f32 %v546, 1e-05
    %v579 = vadd.f32 %v547, 1e-05
    %v580 = vadd.f32 %v548, 1e-05
    %v581 = vadd.f32 %v549, 1e-05
    %v582 = vadd.f32 %v550, 1e-05
    %v583 = vadd.f32 %v551, 1e-05
    %v584 = vadd.f32 %v552, 1e-05
    %v585 = vadd.f32 %v553, 1e-05
    %v586 = vadd.f32 %v554, 1e-05
    %v587 = vadd.f32 %v555, 1e-05
    %v588 = vadd.f32 %v556, 1e-05
    %v589 = vadd.f32 %v557, 1e-05
    %v590 = vadd.f32 %v558, 1e-05
    %v591 = vadd.f32 %v559, 1e-05
    %v592 = vadd.f32 %v560, 1e-05
    %v593 = vadd.f32 %v561, 1e-05
    %v594 = vadd.f32 %v562, 1e-05
    %v595 = vadd.f32 %v563, 1e-05
    %v596 = vadd.f32 %v564, 1e-05
    %v597 = vadd.f32 %v565, 1e-05
    %v598 = vrsqrt.pop %v566
    %v599 = vrsqrt.pop %v567
    %v600 = vrsqrt.pop %v568
    %v601 = vrsqrt.pop %v569
    %v602 = vrsqrt.pop %v570
    %v603 = vrsqrt.pop %v571
    %v604 = vrsqrt.pop %v572
    %v605 = vrsqrt.pop %v573
    %v606 = vrsqrt.pop %v574
    %v607 = vrsqrt.pop %v575
    %v608 = vrsqrt.pop %v576
    %v609 = vrsqrt.pop %v577
    %v610 = vrsqrt.pop %v578
    %v611 = vrsqrt.pop %v579
    %v612 = vrsqrt.pop %v580
    %v613 = vrsqrt.pop %v581
    %v614 = vrsqrt.pop %v582
    %v615 = vrsqrt.pop %v583
    %v616 = vrsqrt.pop %v584
    %v617 = vrsqrt.pop %v585
    %v618 = vrsqrt.pop %v586
    %v619 = vrsqrt.pop %v587
    %v620 = vrsqrt.pop %v588
    %v621 = vrsqrt.pop %v589
    %v622 = vrsqrt.pop %v590
    %v623 = vrsqrt.pop %v591
    %v624 = vrsqrt.pop %v592
    %v625 = vrsqrt.pop %v593
    %v626 = vrsqrt.pop %v594
    %v627 = vrsqrt.pop %v595
    %v628 = vrsqrt.pop %v596
    %v629 = vrsqrt.pop %v597
    %v630 = vmul.f32 %v310, %v598
    %v631 = vmul.f32 %v311, %v598
    %v632 = vmul.f32 %v312, %v599
    %v633 = vmul.f32 %v313, %v599
    %v634 = vmul.f32 %v314, %v600
    %v635 = vmul.f32 %v315, %v600
    %v636 = vmul.f32 %v316, %v601
    %v637 = vmul.f32 %v317, %v601
    %v638 = vmul.f32 %v318, %v602
    %v639 = vmul.f32 %v319, %v602
    %v640 = vmul.f32 %v320, %v603
    %v641 = vmul.f32 %v321, %v603
    %v642 = vmul.f32 %v322, %v604
    %v643 = vmul.f32 %v323, %v604
    %v644 = vmul.f32 %v324, %v605
    %v645 = vmul.f32 %v325, %v605
    %v646 = vmul.f32 %v326, %v606
    %v647 = vmul.f32 %v327, %v606
    %v648 = vmul.f32 %v328, %v607
    %v649 = vmul.f32 %v329, %v607
    %v650 = vmul.f32 %v330, %v608
    %v651 = vmul.f32 %v331, %v608
    %v652 = vmul.f32 %v332, %v609
    %v653 = vmul.f32 %v333, %v609
    %v654 = vmul.f32 %v334, %v610
    %v655 = vmul.f32 %v335, %v610
    %v656 = vmul.f32 %v336, %v611
    %v657 = vmul.f32 %v337, %v611
    %v658 = vmul.f32 %v338, %v612
    %v659 = vmul.f32 %v339, %v612
    %v660 = vmul.f32 %v340, %v613
    %v661 = vmul.f32 %v341, %v613
    %v662 = vmul.f32 %v342, %v614
    %v663 = vmul.f32 %v343, %v614
    %v664 = vmul.f32 %v344, %v615
    %v665 = vmul.f32 %v345, %v615
    %v666 = vmul.f32 %v346, %v616
    %v667 = vmul.f32 %v347, %v616
    %v668 = vmul.f32 %v348, %v617
    %v669 = vmul.f32 %v349, %v617
    %v670 = vmul.f32 %v350, %v618
    %v671 = vmul.f32 %v351, %v618
    %v672 = vmul.f32 %v352, %v619
    %v673 = vmul.f32 %v353, %v619
    %v674 = vmul.f32 %v354, %v620
    %v675 = vmul.f32 %v355, %v620
    %v676 = vmul.f32 %v356, %v621
    %v677 = vmul.f32 %v357, %v621
    %v678 = vmul.f32 %v358, %v622
    %v679 = vmul.f32 %v359, %v622
    %v680 = vmul.f32 %v360, %v623
    %v681 = vmul.f32 %v361, %v623
    %v682 = vmul.f32 %v362, %v624
    %v683 = vmul.f32 %v363, %v624
    %v684 = vmul.f32 %v364, %v625
    %v685 = vmul.f32 %v365, %v625
    %v686 = vmul.f32 %v366, %v626
    %v687 = vmul.f32 %v367, %v626
    %v688 = vmul.f32 %v368, %v627
    %v689 = vmul.f32 %v369, %v627
    %v690 = vmul.f32 %v370, %v628
    %v691 = vmul.f32 %v371, %v628
    %v692 = vmul.f32 %v372, %v629
    %v693 = vmul.f32 %v373, %v629
    %v694 = vld [vmem:[%s1] sm:$0x3]
    %v696 = vlaneseq
    %v697 = vshrl.u32 %v696, 7
    %v698 = vsub.s32 0, %v697
    %v699 = vrot.slane %v694, %v698
    %v700 = vlaneseq
    %v701 = vshrl.u32 %v700, 7
    %v702 = vsub.s32 1, %v701
    %v703 = vrot.slane %v694, %v702
    %v706 = vmul.f32 %v630, %v699
    %v707 = vmul.f32 %v631, %v703
    %v708 = vmul.f32 %v632, %v699
    %v709 = vmul.f32 %v633, %v703
    %v710 = vmul.f32 %v634, %v699
    %v711 = vmul.f32 %v635, %v703
    %v712 = vmul.f32 %v636, %v699
    %v713 = vmul.f32 %v637, %v703
    %v714 = vmul.f32 %v638, %v699
    %v715 = vmul.f32 %v639, %v703
    %v716 = vmul.f32 %v640, %v699
    %v717 = vmul.f32 %v641, %v703
    %v718 = vmul.f32 %v642, %v699
    %v719 = vmul.f32 %v643, %v703
    %v720 = vmul.f32 %v644, %v699
    %v721 = vmul.f32 %v645, %v703
    %v722 = vmul.f32 %v646, %v699
    %v723 = vmul.f32 %v647, %v703
    %v724 = vmul.f32 %v648, %v699
    %v725 = vmul.f32 %v649, %v703
    %v726 = vmul.f32 %v650, %v699
    %v727 = vmul.f32 %v651, %v703
    %v728 = vmul.f32 %v652, %v699
    %v729 = vmul.f32 %v653, %v703
    %v730 = vmul.f32 %v654, %v699
    %v731 = vmul.f32 %v655, %v703
    %v732 = vmul.f32 %v656, %v699
    %v733 = vmul.f32 %v657, %v703
    %v734 = vmul.f32 %v658, %v699
    %v735 = vmul.f32 %v659, %v703
    %v736 = vmul.f32 %v660, %v699
    %v737 = vmul.f32 %v661, %v703
    %v738 = vmul.f32 %v662, %v699
    %v739 = vmul.f32 %v663, %v703
    %v740 = vmul.f32 %v664, %v699
    %v741 = vmul.f32 %v665, %v703
    %v742 = vmul.f32 %v666, %v699
    %v743 = vmul.f32 %v667, %v703
    %v744 = vmul.f32 %v668, %v699
    %v745 = vmul.f32 %v669, %v703
    %v746 = vmul.f32 %v670, %v699
    %v747 = vmul.f32 %v671, %v703
    %v748 = vmul.f32 %v672, %v699
    %v749 = vmul.f32 %v673, %v703
    %v750 = vmul.f32 %v674, %v699
    %v751 = vmul.f32 %v675, %v703
    %v752 = vmul.f32 %v676, %v699
    %v753 = vmul.f32 %v677, %v703
    %v754 = vmul.f32 %v678, %v699
    %v755 = vmul.f32 %v679, %v703
    %v756 = vmul.f32 %v680, %v699
    %v757 = vmul.f32 %v681, %v703
    %v758 = vmul.f32 %v682, %v699
    %v759 = vmul.f32 %v683, %v703
    %v760 = vmul.f32 %v684, %v699
    %v761 = vmul.f32 %v685, %v703
    %v762 = vmul.f32 %v686, %v699
    %v763 = vmul.f32 %v687, %v703
    %v764 = vmul.f32 %v688, %v699
    %v765 = vmul.f32 %v689, %v703
    %v766 = vmul.f32 %v690, %v699
    %v767 = vmul.f32 %v691, %v703
    %v768 = vmul.f32 %v692, %v699
    %v769 = vmul.f32 %v693, %v703
    %v770 = vld [vmem:[#allocation5] sm:$0x3]
    %v772 = vlaneseq
    %v773 = vshrl.u32 %v772, 7
    %v774 = vsub.s32 0, %v773
    %v775 = vrot.slane %v770, %v774
    %v776 = vlaneseq
    %v777 = vshrl.u32 %v776, 7
    %v778 = vsub.s32 1, %v777
    %v779 = vrot.slane %v770, %v778
    %v782 = vadd.f32 %v706, %v775
    %v783 = vadd.f32 %v707, %v779
    %v784 = vadd.f32 %v708, %v775
    %v785 = vadd.f32 %v709, %v779
    %v786 = vadd.f32 %v710, %v775
    %v787 = vadd.f32 %v711, %v779
    %v788 = vadd.f32 %v712, %v775
    %v789 = vadd.f32 %v713, %v779
    %v790 = vadd.f32 %v714, %v775
    %v791 = vadd.f32 %v715, %v779
    %v792 = vadd.f32 %v716, %v775
    %v793 = vadd.f32 %v717, %v779
    %v794 = vadd.f32 %v718, %v775
    %v795 = vadd.f32 %v719, %v779
    %v796 = vadd.f32 %v720, %v775
    %v797 = vadd.f32 %v721, %v779
    %v798 = vadd.f32 %v722, %v775
    %v799 = vadd.f32 %v723, %v779
    %v800 = vadd.f32 %v724, %v775
    %v801 = vadd.f32 %v725, %v779
    %v802 = vadd.f32 %v726, %v775
    %v803 = vadd.f32 %v727, %v779
    %v804 = vadd.f32 %v728, %v775
    %v805 = vadd.f32 %v729, %v779
    %v806 = vadd.f32 %v730, %v775
    %v807 = vadd.f32 %v731, %v779
    %v808 = vadd.f32 %v732, %v775
    %v809 = vadd.f32 %v733, %v779
    %v810 = vadd.f32 %v734, %v775
    %v811 = vadd.f32 %v735, %v779
    %v812 = vadd.f32 %v736, %v775
    %v813 = vadd.f32 %v737, %v779
    %v814 = vadd.f32 %v738, %v775
    %v815 = vadd.f32 %v739, %v779
    %v816 = vadd.f32 %v740, %v775
    %v817 = vadd.f32 %v741, %v779
    %v818 = vadd.f32 %v742, %v775
    %v819 = vadd.f32 %v743, %v779
    %v820 = vadd.f32 %v744, %v775
    %v821 = vadd.f32 %v745, %v779
    %v822 = vadd.f32 %v746, %v775
    %v823 = vadd.f32 %v747, %v779
    %v824 = vadd.f32 %v748, %v775
    %v825 = vadd.f32 %v749, %v779
    %v826 = vadd.f32 %v750, %v775
    %v827 = vadd.f32 %v751, %v779
    %v828 = vadd.f32 %v752, %v775
    %v829 = vadd.f32 %v753, %v779
    %v830 = vadd.f32 %v754, %v775
    %v831 = vadd.f32 %v755, %v779
    %v832 = vadd.f32 %v756, %v775
    %v833 = vadd.f32 %v757, %v779
    %v834 = vadd.f32 %v758, %v775
    %v835 = vadd.f32 %v759, %v779
    %v836 = vadd.f32 %v760, %v775
    %v837 = vadd.f32 %v761, %v779
    %v838 = vadd.f32 %v762, %v775
    %v839 = vadd.f32 %v763, %v779
    %v840 = vadd.f32 %v764, %v775
    %v841 = vadd.f32 %v765, %v779
    %v842 = vadd.f32 %v766, %v775
    %v843 = vadd.f32 %v767, %v779
    %v844 = vadd.f32 %v768, %v775
    %v845 = vadd.f32 %v769, %v779
    %v846 = vpack.c.bf16 %v784, %v782
    %v847 = vpack.c.bf16 %v785, %v783
    %v848 = vpack.c.bf16 %v788, %v786
    %v849 = vpack.c.bf16 %v789, %v787
    %v850 = vpack.c.bf16 %v792, %v790
    %v851 = vpack.c.bf16 %v793, %v791
    %v852 = vpack.c.bf16 %v796, %v794
    %v853 = vpack.c.bf16 %v797, %v795
    %v854 = vpack.c.bf16 %v800, %v798
    %v855 = vpack.c.bf16 %v801, %v799
    %v856 = vpack.c.bf16 %v804, %v802
    %v857 = vpack.c.bf16 %v805, %v803
    %v858 = vpack.c.bf16 %v808, %v806
    %v859 = vpack.c.bf16 %v809, %v807
    %v860 = vpack.c.bf16 %v812, %v810
    %v861 = vpack.c.bf16 %v813, %v811
    %v862 = vpack.c.bf16 %v816, %v814
    %v863 = vpack.c.bf16 %v817, %v815
    %v864 = vpack.c.bf16 %v820, %v818
    %v865 = vpack.c.bf16 %v821, %v819
    %v866 = vpack.c.bf16 %v824, %v822
    %v867 = vpack.c.bf16 %v825, %v823
    %v868 = vpack.c.bf16 %v828, %v826
    %v869 = vpack.c.bf16 %v829, %v827
    %v870 = vpack.c.bf16 %v832, %v830
    %v871 = vpack.c.bf16 %v833, %v831
    %v872 = vpack.c.bf16 %v836, %v834
    %v873 = vpack.c.bf16 %v837, %v835
    %v874 = vpack.c.bf16 %v840, %v838
    %v875 = vpack.c.bf16 %v841, %v839
    %v876 = vpack.c.bf16 %v844, %v842
    %v877 = vpack.c.bf16 %v845, %v843
    %v878 = vld [vmem:[#allocation7] sm:$0xff]
    %v879 = vld [vmem:[#allocation7 + $0x8] sm:$0xff]
    %v880 = vld [vmem:[#allocation7 + $0x10] sm:$0xff]
    %v881 = vld [vmem:[#allocation7 + $0x18] sm:$0xff]
    %v882 = vld [vmem:[#allocation7 + $0x20] sm:$0xff]
    %v883 = vld [vmem:[#allocation7 + $0x28] sm:$0xff]
    %v884 = vld [vmem:[#allocation7 + $0x30] sm:$0xff]
    %v885 = vld [vmem:[#allocation7 + $0x38] sm:$0xff]
    %v886 = vld [vmem:[#allocation7 + $0x40] sm:$0xff]
    %v887 = vld [vmem:[#allocation7 + $0x48] sm:$0xff]
    %v888 = vld [vmem:[#allocation7 + $0x50] sm:$0xff]
    %v889 = vld [vmem:[#allocation7 + $0x58] sm:$0xff]
    %v890 = vld [vmem:[#allocation7 + $0x60] sm:$0xff]
    %v891 = vld [vmem:[#allocation7 + $0x68] sm:$0xff]
    %v892 = vld [vmem:[#allocation7 + $0x70] sm:$0xff]
    %v893 = vld [vmem:[#allocation7 + $0x78] sm:$0xff]
    %v894 = vld [vmem:[#allocation7 + $0x80] sm:$0xff]
    %v895 = vld [vmem:[#allocation7 + $0x88] sm:$0xff]
    %v896 = vld [vmem:[#allocation7 + $0x90] sm:$0xff]
    %v897 = vld [vmem:[#allocation7 + $0x98] sm:$0xff]
    %v898 = vld [vmem:[#allocation7 + $0xa0] sm:$0xff]
    %v899 = vld [vmem:[#allocation7 + $0xa8] sm:$0xff]
    %v900 = vld [vmem:[#allocation7 + $0xb0] sm:$0xff]
    %v901 = vld [vmem:[#allocation7 + $0xb8] sm:$0xff]
    %v902 = vld [vmem:[#allocation7 + $0xc0] sm:$0xff]
    %v903 = vld [vmem:[#allocation7 + $0xc8] sm:$0xff]
    %v904 = vld [vmem:[#allocation7 + $0xd0] sm:$0xff]
    %v905 = vld [vmem:[#allocation7 + $0xd8] sm:$0xff]
    %v906 = vld [vmem:[#allocation7 + $0xe0] sm:$0xff]
    %v907 = vld [vmem:[#allocation7 + $0xe8] sm:$0xff]
    %v908 = vld [vmem:[#allocation7 + $0xf0] sm:$0xff]
    %v909 = vld [vmem:[#allocation7 + $0xf8] sm:$0xff]
    %v910 = vld [vmem:[#allocation7 + $0x100] sm:$0xff]
    %v911 = vld [vmem:[#allocation7 + $0x108] sm:$0xff]
    %v912 = vld [vmem:[#allocation7 + $0x110] sm:$0xff]
    %v913 = vld [vmem:[#allocation7 + $0x118] sm:$0xff]
    %v914 = vld [vmem:[#allocation7 + $0x120] sm:$0xff]
    %v915 = vld [vmem:[#allocation7 + $0x128] sm:$0xff]
    %v916 = vld [vmem:[#allocation7 + $0x130] sm:$0xff]
    %v917 = vld [vmem:[#allocation7 + $0x138] sm:$0xff]
    %v918 = vld [vmem:[#allocation7 + $0x140] sm:$0xff]
    %v919 = vld [vmem:[#allocation7 + $0x148] sm:$0xff]
    %v920 = vld [vmem:[#allocation7 + $0x150] sm:$0xff]
    %v921 = vld [vmem:[#allocation7 + $0x158] sm:$0xff]
    %v922 = vld [vmem:[#allocation7 + $0x160] sm:$0xff]
    %v923 = vld [vmem:[#allocation7 + $0x168] sm:$0xff]
    %v924 = vld [vmem:[#allocation7 + $0x170] sm:$0xff]
    %v925 = vld [vmem:[#allocation7 + $0x178] sm:$0xff]
    %v926 = vld [vmem:[#allocation7 + $0x180] sm:$0xff]
    %v927 = vld [vmem:[#allocation7 + $0x188] sm:$0xff]
    %v928 = vld [vmem:[#allocation7 + $0x190] sm:$0xff]
    %v929 = vld [vmem:[#allocation7 + $0x198] sm:$0xff]
    %v930 = vld [vmem:[#allocation7 + $0x1a0] sm:$0xff]
    %v931 = vld [vmem:[#allocation7 + $0x1a8] sm:$0xff]
    %v932 = vld [vmem:[#allocation7 + $0x1b0] sm:$0xff]
    %v933 = vld [vmem:[#allocation7 + $0x1b8] sm:$0xff]
    %v934 = vld [vmem:[#allocation7 + $0x1c0] sm:$0xff]
    %v935 = vld [vmem:[#allocation7 + $0x1c8] sm:$0xff]
    %v936 = vld [vmem:[#allocation7 + $0x1d0] sm:$0xff]
    %v937 = vld [vmem:[#allocation7 + $0x1d8] sm:$0xff]
    %v938 = vld [vmem:[#allocation7 + $0x1e0] sm:$0xff]
    %v939 = vld [vmem:[#allocation7 + $0x1e8] sm:$0xff]
    %v940 = vld [vmem:[#allocation7 + $0x1f0] sm:$0xff]
    %v941 = vld [vmem:[#allocation7 + $0x1f8] sm:$0xff]
    %v942 = vld [vmem:[#allocation7 + $0x200] sm:$0xff]
    %v943 = vld [vmem:[#allocation7 + $0x208] sm:$0xff]
    %v944 = vld [vmem:[#allocation7 + $0x210] sm:$0xff]
    %v945 = vld [vmem:[#allocation7 + $0x218] sm:$0xff]
    %v946 = vld [vmem:[#allocation7 + $0x220] sm:$0xff]
    %v947 = vld [vmem:[#allocation7 + $0x228] sm:$0xff]
    %v948 = vld [vmem:[#allocation7 + $0x230] sm:$0xff]
    %v949 = vld [vmem:[#allocation7 + $0x238] sm:$0xff]
    %v950 = vld [vmem:[#allocation7 + $0x240] sm:$0xff]
    %v951 = vld [vmem:[#allocation7 + $0x248] sm:$0xff]
    %v952 = vld [vmem:[#allocation7 + $0x250] sm:$0xff]
    %v953 = vld [vmem:[#allocation7 + $0x258] sm:$0xff]
    %v954 = vld [vmem:[#allocation7 + $0x260] sm:$0xff]
    %v955 = vld [vmem:[#allocation7 + $0x268] sm:$0xff]
    %v956 = vld [vmem:[#allocation7 + $0x270] sm:$0xff]
    %v957 = vld [vmem:[#allocation7 + $0x278] sm:$0xff]
    %v958 = vld [vmem:[#allocation7 + $0x280] sm:$0xff]
    %v959 = vld [vmem:[#allocation7 + $0x288] sm:$0xff]
    %v960 = vld [vmem:[#allocation7 + $0x290] sm:$0xff]
    %v961 = vld [vmem:[#allocation7 + $0x298] sm:$0xff]
    %v962 = vld [vmem:[#allocation7 + $0x2a0] sm:$0xff]
    %v963 = vld [vmem:[#allocation7 + $0x2a8] sm:$0xff]
    %v964 = vld [vmem:[#allocation7 + $0x2b0] sm:$0xff]
    %v965 = vld [vmem:[#allocation7 + $0x2b8] sm:$0xff]
    %v966 = vld [vmem:[#allocation7 + $0x2c0] sm:$0xff]
    %v967 = vld [vmem:[#allocation7 + $0x2c8] sm:$0xff]
    %v968 = vld [vmem:[#allocation7 + $0x2d0] sm:$0xff]
    %v969 = vld [vmem:[#allocation7 + $0x2d8] sm:$0xff]
    %v970 = vld [vmem:[#allocation7 + $0x2e0] sm:$0xff]
    %v971 = vld [vmem:[#allocation7 + $0x2e8] sm:$0xff]
    %v972 = vld [vmem:[#allocation7 + $0x2f0] sm:$0xff]
    %v973 = vld [vmem:[#allocation7 + $0x2f8] sm:$0xff]
    %v1070 = vunpack.c.l.b16 %v878
    %v1071 = vunpack.c.h.b16 %v878
    %v1072 = vunpack.c.l.b16 %v879
    %v1073 = vunpack.c.h.b16 %v879
    %v1074 = vunpack.c.l.b16 %v880
    %v1075 = vunpack.c.h.b16 %v880
    %v1076 = vunpack.c.l.b16 %v881
    %v1077 = vunpack.c.h.b16 %v881
    %v1078 = vunpack.c.l.b16 %v882
    %v1079 = vunpack.c.h.b16 %v882
    %v1080 = vunpack.c.l.b16 %v883
    %v1081 = vunpack.c.h.b16 %v883
    %v1082 = vunpack.c.l.b16 %v884
    %v1083 = vunpack.c.h.b16 %v884
    %v1084 = vunpack.c.l.b16 %v885
    %v1085 = vunpack.c.h.b16 %v885
    %v1086 = vunpack.c.l.b16 %v886
    %v1087 = vunpack.c.h.b16 %v886
    %v1088 = vunpack.c.l.b16 %v887
    %v1089 = vunpack.c.h.b16 %v887
    %v1090 = vunpack.c.l.b16 %v888
    %v1091 = vunpack.c.h.b16 %v888
    %v1092 = vunpack.c.l.b16 %v889
    %v1093 = vunpack.c.h.b16 %v889
    %v1094 = vunpack.c.l.b16 %v890
    %v1095 = vunpack.c.h.b16 %v890
    %v1096 = vunpack.c.l.b16 %v891
    %v1097 = vunpack.c.h.b16 %v891
    %v1098 = vunpack.c.l.b16 %v892
    %v1099 = vunpack.c.h.b16 %v892
    %v1100 = vunpack.c.l.b16 %v893
    %v1101 = vunpack.c.h.b16 %v893
    %v1102 = vunpack.c.l.b16 %v894
    %v1103 = vunpack.c.h.b16 %v894
    %v1104 = vunpack.c.l.b16 %v895
    %v1105 = vunpack.c.h.b16 %v895
    %v1106 = vunpack.c.l.b16 %v896
    %v1107 = vunpack.c.h.b16 %v896
    %v1108 = vunpack.c.l.b16 %v897
    %v1109 = vunpack.c.h.b16 %v897
    %v1110 = vunpack.c.l.b16 %v898
    %v1111 = vunpack.c.h.b16 %v898
    %v1112 = vunpack.c.l.b16 %v899
    %v1113 = vunpack.c.h.b16 %v899
    %v1114 = vunpack.c.l.b16 %v900
    %v1115 = vunpack.c.h.b16 %v900
    %v1116 = vunpack.c.l.b16 %v901
    %v1117 = vunpack.c.h.b16 %v901
    %v1118 = vunpack.c.l.b16 %v902
    %v1119 = vunpack.c.h.b16 %v902
    %v1120 = vunpack.c.l.b16 %v903
    %v1121 = vunpack.c.h.b16 %v903
    %v1122 = vunpack.c.l.b16 %v904
    %v1123 = vunpack.c.h.b16 %v904
    %v1124 = vunpack.c.l.b16 %v905
    %v1125 = vunpack.c.h.b16 %v905
    %v1126 = vunpack.c.l.b16 %v906
    %v1127 = vunpack.c.h.b16 %v906
    %v1128 = vunpack.c.l.b16 %v907
    %v1129 = vunpack.c.h.b16 %v907
    %v1130 = vunpack.c.l.b16 %v908
    %v1131 = vunpack.c.h.b16 %v908
    %v1132 = vunpack.c.l.b16 %v909
    %v1133 = vunpack.c.h.b16 %v909
    %v1134 = vunpack.c.l.b16 %v910
    %v1135 = vunpack.c.h.b16 %v910
    %v1136 = vunpack.c.l.b16 %v911
    %v1137 = vunpack.c.h.b16 %v911
    %v1138 = vunpack.c.l.b16 %v912
    %v1139 = vunpack.c.h.b16 %v912
    %v1140 = vunpack.c.l.b16 %v913
    %v1141 = vunpack.c.h.b16 %v913
    %v1142 = vunpack.c.l.b16 %v914
    %v1143 = vunpack.c.h.b16 %v914
    %v1144 = vunpack.c.l.b16 %v915
    %v1145 = vunpack.c.h.b16 %v915
    %v1146 = vunpack.c.l.b16 %v916
    %v1147 = vunpack.c.h.b16 %v916
    %v1148 = vunpack.c.l.b16 %v917
    %v1149 = vunpack.c.h.b16 %v917
    %v1150 = vunpack.c.l.b16 %v918
    %v1151 = vunpack.c.h.b16 %v918
    %v1152 = vunpack.c.l.b16 %v919
    %v1153 = vunpack.c.h.b16 %v919
    %v1154 = vunpack.c.l.b16 %v920
    %v1155 = vunpack.c.h.b16 %v920
    %v1156 = vunpack.c.l.b16 %v921
    %v1157 = vunpack.c.h.b16 %v921
    %v1158 = vunpack.c.l.b16 %v922
    %v1159 = vunpack.c.h.b16 %v922
    %v1160 = vunpack.c.l.b16 %v923
    %v1161 = vunpack.c.h.b16 %v923
    %v1162 = vunpack.c.l.b16 %v924
    %v1163 = vunpack.c.h.b16 %v924
    %v1164 = vunpack.c.l.b16 %v925
    %v1165 = vunpack.c.h.b16 %v925
    %v1166 = vunpack.c.l.b16 %v926
    %v1167 = vunpack.c.h.b16 %v926
    %v1168 = vunpack.c.l.b16 %v927
    %v1169 = vunpack.c.h.b16 %v927
    %v1170 = vunpack.c.l.b16 %v928
    %v1171 = vunpack.c.h.b16 %v928
    %v1172 = vunpack.c.l.b16 %v929
    %v1173 = vunpack.c.h.b16 %v929
    %v1174 = vunpack.c.l.b16 %v930
    %v1175 = vunpack.c.h.b16 %v930
    %v1176 = vunpack.c.l.b16 %v931
    %v1177 = vunpack.c.h.b16 %v931
    %v1178 = vunpack.c.l.b16 %v932
    %v1179 = vunpack.c.h.b16 %v932
    %v1180 = vunpack.c.l.b16 %v933
    %v1181 = vunpack.c.h.b16 %v933
    %v1182 = vunpack.c.l.b16 %v934
    %v1183 = vunpack.c.h.b16 %v934
    %v1184 = vunpack.c.l.b16 %v935
    %v1185 = vunpack.c.h.b16 %v935
    %v1186 = vunpack.c.l.b16 %v936
    %v1187 = vunpack.c.h.b16 %v936
    %v1188 = vunpack.c.l.b16 %v937
    %v1189 = vunpack.c.h.b16 %v937
    %v1190 = vunpack.c.l.b16 %v938
    %v1191 = vunpack.c.h.b16 %v938
    %v1192 = vunpack.c.l.b16 %v939
    %v1193 = vunpack.c.h.b16 %v939
    %v1194 = vunpack.c.l.b16 %v940
    %v1195 = vunpack.c.h.b16 %v940
    %v1196 = vunpack.c.l.b16 %v941
    %v1197 = vunpack.c.h.b16 %v941
    %v1198 = vunpack.c.l.b16 %v942
    %v1199 = vunpack.c.h.b16 %v942
    %v1200 = vunpack.c.l.b16 %v943
    %v1201 = vunpack.c.h.b16 %v943
    %v1202 = vunpack.c.l.b16 %v944
    %v1203 = vunpack.c.h.b16 %v944
    %v1204 = vunpack.c.l.b16 %v945
    %v1205 = vunpack.c.h.b16 %v945
    %v1206 = vunpack.c.l.b16 %v946
    %v1207 = vunpack.c.h.b16 %v946
    %v1208 = vunpack.c.l.b16 %v947
    %v1209 = vunpack.c.h.b16 %v947
    %v1210 = vunpack.c.l.b16 %v948
    %v1211 = vunpack.c.h.b16 %v948
    %v1212 = vunpack.c.l.b16 %v949
    %v1213 = vunpack.c.h.b16 %v949
    %v1214 = vunpack.c.l.b16 %v950
    %v1215 = vunpack.c.h.b16 %v950
    %v1216 = vunpack.c.l.b16 %v951
    %v1217 = vunpack.c.h.b16 %v951
    %v1218 = vunpack.c.l.b16 %v952
    %v1219 = vunpack.c.h.b16 %v952
    %v1220 = vunpack.c.l.b16 %v953
    %v1221 = vunpack.c.h.b16 %v953
    %v1222 = vunpack.c.l.b16 %v954
    %v1223 = vunpack.c.h.b16 %v954
    %v1224 = vunpack.c.l.b16 %v955
    %v1225 = vunpack.c.h.b16 %v955
    %v1226 = vunpack.c.l.b16 %v956
    %v1227 = vunpack.c.h.b16 %v956
    %v1228 = vunpack.c.l.b16 %v957
    %v1229 = vunpack.c.h.b16 %v957
    %v1230 = vunpack.c.l.b16 %v958
    %v1231 = vunpack.c.h.b16 %v958
    %v1232 = vunpack.c.l.b16 %v959
    %v1233 = vunpack.c.h.b16 %v959
    %v1234 = vunpack.c.l.b16 %v960
    %v1235 = vunpack.c.h.b16 %v960
    %v1236 = vunpack.c.l.b16 %v961
    %v1237 = vunpack.c.h.b16 %v961
    %v1238 = vunpack.c.l.b16 %v962
    %v1239 = vunpack.c.h.b16 %v962
    %v1240 = vunpack.c.l.b16 %v963
    %v1241 = vunpack.c.h.b16 %v963
    %v1242 = vunpack.c.l.b16 %v964
    %v1243 = vunpack.c.h.b16 %v964
    %v1244 = vunpack.c.l.b16 %v965
    %v1245 = vunpack.c.h.b16 %v965
    %v1246 = vunpack.c.l.b16 %v966
    %v1247 = vunpack.c.h.b16 %v966
    %v1248 = vunpack.c.l.b16 %v967
    %v1249 = vunpack.c.h.b16 %v967
    %v1250 = vunpack.c.l.b16 %v968
    %v1251 = vunpack.c.h.b16 %v968
    %v1252 = vunpack.c.l.b16 %v969
    %v1253 = vunpack.c.h.b16 %v969
    %v1254 = vunpack.c.l.b16 %v970
    %v1255 = vunpack.c.h.b16 %v970
    %v1256 = vunpack.c.l.b16 %v971
    %v1257 = vunpack.c.h.b16 %v971
    %v1258 = vunpack.c.l.b16 %v972
    %v1259 = vunpack.c.h.b16 %v972
    %v1260 = vunpack.c.l.b16 %v973
    %v1261 = vunpack.c.h.b16 %v973
    %v1262 = vpack.c.b16 %v1076, %v1070
    %v1263 = vpack.c.b16 %v1077, %v1071
    %v1264 = vpack.c.b16 %v1078, %v1072
    %v1265 = vpack.c.b16 %v1079, %v1073
    %v1266 = vpack.c.b16 %v1080, %v1074
    %v1267 = vpack.c.b16 %v1081, %v1075
    %v1268 = vpack.c.b16 %v1088, %v1082
    %v1269 = vpack.c.b16 %v1089, %v1083
    %v1270 = vpack.c.b16 %v1090, %v1084
    %v1271 = vpack.c.b16 %v1091, %v1085
    %v1272 = vpack.c.b16 %v1092, %v1086
    %v1273 = vpack.c.b16 %v1093, %v1087
    %v1274 = vpack.c.b16 %v1100, %v1094
    %v1275 = vpack.c.b16 %v1101, %v1095
    %v1276 = vpack.c.b16 %v1102, %v1096
    %v1277 = vpack.c.b16 %v1103, %v1097
    %v1278 = vpack.c.b16 %v1104, %v1098
    %v1279 = vpack.c.b16 %v1105, %v1099
    %v1280 = vpack.c.b16 %v1112, %v1106
    %v1281 = vpack.c.b16 %v1113, %v1107
    %v1282 = vpack.c.b16 %v1114, %v1108
    %v1283 = vpack.c.b16 %v1115, %v1109
    %v1284 = vpack.c.b16 %v1116, %v1110
    %v1285 = vpack.c.b16 %v1117, %v1111
    %v1286 = vpack.c.b16 %v1124, %v1118
    %v1287 = vpack.c.b16 %v1125, %v1119
    %v1288 = vpack.c.b16 %v1126, %v1120
    %v1289 = vpack.c.b16 %v1127, %v1121
    %v1290 = vpack.c.b16 %v1128, %v1122
    %v1291 = vpack.c.b16 %v1129, %v1123
    %v1292 = vpack.c.b16 %v1136, %v1130
    %v1293 = vpack.c.b16 %v1137, %v1131
    %v1294 = vpack.c.b16 %v1138, %v1132
    %v1295 = vpack.c.b16 %v1139, %v1133
    %v1296 = vpack.c.b16 %v1140, %v1134
    %v1297 = vpack.c.b16 %v1141, %v1135
    %v1298 = vpack.c.b16 %v1148, %v1142
    %v1299 = vpack.c.b16 %v1149, %v1143
    %v1300 = vpack.c.b16 %v1150, %v1144
    %v1301 = vpack.c.b16 %v1151, %v1145
    %v1302 = vpack.c.b16 %v1152, %v1146
    %v1303 = vpack.c.b16 %v1153, %v1147
    %v1304 = vpack.c.b16 %v1160, %v1154
    %v1305 = vpack.c.b16 %v1161, %v1155
    %v1306 = vpack.c.b16 %v1162, %v1156
    %v1307 = vpack.c.b16 %v1163, %v1157
    %v1308 = vpack.c.b16 %v1164, %v1158
    %v1309 = vpack.c.b16 %v1165, %v1159
    %v1310 = vpack.c.b16 %v1172, %v1166
    %v1311 = vpack.c.b16 %v1173, %v1167
    %v1312 = vpack.c.b16 %v1174, %v1168
    %v1313 = vpack.c.b16 %v1175, %v1169
    %v1314 = vpack.c.b16 %v1176, %v1170
    %v1315 = vpack.c.b16 %v1177, %v1171
    %v1316 = vpack.c.b16 %v1184, %v1178
    %v1317 = vpack.c.b16 %v1185, %v1179
    %v1318 = vpack.c.b16 %v1186, %v1180
    %v1319 = vpack.c.b16 %v1187, %v1181
    %v1320 = vpack.c.b16 %v1188, %v1182
    %v1321 = vpack.c.b16 %v1189, %v1183
    %v1322 = vpack.c.b16 %v1196, %v1190
    %v1323 = vpack.c.b16 %v1197, %v1191
    %v1324 = vpack.c.b16 %v1198, %v1192
    %v1325 = vpack.c.b16 %v1199, %v1193
    %v1326 = vpack.c.b16 %v1200, %v1194
    %v1327 = vpack.c.b16 %v1201, %v1195
    %v1328 = vpack.c.b16 %v1208, %v1202
    %v1329 = vpack.c.b16 %v1209, %v1203
    %v1330 = vpack.c.b16 %v1210, %v1204
    %v1331 = vpack.c.b16 %v1211, %v1205
    %v1332 = vpack.c.b16 %v1212, %v1206
    %v1333 = vpack.c.b16 %v1213, %v1207
    %v1334 = vpack.c.b16 %v1220, %v1214
    %v1335 = vpack.c.b16 %v1221, %v1215
    %v1336 = vpack.c.b16 %v1222, %v1216
    %v1337 = vpack.c.b16 %v1223, %v1217
    %v1338 = vpack.c.b16 %v1224, %v1218
    %v1339 = vpack.c.b16 %v1225, %v1219
    %v1340 = vpack.c.b16 %v1232, %v1226
    %v1341 = vpack.c.b16 %v1233, %v1227
    %v1342 = vpack.c.b16 %v1234, %v1228
    %v1343 = vpack.c.b16 %v1235, %v1229
    %v1344 = vpack.c.b16 %v1236, %v1230
    %v1345 = vpack.c.b16 %v1237, %v1231
    %v1346 = vpack.c.b16 %v1244, %v1238
    %v1347 = vpack.c.b16 %v1245, %v1239
    %v1348 = vpack.c.b16 %v1246, %v1240
    %v1349 = vpack.c.b16 %v1247, %v1241
    %v1350 = vpack.c.b16 %v1248, %v1242
    %v1351 = vpack.c.b16 %v1249, %v1243
    %v1352 = vpack.c.b16 %v1256, %v1250
    %v1353 = vpack.c.b16 %v1257, %v1251
    %v1354 = vpack.c.b16 %v1258, %v1252
    %v1355 = vpack.c.b16 %v1259, %v1253
    %v1356 = vpack.c.b16 %v1260, %v1254
    %v1357 = vpack.c.b16 %v1261, %v1255
    %1454 = vmatprep.subr.bf16.mxu0 %v1263
    %1455 = vmatpush1.bf16.msra.mxu0 %v1262
    %1456 = vmatprep.subr.bf16.mxu0 %v1269
    %1457 = vmatpush1.bf16.msra.mxu0 %v1268
    %1458 = vmatprep.subr.bf16.mxu0 %v1275
    %1459 = vmatpush1.bf16.msra.mxu0 %v1274
    %1460 = vmatprep.subr.bf16.mxu0 %v1281
    %1461 = vmatpush1.bf16.msra.mxu0 %v1280
    %1462 = vmatprep.subr.bf16.mxu0 %v1287
    %1463 = vmatpush1.bf16.msra.mxu0 %v1286
    %1464 = vmatprep.subr.bf16.mxu0 %v1293
    %1465 = vmatpush1.bf16.msra.mxu0 %v1292
    %1466 = vmatprep.subr.bf16.mxu0 %v1299
    %1467 = vmatpush1.bf16.msra.mxu0 %v1298
    %1468 = vmatprep.subr.bf16.mxu0 %v1305
    %1469 = vmatpush1.bf16.msra.mxu0 %v1304
    %1470 = vmatprep.subr.bf16.mxu0 %v1311
    %1471 = vmatpush1.bf16.msra.mxu0 %v1310
    %1472 = vmatprep.subr.bf16.mxu0 %v1317
    %1473 = vmatpush1.bf16.msra.mxu0 %v1316
    %1474 = vmatprep.subr.bf16.mxu0 %v1323
    %1475 = vmatpush1.bf16.msra.mxu0 %v1322
    %1476 = vmatprep.subr.bf16.mxu0 %v1329
    %1477 = vmatpush1.bf16.msra.mxu0 %v1328
    %1478 = vmatprep.subr.bf16.mxu0 %v1335
    %1479 = vmatpush1.bf16.msra.mxu0 %v1334
    %1480 = vmatprep.subr.bf16.mxu0 %v1341
    %1481 = vmatpush1.bf16.msra.mxu0 %v1340
    %1482 = vmatprep.subr.bf16.mxu0 %v1347
    %1483 = vmatpush1.bf16.msra.mxu0 %v1346
    %1484 = vmatprep.subr.bf16.mxu0 %v1353
    %1485 = vmatpush1.bf16.msra.mxu0 %v1352
    %1486 = vmatprep.mubr.bf16.mxu0 %v847
    %1487 = vmatmul.mubr.bf16.gmra.mrb[0].mxu0 %v846
    %v1488 = vpop.f32.mrb[0].mxu0
    %v1489 = vadd.f32 0.0, %v1488
    %v1490 = vpop.f32.mrb[0].mxu0
    %v1491 = vadd.f32 0.0, %v1490
    %v1492 = vpop.f32.mrb[0].mxu0
    %v1493 = vadd.f32 0.0, %v1492
    %v1494 = vpop.f32.mrb[0].mxu0
    %v1495 = vadd.f32 0.0, %v1494
    %1496 = vmatprep.mubr.bf16.mxu0 %v849
    %1497 = vmatmul.mubr.bf16.gmra.mrb[0].mxu0 %v848
    %v1498 = vpop.f32.mrb[0].mxu0
    %v1499 = vadd.f32 0.0, %v1498
    %v1500 = vpop.f32.mrb[0].mxu0
    %v1501 = vadd.f32 0.0, %v1500
    %v1502 = vpop.f32.mrb[0].mxu0
    %v1503 = vadd.f32 0.0, %v1502
    %v1504 = vpop.f32.mrb[0].mxu0
    %v1505 = vadd.f32 0.0, %v1504
    %1506 = vmatprep.mubr.bf16.mxu0 %v851
    %1507 = vmatmul.mubr.bf16.gmra.mrb[0].mxu0 %v850
    %v1508 = vpop.f32.mrb[0].mxu0
    %v1509 = vadd.f32 0.0, %v1508
    %v1510 = vpop.f32.mrb[0].mxu0
    %v1511 = vadd.f32 0.0, %v1510
    %v1512 = vpop.f32.mrb[0].mxu0
    %v1513 = vadd.f32 0.0, %v1512
    %v1514 = vpop.f32.mrb[0].mxu0
    %v1515 = vadd.f32 0.0, %v1514
    %1516 = vmatprep.mubr.bf16.mxu0 %v853
    %1517 = vmatmul.mubr.bf16.gmra.mrb[0].mxu0 %v852
    %v1518 = vpop.f32.mrb[0].mxu0
    %v1519 = vadd.f32 0.0, %v1518
    %v1520 = vpop.f32.mrb[0].mxu0
    %v1521 = vadd.f32 0.0, %v1520
    %v1522 = vpop.f32.mrb[0].mxu0
    %v1523 = vadd.f32 0.0, %v1522
    %v1524 = vpop.f32.mrb[0].mxu0
    %v1525 = vadd.f32 0.0, %v1524
    %1526 = vmatprep.mubr.bf16.mxu0 %v855
    %1527 = vmatmul.mubr.bf16.gmra.mrb[0].mxu0 %v854
    %v1528 = vpop.f32.mrb[0].mxu0
    %v1529 = vadd.f32 0.0, %v1528
    %v1530 = vpop.f32.mrb[0].mxu0
    %v1531 = vadd.f32 0.0, %v1530
    %v1532 = vpop.f32.mrb[0].mxu0
    %v1533 = vadd.f32 0.0, %v1532
    %v1534 = vpop.f32.mrb[0].mxu0
    %v1535 = vadd.f32 0.0, %v1534
    %1536 = vmatprep.mubr.bf16.mxu0 %v857
    %1537 = vmatmul.mubr.bf16.gmra.mrb[0].mxu0 %v856
    %v1538 = vpop.f32.mrb[0].mxu0
    %v1539 = vadd.f32 0.0, %v1538
    %v1540 = vpop.f32.mrb[0].mxu0
    %v1541 = vadd.f32 0.0, %v1540
    %v1542 = vpop.f32.mrb[0].mxu0
    %v1543 = vadd.f32 0.0, %v1542
    %v1544 = vpop.f32.mrb[0].mxu0
    %v1545 = vadd.f32 0.0, %v1544
    %1546 = vmatprep.mubr.bf16.mxu0 %v859
    %1547 = vmatmul.mubr.bf16.gmra.mrb[0].mxu0 %v858
    %v1548 = vpop.f32.mrb[0].mxu0
    %v1549 = vadd.f32 0.0, %v1548
    %v1550 = vpop.f32.mrb[0].mxu0
    %v1551 = vadd.f32 0.0, %v1550
    %v1552 = vpop.f32.mrb[0].mxu0
    %v1553 = vadd.f32 0.0, %v1552
    %v1554 = vpop.f32.mrb[0].mxu0
    %v1555 = vadd.f32 0.0, %v1554
    %1556 = vmatprep.mubr.bf16.mxu0 %v861
    %1557 = vmatmul.mubr.bf16.gmra.mrb[0].mxu0 %v860
    %v1558 = vpop.f32.mrb[0].mxu0
    %v1559 = vadd.f32 0.0, %v1558
    %v1560 = vpop.f32.mrb[0].mxu0
    %v1561 = vadd.f32 0.0, %v1560
    %v1562 = vpop.f32.mrb[0].mxu0
    %v1563 = vadd.f32 0.0, %v1562
    %v1564 = vpop.f32.mrb[0].mxu0
    %v1565 = vadd.f32 0.0, %v1564
    %1566 = vmatprep.mubr.bf16.mxu0 %v863
    %1567 = vmatmul.mubr.bf16.gmra.mrb[0].mxu0 %v862
    %v1568 = vpop.f32.mrb[0].mxu0
    %v1569 = vadd.f32 0.0, %v1568
    %v1570 = vpop.f32.mrb[0].mxu0
    %v1571 = vadd.f32 0.0, %v1570
    %v1572 = vpop.f32.mrb[0].mxu0
    %v1573 = vadd.f32 0.0, %v1572
    %v1574 = vpop.f32.mrb[0].mxu0
    %v1575 = vadd.f32 0.0, %v1574
    %1576 = vmatprep.mubr.bf16.mxu0 %v865
    %1577 = vmatmul.mubr.bf16.gmra.mrb[0].mxu0 %v864
    %v1578 = vpop.f32.mrb[0].mxu0
    %v1579 = vadd.f32 0.0, %v1578
    %v1580 = vpop.f32.mrb[0].mxu0
    %v1581 = vadd.f32 0.0, %v1580
    %v1582 = vpop.f32.mrb[0].mxu0
    %v1583 = vadd.f32 0.0, %v1582
    %v1584 = vpop.f32.mrb[0].mxu0
    %v1585 = vadd.f32 0.0, %v1584
    %1586 = vmatprep.mubr.bf16.mxu0 %v867
    %1587 = vmatmul.mubr.bf16.gmra.mrb[0].mxu0 %v866
    %v1588 = vpop.f32.mrb[0].mxu0
    %v1589 = vadd.f32 0.0, %v1588
    %v1590 = vpop.f32.mrb[0].mxu0
    %v1591 = vadd.f32 0.0, %v1590
    %v1592 = vpop.f32.mrb[0].mxu0
    %v1593 = vadd.f32 0.0, %v1592
    %v1594 = vpop.f32.mrb[0].mxu0
    %v1595 = vadd.f32 0.0, %v1594
    %1596 = vmatprep.mubr.bf16.mxu0 %v869
    %1597 = vmatmul.mubr.bf16.gmra.mrb[0].mxu0 %v868
    %v1598 = vpop.f32.mrb[0].mxu0
    %v1599 = vadd.f32 0.0, %v1598
    %v1600 = vpop.f32.mrb[0].mxu0
    %v1601 = vadd.f32 0.0, %v1600
    %v1602 = vpop.f32.mrb[0].mxu0
    %v1603 = vadd.f32 0.0, %v1602
    %v1604 = vpop.f32.mrb[0].mxu0
    %v1605 = vadd.f32 0.0, %v1604
    %1606 = vmatprep.mubr.bf16.mxu0 %v871
    %1607 = vmatmul.mubr.bf16.gmra.mrb[0].mxu0 %v870
    %v1608 = vpop.f32.mrb[0].mxu0
    %v1609 = vadd.f32 0.0, %v1608
    %v1610 = vpop.f32.mrb[0].mxu0
    %v1611 = vadd.f32 0.0, %v1610
    %v1612 = vpop.f32.mrb[0].mxu0
    %v1613 = vadd.f32 0.0, %v1612
    %v1614 = vpop.f32.mrb[0].mxu0
    %v1615 = vadd.f32 0.0, %v1614
    %1616 = vmatprep.mubr.bf16.mxu0 %v873
    %1617 = vmatmul.mubr.bf16.gmra.mrb[0].mxu0 %v872
    %v1618 = vpop.f32.mrb[0].mxu0
    %v1619 = vadd.f32 0.0, %v1618
    %v1620 = vpop.f32.mrb[0].mxu0
    %v1621 = vadd.f32 0.0, %v1620
    %v1622 = vpop.f32.mrb[0].mxu0
    %v1623 = vadd.f32 0.0, %v1622
    %v1624 = vpop.f32.mrb[0].mxu0
    %v1625 = vadd.f32 0.0, %v1624
    %1626 = vmatprep.mubr.bf16.mxu0 %v875
    %1627 = vmatmul.mubr.bf16.gmra.mrb[0].mxu0 %v874
    %v1628 = vpop.f32.mrb[0].mxu0
    %v1629 = vadd.f32 0.0, %v1628
    %v1630 = vpop.f32.mrb[0].mxu0
    %v1631 = vadd.f32 0.0, %v1630
    %v1632 = vpop.f32.mrb[0].mxu0
    %v1633 = vadd.f32 0.0, %v1632
    %v1634 = vpop.f32.mrb[0].mxu0
    %v1635 = vadd.f32 0.0, %v1634
    %1636 = vmatprep.mubr.bf16.mxu0 %v877
    %1637 = vmatmul.mubr.bf16.gmra.mrb[0].mxu0 %v876
    %v1638 = vpop.f32.mrb[0].mxu0
    %v1639 = vadd.f32 0.0, %v1638
    %v1640 = vpop.f32.mrb[0].mxu0
    %v1641 = vadd.f32 0.0, %v1640
    %v1642 = vpop.f32.mrb[0].mxu0
    %v1643 = vadd.f32 0.0, %v1642
    %v1644 = vpop.f32.mrb[0].mxu0
    %v1645 = vadd.f32 0.0, %v1644
    %1646 = vdwg.mxu0
    %1647 = vmatprep.subr.bf16.mxu0 %v1265
    %1648 = vmatpush1.bf16.msra.mxu0 %v1264
    %1649 = vmatprep.subr.bf16.mxu0 %v1271
    %1650 = vmatpush1.bf16.msra.mxu0 %v1270
    %1651 = vmatprep.subr.bf16.mxu0 %v1277
    %1652 = vmatpush1.bf16.msra.mxu0 %v1276
    %1653 = vmatprep.subr.bf16.mxu0 %v1283
    %1654 = vmatpush1.bf16.msra.mxu0 %v1282
    %1655 = vmatprep.subr.bf16.mxu0 %v1289
    %1656 = vmatpush1.bf16.msra.mxu0 %v1288
    %1657 = vmatprep.subr.bf16.mxu0 %v1295
    %1658 = vmatpush1.bf16.msra.mxu0 %v1294
    %1659 = vmatprep.subr.bf16.mxu0 %v1301
    %1660 = vmatpush1.bf16.msra.mxu0 %v1300
    %1661 = vmatprep.subr.bf16.mxu0 %v1307
    %1662 = vmatpush1.bf16.msra.mxu0 %v1306
    %1663 = vmatprep.subr.bf16.mxu0 %v1313
    %1664 = vmatpush1.bf16.msra.mxu0 %v1312
    %1665 = vmatprep.subr.bf16.mxu0 %v1319
    %1666 = vmatpush1.bf16.msra.mxu0 %v1318
    %1667 = vmatprep.subr.bf16.mxu0 %v1325
    %1668 = vmatpush1.bf16.msra.mxu0 %v1324
    %1669 = vmatprep.subr.bf16.mxu0 %v1331
    %1670 = vmatpush1.bf16.msra.mxu0 %v1330
    %1671 = vmatprep.subr.bf16.mxu0 %v1337
    %1672 = vmatpush1.bf16.msra.mxu0 %v1336
    %1673 = vmatprep.subr.bf16.mxu0 %v1343
    %1674 = vmatpush1.bf16.msra.mxu0 %v1342
    %1675 = vmatprep.subr.bf16.mxu0 %v1349
    %1676 = vmatpush1.bf16.msra.mxu0 %v1348
    %1677 = vmatprep.subr.bf16.mxu0 %v1355
    %1678 = vmatpush1.bf16.msra.mxu0 %v1354
    %1679 = vmatprep.mubr.bf16.mxu0 %v847
    %1680 = vmatmul.mubr.bf16.gmra.mrb[0].mxu0 %v846
    %v1681 = vpop.f32.mrb[0].mxu0
    %v1682 = vadd.f32 0.0, %v1681
    %v1683 = vpop.f32.mrb[0].mxu0
    %v1684 = vadd.f32 0.0, %v1683
    %v1685 = vpop.f32.mrb[0].mxu0
    %v1686 = vadd.f32 0.0, %v1685
    %v1687 = vpop.f32.mrb[0].mxu0
    %v1688 = vadd.f32 0.0, %v1687
    %1689 = vmatprep.mubr.bf16.mxu0 %v849
    %1690 = vmatmul.mubr.bf16.gmra.mrb[0].mxu0 %v848
    %v1691 = vpop.f32.mrb[0].mxu0
    %v1692 = vadd.f32 0.0, %v1691
    %v1693 = vpop.f32.mrb[0].mxu0
    %v1694 = vadd.f32 0.0, %v1693
    %v1695 = vpop.f32.mrb[0].mxu0
    %v1696 = vadd.f32 0.0, %v1695
    %v1697 = vpop.f32.mrb[0].mxu0
    %v1698 = vadd.f32 0.0, %v1697
    %1699 = vmatprep.mubr.bf16.mxu0 %v851
    %1700 = vmatmul.mubr.bf16.gmra.mrb[0].mxu0 %v850
    %v1701 = vpop.f32.mrb[0].mxu0
    %v1702 = vadd.f32 0.0, %v1701
    %v1703 = vpop.f32.mrb[0].mxu0
    %v1704 = vadd.f32 0.0, %v1703
    %v1705 = vpop.f32.mrb[0].mxu0
    %v1706 = vadd.f32 0.0, %v1705
    %v1707 = vpop.f32.mrb[0].mxu0
    %v1708 = vadd.f32 0.0, %v1707
    %1709 = vmatprep.mubr.bf16.mxu0 %v853
    %1710 = vmatmul.mubr.bf16.gmra.mrb[0].mxu0 %v852
    %v1711 = vpop.f32.mrb[0].mxu0
    %v1712 = vadd.f32 0.0, %v1711
    %v1713 = vpop.f32.mrb[0].mxu0
    %v1714 = vadd.f32 0.0, %v1713
    %v1715 = vpop.f32.mrb[0].mxu0
    %v1716 = vadd.f32 0.0, %v1715
    %v1717 = vpop.f32.mrb[0].mxu0
    %v1718 = vadd.f32 0.0, %v1717
    %1719 = vmatprep.mubr.bf16.mxu0 %v855
    %1720 = vmatmul.mubr.bf16.gmra.mrb[0].mxu0 %v854
    %v1721 = vpop.f32.mrb[0].mxu0
    %v1722 = vadd.f32 0.0, %v1721
    %v1723 = vpop.f32.mrb[0].mxu0
    %v1724 = vadd.f32 0.0, %v1723
    %v1725 = vpop.f32.mrb[0].mxu0
    %v1726 = vadd.f32 0.0, %v1725
    %v1727 = vpop.f32.mrb[0].mxu0
    %v1728 = vadd.f32 0.0, %v1727
    %1729 = vmatprep.mubr.bf16.mxu0 %v857
    %1730 = vmatmul.mubr.bf16.gmra.mrb[0].mxu0 %v856
    %v1731 = vpop.f32.mrb[0].mxu0
    %v1732 = vadd.f32 0.0, %v1731
    %v1733 = vpop.f32.mrb[0].mxu0
    %v1734 = vadd.f32 0.0, %v1733
    %v1735 = vpop.f32.mrb[0].mxu0
    %v1736 = vadd.f32 0.0, %v1735
    %v1737 = vpop.f32.mrb[0].mxu0
    %v1738 = vadd.f32 0.0, %v1737
    %1739 = vmatprep.mubr.bf16.mxu0 %v859
    %1740 = vmatmul.mubr.bf16.gmra.mrb[0].mxu0 %v858
    %v1741 = vpop.f32.mrb[0].mxu0
    %v1742 = vadd.f32 0.0, %v1741
    %v1743 = vpop.f32.mrb[0].mxu0
    %v1744 = vadd.f32 0.0, %v1743
    %v1745 = vpop.f32.mrb[0].mxu0
    %v1746 = vadd.f32 0.0, %v1745
    %v1747 = vpop.f32.mrb[0].mxu0
    %v1748 = vadd.f32 0.0, %v1747
    %1749 = vmatprep.mubr.bf16.mxu0 %v861
    %1750 = vmatmul.mubr.bf16.gmra.mrb[0].mxu0 %v860
    %v1751 = vpop.f32.mrb[0].mxu0
    %v1752 = vadd.f32 0.0, %v1751
    %v1753 = vpop.f32.mrb[0].mxu0
    %v1754 = vadd.f32 0.0, %v1753
    %v1755 = vpop.f32.mrb[0].mxu0
    %v1756 = vadd.f32 0.0, %v1755
    %v1757 = vpop.f32.mrb[0].mxu0
    %v1758 = vadd.f32 0.0, %v1757
    %1759 = vmatprep.mubr.bf16.mxu0 %v863
    %1760 = vmatmul.mubr.bf16.gmra.mrb[0].mxu0 %v862
    %v1761 = vpop.f32.mrb[0].mxu0
    %v1762 = vadd.f32 0.0, %v1761
    %v1763 = vpop.f32.mrb[0].mxu0
    %v1764 = vadd.f32 0.0, %v1763
    %v1765 = vpop.f32.mrb[0].mxu0
    %v1766 = vadd.f32 0.0, %v1765
    %v1767 = vpop.f32.mrb[0].mxu0
    %v1768 = vadd.f32 0.0, %v1767
    %1769 = vmatprep.mubr.bf16.mxu0 %v865
    %1770 = vmatmul.mubr.bf16.gmra.mrb[0].mxu0 %v864
    %v1771 = vpop.f32.mrb[0].mxu0
    %v1772 = vadd.f32 0.0, %v1771
    %v1773 = vpop.f32.mrb[0].mxu0
    %v1774 = vadd.f32 0.0, %v1773
    %v1775 = vpop.f32.mrb[0].mxu0
    %v1776 = vadd.f32 0.0, %v1775
    %v1777 = vpop.f32.mrb[0].mxu0
    %v1778 = vadd.f32 0.0, %v1777
    %1779 = vmatprep.mubr.bf16.mxu0 %v867
    %1780 = vmatmul.mubr.bf16.gmra.mrb[0].mxu0 %v866
    %v1781 = vpop.f32.mrb[0].mxu0
    %v1782 = vadd.f32 0.0, %v1781
    %v1783 = vpop.f32.mrb[0].mxu0
    %v1784 = vadd.f32 0.0, %v1783
    %v1785 = vpop.f32.mrb[0].mxu0
    %v1786 = vadd.f32 0.0, %v1785
    %v1787 = vpop.f32.mrb[0].mxu0
    %v1788 = vadd.f32 0.0, %v1787
    %1789 = vmatprep.mubr.bf16.mxu0 %v869
    %1790 = vmatmul.mubr.bf16.gmra.mrb[0].mxu0 %v868
    %v1791 = vpop.f32.mrb[0].mxu0
    %v1792 = vadd.f32 0.0, %v1791
    %v1793 = vpop.f32.mrb[0].mxu0
    %v1794 = vadd.f32 0.0, %v1793
    %v1795 = vpop.f32.mrb[0].mxu0
    %v1796 = vadd.f32 0.0, %v1795
    %v1797 = vpop.f32.mrb[0].mxu0
    %v1798 = vadd.f32 0.0, %v1797
    %1799 = vmatprep.mubr.bf16.mxu0 %v871
    %1800 = vmatmul.mubr.bf16.gmra.mrb[0].mxu0 %v870
    %v1801 = vpop.f32.mrb[0].mxu0
    %v1802 = vadd.f32 0.0, %v1801
    %v1803 = vpop.f32.mrb[0].mxu0
    %v1804 = vadd.f32 0.0, %v1803
    %v1805 = vpop.f32.mrb[0].mxu0
    %v1806 = vadd.f32 0.0, %v1805
    %v1807 = vpop.f32.mrb[0].mxu0
    %v1808 = vadd.f32 0.0, %v1807
    %1809 = vmatprep.mubr.bf16.mxu0 %v873
    %1810 = vmatmul.mubr.bf16.gmra.mrb[0].mxu0 %v872
    %v1811 = vpop.f32.mrb[0].mxu0
    %v1812 = vadd.f32 0.0, %v1811
    %v1813 = vpop.f32.mrb[0].mxu0
    %v1814 = vadd.f32 0.0, %v1813
    %v1815 = vpop.f32.mrb[0].mxu0
    %v1816 = vadd.f32 0.0, %v1815
    %v1817 = vpop.f32.mrb[0].mxu0
    %v1818 = vadd.f32 0.0, %v1817
    %1819 = vmatprep.mubr.bf16.mxu0 %v875
    %1820 = vmatmul.mubr.bf16.gmra.mrb[0].mxu0 %v874
    %v1821 = vpop.f32.mrb[0].mxu0
    %v1822 = vadd.f32 0.0, %v1821
    %v1823 = vpop.f32.mrb[0].mxu0
    %v1824 = vadd.f32 0.0, %v1823
    %v1825 = vpop.f32.mrb[0].mxu0
    %v1826 = vadd.f32 0.0, %v1825
    %v1827 = vpop.f32.mrb[0].mxu0
    %v1828 = vadd.f32 0.0, %v1827
    %1829 = vmatprep.mubr.bf16.mxu0 %v877
    %1830 = vmatmul.mubr.bf16.gmra.mrb[0].mxu0 %v876
    %v1831 = vpop.f32.mrb[0].mxu0
    %v1832 = vadd.f32 0.0, %v1831
    %v1833 = vpop.f32.mrb[0].mxu0
    %v1834 = vadd.f32 0.0, %v1833
    %v1835 = vpop.f32.mrb[0].mxu0
    %v1836 = vadd.f32 0.0, %v1835
    %v1837 = vpop.f32.mrb[0].mxu0
    %v1838 = vadd.f32 0.0, %v1837
    %1839 = vdwg.mxu0
    %1840 = vmatprep.subr.bf16.mxu0 %v1267
    %1841 = vmatpush1.bf16.msra.mxu0 %v1266
    %1842 = vmatprep.subr.bf16.mxu0 %v1273
    %1843 = vmatpush1.bf16.msra.mxu0 %v1272
    %1844 = vmatprep.subr.bf16.mxu0 %v1279
    %1845 = vmatpush1.bf16.msra.mxu0 %v1278
    %1846 = vmatprep.subr.bf16.mxu0 %v1285
    %1847 = vmatpush1.bf16.msra.mxu0 %v1284
    %1848 = vmatprep.subr.bf16.mxu0 %v1291
    %1849 = vmatpush1.bf16.msra.mxu0 %v1290
    %1850 = vmatprep.subr.bf16.mxu0 %v1297
    %1851 = vmatpush1.bf16.msra.mxu0 %v1296
    %1852 = vmatprep.subr.bf16.mxu0 %v1303
    %1853 = vmatpush1.bf16.msra.mxu0 %v1302
    %1854 = vmatprep.subr.bf16.mxu0 %v1309
    %1855 = vmatpush1.bf16.msra.mxu0 %v1308
    %1856 = vmatprep.subr.bf16.mxu0 %v1315
    %1857 = vmatpush1.bf16.msra.mxu0 %v1314
    %1858 = vmatprep.subr.bf16.mxu0 %v1321
    %1859 = vmatpush1.bf16.msra.mxu0 %v1320
    %1860 = vmatprep.subr.bf16.mxu0 %v1327
    %1861 = vmatpush1.bf16.msra.mxu0 %v1326
    %1862 = vmatprep.subr.bf16.mxu0 %v1333
    %1863 = vmatpush1.bf16.msra.mxu0 %v1332
    %1864 = vmatprep.subr.bf16.mxu0 %v1339
    %1865 = vmatpush1.bf16.msra.mxu0 %v1338
    %1866 = vmatprep.subr.bf16.mxu0 %v1345
    %1867 = vmatpush1.bf16.msra.mxu0 %v1344
    %1868 = vmatprep.subr.bf16.mxu0 %v1351
    %1869 = vmatpush1.bf16.msra.mxu0 %v1350
    %1870 = vmatprep.subr.bf16.mxu0 %v1357
    %1871 = vmatpush1.bf16.msra.mxu0 %v1356
    %1872 = vmatprep.mubr.bf16.mxu0 %v847
    %1873 = vmatmul.mubr.bf16.gmra.mrb[0].mxu0 %v846
    %v1874 = vpop.f32.mrb[0].mxu0
    %v1875 = vadd.f32 0.0, %v1874
    %v1876 = vpop.f32.mrb[0].mxu0
    %v1877 = vadd.f32 0.0, %v1876
    %v1878 = vpop.f32.mrb[0].mxu0
    %v1879 = vadd.f32 0.0, %v1878
    %v1880 = vpop.f32.mrb[0].mxu0
    %v1881 = vadd.f32 0.0, %v1880
    %1882 = vmatprep.mubr.bf16.mxu0 %v849
    %1883 = vmatmul.mubr.bf16.gmra.mrb[0].mxu0 %v848
    %v1884 = vpop.f32.mrb[0].mxu0
    %v1885 = vadd.f32 0.0, %v1884
    %v1886 = vpop.f32.mrb[0].mxu0
    %v1887 = vadd.f32 0.0, %v1886
    %v1888 = vpop.f32.mrb[0].mxu0
    %v1889 = vadd.f32 0.0, %v1888
    %v1890 = vpop.f32.mrb[0].mxu0
    %v1891 = vadd.f32 0.0, %v1890
    %1892 = vmatprep.mubr.bf16.mxu0 %v851
    %1893 = vmatmul.mubr.bf16.gmra.mrb[0].mxu0 %v850
    %v1894 = vpop.f32.mrb[0].mxu0
    %v1895 = vadd.f32 0.0, %v1894
    %v1896 = vpop.f32.mrb[0].mxu0
    %v1897 = vadd.f32 0.0, %v1896
    %v1898 = vpop.f32.mrb[0].mxu0
    %v1899 = vadd.f32 0.0, %v1898
    %v1900 = vpop.f32.mrb[0].mxu0
    %v1901 = vadd.f32 0.0, %v1900
    %1902 = vmatprep.mubr.bf16.mxu0 %v853
    %1903 = vmatmul.mubr.bf16.gmra.mrb[0].mxu0 %v852
    %v1904 = vpop.f32.mrb[0].mxu0
    %v1905 = vadd.f32 0.0, %v1904
    %v1906 = vpop.f32.mrb[0].mxu0
    %v1907 = vadd.f32 0.0, %v1906
    %v1908 = vpop.f32.mrb[0].mxu0
    %v1909 = vadd.f32 0.0, %v1908
    %v1910 = vpop.f32.mrb[0].mxu0
    %v1911 = vadd.f32 0.0, %v1910
    %1912 = vmatprep.mubr.bf16.mxu0 %v855
    %1913 = vmatmul.mubr.bf16.gmra.mrb[0].mxu0 %v854
    %v1914 = vpop.f32.mrb[0].mxu0
    %v1915 = vadd.f32 0.0, %v1914
    %v1916 = vpop.f32.mrb[0].mxu0
    %v1917 = vadd.f32 0.0, %v1916
    %v1918 = vpop.f32.mrb[0].mxu0
    %v1919 = vadd.f32 0.0, %v1918
    %v1920 = vpop.f32.mrb[0].mxu0
    %v1921 = vadd.f32 0.0, %v1920
    %1922 = vmatprep.mubr.bf16.mxu0 %v857
    %1923 = vmatmul.mubr.bf16.gmra.mrb[0].mxu0 %v856
    %v1924 = vpop.f32.mrb[0].mxu0
    %v1925 = vadd.f32 0.0, %v1924
    %v1926 = vpop.f32.mrb[0].mxu0
    %v1927 = vadd.f32 0.0, %v1926
    %v1928 = vpop.f32.mrb[0].mxu0
    %v1929 = vadd.f32 0.0, %v1928
    %v1930 = vpop.f32.mrb[0].mxu0
    %v1931 = vadd.f32 0.0, %v1930
    %1932 = vmatprep.mubr.bf16.mxu0 %v859
    %1933 = vmatmul.mubr.bf16.gmra.mrb[0].mxu0 %v858
    %v1934 = vpop.f32.mrb[0].mxu0
    %v1935 = vadd.f32 0.0, %v1934
    %v1936 = vpop.f32.mrb[0].mxu0
    %v1937 = vadd.f32 0.0, %v1936
    %v1938 = vpop.f32.mrb[0].mxu0
    %v1939 = vadd.f32 0.0, %v1938
    %v1940 = vpop.f32.mrb[0].mxu0
    %v1941 = vadd.f32 0.0, %v1940
    %1942 = vmatprep.mubr.bf16.mxu0 %v861
    %1943 = vmatmul.mubr.bf16.gmra.mrb[0].mxu0 %v860
    %v1944 = vpop.f32.mrb[0].mxu0
    %v1945 = vadd.f32 0.0, %v1944
    %v1946 = vpop.f32.mrb[0].mxu0
    %v1947 = vadd.f32 0.0, %v1946
    %v1948 = vpop.f32.mrb[0].mxu0
    %v1949 = vadd.f32 0.0, %v1948
    %v1950 = vpop.f32.mrb[0].mxu0
    %v1951 = vadd.f32 0.0, %v1950
    %1952 = vmatprep.mubr.bf16.mxu0 %v863
    %1953 = vmatmul.mubr.bf16.gmra.mrb[0].mxu0 %v862
    %v1954 = vpop.f32.mrb[0].mxu0
    %v1955 = vadd.f32 0.0, %v1954
    %v1956 = vpop.f32.mrb[0].mxu0
    %v1957 = vadd.f32 0.0, %v1956
    %v1958 = vpop.f32.mrb[0].mxu0
    %v1959 = vadd.f32 0.0, %v1958
    %v1960 = vpop.f32.mrb[0].mxu0
    %v1961 = vadd.f32 0.0, %v1960
    %1962 = vmatprep.mubr.bf16.mxu0 %v865
    %1963 = vmatmul.mubr.bf16.gmra.mrb[0].mxu0 %v864
    %v1964 = vpop.f32.mrb[0].mxu0
    %v1965 = vadd.f32 0.0, %v1964
    %v1966 = vpop.f32.mrb[0].mxu0
    %v1967 = vadd.f32 0.0, %v1966
    %v1968 = vpop.f32.mrb[0].mxu0
    %v1969 = vadd.f32 0.0, %v1968
    %v1970 = vpop.f32.mrb[0].mxu0
    %v1971 = vadd.f32 0.0, %v1970
    %1972 = vmatprep.mubr.bf16.mxu0 %v867
    %1973 = vmatmul.mubr.bf16.gmra.mrb[0].mxu0 %v866
    %v1974 = vpop.f32.mrb[0].mxu0
    %v1975 = vadd.f32 0.0, %v1974
    %v1976 = vpop.f32.mrb[0].mxu0
    %v1977 = vadd.f32 0.0, %v1976
    %v1978 = vpop.f32.mrb[0].mxu0
    %v1979 = vadd.f32 0.0, %v1978
    %v1980 = vpop.f32.mrb[0].mxu0
    %v1981 = vadd.f32 0.0, %v1980
    %1982 = vmatprep.mubr.bf16.mxu0 %v869
    %1983 = vmatmul.mubr.bf16.gmra.mrb[0].mxu0 %v868
    %v1984 = vpop.f32.mrb[0].mxu0
    %v1985 = vadd.f32 0.0, %v1984
    %v1986 = vpop.f32.mrb[0].mxu0
    %v1987 = vadd.f32 0.0, %v1986
    %v1988 = vpop.f32.mrb[0].mxu0
    %v1989 = vadd.f32 0.0, %v1988
    %v1990 = vpop.f32.mrb[0].mxu0
    %v1991 = vadd.f32 0.0, %v1990
    %1992 = vmatprep.mubr.bf16.mxu0 %v871
    %1993 = vmatmul.mubr.bf16.gmra.mrb[0].mxu0 %v870
    %v1994 = vpop.f32.mrb[0].mxu0
    %v1995 = vadd.f32 0.0, %v1994
    %v1996 = vpop.f32.mrb[0].mxu0
    %v1997 = vadd.f32 0.0, %v1996
    %v1998 = vpop.f32.mrb[0].mxu0
    %v1999 = vadd.f32 0.0, %v1998
    %v2000 = vpop.f32.mrb[0].mxu0
    %v2001 = vadd.f32 0.0, %v2000
    %2002 = vmatprep.mubr.bf16.mxu0 %v873
    %2003 = vmatmul.mubr.bf16.gmra.mrb[0].mxu0 %v872
    %v2004 = vpop.f32.mrb[0].mxu0
    %v2005 = vadd.f32 0.0, %v2004
    %v2006 = vpop.f32.mrb[0].mxu0
    %v2007 = vadd.f32 0.0, %v2006
    %v2008 = vpop.f32.mrb[0].mxu0
    %v2009 = vadd.f32 0.0, %v2008
    %v2010 = vpop.f32.mrb[0].mxu0
    %v2011 = vadd.f32 0.0, %v2010
    %2012 = vmatprep.mubr.bf16.mxu0 %v875
    %2013 = vmatmul.mubr.bf16.gmra.mrb[0].mxu0 %v874
    %v2014 = vpop.f32.mrb[0].mxu0
    %v2015 = vadd.f32 0.0, %v2014
    %v2016 = vpop.f32.mrb[0].mxu0
    %v2017 = vadd.f32 0.0, %v2016
    %v2018 = vpop.f32.mrb[0].mxu0
    %v2019 = vadd.f32 0.0, %v2018
    %v2020 = vpop.f32.mrb[0].mxu0
    %v2021 = vadd.f32 0.0, %v2020
    %2022 = vmatprep.mubr.bf16.mxu0 %v877
    %2023 = vmatmul.mubr.bf16.gmra.mrb[0].mxu0 %v876
    %v2024 = vpop.f32.mrb[0].mxu0
    %v2025 = vadd.f32 0.0, %v2024
    %v2026 = vpop.f32.mrb[0].mxu0
    %v2027 = vadd.f32 0.0, %v2026
    %v2028 = vpop.f32.mrb[0].mxu0
    %v2029 = vadd.f32 0.0, %v2028
    %v2030 = vpop.f32.mrb[0].mxu0
    %v2031 = vadd.f32 0.0, %v2030
    %2032 = vdwg.mxu0
    %v2033 = vpack.c.bf16 %v1493, %v1489
    %v2034 = vpack.c.bf16 %v1503, %v1499
    %v2035 = vpack.c.bf16 %v1513, %v1509
    %v2036 = vpack.c.bf16 %v1523, %v1519
    %v2037 = vpack.c.bf16 %v1533, %v1529
    %v2038 = vpack.c.bf16 %v1543, %v1539
    %v2039 = vpack.c.bf16 %v1553, %v1549
    %v2040 = vpack.c.bf16 %v1563, %v1559
    %v2041 = vpack.c.bf16 %v1686, %v1682
    %v2042 = vpack.c.bf16 %v1696, %v1692
    %v2043 = vpack.c.bf16 %v1706, %v1702
    %v2044 = vpack.c.bf16 %v1716, %v1712
    %v2045 = vpack.c.bf16 %v1726, %v1722
    %v2046 = vpack.c.bf16 %v1736, %v1732
    %v2047 = vpack.c.bf16 %v1746, %v1742
    %v2048 = vpack.c.bf16 %v1756, %v1752
    %v2049 = vpack.c.bf16 %v1879, %v1875
    %v2050 = vpack.c.bf16 %v1889, %v1885
    %v2051 = vpack.c.bf16 %v1899, %v1895
    %v2052 = vpack.c.bf16 %v1909, %v1905
    %v2053 = vpack.c.bf16 %v1919, %v1915
    %v2054 = vpack.c.bf16 %v1929, %v1925
    %v2055 = vpack.c.bf16 %v1939, %v1935
    %v2056 = vpack.c.bf16 %v1949, %v1945
    %2057 = vmatprep.subr.bf16.mxu0 0
    %2058 = vmatpush1.bf16.xpose.msra.mxu0 %v2041
    %2059 = vmatprep.subr.bf16.mxu0 0
    %2060 = vmatpush1.bf16.xpose.msra.mxu0 %v2042
    %2061 = vmatprep.subr.bf16.mxu0 0
    %2062 = vmatpush1.bf16.xpose.msra.mxu0 %v2043
    %2063 = vmatprep.subr.bf16.mxu0 0
    %2064 = vmatpush1.bf16.xpose.msra.mxu0 %v2044
    %2065 = vmatprep.subr.bf16.mxu0 0
    %2066 = vmatpush1.bf16.xpose.msra.mxu0 %v2045
    %2067 = vmatprep.subr.bf16.mxu0 0
    %2068 = vmatpush1.bf16.xpose.msra.mxu0 %v2046
    %2069 = vmatprep.subr.bf16.mxu0 0
    %2070 = vmatpush1.bf16.xpose.msra.mxu0 %v2047
    %2071 = vmatprep.subr.bf16.mxu0 0
    %2072 = vmatpush1.bf16.xpose.msra.mxu0 %v2048
    %2073 = vmatprep.subr.bf16.mxu0 0
    %2074 = vmatpush1.bf16.xpose.msra.mxu0 0
    %2075 = vmatprep.subr.bf16.mxu0 0
    %2076 = vmatpush1.bf16.xpose.msra.mxu0 0
    %2077 = vmatprep.subr.bf16.mxu0 0
    %2078 = vmatpush1.bf16.xpose.msra.mxu0 0
    %2079 = vmatprep.subr.bf16.mxu0 0
    %2080 = vmatpush1.bf16.xpose.msra.mxu0 0
    %2081 = vmatprep.subr.bf16.mxu0 0
    %2082 = vmatpush1.bf16.xpose.msra.mxu0 0
    %2083 = vmatprep.subr.bf16.mxu0 0
    %2084 = vmatpush1.bf16.xpose.msra.mxu0 0
    %2085 = vmatprep.subr.bf16.mxu0 0
    %2086 = vmatpush1.bf16.xpose.msra.mxu0 0
    %2087 = vmatprep.subr.bf16.mxu0 0
    %2088 = vmatpush1.bf16.xpose.msra.mxu0 0
    %2089 = vmatprep.mubr.bf16.mxu0 0
    %2090 = vmatmul.mubr.bf16.gmra.mrb[0].mxu0 %v2033
    %v2091 = vpop.f32.mrb[0].mxu0
    %v2092 = vadd.f32 0.0, %v2091
    %v2093 = vpop.f32.mrb[0].mxu0
    %v2094 = vpop.f32.mrb[0].mxu0
    %v2095 = vadd.f32 0.0, %v2094
    %v2096 = vpop.f32.mrb[0].mxu0
    %2097 = vmatprep.mubr.bf16.mxu0 0
    %2098 = vmatmul.mubr.bf16.gmra.mrb[0].mxu0 %v2034
    %v2099 = vpop.f32.mrb[0].mxu0
    %v2100 = vadd.f32 0.0, %v2099
    %v2101 = vpop.f32.mrb[0].mxu0
    %v2102 = vpop.f32.mrb[0].mxu0
    %v2103 = vadd.f32 0.0, %v2102
    %v2104 = vpop.f32.mrb[0].mxu0
    %2105 = vmatprep.mubr.bf16.mxu0 0
    %2106 = vmatmul.mubr.bf16.gmra.mrb[0].mxu0 %v2035
    %v2107 = vpop.f32.mrb[0].mxu0
    %v2108 = vadd.f32 0.0, %v2107
    %v2109 = vpop.f32.mrb[0].mxu0
    %v2110 = vpop.f32.mrb[0].mxu0
    %v2111 = vadd.f32 0.0, %v2110
    %v2112 = vpop.f32.mrb[0].mxu0
    %2113 = vmatprep.mubr.bf16.mxu0 0
    %2114 = vmatmul.mubr.bf16.gmra.mrb[0].mxu0 %v2036
    %v2115 = vpop.f32.mrb[0].mxu0
    %v2116 = vadd.f32 0.0, %v2115
    %v2117 = vpop.f32.mrb[0].mxu0
    %v2118 = vpop.f32.mrb[0].mxu0
    %v2119 = vadd.f32 0.0, %v2118
    %v2120 = vpop.f32.mrb[0].mxu0
    %2121 = vmatprep.mubr.bf16.mxu0 0
    %2122 = vmatmul.mubr.bf16.gmra.mrb[0].mxu0 %v2037
    %v2123 = vpop.f32.mrb[0].mxu0
    %v2124 = vadd.f32 0.0, %v2123
    %v2125 = vpop.f32.mrb[0].mxu0
    %v2126 = vpop.f32.mrb[0].mxu0
    %v2127 = vadd.f32 0.0, %v2126
    %v2128 = vpop.f32.mrb[0].mxu0
    %2129 = vmatprep.mubr.bf16.mxu0 0
    %2130 = vmatmul.mubr.bf16.gmra.mrb[0].mxu0 %v2038
    %v2131 = vpop.f32.mrb[0].mxu0
    %v2132 = vadd.f32 0.0, %v2131
    %v2133 = vpop.f32.mrb[0].mxu0
    %v2134 = vpop.f32.mrb[0].mxu0
    %v2135 = vadd.f32 0.0, %v2134
    %v2136 = vpop.f32.mrb[0].mxu0
    %2137 = vmatprep.mubr.bf16.mxu0 0
    %2138 = vmatmul.mubr.bf16.gmra.mrb[0].mxu0 %v2039
    %v2139 = vpop.f32.mrb[0].mxu0
    %v2140 = vadd.f32 0.0, %v2139
    %v2141 = vpop.f32.mrb[0].mxu0
    %v2142 = vpop.f32.mrb[0].mxu0
    %v2143 = vadd.f32 0.0, %v2142
    %v2144 = vpop.f32.mrb[0].mxu0
    %2145 = vmatprep.mubr.bf16.mxu0 0
    %2146 = vmatmul.mubr.bf16.gmra.mrb[0].mxu0 %v2040
    %v2147 = vpop.f32.mrb[0].mxu0
    %v2148 = vadd.f32 0.0, %v2147
    %v2149 = vpop.f32.mrb[0].mxu0
    %v2150 = vpop.f32.mrb[0].mxu0
    %v2151 = vadd.f32 0.0, %v2150
    %v2152 = vpop.f32.mrb[0].mxu0
    %2153 = vdwg.mxu0
    %2154 = vmax.xlane.f32.xlu0 %v2092
    %v2155 = vpop.xlane.xlu0 %2154
    %2156 = vmax.xlane.f32.xlu0 %v2095
    %v2157 = vpop.xlane.xlu0 %2156
    %2158 = vmax.xlane.f32.xlu0 %v2100
    %v2159 = vpop.xlane.xlu0 %2158
    %2160 = vmax.xlane.f32.xlu0 %v2103
    %v2161 = vpop.xlane.xlu0 %2160
    %2162 = vmax.xlane.f32.xlu0 %v2108
    %v2163 = vpop.xlane.xlu0 %2162
    %2164 = vmax.xlane.f32.xlu0 %v2111
    %v2165 = vpop.xlane.xlu0 %2164
    %2166 = vmax.xlane.f32.xlu0 %v2116
    %v2167 = vpop.xlane.xlu0 %2166
    %2168 = vmax.xlane.f32.xlu0 %v2119
    %v2169 = vpop.xlane.xlu0 %2168
    %2170 = vmax.xlane.f32.xlu0 %v2124
    %v2171 = vpop.xlane.xlu0 %2170
    %2172 = vmax.xlane.f32.xlu0 %v2127
    %v2173 = vpop.xlane.xlu0 %2172
    %2174 = vmax.xlane.f32.xlu0 %v2132
    %v2175 = vpop.xlane.xlu0 %2174
    %2176 = vmax.xlane.f32.xlu0 %v2135
    %v2177 = vpop.xlane.xlu0 %2176
    %2178 = vmax.xlane.f32.xlu0 %v2140
    %v2179 = vpop.xlane.xlu0 %2178
    %2180 = vmax.xlane.f32.xlu0 %v2143
    %v2181 = vpop.xlane.xlu0 %2180
    %2182 = vmax.xlane.f32.xlu0 %v2148
    %v2183 = vpop.xlane.xlu0 %2182
    %2184 = vmax.xlane.f32.xlu0 %v2151
    %v2185 = vpop.xlane.xlu0 %2184
    %v2186 = vsub.f32 %v2092, %v2155
    %v2187 = vsub.f32 %v2095, %v2157
    %v2188 = vsub.f32 %v2100, %v2159
    %v2189 = vsub.f32 %v2103, %v2161
    %v2190 = vsub.f32 %v2108, %v2163
    %v2191 = vsub.f32 %v2111, %v2165
    %v2192 = vsub.f32 %v2116, %v2167
    %v2193 = vsub.f32 %v2119, %v2169
    %v2194 = vsub.f32 %v2124, %v2171
    %v2195 = vsub.f32 %v2127, %v2173
    %v2196 = vsub.f32 %v2132, %v2175
    %v2197 = vsub.f32 %v2135, %v2177
    %v2198 = vsub.f32 %v2140, %v2179
    %v2199 = vsub.f32 %v2143, %v2181
    %v2200 = vsub.f32 %v2148, %v2183
    %v2201 = vsub.f32 %v2151, %v2185
    %v2202 = vmul.f32 %v2186, 1.442695
    %v2203 = vpow.pop %v2202
    %v2204 = vmul.f32 %v2187, 1.442695
    %v2205 = vpow.pop %v2204
    %v2206 = vmul.f32 %v2188, 1.442695
    %v2207 = vpow.pop %v2206
    %v2208 = vmul.f32 %v2189, 1.442695
    %v2209 = vpow.pop %v2208
    %v2210 = vmul.f32 %v2190, 1.442695
    %v2211 = vpow.pop %v2210
    %v2212 = vmul.f32 %v2191, 1.442695
    %v2213 = vpow.pop %v2212
    %v2214 = vmul.f32 %v2192, 1.442695
    %v2215 = vpow.pop %v2214
    %v2216 = vmul.f32 %v2193, 1.442695
    %v2217 = vpow.pop %v2216
    %v2218 = vmul.f32 %v2194, 1.442695
    %v2219 = vpow.pop %v2218
    %v2220 = vmul.f32 %v2195, 1.442695
    %v2221 = vpow.pop %v2220
    %v2222 = vmul.f32 %v2196, 1.442695
    %v2223 = vpow.pop %v2222
    %v2224 = vmul.f32 %v2197, 1.442695
    %v2225 = vpow.pop %v2224
    %v2226 = vmul.f32 %v2198, 1.442695
    %v2227 = vpow.pop %v2226
    %v2228 = vmul.f32 %v2199, 1.442695
    %v2229 = vpow.pop %v2228
    %v2230 = vmul.f32 %v2200, 1.442695
    %v2231 = vpow.pop %v2230
    %v2232 = vmul.f32 %v2201, 1.442695
    %v2233 = vpow.pop %v2232
    %2234 = vadd.xlane.f32.xlu0 %v2203
    %v2235 = vpop.xlane.xlu0 %2234
    %2236 = vadd.xlane.f32.xlu0 %v2205
    %v2237 = vpop.xlane.xlu0 %2236
    %2238 = vadd.xlane.f32.xlu0 %v2207
    %v2239 = vpop.xlane.xlu0 %2238
    %2240 = vadd.xlane.f32.xlu0 %v2209
    %v2241 = vpop.xlane.xlu0 %2240
    %2242 = vadd.xlane.f32.xlu0 %v2211
    %v2243 = vpop.xlane.xlu0 %2242
    %2244 = vadd.xlane.f32.xlu0 %v2213
    %v2245 = vpop.xlane.xlu0 %2244
    %2246 = vadd.xlane.f32.xlu0 %v2215
    %v2247 = vpop.xlane.xlu0 %2246
    %2248 = vadd.xlane.f32.xlu0 %v2217
    %v2249 = vpop.xlane.xlu0 %2248
    %2250 = vadd.xlane.f32.xlu0 %v2219
    %v2251 = vpop.xlane.xlu0 %2250
    %2252 = vadd.xlane.f32.xlu0 %v2221
    %v2253 = vpop.xlane.xlu0 %2252
    %2254 = vadd.xlane.f32.xlu0 %v2223
    %v2255 = vpop.xlane.xlu0 %2254
    %2256 = vadd.xlane.f32.xlu0 %v2225
    %v2257 = vpop.xlane.xlu0 %2256
    %2258 = vadd.xlane.f32.xlu0 %v2227
    %v2259 = vpop.xlane.xlu0 %2258
    %2260 = vadd.xlane.f32.xlu0 %v2229
    %v2261 = vpop.xlane.xlu0 %2260
    %2262 = vadd.xlane.f32.xlu0 %v2231
    %v2263 = vpop.xlane.xlu0 %2262
    %2264 = vadd.xlane.f32.xlu0 %v2233
    %v2265 = vpop.xlane.xlu0 %2264
    %v2266 = vrcp.pop %v2235
    %v2267 = vrcp.pop %v2237
    %v2268 = vrcp.pop %v2239
    %v2269 = vrcp.pop %v2241
    %v2270 = vrcp.pop %v2243
    %v2271 = vrcp.pop %v2245
    %v2272 = vrcp.pop %v2247
    %v2273 = vrcp.pop %v2249
    %v2274 = vrcp.pop %v2251
    %v2275 = vrcp.pop %v2253
    %v2276 = vrcp.pop %v2255
    %v2277 = vrcp.pop %v2257
    %v2278 = vrcp.pop %v2259
    %v2279 = vrcp.pop %v2261
    %v2280 = vrcp.pop %v2263
    %v2281 = vrcp.pop %v2265
    %v2282 = vmul.f32 %v2203, %v2266
    %v2283 = vmul.f32 %v2205, %v2267
    %v2284 = vmul.f32 %v2207, %v2268
    %v2285 = vmul.f32 %v2209, %v2269
    %v2286 = vmul.f32 %v2211, %v2270
    %v2287 = vmul.f32 %v2213, %v2271
    %v2288 = vmul.f32 %v2215, %v2272
    %v2289 = vmul.f32 %v2217, %v2273
    %v2290 = vmul.f32 %v2219, %v2274
    %v2291 = vmul.f32 %v2221, %v2275
    %v2292 = vmul.f32 %v2223, %v2276
    %v2293 = vmul.f32 %v2225, %v2277
    %v2294 = vmul.f32 %v2227, %v2278
    %v2295 = vmul.f32 %v2229, %v2279
    %v2296 = vmul.f32 %v2231, %v2280
    %v2297 = vmul.f32 %v2233, %v2281
    %v2298 = vpack.c.bf16 %v2283, %v2282
    %v2299 = vpack.c.bf16 %v2285, %v2284
    %v2300 = vpack.c.bf16 %v2287, %v2286
    %v2301 = vpack.c.bf16 %v2289, %v2288
    %v2302 = vpack.c.bf16 %v2291, %v2290
    %v2303 = vpack.c.bf16 %v2293, %v2292
    %v2304 = vpack.c.bf16 %v2295, %v2294
    %v2305 = vpack.c.bf16 %v2297, %v2296
    %2306 = vmatprep.subr.bf16.mxu0 0
    %2307 = vmatpush1.bf16.msra.mxu0 %v2049
    %2308 = vmatprep.subr.bf16.mxu0 0
    %2309 = vmatpush1.bf16.msra.mxu0 %v2050
    %2310 = vmatprep.subr.bf16.mxu0 0
    %2311 = vmatpush1.bf16.msra.mxu0 %v2051
    %2312 = vmatprep.subr.bf16.mxu0 0
    %2313 = vmatpush1.bf16.msra.mxu0 %v2052
    %2314 = vmatprep.subr.bf16.mxu0 0
    %2315 = vmatpush1.bf16.msra.mxu0 %v2053
    %2316 = vmatprep.subr.bf16.mxu0 0
    %2317 = vmatpush1.bf16.msra.mxu0 %v2054
    %2318 = vmatprep.subr.bf16.mxu0 0
    %2319 = vmatpush1.bf16.msra.mxu0 %v2055
    %2320 = vmatprep.subr.bf16.mxu0 0
    %2321 = vmatpush1.bf16.msra.mxu0 %v2056
    %2322 = vmatprep.subr.bf16.mxu0 0
    %2323 = vmatpush1.bf16.msra.mxu0 0
    %2324 = vmatprep.subr.bf16.mxu0 0
    %2325 = vmatpush1.bf16.msra.mxu0 0
    %2326 = vmatprep.subr.bf16.mxu0 0
    %2327 = vmatpush1.bf16.msra.mxu0 0
    %2328 = vmatprep.subr.bf16.mxu0 0
    %2329 = vmatpush1.bf16.msra.mxu0 0
    %2330 = vmatprep.subr.bf16.mxu0 0
    %2331 = vmatpush1.bf16.msra.mxu0 0
    %2332 = vmatprep.subr.bf16.mxu0 0
    %2333 = vmatpush1.bf16.msra.mxu0 0
    %2334 = vmatprep.subr.bf16.mxu0 0
    %2335 = vmatpush1.bf16.msra.mxu0 0
    %2336 = vmatprep.subr.bf16.mxu0 0
    %2337 = vmatpush1.bf16.msra.mxu0 0
    %2338 = vmatprep.mubr.bf16.mxu0 0
    %2339 = vmatmul.mubr.bf16.gmra.mrb[0].mxu0 %v2298
    %v2340 = vpop.f32.mrb[0].mxu0
    %v2341 = vadd.f32 0.0, %v2340
    %v2342 = vpop.f32.mrb[0].mxu0
    %v2343 = vpop.f32.mrb[0].mxu0
    %v2344 = vadd.f32 0.0, %v2343
    %v2345 = vpop.f32.mrb[0].mxu0
    %2346 = vmatprep.mubr.bf16.mxu0 0
    %2347 = vmatmul.mubr.bf16.gmra.mrb[0].mxu0 %v2299
    %v2348 = vpop.f32.mrb[0].mxu0
    %v2349 = vadd.f32 0.0, %v2348
    %v2350 = vpop.f32.mrb[0].mxu0
    %v2351 = vpop.f32.mrb[0].mxu0
    %v2352 = vadd.f32 0.0, %v2351
    %v2353 = vpop.f32.mrb[0].mxu0
    %2354 = vmatprep.mubr.bf16.mxu0 0
    %2355 = vmatmul.mubr.bf16.gmra.mrb[0].mxu0 %v2300
    %v2356 = vpop.f32.mrb[0].mxu0
    %v2357 = vadd.f32 0.0, %v2356
    %v2358 = vpop.f32.mrb[0].mxu0
    %v2359 = vpop.f32.mrb[0].mxu0
    %v2360 = vadd.f32 0.0, %v2359
    %v2361 = vpop.f32.mrb[0].mxu0
    %2362 = vmatprep.mubr.bf16.mxu0 0
    %2363 = vmatmul.mubr.bf16.gmra.mrb[0].mxu0 %v2301
    %v2364 = vpop.f32.mrb[0].mxu0
    %v2365 = vadd.f32 0.0, %v2364
    %v2366 = vpop.f32.mrb[0].mxu0
    %v2367 = vpop.f32.mrb[0].mxu0
    %v2368 = vadd.f32 0.0, %v2367
    %v2369 = vpop.f32.mrb[0].mxu0
    %2370 = vmatprep.mubr.bf16.mxu0 0
    %2371 = vmatmul.mubr.bf16.gmra.mrb[0].mxu0 %v2302
    %v2372 = vpop.f32.mrb[0].mxu0
    %v2373 = vadd.f32 0.0, %v2372
    %v2374 = vpop.f32.mrb[0].mxu0
    %v2375 = vpop.f32.mrb[0].mxu0
    %v2376 = vadd.f32 0.0, %v2375
    %v2377 = vpop.f32.mrb[0].mxu0
    %2378 = vmatprep.mubr.bf16.mxu0 0
    %2379 = vmatmul.mubr.bf16.gmra.mrb[0].mxu0 %v2303
    %v2380 = vpop.f32.mrb[0].mxu0
    %v2381 = vadd.f32 0.0, %v2380
    %v2382 = vpop.f32.mrb[0].mxu0
    %v2383 = vpop.f32.mrb[0].mxu0
    %v2384 = vadd.f32 0.0, %v2383
    %v2385 = vpop.f32.mrb[0].mxu0
    %2386 = vmatprep.mubr.bf16.mxu0 0
    %2387 = vmatmul.mubr.bf16.gmra.mrb[0].mxu0 %v2304
    %v2388 = vpop.f32.mrb[0].mxu0
    %v2389 = vadd.f32 0.0, %v2388
    %v2390 = vpop.f32.mrb[0].mxu0
    %v2391 = vpop.f32.mrb[0].mxu0
    %v2392 = vadd.f32 0.0, %v2391
    %v2393 = vpop.f32.mrb[0].mxu0
    %2394 = vmatprep.mubr.bf16.mxu0 0
    %2395 = vmatmul.mubr.bf16.gmra.mrb[0].mxu0 %v2305
    %v2396 = vpop.f32.mrb[0].mxu0
    %v2397 = vadd.f32 0.0, %v2396
    %v2398 = vpop.f32.mrb[0].mxu0
    %v2399 = vpop.f32.mrb[0].mxu0
    %v2400 = vadd.f32 0.0, %v2399
    %v2401 = vpop.f32.mrb[0].mxu0
    %2402 = vdwg.mxu0
    %v2403 = vpack.c.bf16 %v1495, %v1491
    %v2404 = vpack.c.bf16 %v1505, %v1501
    %v2405 = vpack.c.bf16 %v1515, %v1511
    %v2406 = vpack.c.bf16 %v1525, %v1521
    %v2407 = vpack.c.bf16 %v1535, %v1531
    %v2408 = vpack.c.bf16 %v1545, %v1541
    %v2409 = vpack.c.bf16 %v1555, %v1551
    %v2410 = vpack.c.bf16 %v1565, %v1561
    %v2411 = vpack.c.bf16 %v1688, %v1684
    %v2412 = vpack.c.bf16 %v1698, %v1694
    %v2413 = vpack.c.bf16 %v1708, %v1704
    %v2414 = vpack.c.bf16 %v1718, %v1714
    %v2415 = vpack.c.bf16 %v1728, %v1724
    %v2416 = vpack.c.bf16 %v1738, %v1734
    %v2417 = vpack.c.bf16 %v1748, %v1744
    %v2418 = vpack.c.bf16 %v1758, %v1754
    %v2419 = vpack.c.bf16 %v1881, %v1877
    %v2420 = vpack.c.bf16 %v1891, %v1887
    %v2421 = vpack.c.bf16 %v1901, %v1897
    %v2422 = vpack.c.bf16 %v1911, %v1907
    %v2423 = vpack.c.bf16 %v1921, %v1917
    %v2424 = vpack.c.bf16 %v1931, %v1927
    %v2425 = vpack.c.bf16 %v1941, %v1937
    %v2426 = vpack.c.bf16 %v1951, %v1947
    %2427 = vmatprep.subr.bf16.mxu0 0
    %2428 = vmatpush1.bf16.xpose.msra.mxu0 %v2411
    %2429 = vmatprep.subr.bf16.mxu0 0
    %2430 = vmatpush1.bf16.xpose.msra.mxu0 %v2412
    %2431 = vmatprep.subr.bf16.mxu0 0
    %2432 = vmatpush1.bf16.xpose.msra.mxu0 %v2413
    %2433 = vmatprep.subr.bf16.mxu0 0
    %2434 = vmatpush1.bf16.xpose.msra.mxu0 %v2414
    %2435 = vmatprep.subr.bf16.mxu0 0
    %2436 = vmatpush1.bf16.xpose.msra.mxu0 %v2415
    %2437 = vmatprep.subr.bf16.mxu0 0
    %2438 = vmatpush1.bf16.xpose.msra.mxu0 %v2416
    %2439 = vmatprep.subr.bf16.mxu0 0
    %2440 = vmatpush1.bf16.xpose.msra.mxu0 %v2417
    %2441 = vmatprep.subr.bf16.mxu0 0
    %2442 = vmatpush1.bf16.xpose.msra.mxu0 %v2418
    %2443 = vmatprep.subr.bf16.mxu0 0
    %2444 = vmatpush1.bf16.xpose.msra.mxu0 0
    %2445 = vmatprep.subr.bf16.mxu0 0
    %2446 = vmatpush1.bf16.xpose.msra.mxu0 0
    %2447 = vmatprep.subr.bf16.mxu0 0
    %2448 = vmatpush1.bf16.xpose.msra.mxu0 0
    %2449 = vmatprep.subr.bf16.mxu0 0
    %2450 = vmatpush1.bf16.xpose.msra.mxu0 0
    %2451 = vmatprep.subr.bf16.mxu0 0
    %2452 = vmatpush1.bf16.xpose.msra.mxu0 0
    %2453 = vmatprep.subr.bf16.mxu0 0
    %2454 = vmatpush1.bf16.xpose.msra.mxu0 0
    %2455 = vmatprep.subr.bf16.mxu0 0
    %2456 = vmatpush1.bf16.xpose.msra.mxu0 0
    %2457 = vmatprep.subr.bf16.mxu0 0
    %2458 = vmatpush1.bf16.xpose.msra.mxu0 0
    %2459 = vmatprep.mubr.bf16.mxu0 0
    %2460 = vmatmul.mubr.bf16.gmra.mrb[0].mxu0 %v2403
    %v2461 = vpop.f32.mrb[0].mxu0
    %v2462 = vadd.f32 0.0, %v2461
    %v2463 = vpop.f32.mrb[0].mxu0
    %v2464 = vpop.f32.mrb[0].mxu0
    %v2465 = vadd.f32 0.0, %v2464
    %v2466 = vpop.f32.mrb[0].mxu0
    %2467 = vmatprep.mubr.bf16.mxu0 0
    %2468 = vmatmul.mubr.bf16.gmra.mrb[0].mxu0 %v2404
    %v2469 = vpop.f32.mrb[0].mxu0
    %v2470 = vadd.f32 0.0, %v2469
    %v2471 = vpop.f32.mrb[0].mxu0
    %v2472 = vpop.f32.mrb[0].mxu0
    %v2473 = vadd.f32 0.0, %v2472
    %v2474 = vpop.f32.mrb[0].mxu0
    %2475 = vmatprep.mubr.bf16.mxu0 0
    %2476 = vmatmul.mubr.bf16.gmra.mrb[0].mxu0 %v2405
    %v2477 = vpop.f32.mrb[0].mxu0
    %v2478 = vadd.f32 0.0, %v2477
    %v2479 = vpop.f32.mrb[0].mxu0
    %v2480 = vpop.f32.mrb[0].mxu0
    %v2481 = vadd.f32 0.0, %v2480
    %v2482 = vpop.f32.mrb[0].mxu0
    %2483 = vmatprep.mubr.bf16.mxu0 0
    %2484 = vmatmul.mubr.bf16.gmra.mrb[0].mxu0 %v2406
    %v2485 = vpop.f32.mrb[0].mxu0
    %v2486 = vadd.f32 0.0, %v2485
    %v2487 = vpop.f32.mrb[0].mxu0
    %v2488 = vpop.f32.mrb[0].mxu0
    %v2489 = vadd.f32 0.0, %v2488
    %v2490 = vpop.f32.mrb[0].mxu0
    %2491 = vmatprep.mubr.bf16.mxu0 0
    %2492 = vmatmul.mubr.bf16.gmra.mrb[0].mxu0 %v2407
    %v2493 = vpop.f32.mrb[0].mxu0
    %v2494 = vadd.f32 0.0, %v2493
    %v2495 = vpop.f32.mrb[0].mxu0
    %v2496 = vpop.f32.mrb[0].mxu0
    %v2497 = vadd.f32 0.0, %v2496
    %v2498 = vpop.f32.mrb[0].mxu0
    %2499 = vmatprep.mubr.bf16.mxu0 0
    %2500 = vmatmul.mubr.bf16.gmra.mrb[0].mxu0 %v2408
    %v2501 = vpop.f32.mrb[0].mxu0
    %v2502 = vadd.f32 0.0, %v2501
    %v2503 = vpop.f32.mrb[0].mxu0
    %v2504 = vpop.f32.mrb[0].mxu0
    %v2505 = vadd.f32 0.0, %v2504
    %v2506 = vpop.f32.mrb[0].mxu0
    %2507 = vmatprep.mubr.bf16.mxu0 0
    %2508 = vmatmul.mubr.bf16.gmra.mrb[0].mxu0 %v2409
    %v2509 = vpop.f32.mrb[0].mxu0
    %v2510 = vadd.f32 0.0, %v2509
    %v2511 = vpop.f32.mrb[0].mxu0
    %v2512 = vpop.f32.mrb[0].mxu0
    %v2513 = vadd.f32 0.0, %v2512
    %v2514 = vpop.f32.mrb[0].mxu0
    %2515 = vmatprep.mubr.bf16.mxu0 0
    %2516 = vmatmul.mubr.bf16.gmra.mrb[0].mxu0 %v2410
    %v2517 = vpop.f32.mrb[0].mxu0
    %v2518 = vadd.f32 0.0, %v2517
    %v2519 = vpop.f32.mrb[0].mxu0
    %v2520 = vpop.f32.mrb[0].mxu0
    %v2521 = vadd.f32 0.0, %v2520
    %v2522 = vpop.f32.mrb[0].mxu0
    %2523 = vdwg.mxu0
    %2524 = vmax.xlane.f32.xlu0 %v2462
    %v2525 = vpop.xlane.xlu0 %2524
    %2526 = vmax.xlane.f32.xlu0 %v2465
    %v2527 = vpop.xlane.xlu0 %2526
    %2528 = vmax.xlane.f32.xlu0 %v2470
    %v2529 = vpop.xlane.xlu0 %2528
    %2530 = vmax.xlane.f32.xlu0 %v2473
    %v2531 = vpop.xlane.xlu0 %2530
    %2532 = vmax.xlane.f32.xlu0 %v2478
    %v2533 = vpop.xlane.xlu0 %2532
    %2534 = vmax.xlane.f32.xlu0 %v2481
    %v2535 = vpop.xlane.xlu0 %2534
    %2536 = vmax.xlane.f32.xlu0 %v2486
    %v2537 = vpop.xlane.xlu0 %2536
    %2538 = vmax.xlane.f32.xlu0 %v2489
    %v2539 = vpop.xlane.xlu0 %2538
    %2540 = vmax.xlane.f32.xlu0 %v2494
    %v2541 = vpop.xlane.xlu0 %2540
    %2542 = vmax.xlane.f32.xlu0 %v2497
    %v2543 = vpop.xlane.xlu0 %2542
    %2544 = vmax.xlane.f32.xlu0 %v2502
    %v2545 = vpop.xlane.xlu0 %2544
    %2546 = vmax.xlane.f32.xlu0 %v2505
    %v2547 = vpop.xlane.xlu0 %2546
    %2548 = vmax.xlane.f32.xlu0 %v2510
    %v2549 = vpop.xlane.xlu0 %2548
    %2550 = vmax.xlane.f32.xlu0 %v2513
    %v2551 = vpop.xlane.xlu0 %2550
    %2552 = vmax.xlane.f32.xlu0 %v2518
    %v2553 = vpop.xlane.xlu0 %2552
    %2554 = vmax.xlane.f32.xlu0 %v2521
    %v2555 = vpop.xlane.xlu0 %2554
    %v2556 = vsub.f32 %v2462, %v2525
    %v2557 = vsub.f32 %v2465, %v2527
    %v2558 = vsub.f32 %v2470, %v2529
    %v2559 = vsub.f32 %v2473, %v2531
    %v2560 = vsub.f32 %v2478, %v2533
    %v2561 = vsub.f32 %v2481, %v2535
    %v2562 = vsub.f32 %v2486, %v2537
    %v2563 = vsub.f32 %v2489, %v2539
    %v2564 = vsub.f32 %v2494, %v2541
    %v2565 = vsub.f32 %v2497, %v2543
    %v2566 = vsub.f32 %v2502, %v2545
    %v2567 = vsub.f32 %v2505, %v2547
    %v2568 = vsub.f32 %v2510, %v2549
    %v2569 = vsub.f32 %v2513, %v2551
    %v2570 = vsub.f32 %v2518, %v2553
    %v2571 = vsub.f32 %v2521, %v2555
    %v2572 = vmul.f32 %v2556, 1.442695
    %v2573 = vpow.pop %v2572
    %v2574 = vmul.f32 %v2557, 1.442695
    %v2575 = vpow.pop %v2574
    %v2576 = vmul.f32 %v2558, 1.442695
    %v2577 = vpow.pop %v2576
    %v2578 = vmul.f32 %v2559, 1.442695
    %v2579 = vpow.pop %v2578
    %v2580 = vmul.f32 %v2560, 1.442695
    %v2581 = vpow.pop %v2580
    %v2582 = vmul.f32 %v2561, 1.442695
    %v2583 = vpow.pop %v2582
    %v2584 = vmul.f32 %v2562, 1.442695
    %v2585 = vpow.pop %v2584
    %v2586 = vmul.f32 %v2563, 1.442695
    %v2587 = vpow.pop %v2586
    %v2588 = vmul.f32 %v2564, 1.442695
    %v2589 = vpow.pop %v2588
    %v2590 = vmul.f32 %v2565, 1.442695
    %v2591 = vpow.pop %v2590
    %v2592 = vmul.f32 %v2566, 1.442695
    %v2593 = vpow.pop %v2592
    %v2594 = vmul.f32 %v2567, 1.442695
    %v2595 = vpow.pop %v2594
    %v2596 = vmul.f32 %v2568, 1.442695
    %v2597 = vpow.pop %v2596
    %v2598 = vmul.f32 %v2569, 1.442695
    %v2599 = vpow.pop %v2598
    %v2600 = vmul.f32 %v2570, 1.442695
    %v2601 = vpow.pop %v2600
    %v2602 = vmul.f32 %v2571, 1.442695
    %v2603 = vpow.pop %v2602
    %2604 = vadd.xlane.f32.xlu0 %v2573
    %v2605 = vpop.xlane.xlu0 %2604
    %2606 = vadd.xlane.f32.xlu0 %v2575
    %v2607 = vpop.xlane.xlu0 %2606
    %2608 = vadd.xlane.f32.xlu0 %v2577
    %v2609 = vpop.xlane.xlu0 %2608
    %2610 = vadd.xlane.f32.xlu0 %v2579
    %v2611 = vpop.xlane.xlu0 %2610
    %2612 = vadd.xlane.f32.xlu0 %v2581
    %v2613 = vpop.xlane.xlu0 %2612
    %2614 = vadd.xlane.f32.xlu0 %v2583
    %v2615 = vpop.xlane.xlu0 %2614
    %2616 = vadd.xlane.f32.xlu0 %v2585
    %v2617 = vpop.xlane.xlu0 %2616
    %2618 = vadd.xlane.f32.xlu0 %v2587
    %v2619 = vpop.xlane.xlu0 %2618
    %2620 = vadd.xlane.f32.xlu0 %v2589
    %v2621 = vpop.xlane.xlu0 %2620
    %2622 = vadd.xlane.f32.xlu0 %v2591
    %v2623 = vpop.xlane.xlu0 %2622
    %2624 = vadd.xlane.f32.xlu0 %v2593
    %v2625 = vpop.xlane.xlu0 %2624
    %2626 = vadd.xlane.f32.xlu0 %v2595
    %v2627 = vpop.xlane.xlu0 %2626
    %2628 = vadd.xlane.f32.xlu0 %v2597
    %v2629 = vpop.xlane.xlu0 %2628
    %2630 = vadd.xlane.f32.xlu0 %v2599
    %v2631 = vpop.xlane.xlu0 %2630
    %2632 = vadd.xlane.f32.xlu0 %v2601
    %v2633 = vpop.xlane.xlu0 %2632
    %2634 = vadd.xlane.f32.xlu0 %v2603
    %v2635 = vpop.xlane.xlu0 %2634
    %v2636 = vrcp.pop %v2605
    %v2637 = vrcp.pop %v2607
    %v2638 = vrcp.pop %v2609
    %v2639 = vrcp.pop %v2611
    %v2640 = vrcp.pop %v2613
    %v2641 = vrcp.pop %v2615
    %v2642 = vrcp.pop %v2617
    %v2643 = vrcp.pop %v2619
    %v2644 = vrcp.pop %v2621
    %v2645 = vrcp.pop %v2623
    %v2646 = vrcp.pop %v2625
    %v2647 = vrcp.pop %v2627
    %v2648 = vrcp.pop %v2629
    %v2649 = vrcp.pop %v2631
    %v2650 = vrcp.pop %v2633
    %v2651 = vrcp.pop %v2635
    %v2652 = vmul.f32 %v2573, %v2636
    %v2653 = vmul.f32 %v2575, %v2637
    %v2654 = vmul.f32 %v2577, %v2638
    %v2655 = vmul.f32 %v2579, %v2639
    %v2656 = vmul.f32 %v2581, %v2640
    %v2657 = vmul.f32 %v2583, %v2641
    %v2658 = vmul.f32 %v2585, %v2642
    %v2659 = vmul.f32 %v2587, %v2643
    %v2660 = vmul.f32 %v2589, %v2644
    %v2661 = vmul.f32 %v2591, %v2645
    %v2662 = vmul.f32 %v2593, %v2646
    %v2663 = vmul.f32 %v2595, %v2647
    %v2664 = vmul.f32 %v2597, %v2648
    %v2665 = vmul.f32 %v2599, %v2649
    %v2666 = vmul.f32 %v2601, %v2650
    %v2667 = vmul.f32 %v2603, %v2651
    %v2668 = vpack.c.bf16 %v2653, %v2652
    %v2669 = vpack.c.bf16 %v2655, %v2654
    %v2670 = vpack.c.bf16 %v2657, %v2656
    %v2671 = vpack.c.bf16 %v2659, %v2658
    %v2672 = vpack.c.bf16 %v2661, %v2660
    %v2673 = vpack.c.bf16 %v2663, %v2662
    %v2674 = vpack.c.bf16 %v2665, %v2664
    %v2675 = vpack.c.bf16 %v2667, %v2666
    %2676 = vmatprep.subr.bf16.mxu0 0
    %2677 = vmatpush1.bf16.msra.mxu0 %v2419
    %2678 = vmatprep.subr.bf16.mxu0 0
    %2679 = vmatpush1.bf16.msra.mxu0 %v2420
    %2680 = vmatprep.subr.bf16.mxu0 0
    %2681 = vmatpush1.bf16.msra.mxu0 %v2421
    %2682 = vmatprep.subr.bf16.mxu0 0
    %2683 = vmatpush1.bf16.msra.mxu0 %v2422
    %2684 = vmatprep.subr.bf16.mxu0 0
    %2685 = vmatpush1.bf16.msra.mxu0 %v2423
    %2686 = vmatprep.subr.bf16.mxu0 0
    %2687 = vmatpush1.bf16.msra.mxu0 %v2424
    %2688 = vmatprep.subr.bf16.mxu0 0
    %2689 = vmatpush1.bf16.msra.mxu0 %v2425
    %2690 = vmatprep.subr.bf16.mxu0 0
    %2691 = vmatpush1.bf16.msra.mxu0 %v2426
    %2692 = vmatprep.subr.bf16.mxu0 0
    %2693 = vmatpush1.bf16.msra.mxu0 0
    %2694 = vmatprep.subr.bf16.mxu0 0
    %2695 = vmatpush1.bf16.msra.mxu0 0
    %2696 = vmatprep.subr.bf16.mxu0 0
    %2697 = vmatpush1.bf16.msra.mxu0 0
    %2698 = vmatprep.subr.bf16.mxu0 0
    %2699 = vmatpush1.bf16.msra.mxu0 0
    %2700 = vmatprep.subr.bf16.mxu0 0
    %2701 = vmatpush1.bf16.msra.mxu0 0
    %2702 = vmatprep.subr.bf16.mxu0 0
    %2703 = vmatpush1.bf16.msra.mxu0 0
    %2704 = vmatprep.subr.bf16.mxu0 0
    %2705 = vmatpush1.bf16.msra.mxu0 0
    %2706 = vmatprep.subr.bf16.mxu0 0
    %2707 = vmatpush1.bf16.msra.mxu0 0
    %2708 = vmatprep.mubr.bf16.mxu0 0
    %2709 = vmatmul.mubr.bf16.gmra.mrb[0].mxu0 %v2668
    %v2710 = vpop.f32.mrb[0].mxu0
    %v2711 = vadd.f32 0.0, %v2710
    %v2712 = vpop.f32.mrb[0].mxu0
    %v2713 = vpop.f32.mrb[0].mxu0
    %v2714 = vadd.f32 0.0, %v2713
    %v2715 = vpop.f32.mrb[0].mxu0
    %2716 = vmatprep.mubr.bf16.mxu0 0
    %2717 = vmatmul.mubr.bf16.gmra.mrb[0].mxu0 %v2669
    %v2718 = vpop.f32.mrb[0].mxu0
    %v2719 = vadd.f32 0.0, %v2718
    %v2720 = vpop.f32.mrb[0].mxu0
    %v2721 = vpop.f32.mrb[0].mxu0
    %v2722 = vadd.f32 0.0, %v2721
    %v2723 = vpop.f32.mrb[0].mxu0
    %2724 = vmatprep.mubr.bf16.mxu0 0
    %2725 = vmatmul.mubr.bf16.gmra.mrb[0].mxu0 %v2670
    %v2726 = vpop.f32.mrb[0].mxu0
    %v2727 = vadd.f32 0.0, %v2726
    %v2728 = vpop.f32.mrb[0].mxu0
    %v2729 = vpop.f32.mrb[0].mxu0
    %v2730 = vadd.f32 0.0, %v2729
    %v2731 = vpop.f32.mrb[0].mxu0
    %2732 = vmatprep.mubr.bf16.mxu0 0
    %2733 = vmatmul.mubr.bf16.gmra.mrb[0].mxu0 %v2671
    %v2734 = vpop.f32.mrb[0].mxu0
    %v2735 = vadd.f32 0.0, %v2734
    %v2736 = vpop.f32.mrb[0].mxu0
    %v2737 = vpop.f32.mrb[0].mxu0
    %v2738 = vadd.f32 0.0, %v2737
    %v2739 = vpop.f32.mrb[0].mxu0
    %2740 = vmatprep.mubr.bf16.mxu0 0
    %2741 = vmatmul.mubr.bf16.gmra.mrb[0].mxu0 %v2672
    %v2742 = vpop.f32.mrb[0].mxu0
    %v2743 = vadd.f32 0.0, %v2742
    %v2744 = vpop.f32.mrb[0].mxu0
    %v2745 = vpop.f32.mrb[0].mxu0
    %v2746 = vadd.f32 0.0, %v2745
    %v2747 = vpop.f32.mrb[0].mxu0
    %2748 = vmatprep.mubr.bf16.mxu0 0
    %2749 = vmatmul.mubr.bf16.gmra.mrb[0].mxu0 %v2673
    %v2750 = vpop.f32.mrb[0].mxu0
    %v2751 = vadd.f32 0.0, %v2750
    %v2752 = vpop.f32.mrb[0].mxu0
    %v2753 = vpop.f32.mrb[0].mxu0
    %v2754 = vadd.f32 0.0, %v2753
    %v2755 = vpop.f32.mrb[0].mxu0
    %2756 = vmatprep.mubr.bf16.mxu0 0
    %2757 = vmatmul.mubr.bf16.gmra.mrb[0].mxu0 %v2674
    %v2758 = vpop.f32.mrb[0].mxu0
    %v2759 = vadd.f32 0.0, %v2758
    %v2760 = vpop.f32.mrb[0].mxu0
    %v2761 = vpop.f32.mrb[0].mxu0
    %v2762 = vadd.f32 0.0, %v2761
    %v2763 = vpop.f32.mrb[0].mxu0
    %2764 = vmatprep.mubr.bf16.mxu0 0
    %2765 = vmatmul.mubr.bf16.gmra.mrb[0].mxu0 %v2675
    %v2766 = vpop.f32.mrb[0].mxu0
    %v2767 = vadd.f32 0.0, %v2766
    %v2768 = vpop.f32.mrb[0].mxu0
    %v2769 = vpop.f32.mrb[0].mxu0
    %v2770 = vadd.f32 0.0, %v2769
    %v2771 = vpop.f32.mrb[0].mxu0
    %2772 = vdwg.mxu0
    %v2773 = vpack.c.bf16 %v1573, %v1569
    %v2774 = vpack.c.bf16 %v1583, %v1579
    %v2775 = vpack.c.bf16 %v1593, %v1589
    %v2776 = vpack.c.bf16 %v1603, %v1599
    %v2777 = vpack.c.bf16 %v1613, %v1609
    %v2778 = vpack.c.bf16 %v1623, %v1619
    %v2779 = vpack.c.bf16 %v1633, %v1629
    %v2780 = vpack.c.bf16 %v1643, %v1639
    %v2781 = vpack.c.bf16 %v1766, %v1762
    %v2782 = vpack.c.bf16 %v1776, %v1772
    %v2783 = vpack.c.bf16 %v1786, %v1782
    %v2784 = vpack.c.bf16 %v1796, %v1792
    %v2785 = vpack.c.bf16 %v1806, %v1802
    %v2786 = vpack.c.bf16 %v1816, %v1812
    %v2787 = vpack.c.bf16 %v1826, %v1822
    %v2788 = vpack.c.bf16 %v1836, %v1832
    %v2789 = vpack.c.bf16 %v1959, %v1955
    %v2790 = vpack.c.bf16 %v1969, %v1965
    %v2791 = vpack.c.bf16 %v1979, %v1975
    %v2792 = vpack.c.bf16 %v1989, %v1985
    %v2793 = vpack.c.bf16 %v1999, %v1995
    %v2794 = vpack.c.bf16 %v2009, %v2005
    %v2795 = vpack.c.bf16 %v2019, %v2015
    %v2796 = vpack.c.bf16 %v2029, %v2025
    %2797 = vmatprep.subr.bf16.mxu0 0
    %2798 = vmatpush1.bf16.xpose.msra.mxu0 %v2781
    %2799 = vmatprep.subr.bf16.mxu0 0
    %2800 = vmatpush1.bf16.xpose.msra.mxu0 %v2782
    %2801 = vmatprep.subr.bf16.mxu0 0
    %2802 = vmatpush1.bf16.xpose.msra.mxu0 %v2783
    %2803 = vmatprep.subr.bf16.mxu0 0
    %2804 = vmatpush1.bf16.xpose.msra.mxu0 %v2784
    %2805 = vmatprep.subr.bf16.mxu0 0
    %2806 = vmatpush1.bf16.xpose.msra.mxu0 %v2785
    %2807 = vmatprep.subr.bf16.mxu0 0
    %2808 = vmatpush1.bf16.xpose.msra.mxu0 %v2786
    %2809 = vmatprep.subr.bf16.mxu0 0
    %2810 = vmatpush1.bf16.xpose.msra.mxu0 %v2787
    %2811 = vmatprep.subr.bf16.mxu0 0
    %2812 = vmatpush1.bf16.xpose.msra.mxu0 %v2788
    %2813 = vmatprep.subr.bf16.mxu0 0
    %2814 = vmatpush1.bf16.xpose.msra.mxu0 0
    %2815 = vmatprep.subr.bf16.mxu0 0
    %2816 = vmatpush1.bf16.xpose.msra.mxu0 0
    %2817 = vmatprep.subr.bf16.mxu0 0
    %2818 = vmatpush1.bf16.xpose.msra.mxu0 0
    %2819 = vmatprep.subr.bf16.mxu0 0
    %2820 = vmatpush1.bf16.xpose.msra.mxu0 0
    %2821 = vmatprep.subr.bf16.mxu0 0
    %2822 = vmatpush1.bf16.xpose.msra.mxu0 0
    %2823 = vmatprep.subr.bf16.mxu0 0
    %2824 = vmatpush1.bf16.xpose.msra.mxu0 0
    %2825 = vmatprep.subr.bf16.mxu0 0
    %2826 = vmatpush1.bf16.xpose.msra.mxu0 0
    %2827 = vmatprep.subr.bf16.mxu0 0
    %2828 = vmatpush1.bf16.xpose.msra.mxu0 0
    %2829 = vmatprep.mubr.bf16.mxu0 0
    %2830 = vmatmul.mubr.bf16.gmra.mrb[0].mxu0 %v2773
    %v2831 = vpop.f32.mrb[0].mxu0
    %v2832 = vadd.f32 0.0, %v2831
    %v2833 = vpop.f32.mrb[0].mxu0
    %v2834 = vpop.f32.mrb[0].mxu0
    %v2835 = vadd.f32 0.0, %v2834
    %v2836 = vpop.f32.mrb[0].mxu0
    %2837 = vmatprep.mubr.bf16.mxu0 0
    %2838 = vmatmul.mubr.bf16.gmra.mrb[0].mxu0 %v2774
    %v2839 = vpop.f32.mrb[0].mxu0
    %v2840 = vadd.f32 0.0, %v2839
    %v2841 = vpop.f32.mrb[0].mxu0
    %v2842 = vpop.f32.mrb[0].mxu0
    %v2843 = vadd.f32 0.0, %v2842
    %v2844 = vpop.f32.mrb[0].mxu0
    %2845 = vmatprep.mubr.bf16.mxu0 0
    %2846 = vmatmul.mubr.bf16.gmra.mrb[0].mxu0 %v2775
    %v2847 = vpop.f32.mrb[0].mxu0
    %v2848 = vadd.f32 0.0, %v2847
    %v2849 = vpop.f32.mrb[0].mxu0
    %v2850 = vpop.f32.mrb[0].mxu0
    %v2851 = vadd.f32 0.0, %v2850
    %v2852 = vpop.f32.mrb[0].mxu0
    %2853 = vmatprep.mubr.bf16.mxu0 0
    %2854 = vmatmul.mubr.bf16.gmra.mrb[0].mxu0 %v2776
    %v2855 = vpop.f32.mrb[0].mxu0
    %v2856 = vadd.f32 0.0, %v2855
    %v2857 = vpop.f32.mrb[0].mxu0
    %v2858 = vpop.f32.mrb[0].mxu0
    %v2859 = vadd.f32 0.0, %v2858
    %v2860 = vpop.f32.mrb[0].mxu0
    %2861 = vmatprep.mubr.bf16.mxu0 0
    %2862 = vmatmul.mubr.bf16.gmra.mrb[0].mxu0 %v2777
    %v2863 = vpop.f32.mrb[0].mxu0
    %v2864 = vadd.f32 0.0, %v2863
    %v2865 = vpop.f32.mrb[0].mxu0
    %v2866 = vpop.f32.mrb[0].mxu0
    %v2867 = vadd.f32 0.0, %v2866
    %v2868 = vpop.f32.mrb[0].mxu0
    %2869 = vmatprep.mubr.bf16.mxu0 0
    %2870 = vmatmul.mubr.bf16.gmra.mrb[0].mxu0 %v2778
    %v2871 = vpop.f32.mrb[0].mxu0
    %v2872 = vadd.f32 0.0, %v2871
    %v2873 = vpop.f32.mrb[0].mxu0
    %v2874 = vpop.f32.mrb[0].mxu0
    %v2875 = vadd.f32 0.0, %v2874
    %v2876 = vpop.f32.mrb[0].mxu0
    %2877 = vmatprep.mubr.bf16.mxu0 0
    %2878 = vmatmul.mubr.bf16.gmra.mrb[0].mxu0 %v2779
    %v2879 = vpop.f32.mrb[0].mxu0
    %v2880 = vadd.f32 0.0, %v2879
    %v2881 = vpop.f32.mrb[0].mxu0
    %v2882 = vpop.f32.mrb[0].mxu0
    %v2883 = vadd.f32 0.0, %v2882
    %v2884 = vpop.f32.mrb[0].mxu0
    %2885 = vmatprep.mubr.bf16.mxu0 0
    %2886 = vmatmul.mubr.bf16.gmra.mrb[0].mxu0 %v2780
    %v2887 = vpop.f32.mrb[0].mxu0
    %v2888 = vadd.f32 0.0, %v2887
    %v2889 = vpop.f32.mrb[0].mxu0
    %v2890 = vpop.f32.mrb[0].mxu0
    %v2891 = vadd.f32 0.0, %v2890
    %v2892 = vpop.f32.mrb[0].mxu0
    %2893 = vdwg.mxu0
    %2894 = vmax.xlane.f32.xlu0 %v2832
    %v2895 = vpop.xlane.xlu0 %2894
    %2896 = vmax.xlane.f32.xlu0 %v2835
    %v2897 = vpop.xlane.xlu0 %2896
    %2898 = vmax.xlane.f32.xlu0 %v2840
    %v2899 = vpop.xlane.xlu0 %2898
    %2900 = vmax.xlane.f32.xlu0 %v2843
    %v2901 = vpop.xlane.xlu0 %2900
    %2902 = vmax.xlane.f32.xlu0 %v2848
    %v2903 = vpop.xlane.xlu0 %2902
    %2904 = vmax.xlane.f32.xlu0 %v2851
    %v2905 = vpop.xlane.xlu0 %2904
    %2906 = vmax.xlane.f32.xlu0 %v2856
    %v2907 = vpop.xlane.xlu0 %2906
    %2908 = vmax.xlane.f32.xlu0 %v2859
    %v2909 = vpop.xlane.xlu0 %2908
    %2910 = vmax.xlane.f32.xlu0 %v2864
    %v2911 = vpop.xlane.xlu0 %2910
    %2912 = vmax.xlane.f32.xlu0 %v2867
    %v2913 = vpop.xlane.xlu0 %2912
    %2914 = vmax.xlane.f32.xlu0 %v2872
    %v2915 = vpop.xlane.xlu0 %2914
    %2916 = vmax.xlane.f32.xlu0 %v2875
    %v2917 = vpop.xlane.xlu0 %2916
    %2918 = vmax.xlane.f32.xlu0 %v2880
    %v2919 = vpop.xlane.xlu0 %2918
    %2920 = vmax.xlane.f32.xlu0 %v2883
    %v2921 = vpop.xlane.xlu0 %2920
    %2922 = vmax.xlane.f32.xlu0 %v2888
    %v2923 = vpop.xlane.xlu0 %2922
    %2924 = vmax.xlane.f32.xlu0 %v2891
    %v2925 = vpop.xlane.xlu0 %2924
    %v2926 = vsub.f32 %v2832, %v2895
    %v2927 = vsub.f32 %v2835, %v2897
    %v2928 = vsub.f32 %v2840, %v2899
    %v2929 = vsub.f32 %v2843, %v2901
    %v2930 = vsub.f32 %v2848, %v2903
    %v2931 = vsub.f32 %v2851, %v2905
    %v2932 = vsub.f32 %v2856, %v2907
    %v2933 = vsub.f32 %v2859, %v2909
    %v2934 = vsub.f32 %v2864, %v2911
    %v2935 = vsub.f32 %v2867, %v2913
    %v2936 = vsub.f32 %v2872, %v2915
    %v2937 = vsub.f32 %v2875, %v2917
    %v2938 = vsub.f32 %v2880, %v2919
    %v2939 = vsub.f32 %v2883, %v2921
    %v2940 = vsub.f32 %v2888, %v2923
    %v2941 = vsub.f32 %v2891, %v2925
    %v2942 = vmul.f32 %v2926, 1.442695
    %v2943 = vpow.pop %v2942
    %v2944 = vmul.f32 %v2927, 1.442695
    %v2945 = vpow.pop %v2944
    %v2946 = vmul.f32 %v2928, 1.442695
    %v2947 = vpow.pop %v2946
    %v2948 = vmul.f32 %v2929, 1.442695
    %v2949 = vpow.pop %v2948
    %v2950 = vmul.f32 %v2930, 1.442695
    %v2951 = vpow.pop %v2950
    %v2952 = vmul.f32 %v2931, 1.442695
    %v2953 = vpow.pop %v2952
    %v2954 = vmul.f32 %v2932, 1.442695
    %v2955 = vpow.pop %v2954
    %v2956 = vmul.f32 %v2933, 1.442695
    %v2957 = vpow.pop %v2956
    %v2958 = vmul.f32 %v2934, 1.442695
    %v2959 = vpow.pop %v2958
    %v2960 = vmul.f32 %v2935, 1.442695
    %v2961 = vpow.pop %v2960
    %v2962 = vmul.f32 %v2936, 1.442695
    %v2963 = vpow.pop %v2962
    %v2964 = vmul.f32 %v2937, 1.442695
    %v2965 = vpow.pop %v2964
    %v2966 = vmul.f32 %v2938, 1.442695
    %v2967 = vpow.pop %v2966
    %v2968 = vmul.f32 %v2939, 1.442695
    %v2969 = vpow.pop %v2968
    %v2970 = vmul.f32 %v2940, 1.442695
    %v2971 = vpow.pop %v2970
    %v2972 = vmul.f32 %v2941, 1.442695
    %v2973 = vpow.pop %v2972
    %2974 = vadd.xlane.f32.xlu0 %v2943
    %v2975 = vpop.xlane.xlu0 %2974
    %2976 = vadd.xlane.f32.xlu0 %v2945
    %v2977 = vpop.xlane.xlu0 %2976
    %2978 = vadd.xlane.f32.xlu0 %v2947
    %v2979 = vpop.xlane.xlu0 %2978
    %2980 = vadd.xlane.f32.xlu0 %v2949
    %v2981 = vpop.xlane.xlu0 %2980
    %2982 = vadd.xlane.f32.xlu0 %v2951
    %v2983 = vpop.xlane.xlu0 %2982
    %2984 = vadd.xlane.f32.xlu0 %v2953
    %v2985 = vpop.xlane.xlu0 %2984
    %2986 = vadd.xlane.f32.xlu0 %v2955
    %v2987 = vpop.xlane.xlu0 %2986
    %2988 = vadd.xlane.f32.xlu0 %v2957
    %v2989 = vpop.xlane.xlu0 %2988
    %2990 = vadd.xlane.f32.xlu0 %v2959
    %v2991 = vpop.xlane.xlu0 %2990
    %2992 = vadd.xlane.f32.xlu0 %v2961
    %v2993 = vpop.xlane.xlu0 %2992
    %2994 = vadd.xlane.f32.xlu0 %v2963
    %v2995 = vpop.xlane.xlu0 %2994
    %2996 = vadd.xlane.f32.xlu0 %v2965
    %v2997 = vpop.xlane.xlu0 %2996
    %2998 = vadd.xlane.f32.xlu0 %v2967
    %v2999 = vpop.xlane.xlu0 %2998
    %3000 = vadd.xlane.f32.xlu0 %v2969
    %v3001 = vpop.xlane.xlu0 %3000
    %3002 = vadd.xlane.f32.xlu0 %v2971
    %v3003 = vpop.xlane.xlu0 %3002
    %3004 = vadd.xlane.f32.xlu0 %v2973
    %v3005 = vpop.xlane.xlu0 %3004
    %v3006 = vrcp.pop %v2975
    %v3007 = vrcp.pop %v2977
    %v3008 = vrcp.pop %v2979
    %v3009 = vrcp.pop %v2981
    %v3010 = vrcp.pop %v2983
    %v3011 = vrcp.pop %v2985
    %v3012 = vrcp.pop %v2987
    %v3013 = vrcp.pop %v2989
    %v3014 = vrcp.pop %v2991
    %v3015 = vrcp.pop %v2993
    %v3016 = vrcp.pop %v2995
    %v3017 = vrcp.pop %v2997
    %v3018 = vrcp.pop %v2999
    %v3019 = vrcp.pop %v3001
    %v3020 = vrcp.pop %v3003
    %v3021 = vrcp.pop %v3005
    %v3022 = vmul.f32 %v2943, %v3006
    %v3023 = vmul.f32 %v2945, %v3007
    %v3024 = vmul.f32 %v2947, %v3008
    %v3025 = vmul.f32 %v2949, %v3009
    %v3026 = vmul.f32 %v2951, %v3010
    %v3027 = vmul.f32 %v2953, %v3011
    %v3028 = vmul.f32 %v2955, %v3012
    %v3029 = vmul.f32 %v2957, %v3013
    %v3030 = vmul.f32 %v2959, %v3014
    %v3031 = vmul.f32 %v2961, %v3015
    %v3032 = vmul.f32 %v2963, %v3016
    %v3033 = vmul.f32 %v2965, %v3017
    %v3034 = vmul.f32 %v2967, %v3018
    %v3035 = vmul.f32 %v2969, %v3019
    %v3036 = vmul.f32 %v2971, %v3020
    %v3037 = vmul.f32 %v2973, %v3021
    %v3038 = vpack.c.bf16 %v3023, %v3022
    %v3039 = vpack.c.bf16 %v3025, %v3024
    %v3040 = vpack.c.bf16 %v3027, %v3026
    %v3041 = vpack.c.bf16 %v3029, %v3028
    %v3042 = vpack.c.bf16 %v3031, %v3030
    %v3043 = vpack.c.bf16 %v3033, %v3032
    %v3044 = vpack.c.bf16 %v3035, %v3034
    %v3045 = vpack.c.bf16 %v3037, %v3036
    %3046 = vmatprep.subr.bf16.mxu0 0
    %3047 = vmatpush1.bf16.msra.mxu0 %v2789
    %3048 = vmatprep.subr.bf16.mxu0 0
    %3049 = vmatpush1.bf16.msra.mxu0 %v2790
    %3050 = vmatprep.subr.bf16.mxu0 0
    %3051 = vmatpush1.bf16.msra.mxu0 %v2791
    %3052 = vmatprep.subr.bf16.mxu0 0
    %3053 = vmatpush1.bf16.msra.mxu0 %v2792
    %3054 = vmatprep.subr.bf16.mxu0 0
    %3055 = vmatpush1.bf16.msra.mxu0 %v2793
    %3056 = vmatprep.subr.bf16.mxu0 0
    %3057 = vmatpush1.bf16.msra.mxu0 %v2794
    %3058 = vmatprep.subr.bf16.mxu0 0
    %3059 = vmatpush1.bf16.msra.mxu0 %v2795
    %3060 = vmatprep.subr.bf16.mxu0 0
    %3061 = vmatpush1.bf16.msra.mxu0 %v2796
    %3062 = vmatprep.subr.bf16.mxu0 0
    %3063 = vmatpush1.bf16.msra.mxu0 0
    %3064 = vmatprep.subr.bf16.mxu0 0
    %3065 = vmatpush1.bf16.msra.mxu0 0
    %3066 = vmatprep.subr.bf16.mxu0 0
    %3067 = vmatpush1.bf16.msra.mxu0 0
    %3068 = vmatprep.subr.bf16.mxu0 0
    %3069 = vmatpush1.bf16.msra.mxu0 0
    %3070 = vmatprep.subr.bf16.mxu0 0
    %3071 = vmatpush1.bf16.msra.mxu0 0
    %3072 = vmatprep.subr.bf16.mxu0 0
    %3073 = vmatpush1.bf16.msra.mxu0 0
    %3074 = vmatprep.subr.bf16.mxu0 0
    %3075 = vmatpush1.bf16.msra.mxu0 0
    %3076 = vmatprep.subr.bf16.mxu0 0
    %3077 = vmatpush1.bf16.msra.mxu0 0
    %3078 = vmatprep.mubr.bf16.mxu0 0
    %3079 = vmatmul.mubr.bf16.gmra.mrb[0].mxu0 %v3038
    %v3080 = vpop.f32.mrb[0].mxu0
    %v3081 = vadd.f32 0.0, %v3080
    %v3082 = vpop.f32.mrb[0].mxu0
    %v3083 = vpop.f32.mrb[0].mxu0
    %v3084 = vadd.f32 0.0, %v3083
    %v3085 = vpop.f32.mrb[0].mxu0
    %3086 = vmatprep.mubr.bf16.mxu0 0
    %3087 = vmatmul.mubr.bf16.gmra.mrb[0].mxu0 %v3039
    %v3088 = vpop.f32.mrb[0].mxu0
    %v3089 = vadd.f32 0.0, %v3088
    %v3090 = vpop.f32.mrb[0].mxu0
    %v3091 = vpop.f32.mrb[0].mxu0
    %v3092 = vadd.f32 0.0, %v3091
    %v3093 = vpop.f32.mrb[0].mxu0
    %3094 = vmatprep.mubr.bf16.mxu0 0
    %3095 = vmatmul.mubr.bf16.gmra.mrb[0].mxu0 %v3040
    %v3096 = vpop.f32.mrb[0].mxu0
    %v3097 = vadd.f32 0.0, %v3096
    %v3098 = vpop.f32.mrb[0].mxu0
    %v3099 = vpop.f32.mrb[0].mxu0
    %v3100 = vadd.f32 0.0, %v3099
    %v3101 = vpop.f32.mrb[0].mxu0
    %3102 = vmatprep.mubr.bf16.mxu0 0
    %3103 = vmatmul.mubr.bf16.gmra.mrb[0].mxu0 %v3041
    %v3104 = vpop.f32.mrb[0].mxu0
    %v3105 = vadd.f32 0.0, %v3104
    %v3106 = vpop.f32.mrb[0].mxu0
    %v3107 = vpop.f32.mrb[0].mxu0
    %v3108 = vadd.f32 0.0, %v3107
    %v3109 = vpop.f32.mrb[0].mxu0
    %3110 = vmatprep.mubr.bf16.mxu0 0
    %3111 = vmatmul.mubr.bf16.gmra.mrb[0].mxu0 %v3042
    %v3112 = vpop.f32.mrb[0].mxu0
    %v3113 = vadd.f32 0.0, %v3112
    %v3114 = vpop.f32.mrb[0].mxu0
    %v3115 = vpop.f32.mrb[0].mxu0
    %v3116 = vadd.f32 0.0, %v3115
    %v3117 = vpop.f32.mrb[0].mxu0
    %3118 = vmatprep.mubr.bf16.mxu0 0
    %3119 = vmatmul.mubr.bf16.gmra.mrb[0].mxu0 %v3043
    %v3120 = vpop.f32.mrb[0].mxu0
    %v3121 = vadd.f32 0.0, %v3120
    %v3122 = vpop.f32.mrb[0].mxu0
    %v3123 = vpop.f32.mrb[0].mxu0
    %v3124 = vadd.f32 0.0, %v3123
    %v3125 = vpop.f32.mrb[0].mxu0
    %3126 = vmatprep.mubr.bf16.mxu0 0
    %3127 = vmatmul.mubr.bf16.gmra.mrb[0].mxu0 %v3044
    %v3128 = vpop.f32.mrb[0].mxu0
    %v3129 = vadd.f32 0.0, %v3128
    %v3130 = vpop.f32.mrb[0].mxu0
    %v3131 = vpop.f32.mrb[0].mxu0
    %v3132 = vadd.f32 0.0, %v3131
    %v3133 = vpop.f32.mrb[0].mxu0
    %3134 = vmatprep.mubr.bf16.mxu0 0
    %3135 = vmatmul.mubr.bf16.gmra.mrb[0].mxu0 %v3045
    %v3136 = vpop.f32.mrb[0].mxu0
    %v3137 = vadd.f32 0.0, %v3136
    %v3138 = vpop.f32.mrb[0].mxu0
    %v3139 = vpop.f32.mrb[0].mxu0
    %v3140 = vadd.f32 0.0, %v3139
    %v3141 = vpop.f32.mrb[0].mxu0
    %3142 = vdwg.mxu0
    %v3143 = vpack.c.bf16 %v1575, %v1571
    %v3144 = vpack.c.bf16 %v1585, %v1581
    %v3145 = vpack.c.bf16 %v1595, %v1591
    %v3146 = vpack.c.bf16 %v1605, %v1601
    %v3147 = vpack.c.bf16 %v1615, %v1611
    %v3148 = vpack.c.bf16 %v1625, %v1621
    %v3149 = vpack.c.bf16 %v1635, %v1631
    %v3150 = vpack.c.bf16 %v1645, %v1641
    %v3151 = vpack.c.bf16 %v1768, %v1764
    %v3152 = vpack.c.bf16 %v1778, %v1774
    %v3153 = vpack.c.bf16 %v1788, %v1784
    %v3154 = vpack.c.bf16 %v1798, %v1794
    %v3155 = vpack.c.bf16 %v1808, %v1804
    %v3156 = vpack.c.bf16 %v1818, %v1814
    %v3157 = vpack.c.bf16 %v1828, %v1824
    %v3158 = vpack.c.bf16 %v1838, %v1834
    %v3159 = vpack.c.bf16 %v1961, %v1957
    %v3160 = vpack.c.bf16 %v1971, %v1967
    %v3161 = vpack.c.bf16 %v1981, %v1977
    %v3162 = vpack.c.bf16 %v1991, %v1987
    %v3163 = vpack.c.bf16 %v2001, %v1997
    %v3164 = vpack.c.bf16 %v2011, %v2007
    %v3165 = vpack.c.bf16 %v2021, %v2017
    %v3166 = vpack.c.bf16 %v2031, %v2027
    %3167 = vmatprep.subr.bf16.mxu0 0
    %3168 = vmatpush1.bf16.xpose.msra.mxu0 %v3151
    %3169 = vmatprep.subr.bf16.mxu0 0
    %3170 = vmatpush1.bf16.xpose.msra.mxu0 %v3152
    %3171 = vmatprep.subr.bf16.mxu0 0
    %3172 = vmatpush1.bf16.xpose.msra.mxu0 %v3153
    %3173 = vmatprep.subr.bf16.mxu0 0
    %3174 = vmatpush1.bf16.xpose.msra.mxu0 %v3154
    %3175 = vmatprep.subr.bf16.mxu0 0
    %3176 = vmatpush1.bf16.xpose.msra.mxu0 %v3155
    %3177 = vmatprep.subr.bf16.mxu0 0
    %3178 = vmatpush1.bf16.xpose.msra.mxu0 %v3156
    %3179 = vmatprep.subr.bf16.mxu0 0
    %3180 = vmatpush1.bf16.xpose.msra.mxu0 %v3157
    %3181 = vmatprep.subr.bf16.mxu0 0
    %3182 = vmatpush1.bf16.xpose.msra.mxu0 %v3158
    %3183 = vmatprep.subr.bf16.mxu0 0
    %3184 = vmatpush1.bf16.xpose.msra.mxu0 0
    %3185 = vmatprep.subr.bf16.mxu0 0
    %3186 = vmatpush1.bf16.xpose.msra.mxu0 0
    %3187 = vmatprep.subr.bf16.mxu0 0
    %3188 = vmatpush1.bf16.xpose.msra.mxu0 0
    %3189 = vmatprep.subr.bf16.mxu0 0
    %3190 = vmatpush1.bf16.xpose.msra.mxu0 0
    %3191 = vmatprep.subr.bf16.mxu0 0
    %3192 = vmatpush1.bf16.xpose.msra.mxu0 0
    %3193 = vmatprep.subr.bf16.mxu0 0
    %3194 = vmatpush1.bf16.xpose.msra.mxu0 0
    %3195 = vmatprep.subr.bf16.mxu0 0
    %3196 = vmatpush1.bf16.xpose.msra.mxu0 0
    %3197 = vmatprep.subr.bf16.mxu0 0
    %3198 = vmatpush1.bf16.xpose.msra.mxu0 0
    %3199 = vmatprep.mubr.bf16.mxu0 0
    %3200 = vmatmul.mubr.bf16.gmra.mrb[0].mxu0 %v3143
    %v3201 = vpop.f32.mrb[0].mxu0
    %v3202 = vadd.f32 0.0, %v3201
    %v3203 = vpop.f32.mrb[0].mxu0
    %v3204 = vpop.f32.mrb[0].mxu0
    %v3205 = vadd.f32 0.0, %v3204
    %v3206 = vpop.f32.mrb[0].mxu0
    %3207 = vmatprep.mubr.bf16.mxu0 0
    %3208 = vmatmul.mubr.bf16.gmra.mrb[0].mxu0 %v3144
    %v3209 = vpop.f32.mrb[0].mxu0
    %v3210 = vadd.f32 0.0, %v3209
    %v3211 = vpop.f32.mrb[0].mxu0
    %v3212 = vpop.f32.mrb[0].mxu0
    %v3213 = vadd.f32 0.0, %v3212
    %v3214 = vpop.f32.mrb[0].mxu0
    %3215 = vmatprep.mubr.bf16.mxu0 0
    %3216 = vmatmul.mubr.bf16.gmra.mrb[0].mxu0 %v3145
    %v3217 = vpop.f32.mrb[0].mxu0
    %v3218 = vadd.f32 0.0, %v3217
    %v3219 = vpop.f32.mrb[0].mxu0
    %v3220 = vpop.f32.mrb[0].mxu0
    %v3221 = vadd.f32 0.0, %v3220
    %v3222 = vpop.f32.mrb[0].mxu0
    %3223 = vmatprep.mubr.bf16.mxu0 0
    %3224 = vmatmul.mubr.bf16.gmra.mrb[0].mxu0 %v3146
    %v3225 = vpop.f32.mrb[0].mxu0
    %v3226 = vadd.f32 0.0, %v3225
    %v3227 = vpop.f32.mrb[0].mxu0
    %v3228 = vpop.f32.mrb[0].mxu0
    %v3229 = vadd.f32 0.0, %v3228
    %v3230 = vpop.f32.mrb[0].mxu0
    %3231 = vmatprep.mubr.bf16.mxu0 0
    %3232 = vmatmul.mubr.bf16.gmra.mrb[0].mxu0 %v3147
    %v3233 = vpop.f32.mrb[0].mxu0
    %v3234 = vadd.f32 0.0, %v3233
    %v3235 = vpop.f32.mrb[0].mxu0
    %v3236 = vpop.f32.mrb[0].mxu0
    %v3237 = vadd.f32 0.0, %v3236
    %v3238 = vpop.f32.mrb[0].mxu0
    %3239 = vmatprep.mubr.bf16.mxu0 0
    %3240 = vmatmul.mubr.bf16.gmra.mrb[0].mxu0 %v3148
    %v3241 = vpop.f32.mrb[0].mxu0
    %v3242 = vadd.f32 0.0, %v3241
    %v3243 = vpop.f32.mrb[0].mxu0
    %v3244 = vpop.f32.mrb[0].mxu0
    %v3245 = vadd.f32 0.0, %v3244
    %v3246 = vpop.f32.mrb[0].mxu0
    %3247 = vmatprep.mubr.bf16.mxu0 0
    %3248 = vmatmul.mubr.bf16.gmra.mrb[0].mxu0 %v3149
    %v3249 = vpop.f32.mrb[0].mxu0
    %v3250 = vadd.f32 0.0, %v3249
    %v3251 = vpop.f32.mrb[0].mxu0
    %v3252 = vpop.f32.mrb[0].mxu0
    %v3253 = vadd.f32 0.0, %v3252
    %v3254 = vpop.f32.mrb[0].mxu0
    %3255 = vmatprep.mubr.bf16.mxu0 0
    %3256 = vmatmul.mubr.bf16.gmra.mrb[0].mxu0 %v3150
    %v3257 = vpop.f32.mrb[0].mxu0
    %v3258 = vadd.f32 0.0, %v3257
    %v3259 = vpop.f32.mrb[0].mxu0
    %v3260 = vpop.f32.mrb[0].mxu0
    %v3261 = vadd.f32 0.0, %v3260
    %v3262 = vpop.f32.mrb[0].mxu0
    %3263 = vdwg.mxu0
    %3264 = vmax.xlane.f32.xlu0 %v3202
    %v3265 = vpop.xlane.xlu0 %3264
    %3266 = vmax.xlane.f32.xlu0 %v3205
    %v3267 = vpop.xlane.xlu0 %3266
    %3268 = vmax.xlane.f32.xlu0 %v3210
    %v3269 = vpop.xlane.xlu0 %3268
    %3270 = vmax.xlane.f32.xlu0 %v3213
    %v3271 = vpop.xlane.xlu0 %3270
    %3272 = vmax.xlane.f32.xlu0 %v3218
    %v3273 = vpop.xlane.xlu0 %3272
    %3274 = vmax.xlane.f32.xlu0 %v3221
    %v3275 = vpop.xlane.xlu0 %3274
    %3276 = vmax.xlane.f32.xlu0 %v3226
    %v3277 = vpop.xlane.xlu0 %3276
    %3278 = vmax.xlane.f32.xlu0 %v3229
    %v3279 = vpop.xlane.xlu0 %3278
    %3280 = vmax.xlane.f32.xlu0 %v3234
    %v3281 = vpop.xlane.xlu0 %3280
    %3282 = vmax.xlane.f32.xlu0 %v3237
    %v3283 = vpop.xlane.xlu0 %3282
    %3284 = vmax.xlane.f32.xlu0 %v3242
    %v3285 = vpop.xlane.xlu0 %3284
    %3286 = vmax.xlane.f32.xlu0 %v3245
    %v3287 = vpop.xlane.xlu0 %3286
    %3288 = vmax.xlane.f32.xlu0 %v3250
    %v3289 = vpop.xlane.xlu0 %3288
    %3290 = vmax.xlane.f32.xlu0 %v3253
    %v3291 = vpop.xlane.xlu0 %3290
    %3292 = vmax.xlane.f32.xlu0 %v3258
    %v3293 = vpop.xlane.xlu0 %3292
    %3294 = vmax.xlane.f32.xlu0 %v3261
    %v3295 = vpop.xlane.xlu0 %3294
    %v3296 = vsub.f32 %v3202, %v3265
    %v3297 = vsub.f32 %v3205, %v3267
    %v3298 = vsub.f32 %v3210, %v3269
    %v3299 = vsub.f32 %v3213, %v3271
    %v3300 = vsub.f32 %v3218, %v3273
    %v3301 = vsub.f32 %v3221, %v3275
    %v3302 = vsub.f32 %v3226, %v3277
    %v3303 = vsub.f32 %v3229, %v3279
    %v3304 = vsub.f32 %v3234, %v3281
    %v3305 = vsub.f32 %v3237, %v3283
    %v3306 = vsub.f32 %v3242, %v3285
    %v3307 = vsub.f32 %v3245, %v3287
    %v3308 = vsub.f32 %v3250, %v3289
    %v3309 = vsub.f32 %v3253, %v3291
    %v3310 = vsub.f32 %v3258, %v3293
    %v3311 = vsub.f32 %v3261, %v3295
    %v3312 = vmul.f32 %v3296, 1.442695
    %v3313 = vpow.pop %v3312
    %v3314 = vmul.f32 %v3297, 1.442695
    %v3315 = vpow.pop %v3314
    %v3316 = vmul.f32 %v3298, 1.442695
    %v3317 = vpow.pop %v3316
    %v3318 = vmul.f32 %v3299, 1.442695
    %v3319 = vpow.pop %v3318
    %v3320 = vmul.f32 %v3300, 1.442695
    %v3321 = vpow.pop %v3320
    %v3322 = vmul.f32 %v3301, 1.442695
    %v3323 = vpow.pop %v3322
    %v3324 = vmul.f32 %v3302, 1.442695
    %v3325 = vpow.pop %v3324
    %v3326 = vmul.f32 %v3303, 1.442695
    %v3327 = vpow.pop %v3326
    %v3328 = vmul.f32 %v3304, 1.442695
    %v3329 = vpow.pop %v3328
    %v3330 = vmul.f32 %v3305, 1.442695
    %v3331 = vpow.pop %v3330
    %v3332 = vmul.f32 %v3306, 1.442695
    %v3333 = vpow.pop %v3332
    %v3334 = vmul.f32 %v3307, 1.442695
    %v3335 = vpow.pop %v3334
    %v3336 = vmul.f32 %v3308, 1.442695
    %v3337 = vpow.pop %v3336
    %v3338 = vmul.f32 %v3309, 1.442695
    %v3339 = vpow.pop %v3338
    %v3340 = vmul.f32 %v3310, 1.442695
    %v3341 = vpow.pop %v3340
    %v3342 = vmul.f32 %v3311, 1.442695
    %v3343 = vpow.pop %v3342
    %3344 = vadd.xlane.f32.xlu0 %v3313
    %v3345 = vpop.xlane.xlu0 %3344
    %3346 = vadd.xlane.f32.xlu0 %v3315
    %v3347 = vpop.xlane.xlu0 %3346
    %3348 = vadd.xlane.f32.xlu0 %v3317
    %v3349 = vpop.xlane.xlu0 %3348
    %3350 = vadd.xlane.f32.xlu0 %v3319
    %v3351 = vpop.xlane.xlu0 %3350
    %3352 = vadd.xlane.f32.xlu0 %v3321
    %v3353 = vpop.xlane.xlu0 %3352
    %3354 = vadd.xlane.f32.xlu0 %v3323
    %v3355 = vpop.xlane.xlu0 %3354
    %3356 = vadd.xlane.f32.xlu0 %v3325
    %v3357 = vpop.xlane.xlu0 %3356
    %3358 = vadd.xlane.f32.xlu0 %v3327
    %v3359 = vpop.xlane.xlu0 %3358
    %3360 = vadd.xlane.f32.xlu0 %v3329
    %v3361 = vpop.xlane.xlu0 %3360
    %3362 = vadd.xlane.f32.xlu0 %v3331
    %v3363 = vpop.xlane.xlu0 %3362
    %3364 = vadd.xlane.f32.xlu0 %v3333
    %v3365 = vpop.xlane.xlu0 %3364
    %3366 = vadd.xlane.f32.xlu0 %v3335
    %v3367 = vpop.xlane.xlu0 %3366
    %3368 = vadd.xlane.f32.xlu0 %v3337
    %v3369 = vpop.xlane.xlu0 %3368
    %3370 = vadd.xlane.f32.xlu0 %v3339
    %v3371 = vpop.xlane.xlu0 %3370
    %3372 = vadd.xlane.f32.xlu0 %v3341
    %v3373 = vpop.xlane.xlu0 %3372
    %3374 = vadd.xlane.f32.xlu0 %v3343
    %v3375 = vpop.xlane.xlu0 %3374
    %v3376 = vrcp.pop %v3345
    %v3377 = vrcp.pop %v3347
    %v3378 = vrcp.pop %v3349
    %v3379 = vrcp.pop %v3351
    %v3380 = vrcp.pop %v3353
    %v3381 = vrcp.pop %v3355
    %v3382 = vrcp.pop %v3357
    %v3383 = vrcp.pop %v3359
    %v3384 = vrcp.pop %v3361
    %v3385 = vrcp.pop %v3363
    %v3386 = vrcp.pop %v3365
    %v3387 = vrcp.pop %v3367
    %v3388 = vrcp.pop %v3369
    %v3389 = vrcp.pop %v3371
    %v3390 = vrcp.pop %v3373
    %v3391 = vrcp.pop %v3375
    %v3392 = vmul.f32 %v3313, %v3376
    %v3393 = vmul.f32 %v3315, %v3377
    %v3394 = vmul.f32 %v3317, %v3378
    %v3395 = vmul.f32 %v3319, %v3379
    %v3396 = vmul.f32 %v3321, %v3380
    %v3397 = vmul.f32 %v3323, %v3381
    %v3398 = vmul.f32 %v3325, %v3382
    %v3399 = vmul.f32 %v3327, %v3383
    %v3400 = vmul.f32 %v3329, %v3384
    %v3401 = vmul.f32 %v3331, %v3385
    %v3402 = vmul.f32 %v3333, %v3386
    %v3403 = vmul.f32 %v3335, %v3387
    %v3404 = vmul.f32 %v3337, %v3388
    %v3405 = vmul.f32 %v3339, %v3389
    %v3406 = vmul.f32 %v3341, %v3390
    %v3407 = vmul.f32 %v3343, %v3391
    %v3408 = vpack.c.bf16 %v3393, %v3392
    %v3409 = vpack.c.bf16 %v3395, %v3394
    %v3410 = vpack.c.bf16 %v3397, %v3396
    %v3411 = vpack.c.bf16 %v3399, %v3398
    %v3412 = vpack.c.bf16 %v3401, %v3400
    %v3413 = vpack.c.bf16 %v3403, %v3402
    %v3414 = vpack.c.bf16 %v3405, %v3404
    %v3415 = vpack.c.bf16 %v3407, %v3406
    %3416 = vmatprep.subr.bf16.mxu0 0
    %3417 = vmatpush1.bf16.msra.mxu0 %v3159
    %3418 = vmatprep.subr.bf16.mxu0 0
    %3419 = vmatpush1.bf16.msra.mxu0 %v3160
    %3420 = vmatprep.subr.bf16.mxu0 0
    %3421 = vmatpush1.bf16.msra.mxu0 %v3161
    %3422 = vmatprep.subr.bf16.mxu0 0
    %3423 = vmatpush1.bf16.msra.mxu0 %v3162
    %3424 = vmatprep.subr.bf16.mxu0 0
    %3425 = vmatpush1.bf16.msra.mxu0 %v3163
    %3426 = vmatprep.subr.bf16.mxu0 0
    %3427 = vmatpush1.bf16.msra.mxu0 %v3164
    %3428 = vmatprep.subr.bf16.mxu0 0
    %3429 = vmatpush1.bf16.msra.mxu0 %v3165
    %3430 = vmatprep.subr.bf16.mxu0 0
    %3431 = vmatpush1.bf16.msra.mxu0 %v3166
    %3432 = vmatprep.subr.bf16.mxu0 0
    %3433 = vmatpush1.bf16.msra.mxu0 0
    %3434 = vmatprep.subr.bf16.mxu0 0
    %3435 = vmatpush1.bf16.msra.mxu0 0
    %3436 = vmatprep.subr.bf16.mxu0 0
    %3437 = vmatpush1.bf16.msra.mxu0 0
    %3438 = vmatprep.subr.bf16.mxu0 0
    %3439 = vmatpush1.bf16.msra.mxu0 0
    %3440 = vmatprep.subr.bf16.mxu0 0
    %3441 = vmatpush1.bf16.msra.mxu0 0
    %3442 = vmatprep.subr.bf16.mxu0 0
    %3443 = vmatpush1.bf16.msra.mxu0 0
    %3444 = vmatprep.subr.bf16.mxu0 0
    %3445 = vmatpush1.bf16.msra.mxu0 0
    %3446 = vmatprep.subr.bf16.mxu0 0
    %3447 = vmatpush1.bf16.msra.mxu0 0
    %3448 = vmatprep.mubr.bf16.mxu0 0
    %3449 = vmatmul.mubr.bf16.gmra.mrb[0].mxu0 %v3408
    %v3450 = vpop.f32.mrb[0].mxu0
    %v3451 = vadd.f32 0.0, %v3450
    %v3452 = vpop.f32.mrb[0].mxu0
    %v3453 = vpop.f32.mrb[0].mxu0
    %v3454 = vadd.f32 0.0, %v3453
    %v3455 = vpop.f32.mrb[0].mxu0
    %3456 = vmatprep.mubr.bf16.mxu0 0
    %3457 = vmatmul.mubr.bf16.gmra.mrb[0].mxu0 %v3409
    %v3458 = vpop.f32.mrb[0].mxu0
    %v3459 = vadd.f32 0.0, %v3458
    %v3460 = vpop.f32.mrb[0].mxu0
    %v3461 = vpop.f32.mrb[0].mxu0
    %v3462 = vadd.f32 0.0, %v3461
    %v3463 = vpop.f32.mrb[0].mxu0
    %3464 = vmatprep.mubr.bf16.mxu0 0
    %3465 = vmatmul.mubr.bf16.gmra.mrb[0].mxu0 %v3410
    %v3466 = vpop.f32.mrb[0].mxu0
    %v3467 = vadd.f32 0.0, %v3466
    %v3468 = vpop.f32.mrb[0].mxu0
    %v3469 = vpop.f32.mrb[0].mxu0
    %v3470 = vadd.f32 0.0, %v3469
    %v3471 = vpop.f32.mrb[0].mxu0
    %3472 = vmatprep.mubr.bf16.mxu0 0
    %3473 = vmatmul.mubr.bf16.gmra.mrb[0].mxu0 %v3411
    %v3474 = vpop.f32.mrb[0].mxu0
    %v3475 = vadd.f32 0.0, %v3474
    %v3476 = vpop.f32.mrb[0].mxu0
    %v3477 = vpop.f32.mrb[0].mxu0
    %v3478 = vadd.f32 0.0, %v3477
    %v3479 = vpop.f32.mrb[0].mxu0
    %3480 = vmatprep.mubr.bf16.mxu0 0
    %3481 = vmatmul.mubr.bf16.gmra.mrb[0].mxu0 %v3412
    %v3482 = vpop.f32.mrb[0].mxu0
    %v3483 = vadd.f32 0.0, %v3482
    %v3484 = vpop.f32.mrb[0].mxu0
    %v3485 = vpop.f32.mrb[0].mxu0
    %v3486 = vadd.f32 0.0, %v3485
    %v3487 = vpop.f32.mrb[0].mxu0
    %3488 = vmatprep.mubr.bf16.mxu0 0
    %3489 = vmatmul.mubr.bf16.gmra.mrb[0].mxu0 %v3413
    %v3490 = vpop.f32.mrb[0].mxu0
    %v3491 = vadd.f32 0.0, %v3490
    %v3492 = vpop.f32.mrb[0].mxu0
    %v3493 = vpop.f32.mrb[0].mxu0
    %v3494 = vadd.f32 0.0, %v3493
    %v3495 = vpop.f32.mrb[0].mxu0
    %3496 = vmatprep.mubr.bf16.mxu0 0
    %3497 = vmatmul.mubr.bf16.gmra.mrb[0].mxu0 %v3414
    %v3498 = vpop.f32.mrb[0].mxu0
    %v3499 = vadd.f32 0.0, %v3498
    %v3500 = vpop.f32.mrb[0].mxu0
    %v3501 = vpop.f32.mrb[0].mxu0
    %v3502 = vadd.f32 0.0, %v3501
    %v3503 = vpop.f32.mrb[0].mxu0
    %3504 = vmatprep.mubr.bf16.mxu0 0
    %3505 = vmatmul.mubr.bf16.gmra.mrb[0].mxu0 %v3415
    %v3506 = vpop.f32.mrb[0].mxu0
    %v3507 = vadd.f32 0.0, %v3506
    %v3508 = vpop.f32.mrb[0].mxu0
    %v3509 = vpop.f32.mrb[0].mxu0
    %v3510 = vadd.f32 0.0, %v3509
    %v3511 = vpop.f32.mrb[0].mxu0
    %3512 = vdwg.mxu0
    %v3513 = vpack.c.bf16 %v2344, %v2341
    %v3514 = vpack.c.bf16 %v2714, %v2711
    %v3515 = vpack.c.bf16 %v2352, %v2349
    %v3516 = vpack.c.bf16 %v2722, %v2719
    %v3517 = vpack.c.bf16 %v2360, %v2357
    %v3518 = vpack.c.bf16 %v2730, %v2727
    %v3519 = vpack.c.bf16 %v2368, %v2365
    %v3520 = vpack.c.bf16 %v2738, %v2735
    %v3521 = vpack.c.bf16 %v2376, %v2373
    %v3522 = vpack.c.bf16 %v2746, %v2743
    %v3523 = vpack.c.bf16 %v2384, %v2381
    %v3524 = vpack.c.bf16 %v2754, %v2751
    %v3525 = vpack.c.bf16 %v2392, %v2389
    %v3526 = vpack.c.bf16 %v2762, %v2759
    %v3527 = vpack.c.bf16 %v2400, %v2397
    %v3528 = vpack.c.bf16 %v2770, %v2767
    %v3529 = vpack.c.bf16 %v3084, %v3081
    %v3530 = vpack.c.bf16 %v3454, %v3451
    %v3531 = vpack.c.bf16 %v3092, %v3089
    %v3532 = vpack.c.bf16 %v3462, %v3459
    %v3533 = vpack.c.bf16 %v3100, %v3097
    %v3534 = vpack.c.bf16 %v3470, %v3467
    %v3535 = vpack.c.bf16 %v3108, %v3105
    %v3536 = vpack.c.bf16 %v3478, %v3475
    %v3537 = vpack.c.bf16 %v3116, %v3113
    %v3538 = vpack.c.bf16 %v3486, %v3483
    %v3539 = vpack.c.bf16 %v3124, %v3121
    %v3540 = vpack.c.bf16 %v3494, %v3491
    %v3541 = vpack.c.bf16 %v3132, %v3129
    %v3542 = vpack.c.bf16 %v3502, %v3499
    %v3543 = vpack.c.bf16 %v3140, %v3137
    %v3544 = vpack.c.bf16 %v3510, %v3507
    %v3545 = vld [vmem:[#allocation8] sm:$0xff]
    %v3546 = vld [vmem:[#allocation8 + $0x8] sm:$0xff]
    %v3547 = vld [vmem:[#allocation8 + $0x10] sm:$0xff]
    %v3548 = vld [vmem:[#allocation8 + $0x18] sm:$0xff]
    %v3549 = vld [vmem:[#allocation8 + $0x20] sm:$0xff]
    %v3550 = vld [vmem:[#allocation8 + $0x28] sm:$0xff]
    %v3551 = vld [vmem:[#allocation8 + $0x30] sm:$0xff]
    %v3552 = vld [vmem:[#allocation8 + $0x38] sm:$0xff]
    %v3553 = vld [vmem:[#allocation8 + $0x40] sm:$0xff]
    %v3554 = vld [vmem:[#allocation8 + $0x48] sm:$0xff]
    %v3555 = vld [vmem:[#allocation8 + $0x50] sm:$0xff]
    %v3556 = vld [vmem:[#allocation8 + $0x58] sm:$0xff]
    %v3557 = vld [vmem:[#allocation8 + $0x60] sm:$0xff]
    %v3558 = vld [vmem:[#allocation8 + $0x68] sm:$0xff]
    %v3559 = vld [vmem:[#allocation8 + $0x70] sm:$0xff]
    %v3560 = vld [vmem:[#allocation8 + $0x78] sm:$0xff]
    %v3561 = vld [vmem:[#allocation8 + $0x80] sm:$0xff]
    %v3562 = vld [vmem:[#allocation8 + $0x88] sm:$0xff]
    %v3563 = vld [vmem:[#allocation8 + $0x90] sm:$0xff]
    %v3564 = vld [vmem:[#allocation8 + $0x98] sm:$0xff]
    %v3565 = vld [vmem:[#allocation8 + $0xa0] sm:$0xff]
    %v3566 = vld [vmem:[#allocation8 + $0xa8] sm:$0xff]
    %v3567 = vld [vmem:[#allocation8 + $0xb0] sm:$0xff]
    %v3568 = vld [vmem:[#allocation8 + $0xb8] sm:$0xff]
    %v3569 = vld [vmem:[#allocation8 + $0xc0] sm:$0xff]
    %v3570 = vld [vmem:[#allocation8 + $0xc8] sm:$0xff]
    %v3571 = vld [vmem:[#allocation8 + $0xd0] sm:$0xff]
    %v3572 = vld [vmem:[#allocation8 + $0xd8] sm:$0xff]
    %v3573 = vld [vmem:[#allocation8 + $0xe0] sm:$0xff]
    %v3574 = vld [vmem:[#allocation8 + $0xe8] sm:$0xff]
    %v3575 = vld [vmem:[#allocation8 + $0xf0] sm:$0xff]
    %v3576 = vld [vmem:[#allocation8 + $0xf8] sm:$0xff]
    %v3577 = vld [vmem:[%s5] sm:$0x3]
    %v3579 = vlaneseq
    %v3580 = vshrl.u32 %v3579, 7
    %v3581 = vsub.s32 0, %v3580
    %v3582 = vrot.slane %v3577, %v3581
    %v3583 = vlaneseq
    %v3584 = vshrl.u32 %v3583, 7
    %v3585 = vsub.s32 1, %v3584
    %v3586 = vrot.slane %v3577, %v3585
    %v3621 = vunpack.c.l.b16 %v3545
    %v3622 = vunpack.c.h.b16 %v3545
    %v3623 = vunpack.c.l.b16 %v3546
    %v3624 = vunpack.c.h.b16 %v3546
    %v3625 = vunpack.c.l.b16 %v3547
    %v3626 = vunpack.c.h.b16 %v3547
    %v3627 = vunpack.c.l.b16 %v3548
    %v3628 = vunpack.c.h.b16 %v3548
    %v3629 = vunpack.c.l.b16 %v3549
    %v3630 = vunpack.c.h.b16 %v3549
    %v3631 = vunpack.c.l.b16 %v3550
    %v3632 = vunpack.c.h.b16 %v3550
    %v3633 = vunpack.c.l.b16 %v3551
    %v3634 = vunpack.c.h.b16 %v3551
    %v3635 = vunpack.c.l.b16 %v3552
    %v3636 = vunpack.c.h.b16 %v3552
    %v3637 = vunpack.c.l.b16 %v3553
    %v3638 = vunpack.c.h.b16 %v3553
    %v3639 = vunpack.c.l.b16 %v3554
    %v3640 = vunpack.c.h.b16 %v3554
    %v3641 = vunpack.c.l.b16 %v3555
    %v3642 = vunpack.c.h.b16 %v3555
    %v3643 = vunpack.c.l.b16 %v3556
    %v3644 = vunpack.c.h.b16 %v3556
    %v3645 = vunpack.c.l.b16 %v3557
    %v3646 = vunpack.c.h.b16 %v3557
    %v3647 = vunpack.c.l.b16 %v3558
    %v3648 = vunpack.c.h.b16 %v3558
    %v3649 = vunpack.c.l.b16 %v3559
    %v3650 = vunpack.c.h.b16 %v3559
    %v3651 = vunpack.c.l.b16 %v3560
    %v3652 = vunpack.c.h.b16 %v3560
    %v3653 = vunpack.c.l.b16 %v3561
    %v3654 = vunpack.c.h.b16 %v3561
    %v3655 = vunpack.c.l.b16 %v3562
    %v3656 = vunpack.c.h.b16 %v3562
    %v3657 = vunpack.c.l.b16 %v3563
    %v3658 = vunpack.c.h.b16 %v3563
    %v3659 = vunpack.c.l.b16 %v3564
    %v3660 = vunpack.c.h.b16 %v3564
    %v3661 = vunpack.c.l.b16 %v3565
    %v3662 = vunpack.c.h.b16 %v3565
    %v3663 = vunpack.c.l.b16 %v3566
    %v3664 = vunpack.c.h.b16 %v3566
    %v3665 = vunpack.c.l.b16 %v3567
    %v3666 = vunpack.c.h.b16 %v3567
    %v3667 = vunpack.c.l.b16 %v3568
    %v3668 = vunpack.c.h.b16 %v3568
    %v3669 = vunpack.c.l.b16 %v3569
    %v3670 = vunpack.c.h.b16 %v3569
    %v3671 = vunpack.c.l.b16 %v3570
    %v3672 = vunpack.c.h.b16 %v3570
    %v3673 = vunpack.c.l.b16 %v3571
    %v3674 = vunpack.c.h.b16 %v3571
    %v3675 = vunpack.c.l.b16 %v3572
    %v3676 = vunpack.c.h.b16 %v3572
    %v3677 = vunpack.c.l.b16 %v3573
    %v3678 = vunpack.c.h.b16 %v3573
    %v3679 = vunpack.c.l.b16 %v3574
    %v3680 = vunpack.c.h.b16 %v3574
    %v3681 = vunpack.c.l.b16 %v3575
    %v3682 = vunpack.c.h.b16 %v3575
    %v3683 = vunpack.c.l.b16 %v3576
    %v3684 = vunpack.c.h.b16 %v3576
    %v3685 = vpack.c.b16 %v3623, %v3621
    %v3686 = vpack.c.b16 %v3624, %v3622
    %v3687 = vpack.c.b16 %v3627, %v3625
    %v3688 = vpack.c.b16 %v3628, %v3626
    %v3689 = vpack.c.b16 %v3631, %v3629
    %v3690 = vpack.c.b16 %v3632, %v3630
    %v3691 = vpack.c.b16 %v3635, %v3633
    %v3692 = vpack.c.b16 %v3636, %v3634
    %v3693 = vpack.c.b16 %v3639, %v3637
    %v3694 = vpack.c.b16 %v3640, %v3638
    %v3695 = vpack.c.b16 %v3643, %v3641
    %v3696 = vpack.c.b16 %v3644, %v3642
    %v3697 = vpack.c.b16 %v3647, %v3645
    %v3698 = vpack.c.b16 %v3648, %v3646
    %v3699 = vpack.c.b16 %v3651, %v3649
    %v3700 = vpack.c.b16 %v3652, %v3650
    %v3701 = vpack.c.b16 %v3655, %v3653
    %v3702 = vpack.c.b16 %v3656, %v3654
    %v3703 = vpack.c.b16 %v3659, %v3657
    %v3704 = vpack.c.b16 %v3660, %v3658
    %v3705 = vpack.c.b16 %v3663, %v3661
    %v3706 = vpack.c.b16 %v3664, %v3662
    %v3707 = vpack.c.b16 %v3667, %v3665
    %v3708 = vpack.c.b16 %v3668, %v3666
    %v3709 = vpack.c.b16 %v3671, %v3669
    %v3710 = vpack.c.b16 %v3672, %v3670
    %v3711 = vpack.c.b16 %v3675, %v3673
    %v3712 = vpack.c.b16 %v3676, %v3674
    %v3713 = vpack.c.b16 %v3679, %v3677
    %v3714 = vpack.c.b16 %v3680, %v3678
    %v3715 = vpack.c.b16 %v3683, %v3681
    %v3716 = vpack.c.b16 %v3684, %v3682
    %3749 = vmatprep.subr.bf16.mxu0 %v3686
    %3750 = vmatpush1.bf16.msra.mxu0 %v3685
    %3751 = vmatprep.subr.bf16.mxu0 %v3688
    %3752 = vmatpush1.bf16.msra.mxu0 %v3687
    %3753 = vmatprep.subr.bf16.mxu0 %v3690
    %3754 = vmatpush1.bf16.msra.mxu0 %v3689
    %3755 = vmatprep.subr.bf16.mxu0 %v3692
    %3756 = vmatpush1.bf16.msra.mxu0 %v3691
    %3757 = vmatprep.subr.bf16.mxu0 %v3694
    %3758 = vmatpush1.bf16.msra.mxu0 %v3693
    %3759 = vmatprep.subr.bf16.mxu0 %v3696
    %3760 = vmatpush1.bf16.msra.mxu0 %v3695
    %3761 = vmatprep.subr.bf16.mxu0 %v3698
    %3762 = vmatpush1.bf16.msra.mxu0 %v3697
    %3763 = vmatprep.subr.bf16.mxu0 %v3700
    %3764 = vmatpush1.bf16.msra.mxu0 %v3699
    %3765 = vmatprep.subr.bf16.mxu0 %v3702
    %3766 = vmatpush1.bf16.msra.mxu0 %v3701
    %3767 = vmatprep.subr.bf16.mxu0 %v3704
    %3768 = vmatpush1.bf16.msra.mxu0 %v3703
    %3769 = vmatprep.subr.bf16.mxu0 %v3706
    %3770 = vmatpush1.bf16.msra.mxu0 %v3705
    %3771 = vmatprep.subr.bf16.mxu0 %v3708
    %3772 = vmatpush1.bf16.msra.mxu0 %v3707
    %3773 = vmatprep.subr.bf16.mxu0 %v3710
    %3774 = vmatpush1.bf16.msra.mxu0 %v3709
    %3775 = vmatprep.subr.bf16.mxu0 %v3712
    %3776 = vmatpush1.bf16.msra.mxu0 %v3711
    %3777 = vmatprep.subr.bf16.mxu0 %v3714
    %3778 = vmatpush1.bf16.msra.mxu0 %v3713
    %3779 = vmatprep.subr.bf16.mxu0 %v3716
    %3780 = vmatpush1.bf16.msra.mxu0 %v3715
    %3781 = vmatprep.mubr.bf16.mxu0 %v3514
    %3782 = vmatmul.mubr.bf16.gmra.mrb[0].mxu0 %v3513
    %v3783 = vpop.f32.mrb[0].mxu0
    %v3784 = vadd.f32 %v3582, %v3783
    %v3785 = vpop.f32.mrb[0].mxu0
    %v3786 = vadd.f32 %v3586, %v3785
    %v3787 = vpop.f32.mrb[0].mxu0
    %v3788 = vadd.f32 %v3582, %v3787
    %v3789 = vpop.f32.mrb[0].mxu0
    %v3790 = vadd.f32 %v3586, %v3789
    %3791 = vmatprep.mubr.bf16.mxu0 %v3516
    %3792 = vmatmul.mubr.bf16.gmra.mrb[0].mxu0 %v3515
    %v3793 = vpop.f32.mrb[0].mxu0
    %v3794 = vadd.f32 %v3582, %v3793
    %v3795 = vpop.f32.mrb[0].mxu0
    %v3796 = vadd.f32 %v3586, %v3795
    %v3797 = vpop.f32.mrb[0].mxu0
    %v3798 = vadd.f32 %v3582, %v3797
    %v3799 = vpop.f32.mrb[0].mxu0
    %v3800 = vadd.f32 %v3586, %v3799
    %3801 = vmatprep.mubr.bf16.mxu0 %v3518
    %3802 = vmatmul.mubr.bf16.gmra.mrb[0].mxu0 %v3517
    %v3803 = vpop.f32.mrb[0].mxu0
    %v3804 = vadd.f32 %v3582, %v3803
    %v3805 = vpop.f32.mrb[0].mxu0
    %v3806 = vadd.f32 %v3586, %v3805
    %v3807 = vpop.f32.mrb[0].mxu0
    %v3808 = vadd.f32 %v3582, %v3807
    %v3809 = vpop.f32.mrb[0].mxu0
    %v3810 = vadd.f32 %v3586, %v3809
    %3811 = vmatprep.mubr.bf16.mxu0 %v3520
    %3812 = vmatmul.mubr.bf16.gmra.mrb[0].mxu0 %v3519
    %v3813 = vpop.f32.mrb[0].mxu0
    %v3814 = vadd.f32 %v3582, %v3813
    %v3815 = vpop.f32.mrb[0].mxu0
    %v3816 = vadd.f32 %v3586, %v3815
    %v3817 = vpop.f32.mrb[0].mxu0
    %v3818 = vadd.f32 %v3582, %v3817
    %v3819 = vpop.f32.mrb[0].mxu0
    %v3820 = vadd.f32 %v3586, %v3819
    %3821 = vmatprep.mubr.bf16.mxu0 %v3522
    %3822 = vmatmul.mubr.bf16.gmra.mrb[0].mxu0 %v3521
    %v3823 = vpop.f32.mrb[0].mxu0
    %v3824 = vadd.f32 %v3582, %v3823
    %v3825 = vpop.f32.mrb[0].mxu0
    %v3826 = vadd.f32 %v3586, %v3825
    %v3827 = vpop.f32.mrb[0].mxu0
    %v3828 = vadd.f32 %v3582, %v3827
    %v3829 = vpop.f32.mrb[0].mxu0
    %v3830 = vadd.f32 %v3586, %v3829
    %3831 = vmatprep.mubr.bf16.mxu0 %v3524
    %3832 = vmatmul.mubr.bf16.gmra.mrb[0].mxu0 %v3523
    %v3833 = vpop.f32.mrb[0].mxu0
    %v3834 = vadd.f32 %v3582, %v3833
    %v3835 = vpop.f32.mrb[0].mxu0
    %v3836 = vadd.f32 %v3586, %v3835
    %v3837 = vpop.f32.mrb[0].mxu0
    %v3838 = vadd.f32 %v3582, %v3837
    %v3839 = vpop.f32.mrb[0].mxu0
    %v3840 = vadd.f32 %v3586, %v3839
    %3841 = vmatprep.mubr.bf16.mxu0 %v3526
    %3842 = vmatmul.mubr.bf16.gmra.mrb[0].mxu0 %v3525
    %v3843 = vpop.f32.mrb[0].mxu0
    %v3844 = vadd.f32 %v3582, %v3843
    %v3845 = vpop.f32.mrb[0].mxu0
    %v3846 = vadd.f32 %v3586, %v3845
    %v3847 = vpop.f32.mrb[0].mxu0
    %v3848 = vadd.f32 %v3582, %v3847
    %v3849 = vpop.f32.mrb[0].mxu0
    %v3850 = vadd.f32 %v3586, %v3849
    %3851 = vmatprep.mubr.bf16.mxu0 %v3528
    %3852 = vmatmul.mubr.bf16.gmra.mrb[0].mxu0 %v3527
    %v3853 = vpop.f32.mrb[0].mxu0
    %v3854 = vadd.f32 %v3582, %v3853
    %v3855 = vpop.f32.mrb[0].mxu0
    %v3856 = vadd.f32 %v3586, %v3855
    %v3857 = vpop.f32.mrb[0].mxu0
    %v3858 = vadd.f32 %v3582, %v3857
    %v3859 = vpop.f32.mrb[0].mxu0
    %v3860 = vadd.f32 %v3586, %v3859
    %3861 = vmatprep.mubr.bf16.mxu0 %v3530
    %3862 = vmatmul.mubr.bf16.gmra.mrb[0].mxu0 %v3529
    %v3863 = vpop.f32.mrb[0].mxu0
    %v3864 = vadd.f32 %v3582, %v3863
    %v3865 = vpop.f32.mrb[0].mxu0
    %v3866 = vadd.f32 %v3586, %v3865
    %v3867 = vpop.f32.mrb[0].mxu0
    %v3868 = vadd.f32 %v3582, %v3867
    %v3869 = vpop.f32.mrb[0].mxu0
    %v3870 = vadd.f32 %v3586, %v3869
    %3871 = vmatprep.mubr.bf16.mxu0 %v3532
    %3872 = vmatmul.mubr.bf16.gmra.mrb[0].mxu0 %v3531
    %v3873 = vpop.f32.mrb[0].mxu0
    %v3874 = vadd.f32 %v3582, %v3873
    %v3875 = vpop.f32.mrb[0].mxu0
    %v3876 = vadd.f32 %v3586, %v3875
    %v3877 = vpop.f32.mrb[0].mxu0
    %v3878 = vadd.f32 %v3582, %v3877
    %v3879 = vpop.f32.mrb[0].mxu0
    %v3880 = vadd.f32 %v3586, %v3879
    %3881 = vmatprep.mubr.bf16.mxu0 %v3534
    %3882 = vmatmul.mubr.bf16.gmra.mrb[0].mxu0 %v3533
    %v3883 = vpop.f32.mrb[0].mxu0
    %v3884 = vadd.f32 %v3582, %v3883
    %v3885 = vpop.f32.mrb[0].mxu0
    %v3886 = vadd.f32 %v3586, %v3885
    %v3887 = vpop.f32.mrb[0].mxu0
    %v3888 = vadd.f32 %v3582, %v3887
    %v3889 = vpop.f32.mrb[0].mxu0
    %v3890 = vadd.f32 %v3586, %v3889
    %3891 = vmatprep.mubr.bf16.mxu0 %v3536
    %3892 = vmatmul.mubr.bf16.gmra.mrb[0].mxu0 %v3535
    %v3893 = vpop.f32.mrb[0].mxu0
    %v3894 = vadd.f32 %v3582, %v3893
    %v3895 = vpop.f32.mrb[0].mxu0
    %v3896 = vadd.f32 %v3586, %v3895
    %v3897 = vpop.f32.mrb[0].mxu0
    %v3898 = vadd.f32 %v3582, %v3897
    %v3899 = vpop.f32.mrb[0].mxu0
    %v3900 = vadd.f32 %v3586, %v3899
    %3901 = vmatprep.mubr.bf16.mxu0 %v3538
    %3902 = vmatmul.mubr.bf16.gmra.mrb[0].mxu0 %v3537
    %v3903 = vpop.f32.mrb[0].mxu0
    %v3904 = vadd.f32 %v3582, %v3903
    %v3905 = vpop.f32.mrb[0].mxu0
    %v3906 = vadd.f32 %v3586, %v3905
    %v3907 = vpop.f32.mrb[0].mxu0
    %v3908 = vadd.f32 %v3582, %v3907
    %v3909 = vpop.f32.mrb[0].mxu0
    %v3910 = vadd.f32 %v3586, %v3909
    %3911 = vmatprep.mubr.bf16.mxu0 %v3540
    %3912 = vmatmul.mubr.bf16.gmra.mrb[0].mxu0 %v3539
    %v3913 = vpop.f32.mrb[0].mxu0
    %v3914 = vadd.f32 %v3582, %v3913
    %v3915 = vpop.f32.mrb[0].mxu0
    %v3916 = vadd.f32 %v3586, %v3915
    %v3917 = vpop.f32.mrb[0].mxu0
    %v3918 = vadd.f32 %v3582, %v3917
    %v3919 = vpop.f32.mrb[0].mxu0
    %v3920 = vadd.f32 %v3586, %v3919
    %3921 = vmatprep.mubr.bf16.mxu0 %v3542
    %3922 = vmatmul.mubr.bf16.gmra.mrb[0].mxu0 %v3541
    %v3923 = vpop.f32.mrb[0].mxu0
    %v3924 = vadd.f32 %v3582, %v3923
    %v3925 = vpop.f32.mrb[0].mxu0
    %v3926 = vadd.f32 %v3586, %v3925
    %v3927 = vpop.f32.mrb[0].mxu0
    %v3928 = vadd.f32 %v3582, %v3927
    %v3929 = vpop.f32.mrb[0].mxu0
    %v3930 = vadd.f32 %v3586, %v3929
    %3931 = vmatprep.mubr.bf16.mxu0 %v3544
    %3932 = vmatmul.mubr.bf16.gmra.mrb[0].mxu0 %v3543
    %v3933 = vpop.f32.mrb[0].mxu0
    %v3934 = vadd.f32 %v3582, %v3933
    %v3935 = vpop.f32.mrb[0].mxu0
    %v3936 = vadd.f32 %v3586, %v3935
    %v3937 = vpop.f32.mrb[0].mxu0
    %v3938 = vadd.f32 %v3582, %v3937
    %v3939 = vpop.f32.mrb[0].mxu0
    %v3940 = vadd.f32 %v3586, %v3939
    %3941 = vdwg.mxu0
    %v3942 = vadd.f32 %v3784, %v117
    %v3943 = vadd.f32 %v3786, %v118
    %v3944 = vadd.f32 %v3788, %v119
    %v3945 = vadd.f32 %v3790, %v120
    %v3946 = vadd.f32 %v3794, %v121
    %v3947 = vadd.f32 %v3796, %v122
    %v3948 = vadd.f32 %v3798, %v123
    %v3949 = vadd.f32 %v3800, %v124
    %v3950 = vadd.f32 %v3804, %v125
    %v3951 = vadd.f32 %v3806, %v126
    %v3952 = vadd.f32 %v3808, %v127
    %v3953 = vadd.f32 %v3810, %v128
    %v3954 = vadd.f32 %v3814, %v129
    %v3955 = vadd.f32 %v3816, %v130
    %v3956 = vadd.f32 %v3818, %v131
    %v3957 = vadd.f32 %v3820, %v132
    %v3958 = vadd.f32 %v3824, %v133
    %v3959 = vadd.f32 %v3826, %v134
    %v3960 = vadd.f32 %v3828, %v135
    %v3961 = vadd.f32 %v3830, %v136
    %v3962 = vadd.f32 %v3834, %v137
    %v3963 = vadd.f32 %v3836, %v138
    %v3964 = vadd.f32 %v3838, %v139
    %v3965 = vadd.f32 %v3840, %v140
    %v3966 = vadd.f32 %v3844, %v141
    %v3967 = vadd.f32 %v3846, %v142
    %v3968 = vadd.f32 %v3848, %v143
    %v3969 = vadd.f32 %v3850, %v144
    %v3970 = vadd.f32 %v3854, %v145
    %v3971 = vadd.f32 %v3856, %v146
    %v3972 = vadd.f32 %v3858, %v147
    %v3973 = vadd.f32 %v3860, %v148
    %v3974 = vadd.f32 %v3864, %v149
    %v3975 = vadd.f32 %v3866, %v150
    %v3976 = vadd.f32 %v3868, %v151
    %v3977 = vadd.f32 %v3870, %v152
    %v3978 = vadd.f32 %v3874, %v153
    %v3979 = vadd.f32 %v3876, %v154
    %v3980 = vadd.f32 %v3878, %v155
    %v3981 = vadd.f32 %v3880, %v156
    %v3982 = vadd.f32 %v3884, %v157
    %v3983 = vadd.f32 %v3886, %v158
    %v3984 = vadd.f32 %v3888, %v159
    %v3985 = vadd.f32 %v3890, %v160
    %v3986 = vadd.f32 %v3894, %v161
    %v3987 = vadd.f32 %v3896, %v162
    %v3988 = vadd.f32 %v3898, %v163
    %v3989 = vadd.f32 %v3900, %v164
    %v3990 = vadd.f32 %v3904, %v165
    %v3991 = vadd.f32 %v3906, %v166
    %v3992 = vadd.f32 %v3908, %v167
    %v3993 = vadd.f32 %v3910, %v168
    %v3994 = vadd.f32 %v3914, %v169
    %v3995 = vadd.f32 %v3916, %v170
    %v3996 = vadd.f32 %v3918, %v171
    %v3997 = vadd.f32 %v3920, %v172
    %v3998 = vadd.f32 %v3924, %v173
    %v3999 = vadd.f32 %v3926, %v174
    %v4000 = vadd.f32 %v3928, %v175
    %v4001 = vadd.f32 %v3930, %v176
    %v4002 = vadd.f32 %v3934, %v177
    %v4003 = vadd.f32 %v3936, %v178
    %v4004 = vadd.f32 %v3938, %v179
    %v4005 = vadd.f32 %v3940, %v180
    %v4006 = vpack.c.bf16 %v3944, %v3942
    %v4007 = vpack.c.bf16 %v3945, %v3943
    %v4008 = vpack.c.bf16 %v3948, %v3946
    %v4009 = vpack.c.bf16 %v3949, %v3947
    %v4010 = vpack.c.bf16 %v3952, %v3950
    %v4011 = vpack.c.bf16 %v3953, %v3951
    %v4012 = vpack.c.bf16 %v3956, %v3954
    %v4013 = vpack.c.bf16 %v3957, %v3955
    %v4014 = vpack.c.bf16 %v3960, %v3958
    %v4015 = vpack.c.bf16 %v3961, %v3959
    %v4016 = vpack.c.bf16 %v3964, %v3962
    %v4017 = vpack.c.bf16 %v3965, %v3963
    %v4018 = vpack.c.bf16 %v3968, %v3966
    %v4019 = vpack.c.bf16 %v3969, %v3967
    %v4020 = vpack.c.bf16 %v3972, %v3970
    %v4021 = vpack.c.bf16 %v3973, %v3971
    %v4022 = vpack.c.bf16 %v3976, %v3974
    %v4023 = vpack.c.bf16 %v3977, %v3975
    %v4024 = vpack.c.bf16 %v3980, %v3978
    %v4025 = vpack.c.bf16 %v3981, %v3979
    %v4026 = vpack.c.bf16 %v3984, %v3982
    %v4027 = vpack.c.bf16 %v3985, %v3983
    %v4028 = vpack.c.bf16 %v3988, %v3986
    %v4029 = vpack.c.bf16 %v3989, %v3987
    %v4030 = vpack.c.bf16 %v3992, %v3990
    %v4031 = vpack.c.bf16 %v3993, %v3991
    %v4032 = vpack.c.bf16 %v3996, %v3994
    %v4033 = vpack.c.bf16 %v3997, %v3995
    %v4034 = vpack.c.bf16 %v4000, %v3998
    %v4035 = vpack.c.bf16 %v4001, %v3999
    %v4036 = vpack.c.bf16 %v4004, %v4002
    %v4037 = vpack.c.bf16 %v4005, %v4003
    %v4038 = vld [vmem:[#allocation10] sm:$0xff]
    %v4039 = vld [vmem:[#allocation10 + $0x8] sm:$0xff]
    %v4040 = vld [vmem:[#allocation10 + $0x10] sm:$0xff]
    %v4041 = vld [vmem:[#allocation10 + $0x18] sm:$0xff]
    %v4042 = vld [vmem:[#allocation10 + $0x20] sm:$0xff]
    %v4043 = vld [vmem:[#allocation10 + $0x28] sm:$0xff]
    %v4044 = vld [vmem:[#allocation10 + $0x30] sm:$0xff]
    %v4045 = vld [vmem:[#allocation10 + $0x38] sm:$0xff]
    %v4046 = vld [vmem:[#allocation10 + $0x40] sm:$0xff]
    %v4047 = vld [vmem:[#allocation10 + $0x48] sm:$0xff]
    %v4048 = vld [vmem:[#allocation10 + $0x50] sm:$0xff]
    %v4049 = vld [vmem:[#allocation10 + $0x58] sm:$0xff]
    %v4050 = vld [vmem:[#allocation10 + $0x60] sm:$0xff]
    %v4051 = vld [vmem:[#allocation10 + $0x68] sm:$0xff]
    %v4052 = vld [vmem:[#allocation10 + $0x70] sm:$0xff]
    %v4053 = vld [vmem:[#allocation10 + $0x78] sm:$0xff]
    %v4054 = vld [vmem:[#allocation10 + $0x80] sm:$0xff]
    %v4055 = vld [vmem:[#allocation10 + $0x88] sm:$0xff]
    %v4056 = vld [vmem:[#allocation10 + $0x90] sm:$0xff]
    %v4057 = vld [vmem:[#allocation10 + $0x98] sm:$0xff]
    %v4058 = vld [vmem:[#allocation10 + $0xa0] sm:$0xff]
    %v4059 = vld [vmem:[#allocation10 + $0xa8] sm:$0xff]
    %v4060 = vld [vmem:[#allocation10 + $0xb0] sm:$0xff]
    %v4061 = vld [vmem:[#allocation10 + $0xb8] sm:$0xff]
    %v4062 = vld [vmem:[#allocation10 + $0xc0] sm:$0xff]
    %v4063 = vld [vmem:[#allocation10 + $0xc8] sm:$0xff]
    %v4064 = vld [vmem:[#allocation10 + $0xd0] sm:$0xff]
    %v4065 = vld [vmem:[#allocation10 + $0xd8] sm:$0xff]
    %v4066 = vld [vmem:[#allocation10 + $0xe0] sm:$0xff]
    %v4067 = vld [vmem:[#allocation10 + $0xe8] sm:$0xff]
    %v4068 = vld [vmem:[#allocation10 + $0xf0] sm:$0xff]
    %v4069 = vld [vmem:[#allocation10 + $0xf8] sm:$0xff]
    %v4070 = vld [vmem:[#allocation10 + $0x100] sm:$0xff]
    %v4071 = vld [vmem:[#allocation10 + $0x108] sm:$0xff]
    %v4072 = vld [vmem:[#allocation10 + $0x110] sm:$0xff]
    %v4073 = vld [vmem:[#allocation10 + $0x118] sm:$0xff]
    %v4074 = vld [vmem:[#allocation10 + $0x120] sm:$0xff]
    %v4075 = vld [vmem:[#allocation10 + $0x128] sm:$0xff]
    %v4076 = vld [vmem:[#allocation10 + $0x130] sm:$0xff]
    %v4077 = vld [vmem:[#allocation10 + $0x138] sm:$0xff]
    %v4078 = vld [vmem:[#allocation10 + $0x140] sm:$0xff]
    %v4079 = vld [vmem:[#allocation10 + $0x148] sm:$0xff]
    %v4080 = vld [vmem:[#allocation10 + $0x150] sm:$0xff]
    %v4081 = vld [vmem:[#allocation10 + $0x158] sm:$0xff]
    %v4082 = vld [vmem:[#allocation10 + $0x160] sm:$0xff]
    %v4083 = vld [vmem:[#allocation10 + $0x168] sm:$0xff]
    %v4084 = vld [vmem:[#allocation10 + $0x170] sm:$0xff]
    %v4085 = vld [vmem:[#allocation10 + $0x178] sm:$0xff]
    %v4086 = vld [vmem:[#allocation10 + $0x180] sm:$0xff]
    %v4087 = vld [vmem:[#allocation10 + $0x188] sm:$0xff]
    %v4088 = vld [vmem:[#allocation10 + $0x190] sm:$0xff]
    %v4089 = vld [vmem:[#allocation10 + $0x198] sm:$0xff]
    %v4090 = vld [vmem:[#allocation10 + $0x1a0] sm:$0xff]
    %v4091 = vld [vmem:[#allocation10 + $0x1a8] sm:$0xff]
    %v4092 = vld [vmem:[#allocation10 + $0x1b0] sm:$0xff]
    %v4093 = vld [vmem:[#allocation10 + $0x1b8] sm:$0xff]
    %v4094 = vld [vmem:[#allocation10 + $0x1c0] sm:$0xff]
    %v4095 = vld [vmem:[#allocation10 + $0x1c8] sm:$0xff]
    %v4096 = vld [vmem:[#allocation10 + $0x1d0] sm:$0xff]
    %v4097 = vld [vmem:[#allocation10 + $0x1d8] sm:$0xff]
    %v4098 = vld [vmem:[#allocation10 + $0x1e0] sm:$0xff]
    %v4099 = vld [vmem:[#allocation10 + $0x1e8] sm:$0xff]
    %v4100 = vld [vmem:[#allocation10 + $0x1f0] sm:$0xff]
    %v4101 = vld [vmem:[#allocation10 + $0x1f8] sm:$0xff]
    %v4102 = vld [vmem:[%s7] sm:$0xf]
    %v4104 = vlaneseq
    %v4105 = vshrl.u32 %v4104, 7
    %v4106 = vsub.s32 0, %v4105
    %v4107 = vrot.slane %v4102, %v4106
    %v4108 = vlaneseq
    %v4109 = vshrl.u32 %v4108, 7
    %v4110 = vsub.s32 1, %v4109
    %v4111 = vrot.slane %v4102, %v4110
    %v4112 = vlaneseq
    %v4113 = vshrl.u32 %v4112, 7
    %v4114 = vsub.s32 2, %v4113
    %v4115 = vrot.slane %v4102, %v4114
    %v4116 = vlaneseq
    %v4117 = vshrl.u32 %v4116, 7
    %v4118 = vsub.s32 3, %v4117
    %v4119 = vrot.slane %v4102, %v4118
    %v4188 = vunpack.c.l.b16 %v4038
    %v4189 = vunpack.c.h.b16 %v4038
    %v4190 = vunpack.c.l.b16 %v4039
    %v4191 = vunpack.c.h.b16 %v4039
    %v4192 = vunpack.c.l.b16 %v4040
    %v4193 = vunpack.c.h.b16 %v4040
    %v4194 = vunpack.c.l.b16 %v4041
    %v4195 = vunpack.c.h.b16 %v4041
    %v4196 = vunpack.c.l.b16 %v4042
    %v4197 = vunpack.c.h.b16 %v4042
    %v4198 = vunpack.c.l.b16 %v4043
    %v4199 = vunpack.c.h.b16 %v4043
    %v4200 = vunpack.c.l.b16 %v4044
    %v4201 = vunpack.c.h.b16 %v4044
    %v4202 = vunpack.c.l.b16 %v4045
    %v4203 = vunpack.c.h.b16 %v4045
    %v4204 = vunpack.c.l.b16 %v4046
    %v4205 = vunpack.c.h.b16 %v4046
    %v4206 = vunpack.c.l.b16 %v4047
    %v4207 = vunpack.c.h.b16 %v4047
    %v4208 = vunpack.c.l.b16 %v4048
    %v4209 = vunpack.c.h.b16 %v4048
    %v4210 = vunpack.c.l.b16 %v4049
    %v4211 = vunpack.c.h.b16 %v4049
    %v4212 = vunpack.c.l.b16 %v4050
    %v4213 = vunpack.c.h.b16 %v4050
    %v4214 = vunpack.c.l.b16 %v4051
    %v4215 = vunpack.c.h.b16 %v4051
    %v4216 = vunpack.c.l.b16 %v4052
    %v4217 = vunpack.c.h.b16 %v4052
    %v4218 = vunpack.c.l.b16 %v4053
    %v4219 = vunpack.c.h.b16 %v4053
    %v4220 = vunpack.c.l.b16 %v4054
    %v4221 = vunpack.c.h.b16 %v4054
    %v4222 = vunpack.c.l.b16 %v4055
    %v4223 = vunpack.c.h.b16 %v4055
    %v4224 = vunpack.c.l.b16 %v4056
    %v4225 = vunpack.c.h.b16 %v4056
    %v4226 = vunpack.c.l.b16 %v4057
    %v4227 = vunpack.c.h.b16 %v4057
    %v4228 = vunpack.c.l.b16 %v4058
    %v4229 = vunpack.c.h.b16 %v4058
    %v4230 = vunpack.c.l.b16 %v4059
    %v4231 = vunpack.c.h.b16 %v4059
    %v4232 = vunpack.c.l.b16 %v4060
    %v4233 = vunpack.c.h.b16 %v4060
    %v4234 = vunpack.c.l.b16 %v4061
    %v4235 = vunpack.c.h.b16 %v4061
    %v4236 = vunpack.c.l.b16 %v4062
    %v4237 = vunpack.c.h.b16 %v4062
    %v4238 = vunpack.c.l.b16 %v4063
    %v4239 = vunpack.c.h.b16 %v4063
    %v4240 = vunpack.c.l.b16 %v4064
    %v4241 = vunpack.c.h.b16 %v4064
    %v4242 = vunpack.c.l.b16 %v4065
    %v4243 = vunpack.c.h.b16 %v4065
    %v4244 = vunpack.c.l.b16 %v4066
    %v4245 = vunpack.c.h.b16 %v4066
    %v4246 = vunpack.c.l.b16 %v4067
    %v4247 = vunpack.c.h.b16 %v4067
    %v4248 = vunpack.c.l.b16 %v4068
    %v4249 = vunpack.c.h.b16 %v4068
    %v4250 = vunpack.c.l.b16 %v4069
    %v4251 = vunpack.c.h.b16 %v4069
    %v4252 = vunpack.c.l.b16 %v4070
    %v4253 = vunpack.c.h.b16 %v4070
    %v4254 = vunpack.c.l.b16 %v4071
    %v4255 = vunpack.c.h.b16 %v4071
    %v4256 = vunpack.c.l.b16 %v4072
    %v4257 = vunpack.c.h.b16 %v4072
    %v4258 = vunpack.c.l.b16 %v4073
    %v4259 = vunpack.c.h.b16 %v4073
    %v4260 = vunpack.c.l.b16 %v4074
    %v4261 = vunpack.c.h.b16 %v4074
    %v4262 = vunpack.c.l.b16 %v4075
    %v4263 = vunpack.c.h.b16 %v4075
    %v4264 = vunpack.c.l.b16 %v4076
    %v4265 = vunpack.c.h.b16 %v4076
    %v4266 = vunpack.c.l.b16 %v4077
    %v4267 = vunpack.c.h.b16 %v4077
    %v4268 = vunpack.c.l.b16 %v4078
    %v4269 = vunpack.c.h.b16 %v4078
    %v4270 = vunpack.c.l.b16 %v4079
    %v4271 = vunpack.c.h.b16 %v4079
    %v4272 = vunpack.c.l.b16 %v4080
    %v4273 = vunpack.c.h.b16 %v4080
    %v4274 = vunpack.c.l.b16 %v4081
    %v4275 = vunpack.c.h.b16 %v4081
    %v4276 = vunpack.c.l.b16 %v4082
    %v4277 = vunpack.c.h.b16 %v4082
    %v4278 = vunpack.c.l.b16 %v4083
    %v4279 = vunpack.c.h.b16 %v4083
    %v4280 = vunpack.c.l.b16 %v4084
    %v4281 = vunpack.c.h.b16 %v4084
    %v4282 = vunpack.c.l.b16 %v4085
    %v4283 = vunpack.c.h.b16 %v4085
    %v4284 = vunpack.c.l.b16 %v4086
    %v4285 = vunpack.c.h.b16 %v4086
    %v4286 = vunpack.c.l.b16 %v4087
    %v4287 = vunpack.c.h.b16 %v4087
    %v4288 = vunpack.c.l.b16 %v4088
    %v4289 = vunpack.c.h.b16 %v4088
    %v4290 = vunpack.c.l.b16 %v4089
    %v4291 = vunpack.c.h.b16 %v4089
    %v4292 = vunpack.c.l.b16 %v4090
    %v4293 = vunpack.c.h.b16 %v4090
    %v4294 = vunpack.c.l.b16 %v4091
    %v4295 = vunpack.c.h.b16 %v4091
    %v4296 = vunpack.c.l.b16 %v4092
    %v4297 = vunpack.c.h.b16 %v4092
    %v4298 = vunpack.c.l.b16 %v4093
    %v4299 = vunpack.c.h.b16 %v4093
    %v4300 = vunpack.c.l.b16 %v4094
    %v4301 = vunpack.c.h.b16 %v4094
    %v4302 = vunpack.c.l.b16 %v4095
    %v4303 = vunpack.c.h.b16 %v4095
    %v4304 = vunpack.c.l.b16 %v4096
    %v4305 = vunpack.c.h.b16 %v4096
    %v4306 = vunpack.c.l.b16 %v4097
    %v4307 = vunpack.c.h.b16 %v4097
    %v4308 = vunpack.c.l.b16 %v4098
    %v4309 = vunpack.c.h.b16 %v4098
    %v4310 = vunpack.c.l.b16 %v4099
    %v4311 = vunpack.c.h.b16 %v4099
    %v4312 = vunpack.c.l.b16 %v4100
    %v4313 = vunpack.c.h.b16 %v4100
    %v4314 = vunpack.c.l.b16 %v4101
    %v4315 = vunpack.c.h.b16 %v4101
    %v4316 = vpack.c.b16 %v4192, %v4188
    %v4317 = vpack.c.b16 %v4193, %v4189
    %v4318 = vpack.c.b16 %v4194, %v4190
    %v4319 = vpack.c.b16 %v4195, %v4191
    %v4320 = vpack.c.b16 %v4200, %v4196
    %v4321 = vpack.c.b16 %v4201, %v4197
    %v4322 = vpack.c.b16 %v4202, %v4198
    %v4323 = vpack.c.b16 %v4203, %v4199
    %v4324 = vpack.c.b16 %v4208, %v4204
    %v4325 = vpack.c.b16 %v4209, %v4205
    %v4326 = vpack.c.b16 %v4210, %v4206
    %v4327 = vpack.c.b16 %v4211, %v4207
    %v4328 = vpack.c.b16 %v4216, %v4212
    %v4329 = vpack.c.b16 %v4217, %v4213
    %v4330 = vpack.c.b16 %v4218, %v4214
    %v4331 = vpack.c.b16 %v4219, %v4215
    %v4332 = vpack.c.b16 %v4224, %v4220
    %v4333 = vpack.c.b16 %v4225, %v4221
    %v4334 = vpack.c.b16 %v4226, %v4222
    %v4335 = vpack.c.b16 %v4227, %v4223
    %v4336 = vpack.c.b16 %v4232, %v4228
    %v4337 = vpack.c.b16 %v4233, %v4229
    %v4338 = vpack.c.b16 %v4234, %v4230
    %v4339 = vpack.c.b16 %v4235, %v4231
    %v4340 = vpack.c.b16 %v4240, %v4236
    %v4341 = vpack.c.b16 %v4241, %v4237
    %v4342 = vpack.c.b16 %v4242, %v4238
    %v4343 = vpack.c.b16 %v4243, %v4239
    %v4344 = vpack.c.b16 %v4248, %v4244
    %v4345 = vpack.c.b16 %v4249, %v4245
    %v4346 = vpack.c.b16 %v4250, %v4246
    %v4347 = vpack.c.b16 %v4251, %v4247
    %v4348 = vpack.c.b16 %v4256, %v4252
    %v4349 = vpack.c.b16 %v4257, %v4253
    %v4350 = vpack.c.b16 %v4258, %v4254
    %v4351 = vpack.c.b16 %v4259, %v4255
    %v4352 = vpack.c.b16 %v4264, %v4260
    %v4353 = vpack.c.b16 %v4265, %v4261
    %v4354 = vpack.c.b16 %v4266, %v4262
    %v4355 = vpack.c.b16 %v4267, %v4263
    %v4356 = vpack.c.b16 %v4272, %v4268
    %v4357 = vpack.c.b16 %v4273, %v4269
    %v4358 = vpack.c.b16 %v4274, %v4270
    %v4359 = vpack.c.b16 %v4275, %v4271
    %v4360 = vpack.c.b16 %v4280, %v4276
    %v4361 = vpack.c.b16 %v4281, %v4277
    %v4362 = vpack.c.b16 %v4282, %v4278
    %v4363 = vpack.c.b16 %v4283, %v4279
    %v4364 = vpack.c.b16 %v4288, %v4284
    %v4365 = vpack.c.b16 %v4289, %v4285
    %v4366 = vpack.c.b16 %v4290, %v4286
    %v4367 = vpack.c.b16 %v4291, %v4287
    %v4368 = vpack.c.b16 %v4296, %v4292
    %v4369 = vpack.c.b16 %v4297, %v4293
    %v4370 = vpack.c.b16 %v4298, %v4294
    %v4371 = vpack.c.b16 %v4299, %v4295
    %v4372 = vpack.c.b16 %v4304, %v4300
    %v4373 = vpack.c.b16 %v4305, %v4301
    %v4374 = vpack.c.b16 %v4306, %v4302
    %v4375 = vpack.c.b16 %v4307, %v4303
    %v4376 = vpack.c.b16 %v4312, %v4308
    %v4377 = vpack.c.b16 %v4313, %v4309
    %v4378 = vpack.c.b16 %v4314, %v4310
    %v4379 = vpack.c.b16 %v4315, %v4311
    %4444 = vmatprep.subr.bf16.mxu0 %v4317
    %4445 = vmatpush1.bf16.msra.mxu0 %v4316
    %4446 = vmatprep.subr.bf16.mxu0 %v4321
    %4447 = vmatpush1.bf16.msra.mxu0 %v4320
    %4448 = vmatprep.subr.bf16.mxu0 %v4325
    %4449 = vmatpush1.bf16.msra.mxu0 %v4324
    %4450 = vmatprep.subr.bf16.mxu0 %v4329
    %4451 = vmatpush1.bf16.msra.mxu0 %v4328
    %4452 = vmatprep.subr.bf16.mxu0 %v4333
    %4453 = vmatpush1.bf16.msra.mxu0 %v4332
    %4454 = vmatprep.subr.bf16.mxu0 %v4337
    %4455 = vmatpush1.bf16.msra.mxu0 %v4336
    %4456 = vmatprep.subr.bf16.mxu0 %v4341
    %4457 = vmatpush1.bf16.msra.mxu0 %v4340
    %4458 = vmatprep.subr.bf16.mxu0 %v4345
    %4459 = vmatpush1.bf16.msra.mxu0 %v4344
    %4460 = vmatprep.subr.bf16.mxu0 %v4349
    %4461 = vmatpush1.bf16.msra.mxu0 %v4348
    %4462 = vmatprep.subr.bf16.mxu0 %v4353
    %4463 = vmatpush1.bf16.msra.mxu0 %v4352
    %4464 = vmatprep.subr.bf16.mxu0 %v4357
    %4465 = vmatpush1.bf16.msra.mxu0 %v4356
    %4466 = vmatprep.subr.bf16.mxu0 %v4361
    %4467 = vmatpush1.bf16.msra.mxu0 %v4360
    %4468 = vmatprep.subr.bf16.mxu0 %v4365
    %4469 = vmatpush1.bf16.msra.mxu0 %v4364
    %4470 = vmatprep.subr.bf16.mxu0 %v4369
    %4471 = vmatpush1.bf16.msra.mxu0 %v4368
    %4472 = vmatprep.subr.bf16.mxu0 %v4373
    %4473 = vmatpush1.bf16.msra.mxu0 %v4372
    %4474 = vmatprep.subr.bf16.mxu0 %v4377
    %4475 = vmatpush1.bf16.msra.mxu0 %v4376
    %4476 = vmatprep.mubr.bf16.mxu0 %v4007
    %4477 = vmatmul.mubr.bf16.gmra.mrb[0].mxu0 %v4006
    %v4478 = vpop.f32.mrb[0].mxu0
    %v4479 = vadd.f32 %v4107, %v4478
    %v4480 = vpop.f32.mrb[0].mxu0
    %v4481 = vadd.f32 %v4111, %v4480
    %v4482 = vpop.f32.mrb[0].mxu0
    %v4483 = vadd.f32 %v4107, %v4482
    %v4484 = vpop.f32.mrb[0].mxu0
    %v4485 = vadd.f32 %v4111, %v4484
    %4486 = vmatprep.mubr.bf16.mxu0 %v4009
    %4487 = vmatmul.mubr.bf16.gmra.mrb[0].mxu0 %v4008
    %v4488 = vpop.f32.mrb[0].mxu0
    %v4489 = vadd.f32 %v4107, %v4488
    %v4490 = vpop.f32.mrb[0].mxu0
    %v4491 = vadd.f32 %v4111, %v4490
    %v4492 = vpop.f32.mrb[0].mxu0
    %v4493 = vadd.f32 %v4107, %v4492
    %v4494 = vpop.f32.mrb[0].mxu0
    %v4495 = vadd.f32 %v4111, %v4494
    %4496 = vmatprep.mubr.bf16.mxu0 %v4011
    %4497 = vmatmul.mubr.bf16.gmra.mrb[0].mxu0 %v4010
    %v4498 = vpop.f32.mrb[0].mxu0
    %v4499 = vadd.f32 %v4107, %v4498
    %v4500 = vpop.f32.mrb[0].mxu0
    %v4501 = vadd.f32 %v4111, %v4500
    %v4502 = vpop.f32.mrb[0].mxu0
    %v4503 = vadd.f32 %v4107, %v4502
    %v4504 = vpop.f32.mrb[0].mxu0
    %v4505 = vadd.f32 %v4111, %v4504
    %4506 = vmatprep.mubr.bf16.mxu0 %v4013
    %4507 = vmatmul.mubr.bf16.gmra.mrb[0].mxu0 %v4012
    %v4508 = vpop.f32.mrb[0].mxu0
    %v4509 = vadd.f32 %v4107, %v4508
    %v4510 = vpop.f32.mrb[0].mxu0
    %v4511 = vadd.f32 %v4111, %v4510
    %v4512 = vpop.f32.mrb[0].mxu0
    %v4513 = vadd.f32 %v4107, %v4512
    %v4514 = vpop.f32.mrb[0].mxu0
    %v4515 = vadd.f32 %v4111, %v4514
    %4516 = vmatprep.mubr.bf16.mxu0 %v4015
    %4517 = vmatmul.mubr.bf16.gmra.mrb[0].mxu0 %v4014
    %v4518 = vpop.f32.mrb[0].mxu0
    %v4519 = vadd.f32 %v4107, %v4518
    %v4520 = vpop.f32.mrb[0].mxu0
    %v4521 = vadd.f32 %v4111, %v4520
    %v4522 = vpop.f32.mrb[0].mxu0
    %v4523 = vadd.f32 %v4107, %v4522
    %v4524 = vpop.f32.mrb[0].mxu0
    %v4525 = vadd.f32 %v4111, %v4524
    %4526 = vmatprep.mubr.bf16.mxu0 %v4017
    %4527 = vmatmul.mubr.bf16.gmra.mrb[0].mxu0 %v4016
    %v4528 = vpop.f32.mrb[0].mxu0
    %v4529 = vadd.f32 %v4107, %v4528
    %v4530 = vpop.f32.mrb[0].mxu0
    %v4531 = vadd.f32 %v4111, %v4530
    %v4532 = vpop.f32.mrb[0].mxu0
    %v4533 = vadd.f32 %v4107, %v4532
    %v4534 = vpop.f32.mrb[0].mxu0
    %v4535 = vadd.f32 %v4111, %v4534
    %4536 = vmatprep.mubr.bf16.mxu0 %v4019
    %4537 = vmatmul.mubr.bf16.gmra.mrb[0].mxu0 %v4018
    %v4538 = vpop.f32.mrb[0].mxu0
    %v4539 = vadd.f32 %v4107, %v4538
    %v4540 = vpop.f32.mrb[0].mxu0
    %v4541 = vadd.f32 %v4111, %v4540
    %v4542 = vpop.f32.mrb[0].mxu0
    %v4543 = vadd.f32 %v4107, %v4542
    %v4544 = vpop.f32.mrb[0].mxu0
    %v4545 = vadd.f32 %v4111, %v4544
    %4546 = vmatprep.mubr.bf16.mxu0 %v4021
    %4547 = vmatmul.mubr.bf16.gmra.mrb[0].mxu0 %v4020
    %v4548 = vpop.f32.mrb[0].mxu0
    %v4549 = vadd.f32 %v4107, %v4548
    %v4550 = vpop.f32.mrb[0].mxu0
    %v4551 = vadd.f32 %v4111, %v4550
    %v4552 = vpop.f32.mrb[0].mxu0
    %v4553 = vadd.f32 %v4107, %v4552
    %v4554 = vpop.f32.mrb[0].mxu0
    %v4555 = vadd.f32 %v4111, %v4554
    %4556 = vmatprep.mubr.bf16.mxu0 %v4023
    %4557 = vmatmul.mubr.bf16.gmra.mrb[0].mxu0 %v4022
    %v4558 = vpop.f32.mrb[0].mxu0
    %v4559 = vadd.f32 %v4107, %v4558
    %v4560 = vpop.f32.mrb[0].mxu0
    %v4561 = vadd.f32 %v4111, %v4560
    %v4562 = vpop.f32.mrb[0].mxu0
    %v4563 = vadd.f32 %v4107, %v4562
    %v4564 = vpop.f32.mrb[0].mxu0
    %v4565 = vadd.f32 %v4111, %v4564
    %4566 = vmatprep.mubr.bf16.mxu0 %v4025
    %4567 = vmatmul.mubr.bf16.gmra.mrb[0].mxu0 %v4024
    %v4568 = vpop.f32.mrb[0].mxu0
    %v4569 = vadd.f32 %v4107, %v4568
    %v4570 = vpop.f32.mrb[0].mxu0
    %v4571 = vadd.f32 %v4111, %v4570
    %v4572 = vpop.f32.mrb[0].mxu0
    %v4573 = vadd.f32 %v4107, %v4572
    %v4574 = vpop.f32.mrb[0].mxu0
    %v4575 = vadd.f32 %v4111, %v4574
    %4576 = vmatprep.mubr.bf16.mxu0 %v4027
    %4577 = vmatmul.mubr.bf16.gmra.mrb[0].mxu0 %v4026
    %v4578 = vpop.f32.mrb[0].mxu0
    %v4579 = vadd.f32 %v4107, %v4578
    %v4580 = vpop.f32.mrb[0].mxu0
    %v4581 = vadd.f32 %v4111, %v4580
    %v4582 = vpop.f32.mrb[0].mxu0
    %v4583 = vadd.f32 %v4107, %v4582
    %v4584 = vpop.f32.mrb[0].mxu0
    %v4585 = vadd.f32 %v4111, %v4584
    %4586 = vmatprep.mubr.bf16.mxu0 %v4029
    %4587 = vmatmul.mubr.bf16.gmra.mrb[0].mxu0 %v4028
    %v4588 = vpop.f32.mrb[0].mxu0
    %v4589 = vadd.f32 %v4107, %v4588
    %v4590 = vpop.f32.mrb[0].mxu0
    %v4591 = vadd.f32 %v4111, %v4590
    %v4592 = vpop.f32.mrb[0].mxu0
    %v4593 = vadd.f32 %v4107, %v4592
    %v4594 = vpop.f32.mrb[0].mxu0
    %v4595 = vadd.f32 %v4111, %v4594
    %4596 = vmatprep.mubr.bf16.mxu0 %v4031
    %4597 = vmatmul.mubr.bf16.gmra.mrb[0].mxu0 %v4030
    %v4598 = vpop.f32.mrb[0].mxu0
    %v4599 = vadd.f32 %v4107, %v4598
    %v4600 = vpop.f32.mrb[0].mxu0
    %v4601 = vadd.f32 %v4111, %v4600
    %v4602 = vpop.f32.mrb[0].mxu0
    %v4603 = vadd.f32 %v4107, %v4602
    %v4604 = vpop.f32.mrb[0].mxu0
    %v4605 = vadd.f32 %v4111, %v4604
    %4606 = vmatprep.mubr.bf16.mxu0 %v4033
    %4607 = vmatmul.mubr.bf16.gmra.mrb[0].mxu0 %v4032
    %v4608 = vpop.f32.mrb[0].mxu0
    %v4609 = vadd.f32 %v4107, %v4608
    %v4610 = vpop.f32.mrb[0].mxu0
    %v4611 = vadd.f32 %v4111, %v4610
    %v4612 = vpop.f32.mrb[0].mxu0
    %v4613 = vadd.f32 %v4107, %v4612
    %v4614 = vpop.f32.mrb[0].mxu0
    %v4615 = vadd.f32 %v4111, %v4614
    %4616 = vmatprep.mubr.bf16.mxu0 %v4035
    %4617 = vmatmul.mubr.bf16.gmra.mrb[0].mxu0 %v4034
    %v4618 = vpop.f32.mrb[0].mxu0
    %v4619 = vadd.f32 %v4107, %v4618
    %v4620 = vpop.f32.mrb[0].mxu0
    %v4621 = vadd.f32 %v4111, %v4620
    %v4622 = vpop.f32.mrb[0].mxu0
    %v4623 = vadd.f32 %v4107, %v4622
    %v4624 = vpop.f32.mrb[0].mxu0
    %v4625 = vadd.f32 %v4111, %v4624
    %4626 = vmatprep.mubr.bf16.mxu0 %v4037
    %4627 = vmatmul.mubr.bf16.gmra.mrb[0].mxu0 %v4036
    %v4628 = vpop.f32.mrb[0].mxu0
    %v4629 = vadd.f32 %v4107, %v4628
    %v4630 = vpop.f32.mrb[0].mxu0
    %v4631 = vadd.f32 %v4111, %v4630
    %v4632 = vpop.f32.mrb[0].mxu0
    %v4633 = vadd.f32 %v4107, %v4632
    %v4634 = vpop.f32.mrb[0].mxu0
    %v4635 = vadd.f32 %v4111, %v4634
    %4636 = vdwg.mxu0
    %4637 = vmatprep.subr.bf16.mxu0 %v4319
    %4638 = vmatpush1.bf16.msra.mxu0 %v4318
    %4639 = vmatprep.subr.bf16.mxu0 %v4323
    %4640 = vmatpush1.bf16.msra.mxu0 %v4322
    %4641 = vmatprep.subr.bf16.mxu0 %v4327
    %4642 = vmatpush1.bf16.msra.mxu0 %v4326
    %4643 = vmatprep.subr.bf16.mxu0 %v4331
    %4644 = vmatpush1.bf16.msra.mxu0 %v4330
    %4645 = vmatprep.subr.bf16.mxu0 %v4335
    %4646 = vmatpush1.bf16.msra.mxu0 %v4334
    %4647 = vmatprep.subr.bf16.mxu0 %v4339
    %4648 = vmatpush1.bf16.msra.mxu0 %v4338
    %4649 = vmatprep.subr.bf16.mxu0 %v4343
    %4650 = vmatpush1.bf16.msra.mxu0 %v4342
    %4651 = vmatprep.subr.bf16.mxu0 %v4347
    %4652 = vmatpush1.bf16.msra.mxu0 %v4346
    %4653 = vmatprep.subr.bf16.mxu0 %v4351
    %4654 = vmatpush1.bf16.msra.mxu0 %v4350
    %4655 = vmatprep.subr.bf16.mxu0 %v4355
    %4656 = vmatpush1.bf16.msra.mxu0 %v4354
    %4657 = vmatprep.subr.bf16.mxu0 %v4359
    %4658 = vmatpush1.bf16.msra.mxu0 %v4358
    %4659 = vmatprep.subr.bf16.mxu0 %v4363
    %4660 = vmatpush1.bf16.msra.mxu0 %v4362
    %4661 = vmatprep.subr.bf16.mxu0 %v4367
    %4662 = vmatpush1.bf16.msra.mxu0 %v4366
    %4663 = vmatprep.subr.bf16.mxu0 %v4371
    %4664 = vmatpush1.bf16.msra.mxu0 %v4370
    %4665 = vmatprep.subr.bf16.mxu0 %v4375
    %4666 = vmatpush1.bf16.msra.mxu0 %v4374
    %4667 = vmatprep.subr.bf16.mxu0 %v4379
    %4668 = vmatpush1.bf16.msra.mxu0 %v4378
    %4669 = vmatprep.mubr.bf16.mxu0 %v4007
    %4670 = vmatmul.mubr.bf16.gmra.mrb[0].mxu0 %v4006
    %v4671 = vpop.f32.mrb[0].mxu0
    %v4672 = vadd.f32 %v4115, %v4671
    %v4673 = vpop.f32.mrb[0].mxu0
    %v4674 = vadd.f32 %v4119, %v4673
    %v4675 = vpop.f32.mrb[0].mxu0
    %v4676 = vadd.f32 %v4115, %v4675
    %v4677 = vpop.f32.mrb[0].mxu0
    %v4678 = vadd.f32 %v4119, %v4677
    %4679 = vmatprep.mubr.bf16.mxu0 %v4009
    %4680 = vmatmul.mubr.bf16.gmra.mrb[0].mxu0 %v4008
    %v4681 = vpop.f32.mrb[0].mxu0
    %v4682 = vadd.f32 %v4115, %v4681
    %v4683 = vpop.f32.mrb[0].mxu0
    %v4684 = vadd.f32 %v4119, %v4683
    %v4685 = vpop.f32.mrb[0].mxu0
    %v4686 = vadd.f32 %v4115, %v4685
    %v4687 = vpop.f32.mrb[0].mxu0
    %v4688 = vadd.f32 %v4119, %v4687
    %4689 = vmatprep.mubr.bf16.mxu0 %v4011
    %4690 = vmatmul.mubr.bf16.gmra.mrb[0].mxu0 %v4010
    %v4691 = vpop.f32.mrb[0].mxu0
    %v4692 = vadd.f32 %v4115, %v4691
    %v4693 = vpop.f32.mrb[0].mxu0
    %v4694 = vadd.f32 %v4119, %v4693
    %v4695 = vpop.f32.mrb[0].mxu0
    %v4696 = vadd.f32 %v4115, %v4695
    %v4697 = vpop.f32.mrb[0].mxu0
    %v4698 = vadd.f32 %v4119, %v4697
    %4699 = vmatprep.mubr.bf16.mxu0 %v4013
    %4700 = vmatmul.mubr.bf16.gmra.mrb[0].mxu0 %v4012
    %v4701 = vpop.f32.mrb[0].mxu0
    %v4702 = vadd.f32 %v4115, %v4701
    %v4703 = vpop.f32.mrb[0].mxu0
    %v4704 = vadd.f32 %v4119, %v4703
    %v4705 = vpop.f32.mrb[0].mxu0
    %v4706 = vadd.f32 %v4115, %v4705
    %v4707 = vpop.f32.mrb[0].mxu0
    %v4708 = vadd.f32 %v4119, %v4707
    %4709 = vmatprep.mubr.bf16.mxu0 %v4015
    %4710 = vmatmul.mubr.bf16.gmra.mrb[0].mxu0 %v4014
    %v4711 = vpop.f32.mrb[0].mxu0
    %v4712 = vadd.f32 %v4115, %v4711
    %v4713 = vpop.f32.mrb[0].mxu0
    %v4714 = vadd.f32 %v4119, %v4713
    %v4715 = vpop.f32.mrb[0].mxu0
    %v4716 = vadd.f32 %v4115, %v4715
    %v4717 = vpop.f32.mrb[0].mxu0
    %v4718 = vadd.f32 %v4119, %v4717
    %4719 = vmatprep.mubr.bf16.mxu0 %v4017
    %4720 = vmatmul.mubr.bf16.gmra.mrb[0].mxu0 %v4016
    %v4721 = vpop.f32.mrb[0].mxu0
    %v4722 = vadd.f32 %v4115, %v4721
    %v4723 = vpop.f32.mrb[0].mxu0
    %v4724 = vadd.f32 %v4119, %v4723
    %v4725 = vpop.f32.mrb[0].mxu0
    %v4726 = vadd.f32 %v4115, %v4725
    %v4727 = vpop.f32.mrb[0].mxu0
    %v4728 = vadd.f32 %v4119, %v4727
    %4729 = vmatprep.mubr.bf16.mxu0 %v4019
    %4730 = vmatmul.mubr.bf16.gmra.mrb[0].mxu0 %v4018
    %v4731 = vpop.f32.mrb[0].mxu0
    %v4732 = vadd.f32 %v4115, %v4731
    %v4733 = vpop.f32.mrb[0].mxu0
    %v4734 = vadd.f32 %v4119, %v4733
    %v4735 = vpop.f32.mrb[0].mxu0
    %v4736 = vadd.f32 %v4115, %v4735
    %v4737 = vpop.f32.mrb[0].mxu0
    %v4738 = vadd.f32 %v4119, %v4737
    %4739 = vmatprep.mubr.bf16.mxu0 %v4021
    %4740 = vmatmul.mubr.bf16.gmra.mrb[0].mxu0 %v4020
    %v4741 = vpop.f32.mrb[0].mxu0
    %v4742 = vadd.f32 %v4115, %v4741
    %v4743 = vpop.f32.mrb[0].mxu0
    %v4744 = vadd.f32 %v4119, %v4743
    %v4745 = vpop.f32.mrb[0].mxu0
    %v4746 = vadd.f32 %v4115, %v4745
    %v4747 = vpop.f32.mrb[0].mxu0
    %v4748 = vadd.f32 %v4119, %v4747
    %4749 = vmatprep.mubr.bf16.mxu0 %v4023
    %4750 = vmatmul.mubr.bf16.gmra.mrb[0].mxu0 %v4022
    %v4751 = vpop.f32.mrb[0].mxu0
    %v4752 = vadd.f32 %v4115, %v4751
    %v4753 = vpop.f32.mrb[0].mxu0
    %v4754 = vadd.f32 %v4119, %v4753
    %v4755 = vpop.f32.mrb[0].mxu0
    %v4756 = vadd.f32 %v4115, %v4755
    %v4757 = vpop.f32.mrb[0].mxu0
    %v4758 = vadd.f32 %v4119, %v4757
    %4759 = vmatprep.mubr.bf16.mxu0 %v4025
    %4760 = vmatmul.mubr.bf16.gmra.mrb[0].mxu0 %v4024
    %v4761 = vpop.f32.mrb[0].mxu0
    %v4762 = vadd.f32 %v4115, %v4761
    %v4763 = vpop.f32.mrb[0].mxu0
    %v4764 = vadd.f32 %v4119, %v4763
    %v4765 = vpop.f32.mrb[0].mxu0
    %v4766 = vadd.f32 %v4115, %v4765
    %v4767 = vpop.f32.mrb[0].mxu0
    %v4768 = vadd.f32 %v4119, %v4767
    %4769 = vmatprep.mubr.bf16.mxu0 %v4027
    %4770 = vmatmul.mubr.bf16.gmra.mrb[0].mxu0 %v4026
    %v4771 = vpop.f32.mrb[0].mxu0
    %v4772 = vadd.f32 %v4115, %v4771
    %v4773 = vpop.f32.mrb[0].mxu0
    %v4774 = vadd.f32 %v4119, %v4773
    %v4775 = vpop.f32.mrb[0].mxu0
    %v4776 = vadd.f32 %v4115, %v4775
    %v4777 = vpop.f32.mrb[0].mxu0
    %v4778 = vadd.f32 %v4119, %v4777
    %4779 = vmatprep.mubr.bf16.mxu0 %v4029
    %4780 = vmatmul.mubr.bf16.gmra.mrb[0].mxu0 %v4028
    %v4781 = vpop.f32.mrb[0].mxu0
    %v4782 = vadd.f32 %v4115, %v4781
    %v4783 = vpop.f32.mrb[0].mxu0
    %v4784 = vadd.f32 %v4119, %v4783
    %v4785 = vpop.f32.mrb[0].mxu0
    %v4786 = vadd.f32 %v4115, %v4785
    %v4787 = vpop.f32.mrb[0].mxu0
    %v4788 = vadd.f32 %v4119, %v4787
    %4789 = vmatprep.mubr.bf16.mxu0 %v4031
    %4790 = vmatmul.mubr.bf16.gmra.mrb[0].mxu0 %v4030
    %v4791 = vpop.f32.mrb[0].mxu0
    %v4792 = vadd.f32 %v4115, %v4791
    %v4793 = vpop.f32.mrb[0].mxu0
    %v4794 = vadd.f32 %v4119, %v4793
    %v4795 = vpop.f32.mrb[0].mxu0
    %v4796 = vadd.f32 %v4115, %v4795
    %v4797 = vpop.f32.mrb[0].mxu0
    %v4798 = vadd.f32 %v4119, %v4797
    %4799 = vmatprep.mubr.bf16.mxu0 %v4033
    %4800 = vmatmul.mubr.bf16.gmra.mrb[0].mxu0 %v4032
    %v4801 = vpop.f32.mrb[0].mxu0
    %v4802 = vadd.f32 %v4115, %v4801
    %v4803 = vpop.f32.mrb[0].mxu0
    %v4804 = vadd.f32 %v4119, %v4803
    %v4805 = vpop.f32.mrb[0].mxu0
    %v4806 = vadd.f32 %v4115, %v4805
    %v4807 = vpop.f32.mrb[0].mxu0
    %v4808 = vadd.f32 %v4119, %v4807
    %4809 = vmatprep.mubr.bf16.mxu0 %v4035
    %4810 = vmatmul.mubr.bf16.gmra.mrb[0].mxu0 %v4034
    %v4811 = vpop.f32.mrb[0].mxu0
    %v4812 = vadd.f32 %v4115, %v4811
    %v4813 = vpop.f32.mrb[0].mxu0
    %v4814 = vadd.f32 %v4119, %v4813
    %v4815 = vpop.f32.mrb[0].mxu0
    %v4816 = vadd.f32 %v4115, %v4815
    %v4817 = vpop.f32.mrb[0].mxu0
    %v4818 = vadd.f32 %v4119, %v4817
    %4819 = vmatprep.mubr.bf16.mxu0 %v4037
    %4820 = vmatmul.mubr.bf16.gmra.mrb[0].mxu0 %v4036
    %v4821 = vpop.f32.mrb[0].mxu0
    %v4822 = vadd.f32 %v4115, %v4821
    %v4823 = vpop.f32.mrb[0].mxu0
    %v4824 = vadd.f32 %v4119, %v4823
    %v4825 = vpop.f32.mrb[0].mxu0
    %v4826 = vadd.f32 %v4115, %v4825
    %v4827 = vpop.f32.mrb[0].mxu0
    %v4828 = vadd.f32 %v4119, %v4827
    %4829 = vdwg.mxu0
    %v4830 = vmul.f32 %v4479, %v4479
    %v4831 = vmul.f32 %v4481, %v4481
    %v4832 = vmul.f32 %v4672, %v4672
    %v4833 = vmul.f32 %v4674, %v4674
    %v4834 = vmul.f32 %v4483, %v4483
    %v4835 = vmul.f32 %v4485, %v4485
    %v4836 = vmul.f32 %v4676, %v4676
    %v4837 = vmul.f32 %v4678, %v4678
    %v4838 = vmul.f32 %v4489, %v4489
    %v4839 = vmul.f32 %v4491, %v4491
    %v4840 = vmul.f32 %v4682, %v4682
    %v4841 = vmul.f32 %v4684, %v4684
    %v4842 = vmul.f32 %v4493, %v4493
    %v4843 = vmul.f32 %v4495, %v4495
    %v4844 = vmul.f32 %v4686, %v4686
    %v4845 = vmul.f32 %v4688, %v4688
    %v4846 = vmul.f32 %v4499, %v4499
    %v4847 = vmul.f32 %v4501, %v4501
    %v4848 = vmul.f32 %v4692, %v4692
    %v4849 = vmul.f32 %v4694, %v4694
    %v4850 = vmul.f32 %v4503, %v4503
    %v4851 = vmul.f32 %v4505, %v4505
    %v4852 = vmul.f32 %v4696, %v4696
    %v4853 = vmul.f32 %v4698, %v4698
    %v4854 = vmul.f32 %v4509, %v4509
    %v4855 = vmul.f32 %v4511, %v4511
    %v4856 = vmul.f32 %v4702, %v4702
    %v4857 = vmul.f32 %v4704, %v4704
    %v4858 = vmul.f32 %v4513, %v4513
    %v4859 = vmul.f32 %v4515, %v4515
    %v4860 = vmul.f32 %v4706, %v4706
    %v4861 = vmul.f32 %v4708, %v4708
    %v4862 = vmul.f32 %v4519, %v4519
    %v4863 = vmul.f32 %v4521, %v4521
    %v4864 = vmul.f32 %v4712, %v4712
    %v4865 = vmul.f32 %v4714, %v4714
    %v4866 = vmul.f32 %v4523, %v4523
    %v4867 = vmul.f32 %v4525, %v4525
    %v4868 = vmul.f32 %v4716, %v4716
    %v4869 = vmul.f32 %v4718, %v4718
    %v4870 = vmul.f32 %v4529, %v4529
    %v4871 = vmul.f32 %v4531, %v4531
    %v4872 = vmul.f32 %v4722, %v4722
    %v4873 = vmul.f32 %v4724, %v4724
    %v4874 = vmul.f32 %v4533, %v4533
    %v4875 = vmul.f32 %v4535, %v4535
    %v4876 = vmul.f32 %v4726, %v4726
    %v4877 = vmul.f32 %v4728, %v4728
    %v4878 = vmul.f32 %v4539, %v4539
    %v4879 = vmul.f32 %v4541, %v4541
    %v4880 = vmul.f32 %v4732, %v4732
    %v4881 = vmul.f32 %v4734, %v4734
    %v4882 = vmul.f32 %v4543, %v4543
    %v4883 = vmul.f32 %v4545, %v4545
    %v4884 = vmul.f32 %v4736, %v4736
    %v4885 = vmul.f32 %v4738, %v4738
    %v4886 = vmul.f32 %v4549, %v4549
    %v4887 = vmul.f32 %v4551, %v4551
    %v4888 = vmul.f32 %v4742, %v4742
    %v4889 = vmul.f32 %v4744, %v4744
    %v4890 = vmul.f32 %v4553, %v4553
    %v4891 = vmul.f32 %v4555, %v4555
    %v4892 = vmul.f32 %v4746, %v4746
    %v4893 = vmul.f32 %v4748, %v4748
    %v4894 = vmul.f32 %v4559, %v4559
    %v4895 = vmul.f32 %v4561, %v4561
    %v4896 = vmul.f32 %v4752, %v4752
    %v4897 = vmul.f32 %v4754, %v4754
    %v4898 = vmul.f32 %v4563, %v4563
    %v4899 = vmul.f32 %v4565, %v4565
    %v4900 = vmul.f32 %v4756, %v4756
    %v4901 = vmul.f32 %v4758, %v4758
    %v4902 = vmul.f32 %v4569, %v4569
    %v4903 = vmul.f32 %v4571, %v4571
    %v4904 = vmul.f32 %v4762, %v4762
    %v4905 = vmul.f32 %v4764, %v4764
    %v4906 = vmul.f32 %v4573, %v4573
    %v4907 = vmul.f32 %v4575, %v4575
    %v4908 = vmul.f32 %v4766, %v4766
    %v4909 = vmul.f32 %v4768, %v4768
    %v4910 = vmul.f32 %v4579, %v4579
    %v4911 = vmul.f32 %v4581, %v4581
    %v4912 = vmul.f32 %v4772, %v4772
    %v4913 = vmul.f32 %v4774, %v4774
    %v4914 = vmul.f32 %v4583, %v4583
    %v4915 = vmul.f32 %v4585, %v4585
    %v4916 = vmul.f32 %v4776, %v4776
    %v4917 = vmul.f32 %v4778, %v4778
    %v4918 = vmul.f32 %v4589, %v4589
    %v4919 = vmul.f32 %v4591, %v4591
    %v4920 = vmul.f32 %v4782, %v4782
    %v4921 = vmul.f32 %v4784, %v4784
    %v4922 = vmul.f32 %v4593, %v4593
    %v4923 = vmul.f32 %v4595, %v4595
    %v4924 = vmul.f32 %v4786, %v4786
    %v4925 = vmul.f32 %v4788, %v4788
    %v4926 = vmul.f32 %v4599, %v4599
    %v4927 = vmul.f32 %v4601, %v4601
    %v4928 = vmul.f32 %v4792, %v4792
    %v4929 = vmul.f32 %v4794, %v4794
    %v4930 = vmul.f32 %v4603, %v4603
    %v4931 = vmul.f32 %v4605, %v4605
    %v4932 = vmul.f32 %v4796, %v4796
    %v4933 = vmul.f32 %v4798, %v4798
    %v4934 = vmul.f32 %v4609, %v4609
    %v4935 = vmul.f32 %v4611, %v4611
    %v4936 = vmul.f32 %v4802, %v4802
    %v4937 = vmul.f32 %v4804, %v4804
    %v4938 = vmul.f32 %v4613, %v4613
    %v4939 = vmul.f32 %v4615, %v4615
    %v4940 = vmul.f32 %v4806, %v4806
    %v4941 = vmul.f32 %v4808, %v4808
    %v4942 = vmul.f32 %v4619, %v4619
    %v4943 = vmul.f32 %v4621, %v4621
    %v4944 = vmul.f32 %v4812, %v4812
    %v4945 = vmul.f32 %v4814, %v4814
    %v4946 = vmul.f32 %v4623, %v4623
    %v4947 = vmul.f32 %v4625, %v4625
    %v4948 = vmul.f32 %v4816, %v4816
    %v4949 = vmul.f32 %v4818, %v4818
    %v4950 = vmul.f32 %v4629, %v4629
    %v4951 = vmul.f32 %v4631, %v4631
    %v4952 = vmul.f32 %v4822, %v4822
    %v4953 = vmul.f32 %v4824, %v4824
    %v4954 = vmul.f32 %v4633, %v4633
    %v4955 = vmul.f32 %v4635, %v4635
    %v4956 = vmul.f32 %v4826, %v4826
    %v4957 = vmul.f32 %v4828, %v4828
    %v4958 = vmul.f32 %v4479, %v4830
    %v4959 = vmul.f32 %v4481, %v4831
    %v4960 = vmul.f32 %v4672, %v4832
    %v4961 = vmul.f32 %v4674, %v4833
    %v4962 = vmul.f32 %v4483, %v4834
    %v4963 = vmul.f32 %v4485, %v4835
    %v4964 = vmul.f32 %v4676, %v4836
    %v4965 = vmul.f32 %v4678, %v4837
    %v4966 = vmul.f32 %v4489, %v4838
    %v4967 = vmul.f32 %v4491, %v4839
    %v4968 = vmul.f32 %v4682, %v4840
    %v4969 = vmul.f32 %v4684, %v4841
    %v4970 = vmul.f32 %v4493, %v4842
    %v4971 = vmul.f32 %v4495, %v4843
    %v4972 = vmul.f32 %v4686, %v4844
    %v4973 = vmul.f32 %v4688, %v4845
    %v4974 = vmul.f32 %v4499, %v4846
    %v4975 = vmul.f32 %v4501, %v4847
    %v4976 = vmul.f32 %v4692, %v4848
    %v4977 = vmul.f32 %v4694, %v4849
    %v4978 = vmul.f32 %v4503, %v4850
    %v4979 = vmul.f32 %v4505, %v4851
    %v4980 = vmul.f32 %v4696, %v4852
    %v4981 = vmul.f32 %v4698, %v4853
    %v4982 = vmul.f32 %v4509, %v4854
    %v4983 = vmul.f32 %v4511, %v4855
    %v4984 = vmul.f32 %v4702, %v4856
    %v4985 = vmul.f32 %v4704, %v4857
    %v4986 = vmul.f32 %v4513, %v4858
    %v4987 = vmul.f32 %v4515, %v4859
    %v4988 = vmul.f32 %v4706, %v4860
    %v4989 = vmul.f32 %v4708, %v4861
    %v4990 = vmul.f32 %v4519, %v4862
    %v4991 = vmul.f32 %v4521, %v4863
    %v4992 = vmul.f32 %v4712, %v4864
    %v4993 = vmul.f32 %v4714, %v4865
    %v4994 = vmul.f32 %v4523, %v4866
    %v4995 = vmul.f32 %v4525, %v4867
    %v4996 = vmul.f32 %v4716, %v4868
    %v4997 = vmul.f32 %v4718, %v4869
    %v4998 = vmul.f32 %v4529, %v4870
    %v4999 = vmul.f32 %v4531, %v4871
    %v5000 = vmul.f32 %v4722, %v4872
    %v5001 = vmul.f32 %v4724, %v4873
    %v5002 = vmul.f32 %v4533, %v4874
    %v5003 = vmul.f32 %v4535, %v4875
    %v5004 = vmul.f32 %v4726, %v4876
    %v5005 = vmul.f32 %v4728, %v4877
    %v5006 = vmul.f32 %v4539, %v4878
    %v5007 = vmul.f32 %v4541, %v4879
    %v5008 = vmul.f32 %v4732, %v4880
    %v5009 = vmul.f32 %v4734, %v4881
    %v5010 = vmul.f32 %v4543, %v4882
    %v5011 = vmul.f32 %v4545, %v4883
    %v5012 = vmul.f32 %v4736, %v4884
    %v5013 = vmul.f32 %v4738, %v4885
    %v5014 = vmul.f32 %v4549, %v4886
    %v5015 = vmul.f32 %v4551, %v4887
    %v5016 = vmul.f32 %v4742, %v4888
    %v5017 = vmul.f32 %v4744, %v4889
    %v5018 = vmul.f32 %v4553, %v4890
    %v5019 = vmul.f32 %v4555, %v4891
    %v5020 = vmul.f32 %v4746, %v4892
    %v5021 = vmul.f32 %v4748, %v4893
    %v5022 = vmul.f32 %v4559, %v4894
    %v5023 = vmul.f32 %v4561, %v4895
    %v5024 = vmul.f32 %v4752, %v4896
    %v5025 = vmul.f32 %v4754, %v4897
    %v5026 = vmul.f32 %v4563, %v4898
    %v5027 = vmul.f32 %v4565, %v4899
    %v5028 = vmul.f32 %v4756, %v4900
    %v5029 = vmul.f32 %v4758, %v4901
    %v5030 = vmul.f32 %v4569, %v4902
    %v5031 = vmul.f32 %v4571, %v4903
    %v5032 = vmul.f32 %v4762, %v4904
    %v5033 = vmul.f32 %v4764, %v4905
    %v5034 = vmul.f32 %v4573, %v4906
    %v5035 = vmul.f32 %v4575, %v4907
    %v5036 = vmul.f32 %v4766, %v4908
    %v5037 = vmul.f32 %v4768, %v4909
    %v5038 = vmul.f32 %v4579, %v4910
    %v5039 = vmul.f32 %v4581, %v4911
    %v5040 = vmul.f32 %v4772, %v4912
    %v5041 = vmul.f32 %v4774, %v4913
    %v5042 = vmul.f32 %v4583, %v4914
    %v5043 = vmul.f32 %v4585, %v4915
    %v5044 = vmul.f32 %v4776, %v4916
    %v5045 = vmul.f32 %v4778, %v4917
    %v5046 = vmul.f32 %v4589, %v4918
    %v5047 = vmul.f32 %v4591, %v4919
    %v5048 = vmul.f32 %v4782, %v4920
    %v5049 = vmul.f32 %v4784, %v4921
    %v5050 = vmul.f32 %v4593, %v4922
    %v5051 = vmul.f32 %v4595, %v4923
    %v5052 = vmul.f32 %v4786, %v4924
    %v5053 = vmul.f32 %v4788, %v4925
    %v5054 = vmul.f32 %v4599, %v4926
    %v5055 = vmul.f32 %v4601, %v4927
    %v5056 = vmul.f32 %v4792, %v4928
    %v5057 = vmul.f32 %v4794, %v4929
    %v5058 = vmul.f32 %v4603, %v4930
    %v5059 = vmul.f32 %v4605, %v4931
    %v5060 = vmul.f32 %v4796, %v4932
    %v5061 = vmul.f32 %v4798, %v4933
    %v5062 = vmul.f32 %v4609, %v4934
    %v5063 = vmul.f32 %v4611, %v4935
    %v5064 = vmul.f32 %v4802, %v4936
    %v5065 = vmul.f32 %v4804, %v4937
    %v5066 = vmul.f32 %v4613, %v4938
    %v5067 = vmul.f32 %v4615, %v4939
    %v5068 = vmul.f32 %v4806, %v4940
    %v5069 = vmul.f32 %v4808, %v4941
    %v5070 = vmul.f32 %v4619, %v4942
    %v5071 = vmul.f32 %v4621, %v4943
    %v5072 = vmul.f32 %v4812, %v4944
    %v5073 = vmul.f32 %v4814, %v4945
    %v5074 = vmul.f32 %v4623, %v4946
    %v5075 = vmul.f32 %v4625, %v4947
    %v5076 = vmul.f32 %v4816, %v4948
    %v5077 = vmul.f32 %v4818, %v4949
    %v5078 = vmul.f32 %v4629, %v4950
    %v5079 = vmul.f32 %v4631, %v4951
    %v5080 = vmul.f32 %v4822, %v4952
    %v5081 = vmul.f32 %v4824, %v4953
    %v5082 = vmul.f32 %v4633, %v4954
    %v5083 = vmul.f32 %v4635, %v4955
    %v5084 = vmul.f32 %v4826, %v4956
    %v5085 = vmul.f32 %v4828, %v4957
    %v5086 = vmul.f32 %v4958, 0.044715
    %v5087 = vmul.f32 %v4959, 0.044715
    %v5088 = vmul.f32 %v4960, 0.044715
    %v5089 = vmul.f32 %v4961, 0.044715
    %v5090 = vmul.f32 %v4962, 0.044715
    %v5091 = vmul.f32 %v4963, 0.044715
    %v5092 = vmul.f32 %v4964, 0.044715
    %v5093 = vmul.f32 %v4965, 0.044715
    %v5094 = vmul.f32 %v4966, 0.044715
    %v5095 = vmul.f32 %v4967, 0.044715
    %v5096 = vmul.f32 %v4968, 0.044715
    %v5097 = vmul.f32 %v4969, 0.044715
    %v5098 = vmul.f32 %v4970, 0.044715
    %v5099 = vmul.f32 %v4971, 0.044715
    %v5100 = vmul.f32 %v4972, 0.044715
    %v5101 = vmul.f32 %v4973, 0.044715
    %v5102 = vmul.f32 %v4974, 0.044715
    %v5103 = vmul.f32 %v4975, 0.044715
    %v5104 = vmul.f32 %v4976, 0.044715
    %v5105 = vmul.f32 %v4977, 0.044715
    %v5106 = vmul.f32 %v4978, 0.044715
    %v5107 = vmul.f32 %v4979, 0.044715
    %v5108 = vmul.f32 %v4980, 0.044715
    %v5109 = vmul.f32 %v4981, 0.044715
    %v5110 = vmul.f32 %v4982, 0.044715
    %v5111 = vmul.f32 %v4983, 0.044715
    %v5112 = vmul.f32 %v4984, 0.044715
    %v5113 = vmul.f32 %v4985, 0.044715
    %v5114 = vmul.f32 %v4986, 0.044715
    %v5115 = vmul.f32 %v4987, 0.044715
    %v5116 = vmul.f32 %v4988, 0.044715
    %v5117 = vmul.f32 %v4989, 0.044715
    %v5118 = vmul.f32 %v4990, 0.044715
    %v5119 = vmul.f32 %v4991, 0.044715
    %v5120 = vmul.f32 %v4992, 0.044715
    %v5121 = vmul.f32 %v4993, 0.044715
    %v5122 = vmul.f32 %v4994, 0.044715
    %v5123 = vmul.f32 %v4995, 0.044715
    %v5124 = vmul.f32 %v4996, 0.044715
    %v5125 = vmul.f32 %v4997, 0.044715
    %v5126 = vmul.f32 %v4998, 0.044715
    %v5127 = vmul.f32 %v4999, 0.044715
    %v5128 = vmul.f32 %v5000, 0.044715
    %v5129 = vmul.f32 %v5001, 0.044715
    %v5130 = vmul.f32 %v5002, 0.044715
    %v5131 = vmul.f32 %v5003, 0.044715
    %v5132 = vmul.f32 %v5004, 0.044715
    %v5133 = vmul.f32 %v5005, 0.044715
    %v5134 = vmul.f32 %v5006, 0.044715
    %v5135 = vmul.f32 %v5007, 0.044715
    %v5136 = vmul.f32 %v5008, 0.044715
    %v5137 = vmul.f32 %v5009, 0.044715
    %v5138 = vmul.f32 %v5010, 0.044715
    %v5139 = vmul.f32 %v5011, 0.044715
    %v5140 = vmul.f32 %v5012, 0.044715
    %v5141 = vmul.f32 %v5013, 0.044715
    %v5142 = vmul.f32 %v5014, 0.044715
    %v5143 = vmul.f32 %v5015, 0.044715
    %v5144 = vmul.f32 %v5016, 0.044715
    %v5145 = vmul.f32 %v5017, 0.044715
    %v5146 = vmul.f32 %v5018, 0.044715
    %v5147 = vmul.f32 %v5019, 0.044715
    %v5148 = vmul.f32 %v5020, 0.044715
    %v5149 = vmul.f32 %v5021, 0.044715
    %v5150 = vmul.f32 %v5022, 0.044715
    %v5151 = vmul.f32 %v5023, 0.044715
    %v5152 = vmul.f32 %v5024, 0.044715
    %v5153 = vmul.f32 %v5025, 0.044715
    %v5154 = vmul.f32 %v5026, 0.044715
    %v5155 = vmul.f32 %v5027, 0.044715
    %v5156 = vmul.f32 %v5028, 0.044715
    %v5157 = vmul.f32 %v5029, 0.044715
    %v5158 = vmul.f32 %v5030, 0.044715
    %v5159 = vmul.f32 %v5031, 0.044715
    %v5160 = vmul.f32 %v5032, 0.044715
    %v5161 = vmul.f32 %v5033, 0.044715
    %v5162 = vmul.f32 %v5034, 0.044715
    %v5163 = vmul.f32 %v5035, 0.044715
    %v5164 = vmul.f32 %v5036, 0.044715
    %v5165 = vmul.f32 %v5037, 0.044715
    %v5166 = vmul.f32 %v5038, 0.044715
    %v5167 = vmul.f32 %v5039, 0.044715
    %v5168 = vmul.f32 %v5040, 0.044715
    %v5169 = vmul.f32 %v5041, 0.044715
    %v5170 = vmul.f32 %v5042, 0.044715
    %v5171 = vmul.f32 %v5043, 0.044715
    %v5172 = vmul.f32 %v5044, 0.044715
    %v5173 = vmul.f32 %v5045, 0.044715
    %v5174 = vmul.f32 %v5046, 0.044715
    %v5175 = vmul.f32 %v5047, 0.044715
    %v5176 = vmul.f32 %v5048, 0.044715
    %v5177 = vmul.f32 %v5049, 0.044715
    %v5178 = vmul.f32 %v5050, 0.044715
    %v5179 = vmul.f32 %v5051, 0.044715
    %v5180 = vmul.f32 %v5052, 0.044715
    %v5181 = vmul.f32 %v5053, 0.044715
    %v5182 = vmul.f32 %v5054, 0.044715
    %v5183 = vmul.f32 %v5055, 0.044715
    %v5184 = vmul.f32 %v5056, 0.044715
    %v5185 = vmul.f32 %v5057, 0.044715
    %v5186 = vmul.f32 %v5058, 0.044715
    %v5187 = vmul.f32 %v5059, 0.044715
    %v5188 = vmul.f32 %v5060, 0.044715
    %v5189 = vmul.f32 %v5061, 0.044715
    %v5190 = vmul.f32 %v5062, 0.044715
    %v5191 = vmul.f32 %v5063, 0.044715
    %v5192 = vmul.f32 %v5064, 0.044715
    %v5193 = vmul.f32 %v5065, 0.044715
    %v5194 = vmul.f32 %v5066, 0.044715
    %v5195 = vmul.f32 %v5067, 0.044715
    %v5196 = vmul.f32 %v5068, 0.044715
    %v5197 = vmul.f32 %v5069, 0.044715
    %v5198 = vmul.f32 %v5070, 0.044715
    %v5199 = vmul.f32 %v5071, 0.044715
    %v5200 = vmul.f32 %v5072, 0.044715
    %v5201 = vmul.f32 %v5073, 0.044715
    %v5202 = vmul.f32 %v5074, 0.044715
    %v5203 = vmul.f32 %v5075, 0.044715
    %v5204 = vmul.f32 %v5076, 0.044715
    %v5205 = vmul.f32 %v5077, 0.044715
    %v5206 = vmul.f32 %v5078, 0.044715
    %v5207 = vmul.f32 %v5079, 0.044715
    %v5208 = vmul.f32 %v5080, 0.044715
    %v5209 = vmul.f32 %v5081, 0.044715
    %v5210 = vmul.f32 %v5082, 0.044715
    %v5211 = vmul.f32 %v5083, 0.044715
    %v5212 = vmul.f32 %v5084, 0.044715
    %v5213 = vmul.f32 %v5085, 0.044715
    %v5214 = vadd.f32 %v4479, %v5086
    %v5215 = vadd.f32 %v4481, %v5087
    %v5216 = vadd.f32 %v4672, %v5088
    %v5217 = vadd.f32 %v4674, %v5089
    %v5218 = vadd.f32 %v4483, %v5090
    %v5219 = vadd.f32 %v4485, %v5091
    %v5220 = vadd.f32 %v4676, %v5092
    %v5221 = vadd.f32 %v4678, %v5093
    %v5222 = vadd.f32 %v4489, %v5094
    %v5223 = vadd.f32 %v4491, %v5095
    %v5224 = vadd.f32 %v4682, %v5096
    %v5225 = vadd.f32 %v4684, %v5097
    %v5226 = vadd.f32 %v4493, %v5098
    %v5227 = vadd.f32 %v4495, %v5099
    %v5228 = vadd.f32 %v4686, %v5100
    %v5229 = vadd.f32 %v4688, %v5101
    %v5230 = vadd.f32 %v4499, %v5102
    %v5231 = vadd.f32 %v4501, %v5103
    %v5232 = vadd.f32 %v4692, %v5104
    %v5233 = vadd.f32 %v4694, %v5105
    %v5234 = vadd.f32 %v4503, %v5106
    %v5235 = vadd.f32 %v4505, %v5107
    %v5236 = vadd.f32 %v4696, %v5108
    %v5237 = vadd.f32 %v4698, %v5109
    %v5238 = vadd.f32 %v4509, %v5110
    %v5239 = vadd.f32 %v4511, %v5111
    %v5240 = vadd.f32 %v4702, %v5112
    %v5241 = vadd.f32 %v4704, %v5113
    %v5242 = vadd.f32 %v4513, %v5114
    %v5243 = vadd.f32 %v4515, %v5115
    %v5244 = vadd.f32 %v4706, %v5116
    %v5245 = vadd.f32 %v4708, %v5117
    %v5246 = vadd.f32 %v4519, %v5118
    %v5247 = vadd.f32 %v4521, %v5119
    %v5248 = vadd.f32 %v4712, %v5120
    %v5249 = vadd.f32 %v4714, %v5121
    %v5250 = vadd.f32 %v4523, %v5122
    %v5251 = vadd.f32 %v4525, %v5123
    %v5252 = vadd.f32 %v4716, %v5124
    %v5253 = vadd.f32 %v4718, %v5125
    %v5254 = vadd.f32 %v4529, %v5126
    %v5255 = vadd.f32 %v4531, %v5127
    %v5256 = vadd.f32 %v4722, %v5128
    %v5257 = vadd.f32 %v4724, %v5129
    %v5258 = vadd.f32 %v4533, %v5130
    %v5259 = vadd.f32 %v4535, %v5131
    %v5260 = vadd.f32 %v4726, %v5132
    %v5261 = vadd.f32 %v4728, %v5133
    %v5262 = vadd.f32 %v4539, %v5134
    %v5263 = vadd.f32 %v4541, %v5135
    %v5264 = vadd.f32 %v4732, %v5136
    %v5265 = vadd.f32 %v4734, %v5137
    %v5266 = vadd.f32 %v4543, %v5138
    %v5267 = vadd.f32 %v4545, %v5139
    %v5268 = vadd.f32 %v4736, %v5140
    %v5269 = vadd.f32 %v4738, %v5141
    %v5270 = vadd.f32 %v4549, %v5142
    %v5271 = vadd.f32 %v4551, %v5143
    %v5272 = vadd.f32 %v4742, %v5144
    %v5273 = vadd.f32 %v4744, %v5145
    %v5274 = vadd.f32 %v4553, %v5146
    %v5275 = vadd.f32 %v4555, %v5147
    %v5276 = vadd.f32 %v4746, %v5148
    %v5277 = vadd.f32 %v4748, %v5149
    %v5278 = vadd.f32 %v4559, %v5150
    %v5279 = vadd.f32 %v4561, %v5151
    %v5280 = vadd.f32 %v4752, %v5152
    %v5281 = vadd.f32 %v4754, %v5153
    %v5282 = vadd.f32 %v4563, %v5154
    %v5283 = vadd.f32 %v4565, %v5155
    %v5284 = vadd.f32 %v4756, %v5156
    %v5285 = vadd.f32 %v4758, %v5157
    %v5286 = vadd.f32 %v4569, %v5158
    %v5287 = vadd.f32 %v4571, %v5159
    %v5288 = vadd.f32 %v4762, %v5160
    %v5289 = vadd.f32 %v4764, %v5161
    %v5290 = vadd.f32 %v4573, %v5162
    %v5291 = vadd.f32 %v4575, %v5163
    %v5292 = vadd.f32 %v4766, %v5164
    %v5293 = vadd.f32 %v4768, %v5165
    %v5294 = vadd.f32 %v4579, %v5166
    %v5295 = vadd.f32 %v4581, %v5167
    %v5296 = vadd.f32 %v4772, %v5168
    %v5297 = vadd.f32 %v4774, %v5169
    %v5298 = vadd.f32 %v4583, %v5170
    %v5299 = vadd.f32 %v4585, %v5171
    %v5300 = vadd.f32 %v4776, %v5172
    %v5301 = vadd.f32 %v4778, %v5173
    %v5302 = vadd.f32 %v4589, %v5174
    %v5303 = vadd.f32 %v4591, %v5175
    %v5304 = vadd.f32 %v4782, %v5176
    %v5305 = vadd.f32 %v4784, %v5177
    %v5306 = vadd.f32 %v4593, %v5178
    %v5307 = vadd.f32 %v4595, %v5179
    %v5308 = vadd.f32 %v4786, %v5180
    %v5309 = vadd.f32 %v4788, %v5181
    %v5310 = vadd.f32 %v4599, %v5182
    %v5311 = vadd.f32 %v4601, %v5183
    %v5312 = vadd.f32 %v4792, %v5184
    %v5313 = vadd.f32 %v4794, %v5185
    %v5314 = vadd.f32 %v4603, %v5186
    %v5315 = vadd.f32 %v4605, %v5187
    %v5316 = vadd.f32 %v4796, %v5188
    %v5317 = vadd.f32 %v4798, %v5189
    %v5318 = vadd.f32 %v4609, %v5190
    %v5319 = vadd.f32 %v4611, %v5191
    %v5320 = vadd.f32 %v4802, %v5192
    %v5321 = vadd.f32 %v4804, %v5193
    %v5322 = vadd.f32 %v4613, %v5194
    %v5323 = vadd.f32 %v4615, %v5195
    %v5324 = vadd.f32 %v4806, %v5196
    %v5325 = vadd.f32 %v4808, %v5197
    %v5326 = vadd.f32 %v4619, %v5198
    %v5327 = vadd.f32 %v4621, %v5199
    %v5328 = vadd.f32 %v4812, %v5200
    %v5329 = vadd.f32 %v4814, %v5201
    %v5330 = vadd.f32 %v4623, %v5202
    %v5331 = vadd.f32 %v4625, %v5203
    %v5332 = vadd.f32 %v4816, %v5204
    %v5333 = vadd.f32 %v4818, %v5205
    %v5334 = vadd.f32 %v4629, %v5206
    %v5335 = vadd.f32 %v4631, %v5207
    %v5336 = vadd.f32 %v4822, %v5208
    %v5337 = vadd.f32 %v4824, %v5209
    %v5338 = vadd.f32 %v4633, %v5210
    %v5339 = vadd.f32 %v4635, %v5211
    %v5340 = vadd.f32 %v4826, %v5212
    %v5341 = vadd.f32 %v4828, %v5213
    %v5342 = vmul.f32 %v5214, 0.7978846
    %v5343 = vmul.f32 %v5215, 0.7978846
    %v5344 = vmul.f32 %v5216, 0.7978846
    %v5345 = vmul.f32 %v5217, 0.7978846
    %v5346 = vmul.f32 %v5218, 0.7978846
    %v5347 = vmul.f32 %v5219, 0.7978846
    %v5348 = vmul.f32 %v5220, 0.7978846
    %v5349 = vmul.f32 %v5221, 0.7978846
    %v5350 = vmul.f32 %v5222, 0.7978846
    %v5351 = vmul.f32 %v5223, 0.7978846
    %v5352 = vmul.f32 %v5224, 0.7978846
    %v5353 = vmul.f32 %v5225, 0.7978846
    %v5354 = vmul.f32 %v5226, 0.7978846
    %v5355 = vmul.f32 %v5227, 0.7978846
    %v5356 = vmul.f32 %v5228, 0.7978846
    %v5357 = vmul.f32 %v5229, 0.7978846
    %v5358 = vmul.f32 %v5230, 0.7978846
    %v5359 = vmul.f32 %v5231, 0.7978846
    %v5360 = vmul.f32 %v5232, 0.7978846
    %v5361 = vmul.f32 %v5233, 0.7978846
    %v5362 = vmul.f32 %v5234, 0.7978846
    %v5363 = vmul.f32 %v5235, 0.7978846
    %v5364 = vmul.f32 %v5236, 0.7978846
    %v5365 = vmul.f32 %v5237, 0.7978846
    %v5366 = vmul.f32 %v5238, 0.7978846
    %v5367 = vmul.f32 %v5239, 0.7978846
    %v5368 = vmul.f32 %v5240, 0.7978846
    %v5369 = vmul.f32 %v5241, 0.7978846
    %v5370 = vmul.f32 %v5242, 0.7978846
    %v5371 = vmul.f32 %v5243, 0.7978846
    %v5372 = vmul.f32 %v5244, 0.7978846
    %v5373 = vmul.f32 %v5245, 0.7978846
    %v5374 = vmul.f32 %v5246, 0.7978846
    %v5375 = vmul.f32 %v5247, 0.7978846
    %v5376 = vmul.f32 %v5248, 0.7978846
    %v5377 = vmul.f32 %v5249, 0.7978846
    %v5378 = vmul.f32 %v5250, 0.7978846
    %v5379 = vmul.f32 %v5251, 0.7978846
    %v5380 = vmul.f32 %v5252, 0.7978846
    %v5381 = vmul.f32 %v5253, 0.7978846
    %v5382 = vmul.f32 %v5254, 0.7978846
    %v5383 = vmul.f32 %v5255, 0.7978846
    %v5384 = vmul.f32 %v5256, 0.7978846
    %v5385 = vmul.f32 %v5257, 0.7978846
    %v5386 = vmul.f32 %v5258, 0.7978846
    %v5387 = vmul.f32 %v5259, 0.7978846
    %v5388 = vmul.f32 %v5260, 0.7978846
    %v5389 = vmul.f32 %v5261, 0.7978846
    %v5390 = vmul.f32 %v5262, 0.7978846
    %v5391 = vmul.f32 %v5263, 0.7978846
    %v5392 = vmul.f32 %v5264, 0.7978846
    %v5393 = vmul.f32 %v5265, 0.7978846
    %v5394 = vmul.f32 %v5266, 0.7978846
    %v5395 = vmul.f32 %v5267, 0.7978846
    %v5396 = vmul.f32 %v5268, 0.7978846
    %v5397 = vmul.f32 %v5269, 0.7978846
    %v5398 = vmul.f32 %v5270, 0.7978846
    %v5399 = vmul.f32 %v5271, 0.7978846
    %v5400 = vmul.f32 %v5272, 0.7978846
    %v5401 = vmul.f32 %v5273, 0.7978846
    %v5402 = vmul.f32 %v5274, 0.7978846
    %v5403 = vmul.f32 %v5275, 0.7978846
    %v5404 = vmul.f32 %v5276, 0.7978846
    %v5405 = vmul.f32 %v5277, 0.7978846
    %v5406 = vmul.f32 %v5278, 0.7978846
    %v5407 = vmul.f32 %v5279, 0.7978846
    %v5408 = vmul.f32 %v5280, 0.7978846
    %v5409 = vmul.f32 %v5281, 0.7978846
    %v5410 = vmul.f32 %v5282, 0.7978846
    %v5411 = vmul.f32 %v5283, 0.7978846
    %v5412 = vmul.f32 %v5284, 0.7978846
    %v5413 = vmul.f32 %v5285, 0.7978846
    %v5414 = vmul.f32 %v5286, 0.7978846
    %v5415 = vmul.f32 %v5287, 0.7978846
    %v5416 = vmul.f32 %v5288, 0.7978846
    %v5417 = vmul.f32 %v5289, 0.7978846
    %v5418 = vmul.f32 %v5290, 0.7978846
    %v5419 = vmul.f32 %v5291, 0.7978846
    %v5420 = vmul.f32 %v5292, 0.7978846
    %v5421 = vmul.f32 %v5293, 0.7978846
    %v5422 = vmul.f32 %v5294, 0.7978846
    %v5423 = vmul.f32 %v5295, 0.7978846
    %v5424 = vmul.f32 %v5296, 0.7978846
    %v5425 = vmul.f32 %v5297, 0.7978846
    %v5426 = vmul.f32 %v5298, 0.7978846
    %v5427 = vmul.f32 %v5299, 0.7978846
    %v5428 = vmul.f32 %v5300, 0.7978846
    %v5429 = vmul.f32 %v5301, 0.7978846
    %v5430 = vmul.f32 %v5302, 0.7978846
    %v5431 = vmul.f32 %v5303, 0.7978846
    %v5432 = vmul.f32 %v5304, 0.7978846
    %v5433 = vmul.f32 %v5305, 0.7978846
    %v5434 = vmul.f32 %v5306, 0.7978846
    %v5435 = vmul.f32 %v5307, 0.7978846
    %v5436 = vmul.f32 %v5308, 0.7978846
    %v5437 = vmul.f32 %v5309, 0.7978846
    %v5438 = vmul.f32 %v5310, 0.7978846
    %v5439 = vmul.f32 %v5311, 0.7978846
    %v5440 = vmul.f32 %v5312, 0.7978846
    %v5441 = vmul.f32 %v5313, 0.7978846
    %v5442 = vmul.f32 %v5314, 0.7978846
    %v5443 = vmul.f32 %v5315, 0.7978846
    %v5444 = vmul.f32 %v5316, 0.7978846
    %v5445 = vmul.f32 %v5317, 0.7978846
    %v5446 = vmul.f32 %v5318, 0.7978846
    %v5447 = vmul.f32 %v5319, 0.7978846
    %v5448 = vmul.f32 %v5320, 0.7978846
    %v5449 = vmul.f32 %v5321, 0.7978846
    %v5450 = vmul.f32 %v5322, 0.7978846
    %v5451 = vmul.f32 %v5323, 0.7978846
    %v5452 = vmul.f32 %v5324, 0.7978846
    %v5453 = vmul.f32 %v5325, 0.7978846
    %v5454 = vmul.f32 %v5326, 0.7978846
    %v5455 = vmul.f32 %v5327, 0.7978846
    %v5456 = vmul.f32 %v5328, 0.7978846
    %v5457 = vmul.f32 %v5329, 0.7978846
    %v5458 = vmul.f32 %v5330, 0.7978846
    %v5459 = vmul.f32 %v5331, 0.7978846
    %v5460 = vmul.f32 %v5332, 0.7978846
    %v5461 = vmul.f32 %v5333, 0.7978846
    %v5462 = vmul.f32 %v5334, 0.7978846
    %v5463 = vmul.f32 %v5335, 0.7978846
    %v5464 = vmul.f32 %v5336, 0.7978846
    %v5465 = vmul.f32 %v5337, 0.7978846
    %v5466 = vmul.f32 %v5338, 0.7978846
    %v5467 = vmul.f32 %v5339, 0.7978846
    %v5468 = vmul.f32 %v5340, 0.7978846
    %v5469 = vmul.f32 %v5341, 0.7978846
    %v5470 = vtanh.pop %v5342
    %v5471 = vtanh.pop %v5343
    %v5472 = vtanh.pop %v5344
    %v5473 = vtanh.pop %v5345
    %v5474 = vtanh.pop %v5346
    %v5475 = vtanh.pop %v5347
    %v5476 = vtanh.pop %v5348
    %v5477 = vtanh.pop %v5349
    %v5478 = vtanh.pop %v5350
    %v5479 = vtanh.pop %v5351
    %v5480 = vtanh.pop %v5352
    %v5481 = vtanh.pop %v5353
    %v5482 = vtanh.pop %v5354
    %v5483 = vtanh.pop %v5355
    %v5484 = vtanh.pop %v5356
    %v5485 = vtanh.pop %v5357
    %v5486 = vtanh.pop %v5358
    %v5487 = vtanh.pop %v5359
    %v5488 = vtanh.pop %v5360
    %v5489 = vtanh.pop %v5361
    %v5490 = vtanh.pop %v5362
    %v5491 = vtanh.pop %v5363
    %v5492 = vtanh.pop %v5364
    %v5493 = vtanh.pop %v5365
    %v5494 = vtanh.pop %v5366
    %v5495 = vtanh.pop %v5367
    %v5496 = vtanh.pop %v5368
    %v5497 = vtanh.pop %v5369
    %v5498 = vtanh.pop %v5370
    %v5499 = vtanh.pop %v5371
    %v5500 = vtanh.pop %v5372
    %v5501 = vtanh.pop %v5373
    %v5502 = vtanh.pop %v5374
    %v5503 = vtanh.pop %v5375
    %v5504 = vtanh.pop %v5376
    %v5505 = vtanh.pop %v5377
    %v5506 = vtanh.pop %v5378
    %v5507 = vtanh.pop %v5379
    %v5508 = vtanh.pop %v5380
    %v5509 = vtanh.pop %v5381
    %v5510 = vtanh.pop %v5382
    %v5511 = vtanh.pop %v5383
    %v5512 = vtanh.pop %v5384
    %v5513 = vtanh.pop %v5385
    %v5514 = vtanh.pop %v5386
    %v5515 = vtanh.pop %v5387
    %v5516 = vtanh.pop %v5388
    %v5517 = vtanh.pop %v5389
    %v5518 = vtanh.pop %v5390
    %v5519 = vtanh.pop %v5391
    %v5520 = vtanh.pop %v5392
    %v5521 = vtanh.pop %v5393
    %v5522 = vtanh.pop %v5394
    %v5523 = vtanh.pop %v5395
    %v5524 = vtanh.pop %v5396
    %v5525 = vtanh.pop %v5397
    %v5526 = vtanh.pop %v5398
    %v5527 = vtanh.pop %v5399
    %v5528 = vtanh.pop %v5400
    %v5529 = vtanh.pop %v5401
    %v5530 = vtanh.pop %v5402
    %v5531 = vtanh.pop %v5403
    %v5532 = vtanh.pop %v5404
    %v5533 = vtanh.pop %v5405
    %v5534 = vtanh.pop %v5406
    %v5535 = vtanh.pop %v5407
    %v5536 = vtanh.pop %v5408
    %v5537 = vtanh.pop %v5409
    %v5538 = vtanh.pop %v5410
    %v5539 = vtanh.pop %v5411
    %v5540 = vtanh.pop %v5412
    %v5541 = vtanh.pop %v5413
    %v5542 = vtanh.pop %v5414
    %v5543 = vtanh.pop %v5415
    %v5544 = vtanh.pop %v5416
    %v5545 = vtanh.pop %v5417
    %v5546 = vtanh.pop %v5418
    %v5547 = vtanh.pop %v5419
    %v5548 = vtanh.pop %v5420
    %v5549 = vtanh.pop %v5421
    %v5550 = vtanh.pop %v5422
    %v5551 = vtanh.pop %v5423
    %v5552 = vtanh.pop %v5424
    %v5553 = vtanh.pop %v5425
    %v5554 = vtanh.pop %v5426
    %v5555 = vtanh.pop %v5427
    %v5556 = vtanh.pop %v5428
    %v5557 = vtanh.pop %v5429
    %v5558 = vtanh.pop %v5430
    %v5559 = vtanh.pop %v5431
    %v5560 = vtanh.pop %v5432
    %v5561 = vtanh.pop %v5433
    %v5562 = vtanh.pop %v5434
    %v5563 = vtanh.pop %v5435
    %v5564 = vtanh.pop %v5436
    %v5565 = vtanh.pop %v5437
    %v5566 = vtanh.pop %v5438
    %v5567 = vtanh.pop %v5439
    %v5568 = vtanh.pop %v5440
    %v5569 = vtanh.pop %v5441
    %v5570 = vtanh.pop %v5442
    %v5571 = vtanh.pop %v5443
    %v5572 = vtanh.pop %v5444
    %v5573 = vtanh.pop %v5445
    %v5574 = vtanh.pop %v5446
    %v5575 = vtanh.pop %v5447
    %v5576 = vtanh.pop %v5448
    %v5577 = vtanh.pop %v5449
    %v5578 = vtanh.pop %v5450
    %v5579 = vtanh.pop %v5451
    %v5580 = vtanh.pop %v5452
    %v5581 = vtanh.pop %v5453
    %v5582 = vtanh.pop %v5454
    %v5583 = vtanh.pop %v5455
    %v5584 = vtanh.pop %v5456
    %v5585 = vtanh.pop %v5457
    %v5586 = vtanh.pop %v5458
    %v5587 = vtanh.pop %v5459
    %v5588 = vtanh.pop %v5460
    %v5589 = vtanh.pop %v5461
    %v5590 = vtanh.pop %v5462
    %v5591 = vtanh.pop %v5463
    %v5592 = vtanh.pop %v5464
    %v5593 = vtanh.pop %v5465
    %v5594 = vtanh.pop %v5466
    %v5595 = vtanh.pop %v5467
    %v5596 = vtanh.pop %v5468
    %v5597 = vtanh.pop %v5469
    %v5598 = vadd.f32 %v5470, 1.0
    %v5599 = vadd.f32 %v5471, 1.0
    %v5600 = vadd.f32 %v5472, 1.0
    %v5601 = vadd.f32 %v5473, 1.0
    %v5602 = vadd.f32 %v5474, 1.0
    %v5603 = vadd.f32 %v5475, 1.0
    %v5604 = vadd.f32 %v5476, 1.0
    %v5605 = vadd.f32 %v5477, 1.0
    %v5606 = vadd.f32 %v5478, 1.0
    %v5607 = vadd.f32 %v5479, 1.0
    %v5608 = vadd.f32 %v5480, 1.0
    %v5609 = vadd.f32 %v5481, 1.0
    %v5610 = vadd.f32 %v5482, 1.0
    %v5611 = vadd.f32 %v5483, 1.0
    %v5612 = vadd.f32 %v5484, 1.0
    %v5613 = vadd.f32 %v5485, 1.0
    %v5614 = vadd.f32 %v5486, 1.0
    %v5615 = vadd.f32 %v5487, 1.0
    %v5616 = vadd.f32 %v5488, 1.0
    %v5617 = vadd.f32 %v5489, 1.0
    %v5618 = vadd.f32 %v5490, 1.0
    %v5619 = vadd.f32 %v5491, 1.0
    %v5620 = vadd.f32 %v5492, 1.0
    %v5621 = vadd.f32 %v5493, 1.0
    %v5622 = vadd.f32 %v5494, 1.0
    %v5623 = vadd.f32 %v5495, 1.0
    %v5624 = vadd.f32 %v5496, 1.0
    %v5625 = vadd.f32 %v5497, 1.0
    %v5626 = vadd.f32 %v5498, 1.0
    %v5627 = vadd.f32 %v5499, 1.0
    %v5628 = vadd.f32 %v5500, 1.0
    %v5629 = vadd.f32 %v5501, 1.0
    %v5630 = vadd.f32 %v5502, 1.0
    %v5631 = vadd.f32 %v5503, 1.0
    %v5632 = vadd.f32 %v5504, 1.0
    %v5633 = vadd.f32 %v5505, 1.0
    %v5634 = vadd.f32 %v5506, 1.0
    %v5635 = vadd.f32 %v5507, 1.0
    %v5636 = vadd.f32 %v5508, 1.0
    %v5637 = vadd.f32 %v5509, 1.0
    %v5638 = vadd.f32 %v5510, 1.0
    %v5639 = vadd.f32 %v5511, 1.0
    %v5640 = vadd.f32 %v5512, 1.0
    %v5641 = vadd.f32 %v5513, 1.0
    %v5642 = vadd.f32 %v5514, 1.0
    %v5643 = vadd.f32 %v5515, 1.0
    %v5644 = vadd.f32 %v5516, 1.0
    %v5645 = vadd.f32 %v5517, 1.0
    %v5646 = vadd.f32 %v5518, 1.0
    %v5647 = vadd.f32 %v5519, 1.0
    %v5648 = vadd.f32 %v5520, 1.0
    %v5649 = vadd.f32 %v5521, 1.0
    %v5650 = vadd.f32 %v5522, 1.0
    %v5651 = vadd.f32 %v5523, 1.0
    %v5652 = vadd.f32 %v5524, 1.0
    %v5653 = vadd.f32 %v5525, 1.0
    %v5654 = vadd.f32 %v5526, 1.0
    %v5655 = vadd.f32 %v5527, 1.0
    %v5656 = vadd.f32 %v5528, 1.0
    %v5657 = vadd.f32 %v5529, 1.0
    %v5658 = vadd.f32 %v5530, 1.0
    %v5659 = vadd.f32 %v5531, 1.0
    %v5660 = vadd.f32 %v5532, 1.0
    %v5661 = vadd.f32 %v5533, 1.0
    %v5662 = vadd.f32 %v5534, 1.0
    %v5663 = vadd.f32 %v5535, 1.0
    %v5664 = vadd.f32 %v5536, 1.0
    %v5665 = vadd.f32 %v5537, 1.0
    %v5666 = vadd.f32 %v5538, 1.0
    %v5667 = vadd.f32 %v5539, 1.0
    %v5668 = vadd.f32 %v5540, 1.0
    %v5669 = vadd.f32 %v5541, 1.0
    %v5670 = vadd.f32 %v5542, 1.0
    %v5671 = vadd.f32 %v5543, 1.0
    %v5672 = vadd.f32 %v5544, 1.0
    %v5673 = vadd.f32 %v5545, 1.0
    %v5674 = vadd.f32 %v5546, 1.0
    %v5675 = vadd.f32 %v5547, 1.0
    %v5676 = vadd.f32 %v5548, 1.0
    %v5677 = vadd.f32 %v5549, 1.0
    %v5678 = vadd.f32 %v5550, 1.0
    %v5679 = vadd.f32 %v5551, 1.0
    %v5680 = vadd.f32 %v5552, 1.0
    %v5681 = vadd.f32 %v5553, 1.0
    %v5682 = vadd.f32 %v5554, 1.0
    %v5683 = vadd.f32 %v5555, 1.0
    %v5684 = vadd.f32 %v5556, 1.0
    %v5685 = vadd.f32 %v5557, 1.0
    %v5686 = vadd.f32 %v5558, 1.0
    %v5687 = vadd.f32 %v5559, 1.0
    %v5688 = vadd.f32 %v5560, 1.0
    %v5689 = vadd.f32 %v5561, 1.0
    %v5690 = vadd.f32 %v5562, 1.0
    %v5691 = vadd.f32 %v5563, 1.0
    %v5692 = vadd.f32 %v5564, 1.0
    %v5693 = vadd.f32 %v5565, 1.0
    %v5694 = vadd.f32 %v5566, 1.0
    %v5695 = vadd.f32 %v5567, 1.0
    %v5696 = vadd.f32 %v5568, 1.0
    %v5697 = vadd.f32 %v5569, 1.0
    %v5698 = vadd.f32 %v5570, 1.0
    %v5699 = vadd.f32 %v5571, 1.0
    %v5700 = vadd.f32 %v5572, 1.0
    %v5701 = vadd.f32 %v5573, 1.0
    %v5702 = vadd.f32 %v5574, 1.0
    %v5703 = vadd.f32 %v5575, 1.0
    %v5704 = vadd.f32 %v5576, 1.0
    %v5705 = vadd.f32 %v5577, 1.0
    %v5706 = vadd.f32 %v5578, 1.0
    %v5707 = vadd.f32 %v5579, 1.0
    %v5708 = vadd.f32 %v5580, 1.0
    %v5709 = vadd.f32 %v5581, 1.0
    %v5710 = vadd.f32 %v5582, 1.0
    %v5711 = vadd.f32 %v5583, 1.0
    %v5712 = vadd.f32 %v5584, 1.0
    %v5713 = vadd.f32 %v5585, 1.0
    %v5714 = vadd.f32 %v5586, 1.0
    %v5715 = vadd.f32 %v5587, 1.0
    %v5716 = vadd.f32 %v5588, 1.0
    %v5717 = vadd.f32 %v5589, 1.0
    %v5718 = vadd.f32 %v5590, 1.0
    %v5719 = vadd.f32 %v5591, 1.0
    %v5720 = vadd.f32 %v5592, 1.0
    %v5721 = vadd.f32 %v5593, 1.0
    %v5722 = vadd.f32 %v5594, 1.0
    %v5723 = vadd.f32 %v5595, 1.0
    %v5724 = vadd.f32 %v5596, 1.0
    %v5725 = vadd.f32 %v5597, 1.0
    %v5726 = vmul.f32 %v5598, 0.5
    %v5727 = vmul.f32 %v5599, 0.5
    %v5728 = vmul.f32 %v5600, 0.5
    %v5729 = vmul.f32 %v5601, 0.5
    %v5730 = vmul.f32 %v5602, 0.5
    %v5731 = vmul.f32 %v5603, 0.5
    %v5732 = vmul.f32 %v5604, 0.5
    %v5733 = vmul.f32 %v5605, 0.5
    %v5734 = vmul.f32 %v5606, 0.5
    %v5735 = vmul.f32 %v5607, 0.5
    %v5736 = vmul.f32 %v5608, 0.5
    %v5737 = vmul.f32 %v5609, 0.5
    %v5738 = vmul.f32 %v5610, 0.5
    %v5739 = vmul.f32 %v5611, 0.5
    %v5740 = vmul.f32 %v5612, 0.5
    %v5741 = vmul.f32 %v5613, 0.5
    %v5742 = vmul.f32 %v5614, 0.5
    %v5743 = vmul.f32 %v5615, 0.5
    %v5744 = vmul.f32 %v5616, 0.5
    %v5745 = vmul.f32 %v5617, 0.5
    %v5746 = vmul.f32 %v5618, 0.5
    %v5747 = vmul.f32 %v5619, 0.5
    %v5748 = vmul.f32 %v5620, 0.5
    %v5749 = vmul.f32 %v5621, 0.5
    %v5750 = vmul.f32 %v5622, 0.5
    %v5751 = vmul.f32 %v5623, 0.5
    %v5752 = vmul.f32 %v5624, 0.5
    %v5753 = vmul.f32 %v5625, 0.5
    %v5754 = vmul.f32 %v5626, 0.5
    %v5755 = vmul.f32 %v5627, 0.5
    %v5756 = vmul.f32 %v5628, 0.5
    %v5757 = vmul.f32 %v5629, 0.5
    %v5758 = vmul.f32 %v5630, 0.5
    %v5759 = vmul.f32 %v5631, 0.5
    %v5760 = vmul.f32 %v5632, 0.5
    %v5761 = vmul.f32 %v5633, 0.5
    %v5762 = vmul.f32 %v5634, 0.5
    %v5763 = vmul.f32 %v5635, 0.5
    %v5764 = vmul.f32 %v5636, 0.5
    %v5765 = vmul.f32 %v5637, 0.5
    %v5766 = vmul.f32 %v5638, 0.5
    %v5767 = vmul.f32 %v5639, 0.5
    %v5768 = vmul.f32 %v5640, 0.5
    %v5769 = vmul.f32 %v5641, 0.5
    %v5770 = vmul.f32 %v5642, 0.5
    %v5771 = vmul.f32 %v5643, 0.5
    %v5772 = vmul.f32 %v5644, 0.5
    %v5773 = vmul.f32 %v5645, 0.5
    %v5774 = vmul.f32 %v5646, 0.5
    %v5775 = vmul.f32 %v5647, 0.5
    %v5776 = vmul.f32 %v5648, 0.5
    %v5777 = vmul.f32 %v5649, 0.5
    %v5778 = vmul.f32 %v5650, 0.5
    %v5779 = vmul.f32 %v5651, 0.5
    %v5780 = vmul.f32 %v5652, 0.5
    %v5781 = vmul.f32 %v5653, 0.5
    %v5782 = vmul.f32 %v5654, 0.5
    %v5783 = vmul.f32 %v5655, 0.5
    %v5784 = vmul.f32 %v5656, 0.5
    %v5785 = vmul.f32 %v5657, 0.5
    %v5786 = vmul.f32 %v5658, 0.5
    %v5787 = vmul.f32 %v5659, 0.5
    %v5788 = vmul.f32 %v5660, 0.5
    %v5789 = vmul.f32 %v5661, 0.5
    %v5790 = vmul.f32 %v5662, 0.5
    %v5791 = vmul.f32 %v5663, 0.5
    %v5792 = vmul.f32 %v5664, 0.5
    %v5793 = vmul.f32 %v5665, 0.5
    %v5794 = vmul.f32 %v5666, 0.5
    %v5795 = vmul.f32 %v5667, 0.5
    %v5796 = vmul.f32 %v5668, 0.5
    %v5797 = vmul.f32 %v5669, 0.5
    %v5798 = vmul.f32 %v5670, 0.5
    %v5799 = vmul.f32 %v5671, 0.5
    %v5800 = vmul.f32 %v5672, 0.5
    %v5801 = vmul.f32 %v5673, 0.5
    %v5802 = vmul.f32 %v5674, 0.5
    %v5803 = vmul.f32 %v5675, 0.5
    %v5804 = vmul.f32 %v5676, 0.5
    %v5805 = vmul.f32 %v5677, 0.5
    %v5806 = vmul.f32 %v5678, 0.5
    %v5807 = vmul.f32 %v5679, 0.5
    %v5808 = vmul.f32 %v5680, 0.5
    %v5809 = vmul.f32 %v5681, 0.5
    %v5810 = vmul.f32 %v5682, 0.5
    %v5811 = vmul.f32 %v5683, 0.5
    %v5812 = vmul.f32 %v5684, 0.5
    %v5813 = vmul.f32 %v5685, 0.5
    %v5814 = vmul.f32 %v5686, 0.5
    %v5815 = vmul.f32 %v5687, 0.5
    %v5816 = vmul.f32 %v5688, 0.5
    %v5817 = vmul.f32 %v5689, 0.5
    %v5818 = vmul.f32 %v5690, 0.5
    %v5819 = vmul.f32 %v5691, 0.5
    %v5820 = vmul.f32 %v5692, 0.5
    %v5821 = vmul.f32 %v5693, 0.5
    %v5822 = vmul.f32 %v5694, 0.5
    %v5823 = vmul.f32 %v5695, 0.5
    %v5824 = vmul.f32 %v5696, 0.5
    %v5825 = vmul.f32 %v5697, 0.5
    %v5826 = vmul.f32 %v5698, 0.5
    %v5827 = vmul.f32 %v5699, 0.5
    %v5828 = vmul.f32 %v5700, 0.5
    %v5829 = vmul.f32 %v5701, 0.5
    %v5830 = vmul.f32 %v5702, 0.5
    %v5831 = vmul.f32 %v5703, 0.5
    %v5832 = vmul.f32 %v5704, 0.5
    %v5833 = vmul.f32 %v5705, 0.5
    %v5834 = vmul.f32 %v5706, 0.5
    %v5835 = vmul.f32 %v5707, 0.5
    %v5836 = vmul.f32 %v5708, 0.5
    %v5837 = vmul.f32 %v5709, 0.5
    %v5838 = vmul.f32 %v5710, 0.5
    %v5839 = vmul.f32 %v5711, 0.5
    %v5840 = vmul.f32 %v5712, 0.5
    %v5841 = vmul.f32 %v5713, 0.5
    %v5842 = vmul.f32 %v5714, 0.5
    %v5843 = vmul.f32 %v5715, 0.5
    %v5844 = vmul.f32 %v5716, 0.5
    %v5845 = vmul.f32 %v5717, 0.5
    %v5846 = vmul.f32 %v5718, 0.5
    %v5847 = vmul.f32 %v5719, 0.5
    %v5848 = vmul.f32 %v5720, 0.5
    %v5849 = vmul.f32 %v5721, 0.5
    %v5850 = vmul.f32 %v5722, 0.5
    %v5851 = vmul.f32 %v5723, 0.5
    %v5852 = vmul.f32 %v5724, 0.5
    %v5853 = vmul.f32 %v5725, 0.5
    %v5854 = vmul.f32 %v4479, %v5726
    %v5855 = vmul.f32 %v4481, %v5727
    %v5856 = vmul.f32 %v4672, %v5728
    %v5857 = vmul.f32 %v4674, %v5729
    %v5858 = vmul.f32 %v4483, %v5730
    %v5859 = vmul.f32 %v4485, %v5731
    %v5860 = vmul.f32 %v4676, %v5732
    %v5861 = vmul.f32 %v4678, %v5733
    %v5862 = vmul.f32 %v4489, %v5734
    %v5863 = vmul.f32 %v4491, %v5735
    %v5864 = vmul.f32 %v4682, %v5736
    %v5865 = vmul.f32 %v4684, %v5737
    %v5866 = vmul.f32 %v4493, %v5738
    %v5867 = vmul.f32 %v4495, %v5739
    %v5868 = vmul.f32 %v4686, %v5740
    %v5869 = vmul.f32 %v4688, %v5741
    %v5870 = vmul.f32 %v4499, %v5742
    %v5871 = vmul.f32 %v4501, %v5743
    %v5872 = vmul.f32 %v4692, %v5744
    %v5873 = vmul.f32 %v4694, %v5745
    %v5874 = vmul.f32 %v4503, %v5746
    %v5875 = vmul.f32 %v4505, %v5747
    %v5876 = vmul.f32 %v4696, %v5748
    %v5877 = vmul.f32 %v4698, %v5749
    %v5878 = vmul.f32 %v4509, %v5750
    %v5879 = vmul.f32 %v4511, %v5751
    %v5880 = vmul.f32 %v4702, %v5752
    %v5881 = vmul.f32 %v4704, %v5753
    %v5882 = vmul.f32 %v4513, %v5754
    %v5883 = vmul.f32 %v4515, %v5755
    %v5884 = vmul.f32 %v4706, %v5756
    %v5885 = vmul.f32 %v4708, %v5757
    %v5886 = vmul.f32 %v4519, %v5758
    %v5887 = vmul.f32 %v4521, %v5759
    %v5888 = vmul.f32 %v4712, %v5760
    %v5889 = vmul.f32 %v4714, %v5761
    %v5890 = vmul.f32 %v4523, %v5762
    %v5891 = vmul.f32 %v4525, %v5763
    %v5892 = vmul.f32 %v4716, %v5764
    %v5893 = vmul.f32 %v4718, %v5765
    %v5894 = vmul.f32 %v4529, %v5766
    %v5895 = vmul.f32 %v4531, %v5767
    %v5896 = vmul.f32 %v4722, %v5768
    %v5897 = vmul.f32 %v4724, %v5769
    %v5898 = vmul.f32 %v4533, %v5770
    %v5899 = vmul.f32 %v4535, %v5771
    %v5900 = vmul.f32 %v4726, %v5772
    %v5901 = vmul.f32 %v4728, %v5773
    %v5902 = vmul.f32 %v4539, %v5774
    %v5903 = vmul.f32 %v4541, %v5775
    %v5904 = vmul.f32 %v4732, %v5776
    %v5905 = vmul.f32 %v4734, %v5777
    %v5906 = vmul.f32 %v4543, %v5778
    %v5907 = vmul.f32 %v4545, %v5779
    %v5908 = vmul.f32 %v4736, %v5780
    %v5909 = vmul.f32 %v4738, %v5781
    %v5910 = vmul.f32 %v4549, %v5782
    %v5911 = vmul.f32 %v4551, %v5783
    %v5912 = vmul.f32 %v4742, %v5784
    %v5913 = vmul.f32 %v4744, %v5785
    %v5914 = vmul.f32 %v4553, %v5786
    %v5915 = vmul.f32 %v4555, %v5787
    %v5916 = vmul.f32 %v4746, %v5788
    %v5917 = vmul.f32 %v4748, %v5789
    %v5918 = vmul.f32 %v4559, %v5790
    %v5919 = vmul.f32 %v4561, %v5791
    %v5920 = vmul.f32 %v4752, %v5792
    %v5921 = vmul.f32 %v4754, %v5793
    %v5922 = vmul.f32 %v4563, %v5794
    %v5923 = vmul.f32 %v4565, %v5795
    %v5924 = vmul.f32 %v4756, %v5796
    %v5925 = vmul.f32 %v4758, %v5797
    %v5926 = vmul.f32 %v4569, %v5798
    %v5927 = vmul.f32 %v4571, %v5799
    %v5928 = vmul.f32 %v4762, %v5800
    %v5929 = vmul.f32 %v4764, %v5801
    %v5930 = vmul.f32 %v4573, %v5802
    %v5931 = vmul.f32 %v4575, %v5803
    %v5932 = vmul.f32 %v4766, %v5804
    %v5933 = vmul.f32 %v4768, %v5805
    %v5934 = vmul.f32 %v4579, %v5806
    %v5935 = vmul.f32 %v4581, %v5807
    %v5936 = vmul.f32 %v4772, %v5808
    %v5937 = vmul.f32 %v4774, %v5809
    %v5938 = vmul.f32 %v4583, %v5810
    %v5939 = vmul.f32 %v4585, %v5811
    %v5940 = vmul.f32 %v4776, %v5812
    %v5941 = vmul.f32 %v4778, %v5813
    %v5942 = vmul.f32 %v4589, %v5814
    %v5943 = vmul.f32 %v4591, %v5815
    %v5944 = vmul.f32 %v4782, %v5816
    %v5945 = vmul.f32 %v4784, %v5817
    %v5946 = vmul.f32 %v4593, %v5818
    %v5947 = vmul.f32 %v4595, %v5819
    %v5948 = vmul.f32 %v4786, %v5820
    %v5949 = vmul.f32 %v4788, %v5821
    %v5950 = vmul.f32 %v4599, %v5822
    %v5951 = vmul.f32 %v4601, %v5823
    %v5952 = vmul.f32 %v4792, %v5824
    %v5953 = vmul.f32 %v4794, %v5825
    %v5954 = vmul.f32 %v4603, %v5826
    %v5955 = vmul.f32 %v4605, %v5827
    %v5956 = vmul.f32 %v4796, %v5828
    %v5957 = vmul.f32 %v4798, %v5829
    %v5958 = vmul.f32 %v4609, %v5830
    %v5959 = vmul.f32 %v4611, %v5831
    %v5960 = vmul.f32 %v4802, %v5832
    %v5961 = vmul.f32 %v4804, %v5833
    %v5962 = vmul.f32 %v4613, %v5834
    %v5963 = vmul.f32 %v4615, %v5835
    %v5964 = vmul.f32 %v4806, %v5836
    %v5965 = vmul.f32 %v4808, %v5837
    %v5966 = vmul.f32 %v4619, %v5838
    %v5967 = vmul.f32 %v4621, %v5839
    %v5968 = vmul.f32 %v4812, %v5840
    %v5969 = vmul.f32 %v4814, %v5841
    %v5970 = vmul.f32 %v4623, %v5842
    %v5971 = vmul.f32 %v4625, %v5843
    %v5972 = vmul.f32 %v4816, %v5844
    %v5973 = vmul.f32 %v4818, %v5845
    %v5974 = vmul.f32 %v4629, %v5846
    %v5975 = vmul.f32 %v4631, %v5847
    %v5976 = vmul.f32 %v4822, %v5848
    %v5977 = vmul.f32 %v4824, %v5849
    %v5978 = vmul.f32 %v4633, %v5850
    %v5979 = vmul.f32 %v4635, %v5851
    %v5980 = vmul.f32 %v4826, %v5852
    %v5981 = vmul.f32 %v4828, %v5853
    %v5982 = vpack.c.bf16 %v5858, %v5854
    %v5983 = vpack.c.bf16 %v5859, %v5855
    %v5984 = vpack.c.bf16 %v5860, %v5856
    %v5985 = vpack.c.bf16 %v5861, %v5857
    %v5986 = vpack.c.bf16 %v5866, %v5862
    %v5987 = vpack.c.bf16 %v5867, %v5863
    %v5988 = vpack.c.bf16 %v5868, %v5864
    %v5989 = vpack.c.bf16 %v5869, %v5865
    %v5990 = vpack.c.bf16 %v5874, %v5870
    %v5991 = vpack.c.bf16 %v5875, %v5871
    %v5992 = vpack.c.bf16 %v5876, %v5872
    %v5993 = vpack.c.bf16 %v5877, %v5873
    %v5994 = vpack.c.bf16 %v5882, %v5878
    %v5995 = vpack.c.bf16 %v5883, %v5879
    %v5996 = vpack.c.bf16 %v5884, %v5880
    %v5997 = vpack.c.bf16 %v5885, %v5881
    %v5998 = vpack.c.bf16 %v5890, %v5886
    %v5999 = vpack.c.bf16 %v5891, %v5887
    %v6000 = vpack.c.bf16 %v5892, %v5888
    %v6001 = vpack.c.bf16 %v5893, %v5889
    %v6002 = vpack.c.bf16 %v5898, %v5894
    %v6003 = vpack.c.bf16 %v5899, %v5895
    %v6004 = vpack.c.bf16 %v5900, %v5896
    %v6005 = vpack.c.bf16 %v5901, %v5897
    %v6006 = vpack.c.bf16 %v5906, %v5902
    %v6007 = vpack.c.bf16 %v5907, %v5903
    %v6008 = vpack.c.bf16 %v5908, %v5904
    %v6009 = vpack.c.bf16 %v5909, %v5905
    %v6010 = vpack.c.bf16 %v5914, %v5910
    %v6011 = vpack.c.bf16 %v5915, %v5911
    %v6012 = vpack.c.bf16 %v5916, %v5912
    %v6013 = vpack.c.bf16 %v5917, %v5913
    %v6014 = vpack.c.bf16 %v5922, %v5918
    %v6015 = vpack.c.bf16 %v5923, %v5919
    %v6016 = vpack.c.bf16 %v5924, %v5920
    %v6017 = vpack.c.bf16 %v5925, %v5921
    %v6018 = vpack.c.bf16 %v5930, %v5926
    %v6019 = vpack.c.bf16 %v5931, %v5927
    %v6020 = vpack.c.bf16 %v5932, %v5928
    %v6021 = vpack.c.bf16 %v5933, %v5929
    %v6022 = vpack.c.bf16 %v5938, %v5934
    %v6023 = vpack.c.bf16 %v5939, %v5935
    %v6024 = vpack.c.bf16 %v5940, %v5936
    %v6025 = vpack.c.bf16 %v5941, %v5937
    %v6026 = vpack.c.bf16 %v5946, %v5942
    %v6027 = vpack.c.bf16 %v5947, %v5943
    %v6028 = vpack.c.bf16 %v5948, %v5944
    %v6029 = vpack.c.bf16 %v5949, %v5945
    %v6030 = vpack.c.bf16 %v5954, %v5950
    %v6031 = vpack.c.bf16 %v5955, %v5951
    %v6032 = vpack.c.bf16 %v5956, %v5952
    %v6033 = vpack.c.bf16 %v5957, %v5953
    %v6034 = vpack.c.bf16 %v5962, %v5958
    %v6035 = vpack.c.bf16 %v5963, %v5959
    %v6036 = vpack.c.bf16 %v5964, %v5960
    %v6037 = vpack.c.bf16 %v5965, %v5961
    %v6038 = vpack.c.bf16 %v5970, %v5966
    %v6039 = vpack.c.bf16 %v5971, %v5967
    %v6040 = vpack.c.bf16 %v5972, %v5968
    %v6041 = vpack.c.bf16 %v5973, %v5969
    %v6042 = vpack.c.bf16 %v5978, %v5974
    %v6043 = vpack.c.bf16 %v5979, %v5975
    %v6044 = vpack.c.bf16 %v5980, %v5976
    %v6045 = vpack.c.bf16 %v5981, %v5977
    %v6046 = vld [vmem:[#allocation11] sm:$0xff]
    %v6047 = vld [vmem:[#allocation11 + $0x8] sm:$0xff]
    %v6048 = vld [vmem:[#allocation11 + $0x10] sm:$0xff]
    %v6049 = vld [vmem:[#allocation11 + $0x18] sm:$0xff]
    %v6050 = vld [vmem:[#allocation11 + $0x20] sm:$0xff]
    %v6051 = vld [vmem:[#allocation11 + $0x28] sm:$0xff]
    %v6052 = vld [vmem:[#allocation11 + $0x30] sm:$0xff]
    %v6053 = vld [vmem:[#allocation11 + $0x38] sm:$0xff]
    %v6054 = vld [vmem:[#allocation11 + $0x40] sm:$0xff]
    %v6055 = vld [vmem:[#allocation11 + $0x48] sm:$0xff]
    %v6056 = vld [vmem:[#allocation11 + $0x50] sm:$0xff]
    %v6057 = vld [vmem:[#allocation11 + $0x58] sm:$0xff]
    %v6058 = vld [vmem:[#allocation11 + $0x60] sm:$0xff]
    %v6059 = vld [vmem:[#allocation11 + $0x68] sm:$0xff]
    %v6060 = vld [vmem:[#allocation11 + $0x70] sm:$0xff]
    %v6061 = vld [vmem:[#allocation11 + $0x78] sm:$0xff]
    %v6062 = vld [vmem:[#allocation11 + $0x80] sm:$0xff]
    %v6063 = vld [vmem:[#allocation11 + $0x88] sm:$0xff]
    %v6064 = vld [vmem:[#allocation11 + $0x90] sm:$0xff]
    %v6065 = vld [vmem:[#allocation11 + $0x98] sm:$0xff]
    %v6066 = vld [vmem:[#allocation11 + $0xa0] sm:$0xff]
    %v6067 = vld [vmem:[#allocation11 + $0xa8] sm:$0xff]
    %v6068 = vld [vmem:[#allocation11 + $0xb0] sm:$0xff]
    %v6069 = vld [vmem:[#allocation11 + $0xb8] sm:$0xff]
    %v6070 = vld [vmem:[#allocation11 + $0xc0] sm:$0xff]
    %v6071 = vld [vmem:[#allocation11 + $0xc8] sm:$0xff]
    %v6072 = vld [vmem:[#allocation11 + $0xd0] sm:$0xff]
    %v6073 = vld [vmem:[#allocation11 + $0xd8] sm:$0xff]
    %v6074 = vld [vmem:[#allocation11 + $0xe0] sm:$0xff]
    %v6075 = vld [vmem:[#allocation11 + $0xe8] sm:$0xff]
    %v6076 = vld [vmem:[#allocation11 + $0xf0] sm:$0xff]
    %v6077 = vld [vmem:[#allocation11 + $0xf8] sm:$0xff]
    %v6078 = vld [vmem:[#allocation11 + $0x100] sm:$0xff]
    %v6079 = vld [vmem:[#allocation11 + $0x108] sm:$0xff]
    %v6080 = vld [vmem:[#allocation11 + $0x110] sm:$0xff]
    %v6081 = vld [vmem:[#allocation11 + $0x118] sm:$0xff]
    %v6082 = vld [vmem:[#allocation11 + $0x120] sm:$0xff]
    %v6083 = vld [vmem:[#allocation11 + $0x128] sm:$0xff]
    %v6084 = vld [vmem:[#allocation11 + $0x130] sm:$0xff]
    %v6085 = vld [vmem:[#allocation11 + $0x138] sm:$0xff]
    %v6086 = vld [vmem:[#allocation11 + $0x140] sm:$0xff]
    %v6087 = vld [vmem:[#allocation11 + $0x148] sm:$0xff]
    %v6088 = vld [vmem:[#allocation11 + $0x150] sm:$0xff]
    %v6089 = vld [vmem:[#allocation11 + $0x158] sm:$0xff]
    %v6090 = vld [vmem:[#allocation11 + $0x160] sm:$0xff]
    %v6091 = vld [vmem:[#allocation11 + $0x168] sm:$0xff]
    %v6092 = vld [vmem:[#allocation11 + $0x170] sm:$0xff]
    %v6093 = vld [vmem:[#allocation11 + $0x178] sm:$0xff]
    %v6094 = vld [vmem:[#allocation11 + $0x180] sm:$0xff]
    %v6095 = vld [vmem:[#allocation11 + $0x188] sm:$0xff]
    %v6096 = vld [vmem:[#allocation11 + $0x190] sm:$0xff]
    %v6097 = vld [vmem:[#allocation11 + $0x198] sm:$0xff]
    %v6098 = vld [vmem:[#allocation11 + $0x1a0] sm:$0xff]
    %v6099 = vld [vmem:[#allocation11 + $0x1a8] sm:$0xff]
    %v6100 = vld [vmem:[#allocation11 + $0x1b0] sm:$0xff]
    %v6101 = vld [vmem:[#allocation11 + $0x1b8] sm:$0xff]
    %v6102 = vld [vmem:[#allocation11 + $0x1c0] sm:$0xff]
    %v6103 = vld [vmem:[#allocation11 + $0x1c8] sm:$0xff]
    %v6104 = vld [vmem:[#allocation11 + $0x1d0] sm:$0xff]
    %v6105 = vld [vmem:[#allocation11 + $0x1d8] sm:$0xff]
    %v6106 = vld [vmem:[#allocation11 + $0x1e0] sm:$0xff]
    %v6107 = vld [vmem:[#allocation11 + $0x1e8] sm:$0xff]
    %v6108 = vld [vmem:[#allocation11 + $0x1f0] sm:$0xff]
    %v6109 = vld [vmem:[#allocation11 + $0x1f8] sm:$0xff]
    %v6110 = vld [vmem:[%s9] sm:$0x3]
    %v6112 = vlaneseq
    %v6113 = vshrl.u32 %v6112, 7
    %v6114 = vsub.s32 0, %v6113
    %v6115 = vrot.slane %v6110, %v6114
    %v6116 = vlaneseq
    %v6117 = vshrl.u32 %v6116, 7
    %v6118 = vsub.s32 1, %v6117
    %v6119 = vrot.slane %v6110, %v6118
    %v6186 = vunpack.c.l.b16 %v6046
    %v6187 = vunpack.c.h.b16 %v6046
    %v6188 = vunpack.c.l.b16 %v6047
    %v6189 = vunpack.c.h.b16 %v6047
    %v6190 = vunpack.c.l.b16 %v6048
    %v6191 = vunpack.c.h.b16 %v6048
    %v6192 = vunpack.c.l.b16 %v6049
    %v6193 = vunpack.c.h.b16 %v6049
    %v6194 = vunpack.c.l.b16 %v6050
    %v6195 = vunpack.c.h.b16 %v6050
    %v6196 = vunpack.c.l.b16 %v6051
    %v6197 = vunpack.c.h.b16 %v6051
    %v6198 = vunpack.c.l.b16 %v6052
    %v6199 = vunpack.c.h.b16 %v6052
    %v6200 = vunpack.c.l.b16 %v6053
    %v6201 = vunpack.c.h.b16 %v6053
    %v6202 = vunpack.c.l.b16 %v6054
    %v6203 = vunpack.c.h.b16 %v6054
    %v6204 = vunpack.c.l.b16 %v6055
    %v6205 = vunpack.c.h.b16 %v6055
    %v6206 = vunpack.c.l.b16 %v6056
    %v6207 = vunpack.c.h.b16 %v6056
    %v6208 = vunpack.c.l.b16 %v6057
    %v6209 = vunpack.c.h.b16 %v6057
    %v6210 = vunpack.c.l.b16 %v6058
    %v6211 = vunpack.c.h.b16 %v6058
    %v6212 = vunpack.c.l.b16 %v6059
    %v6213 = vunpack.c.h.b16 %v6059
    %v6214 = vunpack.c.l.b16 %v6060
    %v6215 = vunpack.c.h.b16 %v6060
    %v6216 = vunpack.c.l.b16 %v6061
    %v6217 = vunpack.c.h.b16 %v6061
    %v6218 = vunpack.c.l.b16 %v6062
    %v6219 = vunpack.c.h.b16 %v6062
    %v6220 = vunpack.c.l.b16 %v6063
    %v6221 = vunpack.c.h.b16 %v6063
    %v6222 = vunpack.c.l.b16 %v6064
    %v6223 = vunpack.c.h.b16 %v6064
    %v6224 = vunpack.c.l.b16 %v6065
    %v6225 = vunpack.c.h.b16 %v6065
    %v6226 = vunpack.c.l.b16 %v6066
    %v6227 = vunpack.c.h.b16 %v6066
    %v6228 = vunpack.c.l.b16 %v6067
    %v6229 = vunpack.c.h.b16 %v6067
    %v6230 = vunpack.c.l.b16 %v6068
    %v6231 = vunpack.c.h.b16 %v6068
    %v6232 = vunpack.c.l.b16 %v6069
    %v6233 = vunpack.c.h.b16 %v6069
    %v6234 = vunpack.c.l.b16 %v6070
    %v6235 = vunpack.c.h.b16 %v6070
    %v6236 = vunpack.c.l.b16 %v6071
    %v6237 = vunpack.c.h.b16 %v6071
    %v6238 = vunpack.c.l.b16 %v6072
    %v6239 = vunpack.c.h.b16 %v6072
    %v6240 = vunpack.c.l.b16 %v6073
    %v6241 = vunpack.c.h.b16 %v6073
    %v6242 = vunpack.c.l.b16 %v6074
    %v6243 = vunpack.c.h.b16 %v6074
    %v6244 = vunpack.c.l.b16 %v6075
    %v6245 = vunpack.c.h.b16 %v6075
    %v6246 = vunpack.c.l.b16 %v6076
    %v6247 = vunpack.c.h.b16 %v6076
    %v6248 = vunpack.c.l.b16 %v6077
    %v6249 = vunpack.c.h.b16 %v6077
    %v6250 = vunpack.c.l.b16 %v6078
    %v6251 = vunpack.c.h.b16 %v6078
    %v6252 = vunpack.c.l.b16 %v6079
    %v6253 = vunpack.c.h.b16 %v6079
    %v6254 = vunpack.c.l.b16 %v6080
    %v6255 = vunpack.c.h.b16 %v6080
    %v6256 = vunpack.c.l.b16 %v6081
    %v6257 = vunpack.c.h.b16 %v6081
    %v6258 = vunpack.c.l.b16 %v6082
    %v6259 = vunpack.c.h.b16 %v6082
    %v6260 = vunpack.c.l.b16 %v6083
    %v6261 = vunpack.c.h.b16 %v6083
    %v6262 = vunpack.c.l.b16 %v6084
    %v6263 = vunpack.c.h.b16 %v6084
    %v6264 = vunpack.c.l.b16 %v6085
    %v6265 = vunpack.c.h.b16 %v6085
    %v6266 = vunpack.c.l.b16 %v6086
    %v6267 = vunpack.c.h.b16 %v6086
    %v6268 = vunpack.c.l.b16 %v6087
    %v6269 = vunpack.c.h.b16 %v6087
    %v6270 = vunpack.c.l.b16 %v6088
    %v6271 = vunpack.c.h.b16 %v6088
    %v6272 = vunpack.c.l.b16 %v6089
    %v6273 = vunpack.c.h.b16 %v6089
    %v6274 = vunpack.c.l.b16 %v6090
    %v6275 = vunpack.c.h.b16 %v6090
    %v6276 = vunpack.c.l.b16 %v6091
    %v6277 = vunpack.c.h.b16 %v6091
    %v6278 = vunpack.c.l.b16 %v6092
    %v6279 = vunpack.c.h.b16 %v6092
    %v6280 = vunpack.c.l.b16 %v6093
    %v6281 = vunpack.c.h.b16 %v6093
    %v6282 = vunpack.c.l.b16 %v6094
    %v6283 = vunpack.c.h.b16 %v6094
    %v6284 = vunpack.c.l.b16 %v6095
    %v6285 = vunpack.c.h.b16 %v6095
    %v6286 = vunpack.c.l.b16 %v6096
    %v6287 = vunpack.c.h.b16 %v6096
    %v6288 = vunpack.c.l.b16 %v6097
    %v6289 = vunpack.c.h.b16 %v6097
    %v6290 = vunpack.c.l.b16 %v6098
    %v6291 = vunpack.c.h.b16 %v6098
    %v6292 = vunpack.c.l.b16 %v6099
    %v6293 = vunpack.c.h.b16 %v6099
    %v6294 = vunpack.c.l.b16 %v6100
    %v6295 = vunpack.c.h.b16 %v6100
    %v6296 = vunpack.c.l.b16 %v6101
    %v6297 = vunpack.c.h.b16 %v6101
    %v6298 = vunpack.c.l.b16 %v6102
    %v6299 = vunpack.c.h.b16 %v6102
    %v6300 = vunpack.c.l.b16 %v6103
    %v6301 = vunpack.c.h.b16 %v6103
    %v6302 = vunpack.c.l.b16 %v6104
    %v6303 = vunpack.c.h.b16 %v6104
    %v6304 = vunpack.c.l.b16 %v6105
    %v6305 = vunpack.c.h.b16 %v6105
    %v6306 = vunpack.c.l.b16 %v6106
    %v6307 = vunpack.c.h.b16 %v6106
    %v6308 = vunpack.c.l.b16 %v6107
    %v6309 = vunpack.c.h.b16 %v6107
    %v6310 = vunpack.c.l.b16 %v6108
    %v6311 = vunpack.c.h.b16 %v6108
    %v6312 = vunpack.c.l.b16 %v6109
    %v6313 = vunpack.c.h.b16 %v6109
    %v6314 = vpack.c.b16 %v6188, %v6186
    %v6315 = vpack.c.b16 %v6189, %v6187
    %v6316 = vpack.c.b16 %v6192, %v6190
    %v6317 = vpack.c.b16 %v6193, %v6191
    %v6318 = vpack.c.b16 %v6196, %v6194
    %v6319 = vpack.c.b16 %v6197, %v6195
    %v6320 = vpack.c.b16 %v6200, %v6198
    %v6321 = vpack.c.b16 %v6201, %v6199
    %v6322 = vpack.c.b16 %v6204, %v6202
    %v6323 = vpack.c.b16 %v6205, %v6203
    %v6324 = vpack.c.b16 %v6208, %v6206
    %v6325 = vpack.c.b16 %v6209, %v6207
    %v6326 = vpack.c.b16 %v6212, %v6210
    %v6327 = vpack.c.b16 %v6213, %v6211
    %v6328 = vpack.c.b16 %v6216, %v6214
    %v6329 = vpack.c.b16 %v6217, %v6215
    %v6330 = vpack.c.b16 %v6220, %v6218
    %v6331 = vpack.c.b16 %v6221, %v6219
    %v6332 = vpack.c.b16 %v6224, %v6222
    %v6333 = vpack.c.b16 %v6225, %v6223
    %v6334 = vpack.c.b16 %v6228, %v6226
    %v6335 = vpack.c.b16 %v6229, %v6227
    %v6336 = vpack.c.b16 %v6232, %v6230
    %v6337 = vpack.c.b16 %v6233, %v6231
    %v6338 = vpack.c.b16 %v6236, %v6234
    %v6339 = vpack.c.b16 %v6237, %v6235
    %v6340 = vpack.c.b16 %v6240, %v6238
    %v6341 = vpack.c.b16 %v6241, %v6239
    %v6342 = vpack.c.b16 %v6244, %v6242
    %v6343 = vpack.c.b16 %v6245, %v6243
    %v6344 = vpack.c.b16 %v6248, %v6246
    %v6345 = vpack.c.b16 %v6249, %v6247
    %v6346 = vpack.c.b16 %v6252, %v6250
    %v6347 = vpack.c.b16 %v6253, %v6251
    %v6348 = vpack.c.b16 %v6256, %v6254
    %v6349 = vpack.c.b16 %v6257, %v6255
    %v6350 = vpack.c.b16 %v6260, %v6258
    %v6351 = vpack.c.b16 %v6261, %v6259
    %v6352 = vpack.c.b16 %v6264, %v6262
    %v6353 = vpack.c.b16 %v6265, %v6263
    %v6354 = vpack.c.b16 %v6268, %v6266
    %v6355 = vpack.c.b16 %v6269, %v6267
    %v6356 = vpack.c.b16 %v6272, %v6270
    %v6357 = vpack.c.b16 %v6273, %v6271
    %v6358 = vpack.c.b16 %v6276, %v6274
    %v6359 = vpack.c.b16 %v6277, %v6275
    %v6360 = vpack.c.b16 %v6280, %v6278
    %v6361 = vpack.c.b16 %v6281, %v6279
    %v6362 = vpack.c.b16 %v6284, %v6282
    %v6363 = vpack.c.b16 %v6285, %v6283
    %v6364 = vpack.c.b16 %v6288, %v6286
    %v6365 = vpack.c.b16 %v6289, %v6287
    %v6366 = vpack.c.b16 %v6292, %v6290
    %v6367 = vpack.c.b16 %v6293, %v6291
    %v6368 = vpack.c.b16 %v6296, %v6294
    %v6369 = vpack.c.b16 %v6297, %v6295
    %v6370 = vpack.c.b16 %v6300, %v6298
    %v6371 = vpack.c.b16 %v6301, %v6299
    %v6372 = vpack.c.b16 %v6304, %v6302
    %v6373 = vpack.c.b16 %v6305, %v6303
    %v6374 = vpack.c.b16 %v6308, %v6306
    %v6375 = vpack.c.b16 %v6309, %v6307
    %v6376 = vpack.c.b16 %v6312, %v6310
    %v6377 = vpack.c.b16 %v6313, %v6311
    %6442 = vmatprep.subr.bf16.mxu0 %v6315
    %6443 = vmatpush1.bf16.msra.mxu0 %v6314
    %6444 = vmatprep.subr.bf16.mxu0 %v6317
    %6445 = vmatpush1.bf16.msra.mxu0 %v6316
    %6446 = vmatprep.subr.bf16.mxu0 %v6319
    %6447 = vmatpush1.bf16.msra.mxu0 %v6318
    %6448 = vmatprep.subr.bf16.mxu0 %v6321
    %6449 = vmatpush1.bf16.msra.mxu0 %v6320
    %6450 = vmatprep.subr.bf16.mxu0 %v6323
    %6451 = vmatpush1.bf16.msra.mxu0 %v6322
    %6452 = vmatprep.subr.bf16.mxu0 %v6325
    %6453 = vmatpush1.bf16.msra.mxu0 %v6324
    %6454 = vmatprep.subr.bf16.mxu0 %v6327
    %6455 = vmatpush1.bf16.msra.mxu0 %v6326
    %6456 = vmatprep.subr.bf16.mxu0 %v6329
    %6457 = vmatpush1.bf16.msra.mxu0 %v6328
    %6458 = vmatprep.subr.bf16.mxu0 %v6331
    %6459 = vmatpush1.bf16.msra.mxu0 %v6330
    %6460 = vmatprep.subr.bf16.mxu0 %v6333
    %6461 = vmatpush1.bf16.msra.mxu0 %v6332
    %6462 = vmatprep.subr.bf16.mxu0 %v6335
    %6463 = vmatpush1.bf16.msra.mxu0 %v6334
    %6464 = vmatprep.subr.bf16.mxu0 %v6337
    %6465 = vmatpush1.bf16.msra.mxu0 %v6336
    %6466 = vmatprep.subr.bf16.mxu0 %v6339
    %6467 = vmatpush1.bf16.msra.mxu0 %v6338
    %6468 = vmatprep.subr.bf16.mxu0 %v6341
    %6469 = vmatpush1.bf16.msra.mxu0 %v6340
    %6470 = vmatprep.subr.bf16.mxu0 %v6343
    %6471 = vmatpush1.bf16.msra.mxu0 %v6342
    %6472 = vmatprep.subr.bf16.mxu0 %v6345
    %6473 = vmatpush1.bf16.msra.mxu0 %v6344
    %6474 = vmatprep.mubr.bf16.mxu0 %v5983
    %6475 = vmatmul.mubr.bf16.gmra.mrb[0].mxu0 %v5982
    %v6476 = vpop.f32.mrb[0].mxu0
    %v6477 = vadd.f32 %v6115, %v6476
    %v6478 = vpop.f32.mrb[0].mxu0
    %v6479 = vadd.f32 %v6119, %v6478
    %v6480 = vpop.f32.mrb[0].mxu0
    %v6481 = vadd.f32 %v6115, %v6480
    %v6482 = vpop.f32.mrb[0].mxu0
    %v6483 = vadd.f32 %v6119, %v6482
    %6484 = vmatprep.mubr.bf16.mxu0 %v5987
    %6485 = vmatmul.mubr.bf16.gmra.mrb[0].mxu0 %v5986
    %v6486 = vpop.f32.mrb[0].mxu0
    %v6487 = vadd.f32 %v6115, %v6486
    %v6488 = vpop.f32.mrb[0].mxu0
    %v6489 = vadd.f32 %v6119, %v6488
    %v6490 = vpop.f32.mrb[0].mxu0
    %v6491 = vadd.f32 %v6115, %v6490
    %v6492 = vpop.f32.mrb[0].mxu0
    %v6493 = vadd.f32 %v6119, %v6492
    %6494 = vmatprep.mubr.bf16.mxu0 %v5991
    %6495 = vmatmul.mubr.bf16.gmra.mrb[0].mxu0 %v5990
    %v6496 = vpop.f32.mrb[0].mxu0
    %v6497 = vadd.f32 %v6115, %v6496
    %v6498 = vpop.f32.mrb[0].mxu0
    %v6499 = vadd.f32 %v6119, %v6498
    %v6500 = vpop.f32.mrb[0].mxu0
    %v6501 = vadd.f32 %v6115, %v6500
    %v6502 = vpop.f32.mrb[0].mxu0
    %v6503 = vadd.f32 %v6119, %v6502
    %6504 = vmatprep.mubr.bf16.mxu0 %v5995
    %6505 = vmatmul.mubr.bf16.gmra.mrb[0].mxu0 %v5994
    %v6506 = vpop.f32.mrb[0].mxu0
    %v6507 = vadd.f32 %v6115, %v6506
    %v6508 = vpop.f32.mrb[0].mxu0
    %v6509 = vadd.f32 %v6119, %v6508
    %v6510 = vpop.f32.mrb[0].mxu0
    %v6511 = vadd.f32 %v6115, %v6510
    %v6512 = vpop.f32.mrb[0].mxu0
    %v6513 = vadd.f32 %v6119, %v6512
    %6514 = vmatprep.mubr.bf16.mxu0 %v5999
    %6515 = vmatmul.mubr.bf16.gmra.mrb[0].mxu0 %v5998
    %v6516 = vpop.f32.mrb[0].mxu0
    %v6517 = vadd.f32 %v6115, %v6516
    %v6518 = vpop.f32.mrb[0].mxu0
    %v6519 = vadd.f32 %v6119, %v6518
    %v6520 = vpop.f32.mrb[0].mxu0
    %v6521 = vadd.f32 %v6115, %v6520
    %v6522 = vpop.f32.mrb[0].mxu0
    %v6523 = vadd.f32 %v6119, %v6522
    %6524 = vmatprep.mubr.bf16.mxu0 %v6003
    %6525 = vmatmul.mubr.bf16.gmra.mrb[0].mxu0 %v6002
    %v6526 = vpop.f32.mrb[0].mxu0
    %v6527 = vadd.f32 %v6115, %v6526
    %v6528 = vpop.f32.mrb[0].mxu0
    %v6529 = vadd.f32 %v6119, %v6528
    %v6530 = vpop.f32.mrb[0].mxu0
    %v6531 = vadd.f32 %v6115, %v6530
    %v6532 = vpop.f32.mrb[0].mxu0
    %v6533 = vadd.f32 %v6119, %v6532
    %6534 = vmatprep.mubr.bf16.mxu0 %v6007
    %6535 = vmatmul.mubr.bf16.gmra.mrb[0].mxu0 %v6006
    %v6536 = vpop.f32.mrb[0].mxu0
    %v6537 = vadd.f32 %v6115, %v6536
    %v6538 = vpop.f32.mrb[0].mxu0
    %v6539 = vadd.f32 %v6119, %v6538
    %v6540 = vpop.f32.mrb[0].mxu0
    %v6541 = vadd.f32 %v6115, %v6540
    %v6542 = vpop.f32.mrb[0].mxu0
    %v6543 = vadd.f32 %v6119, %v6542
    %6544 = vmatprep.mubr.bf16.mxu0 %v6011
    %6545 = vmatmul.mubr.bf16.gmra.mrb[0].mxu0 %v6010
    %v6546 = vpop.f32.mrb[0].mxu0
    %v6547 = vadd.f32 %v6115, %v6546
    %v6548 = vpop.f32.mrb[0].mxu0
    %v6549 = vadd.f32 %v6119, %v6548
    %v6550 = vpop.f32.mrb[0].mxu0
    %v6551 = vadd.f32 %v6115, %v6550
    %v6552 = vpop.f32.mrb[0].mxu0
    %v6553 = vadd.f32 %v6119, %v6552
    %6554 = vmatprep.mubr.bf16.mxu0 %v6015
    %6555 = vmatmul.mubr.bf16.gmra.mrb[0].mxu0 %v6014
    %v6556 = vpop.f32.mrb[0].mxu0
    %v6557 = vadd.f32 %v6115, %v6556
    %v6558 = vpop.f32.mrb[0].mxu0
    %v6559 = vadd.f32 %v6119, %v6558
    %v6560 = vpop.f32.mrb[0].mxu0
    %v6561 = vadd.f32 %v6115, %v6560
    %v6562 = vpop.f32.mrb[0].mxu0
    %v6563 = vadd.f32 %v6119, %v6562
    %6564 = vmatprep.mubr.bf16.mxu0 %v6019
    %6565 = vmatmul.mubr.bf16.gmra.mrb[0].mxu0 %v6018
    %v6566 = vpop.f32.mrb[0].mxu0
    %v6567 = vadd.f32 %v6115, %v6566
    %v6568 = vpop.f32.mrb[0].mxu0
    %v6569 = vadd.f32 %v6119, %v6568
    %v6570 = vpop.f32.mrb[0].mxu0
    %v6571 = vadd.f32 %v6115, %v6570
    %v6572 = vpop.f32.mrb[0].mxu0
    %v6573 = vadd.f32 %v6119, %v6572
    %6574 = vmatprep.mubr.bf16.mxu0 %v6023
    %6575 = vmatmul.mubr.bf16.gmra.mrb[0].mxu0 %v6022
    %v6576 = vpop.f32.mrb[0].mxu0
    %v6577 = vadd.f32 %v6115, %v6576
    %v6578 = vpop.f32.mrb[0].mxu0
    %v6579 = vadd.f32 %v6119, %v6578
    %v6580 = vpop.f32.mrb[0].mxu0
    %v6581 = vadd.f32 %v6115, %v6580
    %v6582 = vpop.f32.mrb[0].mxu0
    %v6583 = vadd.f32 %v6119, %v6582
    %6584 = vmatprep.mubr.bf16.mxu0 %v6027
    %6585 = vmatmul.mubr.bf16.gmra.mrb[0].mxu0 %v6026
    %v6586 = vpop.f32.mrb[0].mxu0
    %v6587 = vadd.f32 %v6115, %v6586
    %v6588 = vpop.f32.mrb[0].mxu0
    %v6589 = vadd.f32 %v6119, %v6588
    %v6590 = vpop.f32.mrb[0].mxu0
    %v6591 = vadd.f32 %v6115, %v6590
    %v6592 = vpop.f32.mrb[0].mxu0
    %v6593 = vadd.f32 %v6119, %v6592
    %6594 = vmatprep.mubr.bf16.mxu0 %v6031
    %6595 = vmatmul.mubr.bf16.gmra.mrb[0].mxu0 %v6030
    %v6596 = vpop.f32.mrb[0].mxu0
    %v6597 = vadd.f32 %v6115, %v6596
    %v6598 = vpop.f32.mrb[0].mxu0
    %v6599 = vadd.f32 %v6119, %v6598
    %v6600 = vpop.f32.mrb[0].mxu0
    %v6601 = vadd.f32 %v6115, %v6600
    %v6602 = vpop.f32.mrb[0].mxu0
    %v6603 = vadd.f32 %v6119, %v6602
    %6604 = vmatprep.mubr.bf16.mxu0 %v6035
    %6605 = vmatmul.mubr.bf16.gmra.mrb[0].mxu0 %v6034
    %v6606 = vpop.f32.mrb[0].mxu0
    %v6607 = vadd.f32 %v6115, %v6606
    %v6608 = vpop.f32.mrb[0].mxu0
    %v6609 = vadd.f32 %v6119, %v6608
    %v6610 = vpop.f32.mrb[0].mxu0
    %v6611 = vadd.f32 %v6115, %v6610
    %v6612 = vpop.f32.mrb[0].mxu0
    %v6613 = vadd.f32 %v6119, %v6612
    %6614 = vmatprep.mubr.bf16.mxu0 %v6039
    %6615 = vmatmul.mubr.bf16.gmra.mrb[0].mxu0 %v6038
    %v6616 = vpop.f32.mrb[0].mxu0
    %v6617 = vadd.f32 %v6115, %v6616
    %v6618 = vpop.f32.mrb[0].mxu0
    %v6619 = vadd.f32 %v6119, %v6618
    %v6620 = vpop.f32.mrb[0].mxu0
    %v6621 = vadd.f32 %v6115, %v6620
    %v6622 = vpop.f32.mrb[0].mxu0
    %v6623 = vadd.f32 %v6119, %v6622
    %6624 = vmatprep.mubr.bf16.mxu0 %v6043
    %6625 = vmatmul.mubr.bf16.gmra.mrb[0].mxu0 %v6042
    %v6626 = vpop.f32.mrb[0].mxu0
    %v6627 = vadd.f32 %v6115, %v6626
    %v6628 = vpop.f32.mrb[0].mxu0
    %v6629 = vadd.f32 %v6119, %v6628
    %v6630 = vpop.f32.mrb[0].mxu0
    %v6631 = vadd.f32 %v6115, %v6630
    %v6632 = vpop.f32.mrb[0].mxu0
    %v6633 = vadd.f32 %v6119, %v6632
    %6634 = vdwg.mxu0
    %6635 = vmatprep.subr.bf16.mxu0 %v6347
    %6636 = vmatpush1.bf16.msra.mxu0 %v6346
    %6637 = vmatprep.subr.bf16.mxu0 %v6349
    %6638 = vmatpush1.bf16.msra.mxu0 %v6348
    %6639 = vmatprep.subr.bf16.mxu0 %v6351
    %6640 = vmatpush1.bf16.msra.mxu0 %v6350
    %6641 = vmatprep.subr.bf16.mxu0 %v6353
    %6642 = vmatpush1.bf16.msra.mxu0 %v6352
    %6643 = vmatprep.subr.bf16.mxu0 %v6355
    %6644 = vmatpush1.bf16.msra.mxu0 %v6354
    %6645 = vmatprep.subr.bf16.mxu0 %v6357
    %6646 = vmatpush1.bf16.msra.mxu0 %v6356
    %6647 = vmatprep.subr.bf16.mxu0 %v6359
    %6648 = vmatpush1.bf16.msra.mxu0 %v6358
    %6649 = vmatprep.subr.bf16.mxu0 %v6361
    %6650 = vmatpush1.bf16.msra.mxu0 %v6360
    %6651 = vmatprep.subr.bf16.mxu0 %v6363
    %6652 = vmatpush1.bf16.msra.mxu0 %v6362
    %6653 = vmatprep.subr.bf16.mxu0 %v6365
    %6654 = vmatpush1.bf16.msra.mxu0 %v6364
    %6655 = vmatprep.subr.bf16.mxu0 %v6367
    %6656 = vmatpush1.bf16.msra.mxu0 %v6366
    %6657 = vmatprep.subr.bf16.mxu0 %v6369
    %6658 = vmatpush1.bf16.msra.mxu0 %v6368
    %6659 = vmatprep.subr.bf16.mxu0 %v6371
    %6660 = vmatpush1.bf16.msra.mxu0 %v6370
    %6661 = vmatprep.subr.bf16.mxu0 %v6373
    %6662 = vmatpush1.bf16.msra.mxu0 %v6372
    %6663 = vmatprep.subr.bf16.mxu0 %v6375
    %6664 = vmatpush1.bf16.msra.mxu0 %v6374
    %6665 = vmatprep.subr.bf16.mxu0 %v6377
    %6666 = vmatpush1.bf16.msra.mxu0 %v6376
    %6667 = vmatprep.mubr.bf16.mxu0 %v5985
    %6668 = vmatmul.mubr.bf16.gmra.mrb[0].mxu0 %v5984
    %v6669 = vpop.f32.mrb[0].mxu0
    %v6670 = vadd.f32 %v6477, %v6669
    %v6671 = vpop.f32.mrb[0].mxu0
    %v6672 = vadd.f32 %v6479, %v6671
    %v6673 = vpop.f32.mrb[0].mxu0
    %v6674 = vadd.f32 %v6481, %v6673
    %v6675 = vpop.f32.mrb[0].mxu0
    %v6676 = vadd.f32 %v6483, %v6675
    %6677 = vmatprep.mubr.bf16.mxu0 %v5989
    %6678 = vmatmul.mubr.bf16.gmra.mrb[0].mxu0 %v5988
    %v6679 = vpop.f32.mrb[0].mxu0
    %v6680 = vadd.f32 %v6487, %v6679
    %v6681 = vpop.f32.mrb[0].mxu0
    %v6682 = vadd.f32 %v6489, %v6681
    %v6683 = vpop.f32.mrb[0].mxu0
    %v6684 = vadd.f32 %v6491, %v6683
    %v6685 = vpop.f32.mrb[0].mxu0
    %v6686 = vadd.f32 %v6493, %v6685
    %6687 = vmatprep.mubr.bf16.mxu0 %v5993
    %6688 = vmatmul.mubr.bf16.gmra.mrb[0].mxu0 %v5992
    %v6689 = vpop.f32.mrb[0].mxu0
    %v6690 = vadd.f32 %v6497, %v6689
    %v6691 = vpop.f32.mrb[0].mxu0
    %v6692 = vadd.f32 %v6499, %v6691
    %v6693 = vpop.f32.mrb[0].mxu0
    %v6694 = vadd.f32 %v6501, %v6693
    %v6695 = vpop.f32.mrb[0].mxu0
    %v6696 = vadd.f32 %v6503, %v6695
    %6697 = vmatprep.mubr.bf16.mxu0 %v5997
    %6698 = vmatmul.mubr.bf16.gmra.mrb[0].mxu0 %v5996
    %v6699 = vpop.f32.mrb[0].mxu0
    %v6700 = vadd.f32 %v6507, %v6699
    %v6701 = vpop.f32.mrb[0].mxu0
    %v6702 = vadd.f32 %v6509, %v6701
    %v6703 = vpop.f32.mrb[0].mxu0
    %v6704 = vadd.f32 %v6511, %v6703
    %v6705 = vpop.f32.mrb[0].mxu0
    %v6706 = vadd.f32 %v6513, %v6705
    %6707 = vmatprep.mubr.bf16.mxu0 %v6001
    %6708 = vmatmul.mubr.bf16.gmra.mrb[0].mxu0 %v6000
    %v6709 = vpop.f32.mrb[0].mxu0
    %v6710 = vadd.f32 %v6517, %v6709
    %v6711 = vpop.f32.mrb[0].mxu0
    %v6712 = vadd.f32 %v6519, %v6711
    %v6713 = vpop.f32.mrb[0].mxu0
    %v6714 = vadd.f32 %v6521, %v6713
    %v6715 = vpop.f32.mrb[0].mxu0
    %v6716 = vadd.f32 %v6523, %v6715
    %6717 = vmatprep.mubr.bf16.mxu0 %v6005
    %6718 = vmatmul.mubr.bf16.gmra.mrb[0].mxu0 %v6004
    %v6719 = vpop.f32.mrb[0].mxu0
    %v6720 = vadd.f32 %v6527, %v6719
    %v6721 = vpop.f32.mrb[0].mxu0
    %v6722 = vadd.f32 %v6529, %v6721
    %v6723 = vpop.f32.mrb[0].mxu0
    %v6724 = vadd.f32 %v6531, %v6723
    %v6725 = vpop.f32.mrb[0].mxu0
    %v6726 = vadd.f32 %v6533, %v6725
    %6727 = vmatprep.mubr.bf16.mxu0 %v6009
    %6728 = vmatmul.mubr.bf16.gmra.mrb[0].mxu0 %v6008
    %v6729 = vpop.f32.mrb[0].mxu0
    %v6730 = vadd.f32 %v6537, %v6729
    %v6731 = vpop.f32.mrb[0].mxu0
    %v6732 = vadd.f32 %v6539, %v6731
    %v6733 = vpop.f32.mrb[0].mxu0
    %v6734 = vadd.f32 %v6541, %v6733
    %v6735 = vpop.f32.mrb[0].mxu0
    %v6736 = vadd.f32 %v6543, %v6735
    %6737 = vmatprep.mubr.bf16.mxu0 %v6013
    %6738 = vmatmul.mubr.bf16.gmra.mrb[0].mxu0 %v6012
    %v6739 = vpop.f32.mrb[0].mxu0
    %v6740 = vadd.f32 %v6547, %v6739
    %v6741 = vpop.f32.mrb[0].mxu0
    %v6742 = vadd.f32 %v6549, %v6741
    %v6743 = vpop.f32.mrb[0].mxu0
    %v6744 = vadd.f32 %v6551, %v6743
    %v6745 = vpop.f32.mrb[0].mxu0
    %v6746 = vadd.f32 %v6553, %v6745
    %6747 = vmatprep.mubr.bf16.mxu0 %v6017
    %6748 = vmatmul.mubr.bf16.gmra.mrb[0].mxu0 %v6016
    %v6749 = vpop.f32.mrb[0].mxu0
    %v6750 = vadd.f32 %v6557, %v6749
    %v6751 = vpop.f32.mrb[0].mxu0
    %v6752 = vadd.f32 %v6559, %v6751
    %v6753 = vpop.f32.mrb[0].mxu0
    %v6754 = vadd.f32 %v6561, %v6753
    %v6755 = vpop.f32.mrb[0].mxu0
    %v6756 = vadd.f32 %v6563, %v6755
    %6757 = vmatprep.mubr.bf16.mxu0 %v6021
    %6758 = vmatmul.mubr.bf16.gmra.mrb[0].mxu0 %v6020
    %v6759 = vpop.f32.mrb[0].mxu0
    %v6760 = vadd.f32 %v6567, %v6759
    %v6761 = vpop.f32.mrb[0].mxu0
    %v6762 = vadd.f32 %v6569, %v6761
    %v6763 = vpop.f32.mrb[0].mxu0
    %v6764 = vadd.f32 %v6571, %v6763
    %v6765 = vpop.f32.mrb[0].mxu0
    %v6766 = vadd.f32 %v6573, %v6765
    %6767 = vmatprep.mubr.bf16.mxu0 %v6025
    %6768 = vmatmul.mubr.bf16.gmra.mrb[0].mxu0 %v6024
    %v6769 = vpop.f32.mrb[0].mxu0
    %v6770 = vadd.f32 %v6577, %v6769
    %v6771 = vpop.f32.mrb[0].mxu0
    %v6772 = vadd.f32 %v6579, %v6771
    %v6773 = vpop.f32.mrb[0].mxu0
    %v6774 = vadd.f32 %v6581, %v6773
    %v6775 = vpop.f32.mrb[0].mxu0
    %v6776 = vadd.f32 %v6583, %v6775
    %6777 = vmatprep.mubr.bf16.mxu0 %v6029
    %6778 = vmatmul.mubr.bf16.gmra.mrb[0].mxu0 %v6028
    %v6779 = vpop.f32.mrb[0].mxu0
    %v6780 = vadd.f32 %v6587, %v6779
    %v6781 = vpop.f32.mrb[0].mxu0
    %v6782 = vadd.f32 %v6589, %v6781
    %v6783 = vpop.f32.mrb[0].mxu0
    %v6784 = vadd.f32 %v6591, %v6783
    %v6785 = vpop.f32.mrb[0].mxu0
    %v6786 = vadd.f32 %v6593, %v6785
    %6787 = vmatprep.mubr.bf16.mxu0 %v6033
    %6788 = vmatmul.mubr.bf16.gmra.mrb[0].mxu0 %v6032
    %v6789 = vpop.f32.mrb[0].mxu0
    %v6790 = vadd.f32 %v6597, %v6789
    %v6791 = vpop.f32.mrb[0].mxu0
    %v6792 = vadd.f32 %v6599, %v6791
    %v6793 = vpop.f32.mrb[0].mxu0
    %v6794 = vadd.f32 %v6601, %v6793
    %v6795 = vpop.f32.mrb[0].mxu0
    %v6796 = vadd.f32 %v6603, %v6795
    %6797 = vmatprep.mubr.bf16.mxu0 %v6037
    %6798 = vmatmul.mubr.bf16.gmra.mrb[0].mxu0 %v6036
    %v6799 = vpop.f32.mrb[0].mxu0
    %v6800 = vadd.f32 %v6607, %v6799
    %v6801 = vpop.f32.mrb[0].mxu0
    %v6802 = vadd.f32 %v6609, %v6801
    %v6803 = vpop.f32.mrb[0].mxu0
    %v6804 = vadd.f32 %v6611, %v6803
    %v6805 = vpop.f32.mrb[0].mxu0
    %v6806 = vadd.f32 %v6613, %v6805
    %6807 = vmatprep.mubr.bf16.mxu0 %v6041
    %6808 = vmatmul.mubr.bf16.gmra.mrb[0].mxu0 %v6040
    %v6809 = vpop.f32.mrb[0].mxu0
    %v6810 = vadd.f32 %v6617, %v6809
    %v6811 = vpop.f32.mrb[0].mxu0
    %v6812 = vadd.f32 %v6619, %v6811
    %v6813 = vpop.f32.mrb[0].mxu0
    %v6814 = vadd.f32 %v6621, %v6813
    %v6815 = vpop.f32.mrb[0].mxu0
    %v6816 = vadd.f32 %v6623, %v6815
    %6817 = vmatprep.mubr.bf16.mxu0 %v6045
    %6818 = vmatmul.mubr.bf16.gmra.mrb[0].mxu0 %v6044
    %v6819 = vpop.f32.mrb[0].mxu0
    %v6820 = vadd.f32 %v6627, %v6819
    %v6821 = vpop.f32.mrb[0].mxu0
    %v6822 = vadd.f32 %v6629, %v6821
    %v6823 = vpop.f32.mrb[0].mxu0
    %v6824 = vadd.f32 %v6631, %v6823
    %v6825 = vpop.f32.mrb[0].mxu0
    %v6826 = vadd.f32 %v6633, %v6825
    %6827 = vdwg.mxu0
    %v6828 = vadd.f32 %v6670, %v3942
    %v6829 = vadd.f32 %v6672, %v3943
    %v6830 = vadd.f32 %v6674, %v3944
    %v6831 = vadd.f32 %v6676, %v3945
    %v6832 = vadd.f32 %v6680, %v3946
    %v6833 = vadd.f32 %v6682, %v3947
    %v6834 = vadd.f32 %v6684, %v3948
    %v6835 = vadd.f32 %v6686, %v3949
    %v6836 = vadd.f32 %v6690, %v3950
    %v6837 = vadd.f32 %v6692, %v3951
    %v6838 = vadd.f32 %v6694, %v3952
    %v6839 = vadd.f32 %v6696, %v3953
    %v6840 = vadd.f32 %v6700, %v3954
    %v6841 = vadd.f32 %v6702, %v3955
    %v6842 = vadd.f32 %v6704, %v3956
    %v6843 = vadd.f32 %v6706, %v3957
    %v6844 = vadd.f32 %v6710, %v3958
    %v6845 = vadd.f32 %v6712, %v3959
    %v6846 = vadd.f32 %v6714, %v3960
    %v6847 = vadd.f32 %v6716, %v3961
    %v6848 = vadd.f32 %v6720, %v3962
    %v6849 = vadd.f32 %v6722, %v3963
    %v6850 = vadd.f32 %v6724, %v3964
    %v6851 = vadd.f32 %v6726, %v3965
    %v6852 = vadd.f32 %v6730, %v3966
    %v6853 = vadd.f32 %v6732, %v3967
    %v6854 = vadd.f32 %v6734, %v3968
    %v6855 = vadd.f32 %v6736, %v3969
    %v6856 = vadd.f32 %v6740, %v3970
    %v6857 = vadd.f32 %v6742, %v3971
    %v6858 = vadd.f32 %v6744, %v3972
    %v6859 = vadd.f32 %v6746, %v3973
    %v6860 = vadd.f32 %v6750, %v3974
    %v6861 = vadd.f32 %v6752, %v3975
    %v6862 = vadd.f32 %v6754, %v3976
    %v6863 = vadd.f32 %v6756, %v3977
    %v6864 = vadd.f32 %v6760, %v3978
    %v6865 = vadd.f32 %v6762, %v3979
    %v6866 = vadd.f32 %v6764, %v3980
    %v6867 = vadd.f32 %v6766, %v3981
    %v6868 = vadd.f32 %v6770, %v3982
    %v6869 = vadd.f32 %v6772, %v3983
    %v6870 = vadd.f32 %v6774, %v3984
    %v6871 = vadd.f32 %v6776, %v3985
    %v6872 = vadd.f32 %v6780, %v3986
    %v6873 = vadd.f32 %v6782, %v3987
    %v6874 = vadd.f32 %v6784, %v3988
    %v6875 = vadd.f32 %v6786, %v3989
    %v6876 = vadd.f32 %v6790, %v3990
    %v6877 = vadd.f32 %v6792, %v3991
    %v6878 = vadd.f32 %v6794, %v3992
    %v6879 = vadd.f32 %v6796, %v3993
    %v6880 = vadd.f32 %v6800, %v3994
    %v6881 = vadd.f32 %v6802, %v3995
    %v6882 = vadd.f32 %v6804, %v3996
    %v6883 = vadd.f32 %v6806, %v3997
    %v6884 = vadd.f32 %v6810, %v3998
    %v6885 = vadd.f32 %v6812, %v3999
    %v6886 = vadd.f32 %v6814, %v4000
    %v6887 = vadd.f32 %v6816, %v4001
    %v6888 = vadd.f32 %v6820, %v4002
    %v6889 = vadd.f32 %v6822, %v4003
    %v6890 = vadd.f32 %v6824, %v4004
    %v6891 = vadd.f32 %v6826, %v4005
    %6892 = vst [vmem:[#allocation13] sm:$0xff] %v6828
    %6893 = vst [vmem:[#allocation13 + $0x8] sm:$0xff] %v6829
    %6894 = vst [vmem:[#allocation13 + $0x10] sm:$0xff] %v6830
    %6895 = vst [vmem:[#allocation13 + $0x18] sm:$0xff] %v6831
    %6896 = vst [vmem:[#allocation13 + $0x20] sm:$0xff] %v6832
    %6897 = vst [vmem:[#allocation13 + $0x28] sm:$0xff] %v6833
    %6898 = vst [vmem:[#allocation13 + $0x30] sm:$0xff] %v6834
    %6899 = vst [vmem:[#allocation13 + $0x38] sm:$0xff] %v6835
    %6900 = vst [vmem:[#allocation13 + $0x40] sm:$0xff] %v6836
    %6901 = vst [vmem:[#allocation13 + $0x48] sm:$0xff] %v6837
    %6902 = vst [vmem:[#allocation13 + $0x50] sm:$0xff] %v6838
    %6903 = vst [vmem:[#allocation13 + $0x58] sm:$0xff] %v6839
    %6904 = vst [vmem:[#allocation13 + $0x60] sm:$0xff] %v6840
    %6905 = vst [vmem:[#allocation13 + $0x68] sm:$0xff] %v6841
    %6906 = vst [vmem:[#allocation13 + $0x70] sm:$0xff] %v6842
    %6907 = vst [vmem:[#allocation13 + $0x78] sm:$0xff] %v6843
    %6908 = vst [vmem:[#allocation13 + $0x80] sm:$0xff] %v6844
    %6909 = vst [vmem:[#allocation13 + $0x88] sm:$0xff] %v6845
    %6910 = vst [vmem:[#allocation13 + $0x90] sm:$0xff] %v6846
    %6911 = vst [vmem:[#allocation13 + $0x98] sm:$0xff] %v6847
    %6912 = vst [vmem:[#allocation13 + $0xa0] sm:$0xff] %v6848
    %6913 = vst [vmem:[#allocation13 + $0xa8] sm:$0xff] %v6849
    %6914 = vst [vmem:[#allocation13 + $0xb0] sm:$0xff] %v6850
    %6915 = vst [vmem:[#allocation13 + $0xb8] sm:$0xff] %v6851
    %6916 = vst [vmem:[#allocation13 + $0xc0] sm:$0xff] %v6852
    %6917 = vst [vmem:[#allocation13 + $0xc8] sm:$0xff] %v6853
    %6918 = vst [vmem:[#allocation13 + $0xd0] sm:$0xff] %v6854
    %6919 = vst [vmem:[#allocation13 + $0xd8] sm:$0xff] %v6855
    %6920 = vst [vmem:[#allocation13 + $0xe0] sm:$0xff] %v6856
    %6921 = vst [vmem:[#allocation13 + $0xe8] sm:$0xff] %v6857
    %6922 = vst [vmem:[#allocation13 + $0xf0] sm:$0xff] %v6858
    %6923 = vst [vmem:[#allocation13 + $0xf8] sm:$0xff] %v6859
    %6924 = vst [vmem:[#allocation13 + $0x100] sm:$0xff] %v6860
    %6925 = vst [vmem:[#allocation13 + $0x108] sm:$0xff] %v6861
    %6926 = vst [vmem:[#allocation13 + $0x110] sm:$0xff] %v6862
    %6927 = vst [vmem:[#allocation13 + $0x118] sm:$0xff] %v6863
    %6928 = vst [vmem:[#allocation13 + $0x120] sm:$0xff] %v6864
    %6929 = vst [vmem:[#allocation13 + $0x128] sm:$0xff] %v6865
    %6930 = vst [vmem:[#allocation13 + $0x130] sm:$0xff] %v6866
    %6931 = vst [vmem:[#allocation13 + $0x138] sm:$0xff] %v6867
    %6932 = vst [vmem:[#allocation13 + $0x140] sm:$0xff] %v6868
    %6933 = vst [vmem:[#allocation13 + $0x148] sm:$0xff] %v6869
    %6934 = vst [vmem:[#allocation13 + $0x150] sm:$0xff] %v6870
    %6935 = vst [vmem:[#allocation13 + $0x158] sm:$0xff] %v6871
    %6936 = vst [vmem:[#allocation13 + $0x160] sm:$0xff] %v6872
    %6937 = vst [vmem:[#allocation13 + $0x168] sm:$0xff] %v6873
    %6938 = vst [vmem:[#allocation13 + $0x170] sm:$0xff] %v6874
    %6939 = vst [vmem:[#allocation13 + $0x178] sm:$0xff] %v6875
    %6940 = vst [vmem:[#allocation13 + $0x180] sm:$0xff] %v6876
    %6941 = vst [vmem:[#allocation13 + $0x188] sm:$0xff] %v6877
    %6942 = vst [vmem:[#allocation13 + $0x190] sm:$0xff] %v6878
    %6943 = vst [vmem:[#allocation13 + $0x198] sm:$0xff] %v6879
    %6944 = vst [vmem:[#allocation13 + $0x1a0] sm:$0xff] %v6880
    %6945 = vst [vmem:[#allocation13 + $0x1a8] sm:$0xff] %v6881
    %6946 = vst [vmem:[#allocation13 + $0x1b0] sm:$0xff] %v6882
    %6947 = vst [vmem:[#allocation13 + $0x1b8] sm:$0xff] %v6883
    %6948 = vst [vmem:[#allocation13 + $0x1c0] sm:$0xff] %v6884
    %6949 = vst [vmem:[#allocation13 + $0x1c8] sm:$0xff] %v6885
    %6950 = vst [vmem:[#allocation13 + $0x1d0] sm:$0xff] %v6886
    %6951 = vst [vmem:[#allocation13 + $0x1d8] sm:$0xff] %v6887
    %6952 = vst [vmem:[#allocation13 + $0x1e0] sm:$0xff] %v6888
    %6953 = vst [vmem:[#allocation13 + $0x1e8] sm:$0xff] %v6889
    %6954 = vst [vmem:[#allocation13 + $0x1f0] sm:$0xff] %v6890
    %6955 = vst [vmem:[#allocation13 + $0x1f8] sm:$0xff] %v6891
    // Predicated region
    $region66: #{tpu_custom_call.1} parent=1 // pred_check
      _
    $region67: #{tpu_custom_call.1} parent=1 // pred_check_branch
      %6957 = sbr.rel (0) target = $region69
    $region68: #{tpu_custom_call.1} parent=1 // pred_region
      %s6959 = ssub.s32 8192, 8192
      %6960 = vsyncadd [#allocation4], %s6959
      %s6961 = sshll.u32 [#allocation13], 4
      %s6962 = int_to_ptr.vmem [resolvable:$true] %s6961
      %6967 = dma.vmem_to_hbm [thread:$0]  %s6962, 8192, %s10, [#allocation4], 256, 256, 16
    $region69: #{tpu_custom_call.1} parent=1 // pred_fallthru
      _
    // Predicated region
    $region70: #{tpu_custom_call.1} parent=1 // pred_check
      _
    $region71: #{tpu_custom_call.1} parent=1 // pred_check_branch
      %6969 = sbr.rel (0) target = $region73
    $region72: #{tpu_custom_call.1} parent=1 // pred_region
      %6970 = dma.done [#allocation4], 8192
    $region73: #{tpu_custom_call.1} parent=1 // pred_fallthru
      _
    %6971 = vsyncpa [#allocation3], 1
    %6972 = vsyncpa [#allocation6], 1
    %6973 = vsyncpa [#allocation9], 1
    %6974 = vsyncpa [#allocation12], 1
    %6975 = vsyncpa [#allocation4], 1

</llo_original>
